<compile_context>
chip_gen: v5e
topology: v5e:2x2
jax: 0.10.0
libtpu: 0.0.40
codegen_flags: <defaults>
</compile_context>

<pallas_src>
import numpy as np
import jax
import jax.numpy as jnp
from jax.experimental import pallas as pl
from jax.experimental.pallas import tpu as pltpu

H, W = 6, 7                  # board spatial dims (x.view(-1, 1, 6, 7))
HP, WP = H + 2, W + 2        # zero-padded dims: 8, 9
NPAD = HP * WP               # 72 padded-flat positions (multiple of 8)
# 3x3 tap offsets in padded-flat coords: (dh-1)*WP + (dw-1), dh outer, dw inner.
TAPS = tuple((dh - 1) * WP + (dw - 1) for dh in range(3) for dw in range(3))


# ---------------------------------------------------------------------------
# Fused kernel: conv1/2/3 (3x3, pad=1) + relu + fc1 + relu + fc2 + relu + fc3
# ---------------------------------------------------------------------------
def _dqn_kernel(taps_ref, w1_ref, b1_ref, w2_ref, b2_ref, w3_ref, b3_ref,
                fw1_ref, fb1_ref, fw2_ref, fb2_ref, fw3_ref, fb3_ref,
                out_ref, feat_ref):
    f32 = jnp.float32
    Bb = taps_ref.shape[1]            # batch block
    M = NPAD * Bb                     # matmul M axis: (position, batch) folded

    # Border-validity mask (depends only on padded-flat position p); built once
    # per grid step from a single narrow iota, applied as a broadcast multiply.
    p_idx = jax.lax.broadcasted_iota(jnp.int32, (NPAD, Bb, 32), 0)
    wp = p_idx % WP
    maskv = ((p_idx >= WP) & (p_idx < NPAD - WP)
             & (wp != 0) & (wp != WP - 1)).astype(f32)

    def mask_valid(h, c):
        return (h.reshape(NPAD, Bb, c) * maskv[:, :, :c]).reshape(M, c)

    # conv1 (1 -> 16): one MXU matmul on the 9-tap im2col tensor.
    h = jnp.dot(taps_ref[...].reshape(M, 9), w1_ref[...],
                preferred_element_type=f32)
    h = mask_valid(jnp.maximum(h + b1_ref[...], 0.0), 16)

    def conv3x3(h, wp_ref, b_ref):
        # Row-factored 3x3 conv in the position-major layout:
        #   out[p] = sum_c roll( [h(p-9) | h(p) | h(p+9)] @ Wcol_c , 1 - c )
        # -> 2 whole-row input rolls, 3 matmuls with K = 3*Cin, 2 output rolls.
        cout = wp_ref.shape[2]
        s9 = (9 * Bb) % M
        hcat = jnp.concatenate(
            [pltpu.roll(h, s9, axis=0), h, pltpu.roll(h, M - s9, axis=0)],
            axis=-1)                                            # (M, 3*Cin)
        acc = jnp.zeros((M, cout), f32)
        for c, s in ((0, Bb), (1, 0), (2, M - Bb)):
            y = jnp.dot(hcat, wp_ref[c], preferred_element_type=f32)
            acc = acc + (y if s == 0 else pltpu.roll(y, s, axis=0))
        return jnp.maximum(acc + b_ref[...], 0.0)

    h = mask_valid(conv3x3(h, w2_ref, b2_ref), 32)              # conv2 (16->32)
    h = conv3x3(h, w3_ref, b3_ref)                              # conv3 (32->64)
    # conv3's border-position garbage is killed by fc1's zero rows; no 3rd mask.

    # fc1 input: scatter the 72 contiguous per-position slabs into a lane-dense
    # (Bb, 72*64) VMEM scratch (the only layout change in the whole kernel).
    h3 = h.reshape(NPAD, Bb, 64)
    for p in range(NPAD):
        feat_ref[:, p * 64:(p + 1) * 64] = h3[p]

    # fc1 -> relu -> (dropout: identity in eval) -> fc2 -> relu -> fc3
    h = jnp.dot(feat_ref[...], fw1_ref[...], preferred_element_type=f32)
    h = jnp.maximum(h + fb1_ref[...], 0.0)
    h = jnp.dot(h, fw2_ref[...], preferred_element_type=f32)
    h = jnp.maximum(h + fb2_ref[...], 0.0)
    out_ref[...] = (jnp.dot(h, fw3_ref[...], preferred_element_type=f32)
                    + fb3_ref[...])


# ---------------------------------------------------------------------------
# Parameter init (deterministic, PyTorch nn.Conv2d / nn.Linear conventions)
# ---------------------------------------------------------------------------
def init_params(key):
    ks = jax.random.split(key, 12)

    def u(k, shape, fan_in):
        b = 1.0 / np.sqrt(fan_in)
        return jax.random.uniform(k, shape, jnp.float32, -b, b)

    p = {}
    p['conv1_w'] = u(ks[0], (16, 1, 3, 3), 9);     p['conv1_b'] = u(ks[1], (16,), 9)
    p['conv2_w'] = u(ks[2], (32, 16, 3, 3), 144);  p['conv2_b'] = u(ks[3], (32,), 144)
    p['conv3_w'] = u(ks[4], (64, 32, 3, 3), 288);  p['conv3_b'] = u(ks[5], (64,), 288)
    p['fc1_w'] = u(ks[6], (128, 64 * H * W), 64 * H * W)
    p['fc1_b'] = u(ks[7], (128,), 64 * H * W)
    p['fc2_w'] = u(ks[8], (64, 128), 128);         p['fc2_b'] = u(ks[9], (64,), 128)
    p['fc3_w'] = u(ks[10], (7, 64), 64);           p['fc3_b'] = u(ks[11], (7,), 64)
    return p


# One-time weight preprocessing (hoisted out of the per-forward path).
def prepare_params(p):
    f32 = jnp.float32

    def pack_rc(w):                     # OIHW -> (kw, kh*Cin, Cout)
        w = jnp.transpose(w, (2, 3, 1, 0))          # (kh, kw, Cin, Cout)
        w = jnp.transpose(w, (1, 0, 2, 3))          # (kw, kh, Cin, Cout)
        return w.reshape(3, 3 * w.shape[2], w.shape[3])

    w1 = jnp.transpose(p['conv1_w'], (2, 3, 1, 0)).reshape(9, 16)
    w2 = pack_rc(p['conv2_w'])                      # (3, 48, 32)
    w3 = pack_rc(p['conv3_w'])                      # (3, 96, 64)
    b1 = p['conv1_b'].reshape(1, 16)
    b2 = p['conv2_b'].reshape(1, 32)
    b3 = p['conv3_b'].reshape(1, 64)

    # fc1 weight scattered onto the padded 8x9 grid (zero rows at border
    # positions), permuted from torch's (C, H, W) flatten order to (p, c).
    wt = jnp.transpose(p['fc1_w'].reshape(128, 64, H, W), (2, 3, 1, 0))
    fw1 = jnp.zeros((HP, WP, 64, 128), f32).at[1:1 + H, 1:1 + W].set(wt)
    fw1 = fw1.reshape(NPAD * 64, 128)
    fb1 = p['fc1_b'].reshape(1, 128)
    # fc2 / fc3 zero-padded to 128 lanes so every MLP matmul is lane-dense.
    fw2 = jnp.zeros((128, 128), f32).at[:, :64].set(p['fc2_w'].T)
    fb2 = jnp.zeros((1, 128), f32).at[:, :64].set(p['fc2_b'].reshape(1, 64))
    fw3 = jnp.zeros((128, 128), f32).at[:64, :7].set(p['fc3_w'].T)
    fb3 = jnp.zeros((1, 128), f32).at[:, :7].set(p['fc3_b'].reshape(1, 7))
    return dict(w1=w1, b1=b1, w2=w2, b2=b2, w3=w3, b3=b3,
                fw1=fw1, fb1=fb1, fw2=fw2, fb2=fb2, fw3=fw3, fb3=fb3)


# ---------------------------------------------------------------------------
# Full forward (glue: layout conversion + one pallas_call)
# ---------------------------------------------------------------------------
def dqn_forward_pallas(x, prep, b_blk=64):
    f32 = jnp.float32
    xf = x.astype(f32).reshape(-1, H, W)            # torch: x.float().view(-1,1,6,7)
    B = xf.shape[0]
    bb = max(8, (int(min(b_blk, ((B + 7) // 8) * 8)) // 8) * 8)
    Bp = ((B + bb - 1) // bb) * bb

    # glue: zero-pad to 8x9, flatten positions, pad batch, go position-major.
    x_pf = jnp.pad(xf, ((0, 0), (1, 1), (1, 1))).reshape(B, NPAD)
    if Bp != B:
        x_pf = jnp.pad(x_pf, ((0, Bp - B), (0, 0)))
    x_pm = x_pf.T                                                  # (72, Bp)
    taps = jnp.stack([jnp.roll(x_pm, -d, axis=0) for d in TAPS], axis=-1)

    def const(a):
        return pl.BlockSpec(a.shape, lambda i: (0,) * a.ndim)

    consts = [prep[k] for k in ('w1', 'b1', 'w2', 'b2', 'w3', 'b3',
                                'fw1', 'fb1', 'fw2', 'fb2', 'fw3', 'fb3')]
    vmem_mb = 40 if bb <= 64 else (64 if bb <= 128 else 100)

    out = pl.pallas_call(
        _dqn_kernel,
        out_shape=jax.ShapeDtypeStruct((Bp, 128), f32),
        grid=(Bp // bb,),
        in_specs=[pl.BlockSpec((NPAD, bb, 9), lambda i: (0, i, 0))]
                 + [const(a) for a in consts],
        out_specs=pl.BlockSpec((bb, 128), lambda i: (i, 0)),
        scratch_shapes=[pltpu.VMEM((bb, NPAD * 64), f32)],
        compiler_params=pltpu.CompilerParams(
            dimension_semantics=("parallel",),
            vmem_limit_bytes=vmem_mb * 1024 * 1024),
    )(taps, *consts)
    return out[:B, :7]


# Pure-JAX reference mirroring the PyTorch module exactly (NCHW, OIHW weights).
def dqn_forward_reference(x, p):
    hi = jax.lax.Precision.HIGHEST
    h = x.astype(jnp.float32).reshape(-1, 1, H, W)
    for name in ('conv1', 'conv2', 'conv3'):
        h = jax.lax.conv_general_dilated(
            h, p[f'{name}_w'], (1, 1), 'SAME',
            dimension_numbers=('NCHW', 'OIHW', 'NCHW'), precision=hi)
        h = jax.nn.relu(h + p[f'{name}_b'].reshape(1, -1, 1, 1))
    h = h.reshape(h.shape[0], -1)                                  # (C,H,W) flatten
    h = jax.nn.relu(jnp.dot(h, p['fc1_w'].T, precision=hi) + p['fc1_b'])
    h = jax.nn.relu(jnp.dot(h, p['fc2_w'].T, precision=hi) + p['fc2_b'])
    return jnp.dot(h, p['fc3_w'].T, precision=hi) + p['fc3_b']


if __name__ == "__main__":
    key = jax.random.PRNGKey(0)
    pkey, xkey = jax.random.split(key)
    params = init_params(pkey)
    prep = prepare_params(params)          # one-time weight preprocessing

    # batch of 2 boards, shape matching the module's expected view(-1, 1, 6, 7)
    x = jax.random.uniform(xkey, (2, 1, 6, 7), jnp.float32)

    fwd = jax.jit(dqn_forward_pallas, static_argnames=("b_blk",))
    out = jax.block_until_ready(fwd(x, prep))

    ref = dqn_forward_reference(x, params)
    assert out.shape == (2, 7) and out.dtype == jnp.float32
    np.testing.assert_allclose(np.asarray(out), np.asarray(ref), rtol=2e-3, atol=2e-3)
    print("KERNEL_OK")
</pallas_src>

<mosaic_0001>
module attributes {stable_mosaic.version = 11 : i64} {
  func.func @_dqn_kernel(%arg0: i32, %arg1: memref<72x8x9xf32, #tpu.memory_space<vmem>>, %arg2: memref<9x16xf32, #tpu.memory_space<vmem>>, %arg3: memref<1x16xf32, #tpu.memory_space<vmem>>, %arg4: memref<3x48x32xf32, #tpu.memory_space<vmem>>, %arg5: memref<1x32xf32, #tpu.memory_space<vmem>>, %arg6: memref<3x96x64xf32, #tpu.memory_space<vmem>>, %arg7: memref<1x64xf32, #tpu.memory_space<vmem>>, %arg8: memref<4608x128xf32, #tpu.memory_space<vmem>>, %arg9: memref<1x128xf32, #tpu.memory_space<vmem>>, %arg10: memref<128x128xf32, #tpu.memory_space<vmem>>, %arg11: memref<1x128xf32, #tpu.memory_space<vmem>>, %arg12: memref<128x128xf32, #tpu.memory_space<vmem>>, %arg13: memref<1x128xf32, #tpu.memory_space<vmem>>, %arg14: memref<8x128xf32, #tpu.memory_space<vmem>>, %arg15: memref<8x4608xf32, #tpu.memory_space<vmem>>) attributes {dimension_semantics = [#tpu.dimension_semantics<parallel>], iteration_bounds = array<i64: 1>, scalar_prefetch = 0 : i64, scratch_operands = 1 : i64, tpu.core_type = #tpu.core_type<tc>, window_params = [{transform_indices = @transform_0, window_bounds = array<i64: 72, 8, 9>}, {pipeline_mode = #tpu.pipeline_mode<synchronous>, transform_indices = @transform_1, window_bounds = array<i64: 9, 16>}, {pipeline_mode = #tpu.pipeline_mode<synchronous>, transform_indices = @transform_2, window_bounds = array<i64: 1, 16>}, {pipeline_mode = #tpu.pipeline_mode<synchronous>, transform_indices = @transform_3, window_bounds = array<i64: 3, 48, 32>}, {pipeline_mode = #tpu.pipeline_mode<synchronous>, transform_indices = @transform_4, window_bounds = array<i64: 1, 32>}, {pipeline_mode = #tpu.pipeline_mode<synchronous>, transform_indices = @transform_5, window_bounds = array<i64: 3, 96, 64>}, {pipeline_mode = #tpu.pipeline_mode<synchronous>, transform_indices = @transform_6, window_bounds = array<i64: 1, 64>}, {pipeline_mode = #tpu.pipeline_mode<synchronous>, transform_indices = @transform_7, window_bounds = array<i64: 4608, 128>}, {pipeline_mode = #tpu.pipeline_mode<synchronous>, transform_indices = @transform_8, window_bounds = array<i64: 1, 128>}, {pipeline_mode = #tpu.pipeline_mode<synchronous>, transform_indices = @transform_9, window_bounds = array<i64: 128, 128>}, {pipeline_mode = #tpu.pipeline_mode<synchronous>, transform_indices = @transform_10, window_bounds = array<i64: 1, 128>}, {pipeline_mode = #tpu.pipeline_mode<synchronous>, transform_indices = @transform_11, window_bounds = array<i64: 128, 128>}, {pipeline_mode = #tpu.pipeline_mode<synchronous>, transform_indices = @transform_12, window_bounds = array<i64: 1, 128>}, {transform_indices = @transform_13, window_bounds = array<i64: 8, 128>}]} {
    %0 = tpu.iota {dimensions = array<i32: 0>} : vector<72x8x32xi32>
    %c9_i32 = arith.constant 9 : i32
    %c0_i32 = arith.constant 0 : i32
    %1 = arith.cmpi eq, %c9_i32, %c0_i32 : i32
    %c1_i32 = arith.constant 1 : i32
    %2 = arith.select %1, %c1_i32, %c9_i32 : i32
    %3 = vector.broadcast %2 : i32 to vector<72x8x32xi32>
    %4 = arith.remsi %0, %3 : vector<72x8x32xi32>
    %c0_i32_0 = arith.constant 0 : i32
    %5 = vector.broadcast %c0_i32_0 : i32 to vector<72x8x32xi32>
    %6 = arith.cmpi ne, %4, %5 : vector<72x8x32xi32>
    %c0_i32_1 = arith.constant 0 : i32
    %7 = vector.broadcast %c0_i32_1 : i32 to vector<72x8x32xi32>
    %8 = arith.cmpi slt, %4, %7 : vector<72x8x32xi32>
    %c0_i32_2 = arith.constant 0 : i32
    %9 = arith.cmpi slt, %2, %c0_i32_2 : i32
    %10 = vector.broadcast %9 : i1 to vector<72x8x32xi1>
    %11 = vector.broadcast %10 : vector<72x8x32xi1> to vector<72x8x32xi1>
    %12 = arith.xori %8, %11 : vector<72x8x32xi1>
    %13 = arith.andi %12, %6 : vector<72x8x32xi1>
    %14 = vector.broadcast %2 : i32 to vector<72x8x32xi32>
    %15 = arith.addi %4, %14 : vector<72x8x32xi32>
    %16 = arith.select %13, %15, %4 : vector<72x8x32xi1>, vector<72x8x32xi32>
    %c9_i32_3 = arith.constant 9 : i32
    %17 = vector.broadcast %c9_i32_3 : i32 to vector<72x8x32xi32>
    %18 = arith.cmpi sge, %0, %17 : vector<72x8x32xi32>
    %c63_i32 = arith.constant 63 : i32
    %19 = vector.broadcast %c63_i32 : i32 to vector<72x8x32xi32>
    %20 = arith.cmpi slt, %0, %19 : vector<72x8x32xi32>
    %21 = arith.andi %18, %20 : vector<72x8x32xi1>
    %c0_i32_4 = arith.constant 0 : i32
    %22 = vector.broadcast %c0_i32_4 : i32 to vector<72x8x32xi32>
    %23 = arith.cmpi ne, %16, %22 : vector<72x8x32xi32>
    %24 = arith.andi %21, %23 : vector<72x8x32xi1>
    %c8_i32 = arith.constant 8 : i32
    %25 = vector.broadcast %c8_i32 : i32 to vector<72x8x32xi32>
    %26 = arith.cmpi ne, %16, %25 : vector<72x8x32xi32>
    %27 = arith.andi %24, %26 : vector<72x8x32xi1>
    %28 = arith.extui %27 : vector<72x8x32xi1> to vector<72x8x32xi32>
    %29 = arith.sitofp %28 : vector<72x8x32xi32> to vector<72x8x32xf32>
    %c0 = arith.constant 0 : index
    %c0_5 = arith.constant 0 : index
    %c0_6 = arith.constant 0 : index
    %30 = vector.load %arg1[%c0, %c0_5, %c0_6] : memref<72x8x9xf32, #tpu.memory_space<vmem>>, vector<72x8x9xf32>
    %31 = vector.shape_cast %30 : vector<72x8x9xf32> to vector<576x9xf32>
    %c0_7 = arith.constant 0 : index
    %c0_8 = arith.constant 0 : index
    %32 = vector.load %arg2[%c0_7, %c0_8] : memref<9x16xf32, #tpu.memory_space<vmem>>, vector<9x16xf32>
    %cst = arith.constant dense<0.000000e+00> : vector<576x16xf32>
    %33 = tpu.matmul %31, %32, %cst {dimension_numbers = #tpu.dot_dimension_numbers<[1], [0], [0], [1], [0, 0, 1, 1], [], []>} : vector<576x9xf32>, vector<9x16xf32>, vector<576x16xf32> -> vector<576x16xf32>
    %c0_9 = arith.constant 0 : index
    %c0_10 = arith.constant 0 : index
    %34 = vector.load %arg3[%c0_9, %c0_10] : memref<1x16xf32, #tpu.memory_space<vmem>>, vector<1x16xf32>
    %35 = vector.broadcast %34 : vector<1x16xf32> to vector<576x16xf32>
    %36 = arith.addf %33, %35 : vector<576x16xf32>
    %cst_11 = arith.constant 0.000000e+00 : f32
    %37 = vector.broadcast %cst_11 : f32 to vector<576x16xf32>
    %38 = arith.maximumf %36, %37 : vector<576x16xf32>
    %39 = vector.shape_cast %38 : vector<576x16xf32> to vector<72x8x16xf32>
    %40 = vector.extract_strided_slice %29 {offsets = [0, 0, 0], sizes = [72, 8, 16], strides = [1, 1, 1]} : vector<72x8x32xf32> to vector<72x8x16xf32>
    %41 = arith.mulf %39, %40 : vector<72x8x16xf32>
    %42 = vector.shape_cast %41 : vector<72x8x16xf32> to vector<576x16xf32>
    %c72_i32 = arith.constant 72 : i32
    %43 = tpu.dynamic_rotate %42 by %c72_i32 dim 0 : vector<576x16xf32>, i32 -> vector<576x16xf32>
    %c504_i32 = arith.constant 504 : i32
    %44 = tpu.dynamic_rotate %42 by %c504_i32 dim 0 : vector<576x16xf32>, i32 -> vector<576x16xf32>
    %45 = tpu.concatenate %43, %42, %44 in 1 : vector<576x16xf32>, vector<576x16xf32>, vector<576x16xf32> -> vector<576x48xf32>
    %cst_12 = arith.constant 0.000000e+00 : f32
    %46 = vector.broadcast %cst_12 : f32 to vector<576x32xf32>
    %c0_13 = arith.constant 0 : index
    %c0_14 = arith.constant 0 : index
    %c0_15 = arith.constant 0 : index
    %47 = vector.load %arg4[%c0_13, %c0_14, %c0_15] : memref<3x48x32xf32, #tpu.memory_space<vmem>>, vector<1x48x32xf32>
    %48 = vector.shape_cast %47 : vector<1x48x32xf32> to vector<48x32xf32>
    %cst_16 = arith.constant dense<0.000000e+00> : vector<576x32xf32>
    %49 = tpu.matmul %45, %48, %cst_16 {dimension_numbers = #tpu.dot_dimension_numbers<[1], [0], [0], [1], [0, 0, 1, 1], [], []>} : vector<576x48xf32>, vector<48x32xf32>, vector<576x32xf32> -> vector<576x32xf32>
    %c8_i32_17 = arith.constant 8 : i32
    %50 = tpu.dynamic_rotate %49 by %c8_i32_17 dim 0 : vector<576x32xf32>, i32 -> vector<576x32xf32>
    %51 = arith.addf %46, %50 : vector<576x32xf32>
    %c1 = arith.constant 1 : index
    %c0_18 = arith.constant 0 : index
    %c0_19 = arith.constant 0 : index
    %52 = vector.load %arg4[%c1, %c0_18, %c0_19] : memref<3x48x32xf32, #tpu.memory_space<vmem>>, vector<1x48x32xf32>
    %53 = vector.shape_cast %52 : vector<1x48x32xf32> to vector<48x32xf32>
    %cst_20 = arith.constant dense<0.000000e+00> : vector<576x32xf32>
    %54 = tpu.matmul %45, %53, %cst_20 {dimension_numbers = #tpu.dot_dimension_numbers<[1], [0], [0], [1], [0, 0, 1, 1], [], []>} : vector<576x48xf32>, vector<48x32xf32>, vector<576x32xf32> -> vector<576x32xf32>
    %55 = arith.addf %51, %54 : vector<576x32xf32>
    %c2 = arith.constant 2 : index
    %c0_21 = arith.constant 0 : index
    %c0_22 = arith.constant 0 : index
    %56 = vector.load %arg4[%c2, %c0_21, %c0_22] : memref<3x48x32xf32, #tpu.memory_space<vmem>>, vector<1x48x32xf32>
    %57 = vector.shape_cast %56 : vector<1x48x32xf32> to vector<48x32xf32>
    %cst_23 = arith.constant dense<0.000000e+00> : vector<576x32xf32>
    %58 = tpu.matmul %45, %57, %cst_23 {dimension_numbers = #tpu.dot_dimension_numbers<[1], [0], [0], [1], [0, 0, 1, 1], [], []>} : vector<576x48xf32>, vector<48x32xf32>, vector<576x32xf32> -> vector<576x32xf32>
    %c568_i32 = arith.constant 568 : i32
    %59 = tpu.dynamic_rotate %58 by %c568_i32 dim 0 : vector<576x32xf32>, i32 -> vector<576x32xf32>
    %60 = arith.addf %55, %59 : vector<576x32xf32>
    %c0_24 = arith.constant 0 : index
    %c0_25 = arith.constant 0 : index
    %61 = vector.load %arg5[%c0_24, %c0_25] : memref<1x32xf32, #tpu.memory_space<vmem>>, vector<1x32xf32>
    %62 = vector.broadcast %61 : vector<1x32xf32> to vector<576x32xf32>
    %63 = arith.addf %60, %62 : vector<576x32xf32>
    %cst_26 = arith.constant 0.000000e+00 : f32
    %64 = vector.broadcast %cst_26 : f32 to vector<576x32xf32>
    %65 = arith.maximumf %63, %64 : vector<576x32xf32>
    %66 = vector.shape_cast %65 : vector<576x32xf32> to vector<72x8x32xf32>
    %67 = arith.mulf %66, %29 : vector<72x8x32xf32>
    %68 = vector.shape_cast %67 : vector<72x8x32xf32> to vector<576x32xf32>
    %c72_i32_27 = arith.constant 72 : i32
    %69 = tpu.dynamic_rotate %68 by %c72_i32_27 dim 0 : vector<576x32xf32>, i32 -> vector<576x32xf32>
    %c504_i32_28 = arith.constant 504 : i32
    %70 = tpu.dynamic_rotate %68 by %c504_i32_28 dim 0 : vector<576x32xf32>, i32 -> vector<576x32xf32>
    %71 = tpu.concatenate %69, %68, %70 in 1 : vector<576x32xf32>, vector<576x32xf32>, vector<576x32xf32> -> vector<576x96xf32>
    %cst_29 = arith.constant 0.000000e+00 : f32
    %72 = vector.broadcast %cst_29 : f32 to vector<576x64xf32>
    %c0_30 = arith.constant 0 : index
    %c0_31 = arith.constant 0 : index
    %c0_32 = arith.constant 0 : index
    %73 = vector.load %arg6[%c0_30, %c0_31, %c0_32] : memref<3x96x64xf32, #tpu.memory_space<vmem>>, vector<1x96x64xf32>
    %74 = vector.shape_cast %73 : vector<1x96x64xf32> to vector<96x64xf32>
    %cst_33 = arith.constant dense<0.000000e+00> : vector<576x64xf32>
    %75 = tpu.matmul %71, %74, %cst_33 {dimension_numbers = #tpu.dot_dimension_numbers<[1], [0], [0], [1], [0, 0, 1, 1], [], []>} : vector<576x96xf32>, vector<96x64xf32>, vector<576x64xf32> -> vector<576x64xf32>
    %c8_i32_34 = arith.constant 8 : i32
    %76 = tpu.dynamic_rotate %75 by %c8_i32_34 dim 0 : vector<576x64xf32>, i32 -> vector<576x64xf32>
    %77 = arith.addf %72, %76 : vector<576x64xf32>
    %c1_35 = arith.constant 1 : index
    %c0_36 = arith.constant 0 : index
    %c0_37 = arith.constant 0 : index
    %78 = vector.load %arg6[%c1_35, %c0_36, %c0_37] : memref<3x96x64xf32, #tpu.memory_space<vmem>>, vector<1x96x64xf32>
    %79 = vector.shape_cast %78 : vector<1x96x64xf32> to vector<96x64xf32>
    %cst_38 = arith.constant dense<0.000000e+00> : vector<576x64xf32>
    %80 = tpu.matmul %71, %79, %cst_38 {dimension_numbers = #tpu.dot_dimension_numbers<[1], [0], [0], [1], [0, 0, 1, 1], [], []>} : vector<576x96xf32>, vector<96x64xf32>, vector<576x64xf32> -> vector<576x64xf32>
    %81 = arith.addf %77, %80 : vector<576x64xf32>
    %c2_39 = arith.constant 2 : index
    %c0_40 = arith.constant 0 : index
    %c0_41 = arith.constant 0 : index
    %82 = vector.load %arg6[%c2_39, %c0_40, %c0_41] : memref<3x96x64xf32, #tpu.memory_space<vmem>>, vector<1x96x64xf32>
    %83 = vector.shape_cast %82 : vector<1x96x64xf32> to vector<96x64xf32>
    %cst_42 = arith.constant dense<0.000000e+00> : vector<576x64xf32>
    %84 = tpu.matmul %71, %83, %cst_42 {dimension_numbers = #tpu.dot_dimension_numbers<[1], [0], [0], [1], [0, 0, 1, 1], [], []>} : vector<576x96xf32>, vector<96x64xf32>, vector<576x64xf32> -> vector<576x64xf32>
    %c568_i32_43 = arith.constant 568 : i32
    %85 = tpu.dynamic_rotate %84 by %c568_i32_43 dim 0 : vector<576x64xf32>, i32 -> vector<576x64xf32>
    %86 = arith.addf %81, %85 : vector<576x64xf32>
    %c0_44 = arith.constant 0 : index
    %c0_45 = arith.constant 0 : index
    %87 = vector.load %arg7[%c0_44, %c0_45] : memref<1x64xf32, #tpu.memory_space<vmem>>, vector<1x64xf32>
    %88 = vector.broadcast %87 : vector<1x64xf32> to vector<576x64xf32>
    %89 = arith.addf %86, %88 : vector<576x64xf32>
    %cst_46 = arith.constant 0.000000e+00 : f32
    %90 = vector.broadcast %cst_46 : f32 to vector<576x64xf32>
    %91 = arith.maximumf %89, %90 : vector<576x64xf32>
    %92 = vector.shape_cast %91 : vector<576x64xf32> to vector<72x8x64xf32>
    %93 = vector.extract_strided_slice %92 {offsets = [0, 0, 0], sizes = [1, 8, 64], strides = [1, 1, 1]} : vector<72x8x64xf32> to vector<1x8x64xf32>
    %94 = vector.shape_cast %93 : vector<1x8x64xf32> to vector<8x64xf32>
    %c0_47 = arith.constant 0 : index
    %c0_48 = arith.constant 0 : index
    %95 = vector.load %arg15[%c0_47, %c0_48] : memref<8x4608xf32, #tpu.memory_space<vmem>>, vector<8x64xf32>
    tpu.vector_store %arg15[%c0_47, %c0_48], %94 {strides = array<i32>} : memref<8x4608xf32, #tpu.memory_space<vmem>>, vector<8x64xf32>,
    %96 = vector.extract_strided_slice %92 {offsets = [1, 0, 0], sizes = [1, 8, 64], strides = [1, 1, 1]} : vector<72x8x64xf32> to vector<1x8x64xf32>
    %97 = vector.shape_cast %96 : vector<1x8x64xf32> to vector<8x64xf32>
    %c0_49 = arith.constant 0 : index
    %c64 = arith.constant 64 : index
    %98 = vector.load %arg15[%c0_49, %c64] : memref<8x4608xf32, #tpu.memory_space<vmem>>, vector<8x64xf32>
    tpu.vector_store %arg15[%c0_49, %c64], %97 {strides = array<i32>} : memref<8x4608xf32, #tpu.memory_space<vmem>>, vector<8x64xf32>,
    %99 = vector.extract_strided_slice %92 {offsets = [2, 0, 0], sizes = [1, 8, 64], strides = [1, 1, 1]} : vector<72x8x64xf32> to vector<1x8x64xf32>
    %100 = vector.shape_cast %99 : vector<1x8x64xf32> to vector<8x64xf32>
    %c0_50 = arith.constant 0 : index
    %c128 = arith.constant 128 : index
    %101 = vector.load %arg15[%c0_50, %c128] : memref<8x4608xf32, #tpu.memory_space<vmem>>, vector<8x64xf32>
    tpu.vector_store %arg15[%c0_50, %c128], %100 {strides = array<i32>} : memref<8x4608xf32, #tpu.memory_space<vmem>>, vector<8x64xf32>,
    %102 = vector.extract_strided_slice %92 {offsets = [3, 0, 0], sizes = [1, 8, 64], strides = [1, 1, 1]} : vector<72x8x64xf32> to vector<1x8x64xf32>
    %103 = vector.shape_cast %102 : vector<1x8x64xf32> to vector<8x64xf32>
    %c0_51 = arith.constant 0 : index
    %c192 = arith.constant 192 : index
    %104 = vector.load %arg15[%c0_51, %c192] : memref<8x4608xf32, #tpu.memory_space<vmem>>, vector<8x64xf32>
    tpu.vector_store %arg15[%c0_51, %c192], %103 {strides = array<i32>} : memref<8x4608xf32, #tpu.memory_space<vmem>>, vector<8x64xf32>,
    %105 = vector.extract_strided_slice %92 {offsets = [4, 0, 0], sizes = [1, 8, 64], strides = [1, 1, 1]} : vector<72x8x64xf32> to vector<1x8x64xf32>
    %106 = vector.shape_cast %105 : vector<1x8x64xf32> to vector<8x64xf32>
    %c0_52 = arith.constant 0 : index
    %c256 = arith.constant 256 : index
    %107 = vector.load %arg15[%c0_52, %c256] : memref<8x4608xf32, #tpu.memory_space<vmem>>, vector<8x64xf32>
    tpu.vector_store %arg15[%c0_52, %c256], %106 {strides = array<i32>} : memref<8x4608xf32, #tpu.memory_space<vmem>>, vector<8x64xf32>,
    %108 = vector.extract_strided_slice %92 {offsets = [5, 0, 0], sizes = [1, 8, 64], strides = [1, 1, 1]} : vector<72x8x64xf32> to vector<1x8x64xf32>
    %109 = vector.shape_cast %108 : vector<1x8x64xf32> to vector<8x64xf32>
    %c0_53 = arith.constant 0 : index
    %c320 = arith.constant 320 : index
    %110 = vector.load %arg15[%c0_53, %c320] : memref<8x4608xf32, #tpu.memory_space<vmem>>, vector<8x64xf32>
    tpu.vector_store %arg15[%c0_53, %c320], %109 {strides = array<i32>} : memref<8x4608xf32, #tpu.memory_space<vmem>>, vector<8x64xf32>,
    %111 = vector.extract_strided_slice %92 {offsets = [6, 0, 0], sizes = [1, 8, 64], strides = [1, 1, 1]} : vector<72x8x64xf32> to vector<1x8x64xf32>
    %112 = vector.shape_cast %111 : vector<1x8x64xf32> to vector<8x64xf32>
    %c0_54 = arith.constant 0 : index
    %c384 = arith.constant 384 : index
    %113 = vector.load %arg15[%c0_54, %c384] : memref<8x4608xf32, #tpu.memory_space<vmem>>, vector<8x64xf32>
    tpu.vector_store %arg15[%c0_54, %c384], %112 {strides = array<i32>} : memref<8x4608xf32, #tpu.memory_space<vmem>>, vector<8x64xf32>,
    %114 = vector.extract_strided_slice %92 {offsets = [7, 0, 0], sizes = [1, 8, 64], strides = [1, 1, 1]} : vector<72x8x64xf32> to vector<1x8x64xf32>
    %115 = vector.shape_cast %114 : vector<1x8x64xf32> to vector<8x64xf32>
    %c0_55 = arith.constant 0 : index
    %c448 = arith.constant 448 : index
    %116 = vector.load %arg15[%c0_55, %c448] : memref<8x4608xf32, #tpu.memory_space<vmem>>, vector<8x64xf32>
    tpu.vector_store %arg15[%c0_55, %c448], %115 {strides = array<i32>} : memref<8x4608xf32, #tpu.memory_space<vmem>>, vector<8x64xf32>,
    %117 = vector.extract_strided_slice %92 {offsets = [8, 0, 0], sizes = [1, 8, 64], strides = [1, 1, 1]} : vector<72x8x64xf32> to vector<1x8x64xf32>
    %118 = vector.shape_cast %117 : vector<1x8x64xf32> to vector<8x64xf32>
    %c0_56 = arith.constant 0 : index
    %c512 = arith.constant 512 : index
    %119 = vector.load %arg15[%c0_56, %c512] : memref<8x4608xf32, #tpu.memory_space<vmem>>, vector<8x64xf32>
    tpu.vector_store %arg15[%c0_56, %c512], %118 {strides = array<i32>} : memref<8x4608xf32, #tpu.memory_space<vmem>>, vector<8x64xf32>,
    %120 = vector.extract_strided_slice %92 {offsets = [9, 0, 0], sizes = [1, 8, 64], strides = [1, 1, 1]} : vector<72x8x64xf32> to vector<1x8x64xf32>
    %121 = vector.shape_cast %120 : vector<1x8x64xf32> to vector<8x64xf32>
    %c0_57 = arith.constant 0 : index
    %c576 = arith.constant 576 : index
    %122 = vector.load %arg15[%c0_57, %c576] : memref<8x4608xf32, #tpu.memory_space<vmem>>, vector<8x64xf32>
    tpu.vector_store %arg15[%c0_57, %c576], %121 {strides = array<i32>} : memref<8x4608xf32, #tpu.memory_space<vmem>>, vector<8x64xf32>,
    %123 = vector.extract_strided_slice %92 {offsets = [10, 0, 0], sizes = [1, 8, 64], strides = [1, 1, 1]} : vector<72x8x64xf32> to vector<1x8x64xf32>
    %124 = vector.shape_cast %123 : vector<1x8x64xf32> to vector<8x64xf32>
    %c0_58 = arith.constant 0 : index
    %c640 = arith.constant 640 : index
    %125 = vector.load %arg15[%c0_58, %c640] : memref<8x4608xf32, #tpu.memory_space<vmem>>, vector<8x64xf32>
    tpu.vector_store %arg15[%c0_58, %c640], %124 {strides = array<i32>} : memref<8x4608xf32, #tpu.memory_space<vmem>>, vector<8x64xf32>,
    %126 = vector.extract_strided_slice %92 {offsets = [11, 0, 0], sizes = [1, 8, 64], strides = [1, 1, 1]} : vector<72x8x64xf32> to vector<1x8x64xf32>
    %127 = vector.shape_cast %126 : vector<1x8x64xf32> to vector<8x64xf32>
    %c0_59 = arith.constant 0 : index
    %c704 = arith.constant 704 : index
    %128 = vector.load %arg15[%c0_59, %c704] : memref<8x4608xf32, #tpu.memory_space<vmem>>, vector<8x64xf32>
    tpu.vector_store %arg15[%c0_59, %c704], %127 {strides = array<i32>} : memref<8x4608xf32, #tpu.memory_space<vmem>>, vector<8x64xf32>,
    %129 = vector.extract_strided_slice %92 {offsets = [12, 0, 0], sizes = [1, 8, 64], strides = [1, 1, 1]} : vector<72x8x64xf32> to vector<1x8x64xf32>
    %130 = vector.shape_cast %129 : vector<1x8x64xf32> to vector<8x64xf32>
    %c0_60 = arith.constant 0 : index
    %c768 = arith.constant 768 : index
    %131 = vector.load %arg15[%c0_60, %c768] : memref<8x4608xf32, #tpu.memory_space<vmem>>, vector<8x64xf32>
    tpu.vector_store %arg15[%c0_60, %c768], %130 {strides = array<i32>} : memref<8x4608xf32, #tpu.memory_space<vmem>>, vector<8x64xf32>,
    %132 = vector.extract_strided_slice %92 {offsets = [13, 0, 0], sizes = [1, 8, 64], strides = [1, 1, 1]} : vector<72x8x64xf32> to vector<1x8x64xf32>
    %133 = vector.shape_cast %132 : vector<1x8x64xf32> to vector<8x64xf32>
    %c0_61 = arith.constant 0 : index
    %c832 = arith.constant 832 : index
    %134 = vector.load %arg15[%c0_61, %c832] : memref<8x4608xf32, #tpu.memory_space<vmem>>, vector<8x64xf32>
    tpu.vector_store %arg15[%c0_61, %c832], %133 {strides = array<i32>} : memref<8x4608xf32, #tpu.memory_space<vmem>>, vector<8x64xf32>,
    %135 = vector.extract_strided_slice %92 {offsets = [14, 0, 0], sizes = [1, 8, 64], strides = [1, 1, 1]} : vector<72x8x64xf32> to vector<1x8x64xf32>
    %136 = vector.shape_cast %135 : vector<1x8x64xf32> to vector<8x64xf32>
    %c0_62 = arith.constant 0 : index
    %c896 = arith.constant 896 : index
    %137 = vector.load %arg15[%c0_62, %c896] : memref<8x4608xf32, #tpu.memory_space<vmem>>, vector<8x64xf32>
    tpu.vector_store %arg15[%c0_62, %c896], %136 {strides = array<i32>} : memref<8x4608xf32, #tpu.memory_space<vmem>>, vector<8x64xf32>,
    %138 = vector.extract_strided_slice %92 {offsets = [15, 0, 0], sizes = [1, 8, 64], strides = [1, 1, 1]} : vector<72x8x64xf32> to vector<1x8x64xf32>
    %139 = vector.shape_cast %138 : vector<1x8x64xf32> to vector<8x64xf32>
    %c0_63 = arith.constant 0 : index
    %c960 = arith.constant 960 : index
    %140 = vector.load %arg15[%c0_63, %c960] : memref<8x4608xf32, #tpu.memory_space<vmem>>, vector<8x64xf32>
    tpu.vector_store %arg15[%c0_63, %c960], %139 {strides = array<i32>} : memref<8x4608xf32, #tpu.memory_space<vmem>>, vector<8x64xf32>,
    %141 = vector.extract_strided_slice %92 {offsets = [16, 0, 0], sizes = [1, 8, 64], strides = [1, 1, 1]} : vector<72x8x64xf32> to vector<1x8x64xf32>
    %142 = vector.shape_cast %141 : vector<1x8x64xf32> to vector<8x64xf32>
    %c0_64 = arith.constant 0 : index
    %c1024 = arith.constant 1024 : index
    %143 = vector.load %arg15[%c0_64, %c1024] : memref<8x4608xf32, #tpu.memory_space<vmem>>, vector<8x64xf32>
    tpu.vector_store %arg15[%c0_64, %c1024], %142 {strides = array<i32>} : memref<8x4608xf32, #tpu.memory_space<vmem>>, vector<8x64xf32>,
    %144 = vector.extract_strided_slice %92 {offsets = [17, 0, 0], sizes = [1, 8, 64], strides = [1, 1, 1]} : vector<72x8x64xf32> to vector<1x8x64xf32>
    %145 = vector.shape_cast %144 : vector<1x8x64xf32> to vector<8x64xf32>
    %c0_65 = arith.constant 0 : index
    %c1088 = arith.constant 1088 : index
    %146 = vector.load %arg15[%c0_65, %c1088] : memref<8x4608xf32, #tpu.memory_space<vmem>>, vector<8x64xf32>
    tpu.vector_store %arg15[%c0_65, %c1088], %145 {strides = array<i32>} : memref<8x4608xf32, #tpu.memory_space<vmem>>, vector<8x64xf32>,
    %147 = vector.extract_strided_slice %92 {offsets = [18, 0, 0], sizes = [1, 8, 64], strides = [1, 1, 1]} : vector<72x8x64xf32> to vector<1x8x64xf32>
    %148 = vector.shape_cast %147 : vector<1x8x64xf32> to vector<8x64xf32>
    %c0_66 = arith.constant 0 : index
    %c1152 = arith.constant 1152 : index
    %149 = vector.load %arg15[%c0_66, %c1152] : memref<8x4608xf32, #tpu.memory_space<vmem>>, vector<8x64xf32>
    tpu.vector_store %arg15[%c0_66, %c1152], %148 {strides = array<i32>} : memref<8x4608xf32, #tpu.memory_space<vmem>>, vector<8x64xf32>,
    %150 = vector.extract_strided_slice %92 {offsets = [19, 0, 0], sizes = [1, 8, 64], strides = [1, 1, 1]} : vector<72x8x64xf32> to vector<1x8x64xf32>
    %151 = vector.shape_cast %150 : vector<1x8x64xf32> to vector<8x64xf32>
    %c0_67 = arith.constant 0 : index
    %c1216 = arith.constant 1216 : index
    %152 = vector.load %arg15[%c0_67, %c1216] : memref<8x4608xf32, #tpu.memory_space<vmem>>, vector<8x64xf32>
    tpu.vector_store %arg15[%c0_67, %c1216], %151 {strides = array<i32>} : memref<8x4608xf32, #tpu.memory_space<vmem>>, vector<8x64xf32>,
    %153 = vector.extract_strided_slice %92 {offsets = [20, 0, 0], sizes = [1, 8, 64], strides = [1, 1, 1]} : vector<72x8x64xf32> to vector<1x8x64xf32>
    %154 = vector.shape_cast %153 : vector<1x8x64xf32> to vector<8x64xf32>
    %c0_68 = arith.constant 0 : index
    %c1280 = arith.constant 1280 : index
    %155 = vector.load %arg15[%c0_68, %c1280] : memref<8x4608xf32, #tpu.memory_space<vmem>>, vector<8x64xf32>
    tpu.vector_store %arg15[%c0_68, %c1280], %154 {strides = array<i32>} : memref<8x4608xf32, #tpu.memory_space<vmem>>, vector<8x64xf32>,
    %156 = vector.extract_strided_slice %92 {offsets = [21, 0, 0], sizes = [1, 8, 64], strides = [1, 1, 1]} : vector<72x8x64xf32> to vector<1x8x64xf32>
    %157 = vector.shape_cast %156 : vector<1x8x64xf32> to vector<8x64xf32>
    %c0_69 = arith.constant 0 : index
    %c1344 = arith.constant 1344 : index
    %158 = vector.load %arg15[%c0_69, %c1344] : memref<8x4608xf32, #tpu.memory_space<vmem>>, vector<8x64xf32>
    tpu.vector_store %arg15[%c0_69, %c1344], %157 {strides = array<i32>} : memref<8x4608xf32, #tpu.memory_space<vmem>>, vector<8x64xf32>,
    %159 = vector.extract_strided_slice %92 {offsets = [22, 0, 0], sizes = [1, 8, 64], strides = [1, 1, 1]} : vector<72x8x64xf32> to vector<1x8x64xf32>
    %160 = vector.shape_cast %159 : vector<1x8x64xf32> to vector<8x64xf32>
    %c0_70 = arith.constant 0 : index
    %c1408 = arith.constant 1408 : index
    %161 = vector.load %arg15[%c0_70, %c1408] : memref<8x4608xf32, #tpu.memory_space<vmem>>, vector<8x64xf32>
    tpu.vector_store %arg15[%c0_70, %c1408], %160 {strides = array<i32>} : memref<8x4608xf32, #tpu.memory_space<vmem>>, vector<8x64xf32>,
    %162 = vector.extract_strided_slice %92 {offsets = [23, 0, 0], sizes = [1, 8, 64], strides = [1, 1, 1]} : vector<72x8x64xf32> to vector<1x8x64xf32>
    %163 = vector.shape_cast %162 : vector<1x8x64xf32> to vector<8x64xf32>
    %c0_71 = arith.constant 0 : index
    %c1472 = arith.constant 1472 : index
    %164 = vector.load %arg15[%c0_71, %c1472] : memref<8x4608xf32, #tpu.memory_space<vmem>>, vector<8x64xf32>
    tpu.vector_store %arg15[%c0_71, %c1472], %163 {strides = array<i32>} : memref<8x4608xf32, #tpu.memory_space<vmem>>, vector<8x64xf32>,
    %165 = vector.extract_strided_slice %92 {offsets = [24, 0, 0], sizes = [1, 8, 64], strides = [1, 1, 1]} : vector<72x8x64xf32> to vector<1x8x64xf32>
    %166 = vector.shape_cast %165 : vector<1x8x64xf32> to vector<8x64xf32>
    %c0_72 = arith.constant 0 : index
    %c1536 = arith.constant 1536 : index
    %167 = vector.load %arg15[%c0_72, %c1536] : memref<8x4608xf32, #tpu.memory_space<vmem>>, vector<8x64xf32>
    tpu.vector_store %arg15[%c0_72, %c1536], %166 {strides = array<i32>} : memref<8x4608xf32, #tpu.memory_space<vmem>>, vector<8x64xf32>,
    %168 = vector.extract_strided_slice %92 {offsets = [25, 0, 0], sizes = [1, 8, 64], strides = [1, 1, 1]} : vector<72x8x64xf32> to vector<1x8x64xf32>
    %169 = vector.shape_cast %168 : vector<1x8x64xf32> to vector<8x64xf32>
    %c0_73 = arith.constant 0 : index
    %c1600 = arith.constant 1600 : index
    %170 = vector.load %arg15[%c0_73, %c1600] : memref<8x4608xf32, #tpu.memory_space<vmem>>, vector<8x64xf32>
    tpu.vector_store %arg15[%c0_73, %c1600], %169 {strides = array<i32>} : memref<8x4608xf32, #tpu.memory_space<vmem>>, vector<8x64xf32>,
    %171 = vector.extract_strided_slice %92 {offsets = [26, 0, 0], sizes = [1, 8, 64], strides = [1, 1, 1]} : vector<72x8x64xf32> to vector<1x8x64xf32>
    %172 = vector.shape_cast %171 : vector<1x8x64xf32> to vector<8x64xf32>
    %c0_74 = arith.constant 0 : index
    %c1664 = arith.constant 1664 : index
    %173 = vector.load %arg15[%c0_74, %c1664] : memref<8x4608xf32, #tpu.memory_space<vmem>>, vector<8x64xf32>
    tpu.vector_store %arg15[%c0_74, %c1664], %172 {strides = array<i32>} : memref<8x4608xf32, #tpu.memory_space<vmem>>, vector<8x64xf32>,
    %174 = vector.extract_strided_slice %92 {offsets = [27, 0, 0], sizes = [1, 8, 64], strides = [1, 1, 1]} : vector<72x8x64xf32> to vector<1x8x64xf32>
    %175 = vector.shape_cast %174 : vector<1x8x64xf32> to vector<8x64xf32>
    %c0_75 = arith.constant 0 : index
    %c1728 = arith.constant 1728 : index
    %176 = vector.load %arg15[%c0_75, %c1728] : memref<8x4608xf32, #tpu.memory_space<vmem>>, vector<8x64xf32>
    tpu.vector_store %arg15[%c0_75, %c1728], %175 {strides = array<i32>} : memref<8x4608xf32, #tpu.memory_space<vmem>>, vector<8x64xf32>,
    %177 = vector.extract_strided_slice %92 {offsets = [28, 0, 0], sizes = [1, 8, 64], strides = [1, 1, 1]} : vector<72x8x64xf32> to vector<1x8x64xf32>
    %178 = vector.shape_cast %177 : vector<1x8x64xf32> to vector<8x64xf32>
    %c0_76 = arith.constant 0 : index
    %c1792 = arith.constant 1792 : index
    %179 = vector.load %arg15[%c0_76, %c1792] : memref<8x4608xf32, #tpu.memory_space<vmem>>, vector<8x64xf32>
    tpu.vector_store %arg15[%c0_76, %c1792], %178 {strides = array<i32>} : memref<8x4608xf32, #tpu.memory_space<vmem>>, vector<8x64xf32>,
    %180 = vector.extract_strided_slice %92 {offsets = [29, 0, 0], sizes = [1, 8, 64], strides = [1, 1, 1]} : vector<72x8x64xf32> to vector<1x8x64xf32>
    %181 = vector.shape_cast %180 : vector<1x8x64xf32> to vector<8x64xf32>
    %c0_77 = arith.constant 0 : index
    %c1856 = arith.constant 1856 : index
    %182 = vector.load %arg15[%c0_77, %c1856] : memref<8x4608xf32, #tpu.memory_space<vmem>>, vector<8x64xf32>
    tpu.vector_store %arg15[%c0_77, %c1856], %181 {strides = array<i32>} : memref<8x4608xf32, #tpu.memory_space<vmem>>, vector<8x64xf32>,
    %183 = vector.extract_strided_slice %92 {offsets = [30, 0, 0], sizes = [1, 8, 64], strides = [1, 1, 1]} : vector<72x8x64xf32> to vector<1x8x64xf32>
    %184 = vector.shape_cast %183 : vector<1x8x64xf32> to vector<8x64xf32>
    %c0_78 = arith.constant 0 : index
    %c1920 = arith.constant 1920 : index
    %185 = vector.load %arg15[%c0_78, %c1920] : memref<8x4608xf32, #tpu.memory_space<vmem>>, vector<8x64xf32>
    tpu.vector_store %arg15[%c0_78, %c1920], %184 {strides = array<i32>} : memref<8x4608xf32, #tpu.memory_space<vmem>>, vector<8x64xf32>,
    %186 = vector.extract_strided_slice %92 {offsets = [31, 0, 0], sizes = [1, 8, 64], strides = [1, 1, 1]} : vector<72x8x64xf32> to vector<1x8x64xf32>
    %187 = vector.shape_cast %186 : vector<1x8x64xf32> to vector<8x64xf32>
    %c0_79 = arith.constant 0 : index
    %c1984 = arith.constant 1984 : index
    %188 = vector.load %arg15[%c0_79, %c1984] : memref<8x4608xf32, #tpu.memory_space<vmem>>, vector<8x64xf32>
    tpu.vector_store %arg15[%c0_79, %c1984], %187 {strides = array<i32>} : memref<8x4608xf32, #tpu.memory_space<vmem>>, vector<8x64xf32>,
    %189 = vector.extract_strided_slice %92 {offsets = [32, 0, 0], sizes = [1, 8, 64], strides = [1, 1, 1]} : vector<72x8x64xf32> to vector<1x8x64xf32>
    %190 = vector.shape_cast %189 : vector<1x8x64xf32> to vector<8x64xf32>
    %c0_80 = arith.constant 0 : index
    %c2048 = arith.constant 2048 : index
    %191 = vector.load %arg15[%c0_80, %c2048] : memref<8x4608xf32, #tpu.memory_space<vmem>>, vector<8x64xf32>
    tpu.vector_store %arg15[%c0_80, %c2048], %190 {strides = array<i32>} : memref<8x4608xf32, #tpu.memory_space<vmem>>, vector<8x64xf32>,
    %192 = vector.extract_strided_slice %92 {offsets = [33, 0, 0], sizes = [1, 8, 64], strides = [1, 1, 1]} : vector<72x8x64xf32> to vector<1x8x64xf32>
    %193 = vector.shape_cast %192 : vector<1x8x64xf32> to vector<8x64xf32>
    %c0_81 = arith.constant 0 : index
    %c2112 = arith.constant 2112 : index
    %194 = vector.load %arg15[%c0_81, %c2112] : memref<8x4608xf32, #tpu.memory_space<vmem>>, vector<8x64xf32>
    tpu.vector_store %arg15[%c0_81, %c2112], %193 {strides = array<i32>} : memref<8x4608xf32, #tpu.memory_space<vmem>>, vector<8x64xf32>,
    %195 = vector.extract_strided_slice %92 {offsets = [34, 0, 0], sizes = [1, 8, 64], strides = [1, 1, 1]} : vector<72x8x64xf32> to vector<1x8x64xf32>
    %196 = vector.shape_cast %195 : vector<1x8x64xf32> to vector<8x64xf32>
    %c0_82 = arith.constant 0 : index
    %c2176 = arith.constant 2176 : index
    %197 = vector.load %arg15[%c0_82, %c2176] : memref<8x4608xf32, #tpu.memory_space<vmem>>, vector<8x64xf32>
    tpu.vector_store %arg15[%c0_82, %c2176], %196 {strides = array<i32>} : memref<8x4608xf32, #tpu.memory_space<vmem>>, vector<8x64xf32>,
    %198 = vector.extract_strided_slice %92 {offsets = [35, 0, 0], sizes = [1, 8, 64], strides = [1, 1, 1]} : vector<72x8x64xf32> to vector<1x8x64xf32>
    %199 = vector.shape_cast %198 : vector<1x8x64xf32> to vector<8x64xf32>
    %c0_83 = arith.constant 0 : index
    %c2240 = arith.constant 2240 : index
    %200 = vector.load %arg15[%c0_83, %c2240] : memref<8x4608xf32, #tpu.memory_space<vmem>>, vector<8x64xf32>
    tpu.vector_store %arg15[%c0_83, %c2240], %199 {strides = array<i32>} : memref<8x4608xf32, #tpu.memory_space<vmem>>, vector<8x64xf32>,
    %201 = vector.extract_strided_slice %92 {offsets = [36, 0, 0], sizes = [1, 8, 64], strides = [1, 1, 1]} : vector<72x8x64xf32> to vector<1x8x64xf32>
    %202 = vector.shape_cast %201 : vector<1x8x64xf32> to vector<8x64xf32>
    %c0_84 = arith.constant 0 : index
    %c2304 = arith.constant 2304 : index
    %203 = vector.load %arg15[%c0_84, %c2304] : memref<8x4608xf32, #tpu.memory_space<vmem>>, vector<8x64xf32>
    tpu.vector_store %arg15[%c0_84, %c2304], %202 {strides = array<i32>} : memref<8x4608xf32, #tpu.memory_space<vmem>>, vector<8x64xf32>,
    %204 = vector.extract_strided_slice %92 {offsets = [37, 0, 0], sizes = [1, 8, 64], strides = [1, 1, 1]} : vector<72x8x64xf32> to vector<1x8x64xf32>
    %205 = vector.shape_cast %204 : vector<1x8x64xf32> to vector<8x64xf32>
    %c0_85 = arith.constant 0 : index
    %c2368 = arith.constant 2368 : index
    %206 = vector.load %arg15[%c0_85, %c2368] : memref<8x4608xf32, #tpu.memory_space<vmem>>, vector<8x64xf32>
    tpu.vector_store %arg15[%c0_85, %c2368], %205 {strides = array<i32>} : memref<8x4608xf32, #tpu.memory_space<vmem>>, vector<8x64xf32>,
    %207 = vector.extract_strided_slice %92 {offsets = [38, 0, 0], sizes = [1, 8, 64], strides = [1, 1, 1]} : vector<72x8x64xf32> to vector<1x8x64xf32>
    %208 = vector.shape_cast %207 : vector<1x8x64xf32> to vector<8x64xf32>
    %c0_86 = arith.constant 0 : index
    %c2432 = arith.constant 2432 : index
    %209 = vector.load %arg15[%c0_86, %c2432] : memref<8x4608xf32, #tpu.memory_space<vmem>>, vector<8x64xf32>
    tpu.vector_store %arg15[%c0_86, %c2432], %208 {strides = array<i32>} : memref<8x4608xf32, #tpu.memory_space<vmem>>, vector<8x64xf32>,
    %210 = vector.extract_strided_slice %92 {offsets = [39, 0, 0], sizes = [1, 8, 64], strides = [1, 1, 1]} : vector<72x8x64xf32> to vector<1x8x64xf32>
    %211 = vector.shape_cast %210 : vector<1x8x64xf32> to vector<8x64xf32>
    %c0_87 = arith.constant 0 : index
    %c2496 = arith.constant 2496 : index
    %212 = vector.load %arg15[%c0_87, %c2496] : memref<8x4608xf32, #tpu.memory_space<vmem>>, vector<8x64xf32>
    tpu.vector_store %arg15[%c0_87, %c2496], %211 {strides = array<i32>} : memref<8x4608xf32, #tpu.memory_space<vmem>>, vector<8x64xf32>,
    %213 = vector.extract_strided_slice %92 {offsets = [40, 0, 0], sizes = [1, 8, 64], strides = [1, 1, 1]} : vector<72x8x64xf32> to vector<1x8x64xf32>
    %214 = vector.shape_cast %213 : vector<1x8x64xf32> to vector<8x64xf32>
    %c0_88 = arith.constant 0 : index
    %c2560 = arith.constant 2560 : index
    %215 = vector.load %arg15[%c0_88, %c2560] : memref<8x4608xf32, #tpu.memory_space<vmem>>, vector<8x64xf32>
    tpu.vector_store %arg15[%c0_88, %c2560], %214 {strides = array<i32>} : memref<8x4608xf32, #tpu.memory_space<vmem>>, vector<8x64xf32>,
    %216 = vector.extract_strided_slice %92 {offsets = [41, 0, 0], sizes = [1, 8, 64], strides = [1, 1, 1]} : vector<72x8x64xf32> to vector<1x8x64xf32>
    %217 = vector.shape_cast %216 : vector<1x8x64xf32> to vector<8x64xf32>
    %c0_89 = arith.constant 0 : index
    %c2624 = arith.constant 2624 : index
    %218 = vector.load %arg15[%c0_89, %c2624] : memref<8x4608xf32, #tpu.memory_space<vmem>>, vector<8x64xf32>
    tpu.vector_store %arg15[%c0_89, %c2624], %217 {strides = array<i32>} : memref<8x4608xf32, #tpu.memory_space<vmem>>, vector<8x64xf32>,
    %219 = vector.extract_strided_slice %92 {offsets = [42, 0, 0], sizes = [1, 8, 64], strides = [1, 1, 1]} : vector<72x8x64xf32> to vector<1x8x64xf32>
    %220 = vector.shape_cast %219 : vector<1x8x64xf32> to vector<8x64xf32>
    %c0_90 = arith.constant 0 : index
    %c2688 = arith.constant 2688 : index
    %221 = vector.load %arg15[%c0_90, %c2688] : memref<8x4608xf32, #tpu.memory_space<vmem>>, vector<8x64xf32>
    tpu.vector_store %arg15[%c0_90, %c2688], %220 {strides = array<i32>} : memref<8x4608xf32, #tpu.memory_space<vmem>>, vector<8x64xf32>,
    %222 = vector.extract_strided_slice %92 {offsets = [43, 0, 0], sizes = [1, 8, 64], strides = [1, 1, 1]} : vector<72x8x64xf32> to vector<1x8x64xf32>
    %223 = vector.shape_cast %222 : vector<1x8x64xf32> to vector<8x64xf32>
    %c0_91 = arith.constant 0 : index
    %c2752 = arith.constant 2752 : index
    %224 = vector.load %arg15[%c0_91, %c2752] : memref<8x4608xf32, #tpu.memory_space<vmem>>, vector<8x64xf32>
    tpu.vector_store %arg15[%c0_91, %c2752], %223 {strides = array<i32>} : memref<8x4608xf32, #tpu.memory_space<vmem>>, vector<8x64xf32>,
    %225 = vector.extract_strided_slice %92 {offsets = [44, 0, 0], sizes = [1, 8, 64], strides = [1, 1, 1]} : vector<72x8x64xf32> to vector<1x8x64xf32>
    %226 = vector.shape_cast %225 : vector<1x8x64xf32> to vector<8x64xf32>
    %c0_92 = arith.constant 0 : index
    %c2816 = arith.constant 2816 : index
    %227 = vector.load %arg15[%c0_92, %c2816] : memref<8x4608xf32, #tpu.memory_space<vmem>>, vector<8x64xf32>
    tpu.vector_store %arg15[%c0_92, %c2816], %226 {strides = array<i32>} : memref<8x4608xf32, #tpu.memory_space<vmem>>, vector<8x64xf32>,
    %228 = vector.extract_strided_slice %92 {offsets = [45, 0, 0], sizes = [1, 8, 64], strides = [1, 1, 1]} : vector<72x8x64xf32> to vector<1x8x64xf32>
    %229 = vector.shape_cast %228 : vector<1x8x64xf32> to vector<8x64xf32>
    %c0_93 = arith.constant 0 : index
    %c2880 = arith.constant 2880 : index
    %230 = vector.load %arg15[%c0_93, %c2880] : memref<8x4608xf32, #tpu.memory_space<vmem>>, vector<8x64xf32>
    tpu.vector_store %arg15[%c0_93, %c2880], %229 {strides = array<i32>} : memref<8x4608xf32, #tpu.memory_space<vmem>>, vector<8x64xf32>,
    %231 = vector.extract_strided_slice %92 {offsets = [46, 0, 0], sizes = [1, 8, 64], strides = [1, 1, 1]} : vector<72x8x64xf32> to vector<1x8x64xf32>
    %232 = vector.shape_cast %231 : vector<1x8x64xf32> to vector<8x64xf32>
    %c0_94 = arith.constant 0 : index
    %c2944 = arith.constant 2944 : index
    %233 = vector.load %arg15[%c0_94, %c2944] : memref<8x4608xf32, #tpu.memory_space<vmem>>, vector<8x64xf32>
    tpu.vector_store %arg15[%c0_94, %c2944], %232 {strides = array<i32>} : memref<8x4608xf32, #tpu.memory_space<vmem>>, vector<8x64xf32>,
    %234 = vector.extract_strided_slice %92 {offsets = [47, 0, 0], sizes = [1, 8, 64], strides = [1, 1, 1]} : vector<72x8x64xf32> to vector<1x8x64xf32>
    %235 = vector.shape_cast %234 : vector<1x8x64xf32> to vector<8x64xf32>
    %c0_95 = arith.constant 0 : index
    %c3008 = arith.constant 3008 : index
    %236 = vector.load %arg15[%c0_95, %c3008] : memref<8x4608xf32, #tpu.memory_space<vmem>>, vector<8x64xf32>
    tpu.vector_store %arg15[%c0_95, %c3008], %235 {strides = array<i32>} : memref<8x4608xf32, #tpu.memory_space<vmem>>, vector<8x64xf32>,
    %237 = vector.extract_strided_slice %92 {offsets = [48, 0, 0], sizes = [1, 8, 64], strides = [1, 1, 1]} : vector<72x8x64xf32> to vector<1x8x64xf32>
    %238 = vector.shape_cast %237 : vector<1x8x64xf32> to vector<8x64xf32>
    %c0_96 = arith.constant 0 : index
    %c3072 = arith.constant 3072 : index
    %239 = vector.load %arg15[%c0_96, %c3072] : memref<8x4608xf32, #tpu.memory_space<vmem>>, vector<8x64xf32>
    tpu.vector_store %arg15[%c0_96, %c3072], %238 {strides = array<i32>} : memref<8x4608xf32, #tpu.memory_space<vmem>>, vector<8x64xf32>,
    %240 = vector.extract_strided_slice %92 {offsets = [49, 0, 0], sizes = [1, 8, 64], strides = [1, 1, 1]} : vector<72x8x64xf32> to vector<1x8x64xf32>
    %241 = vector.shape_cast %240 : vector<1x8x64xf32> to vector<8x64xf32>
    %c0_97 = arith.constant 0 : index
    %c3136 = arith.constant 3136 : index
    %242 = vector.load %arg15[%c0_97, %c3136] : memref<8x4608xf32, #tpu.memory_space<vmem>>, vector<8x64xf32>
    tpu.vector_store %arg15[%c0_97, %c3136], %241 {strides = array<i32>} : memref<8x4608xf32, #tpu.memory_space<vmem>>, vector<8x64xf32>,
    %243 = vector.extract_strided_slice %92 {offsets = [50, 0, 0], sizes = [1, 8, 64], strides = [1, 1, 1]} : vector<72x8x64xf32> to vector<1x8x64xf32>
    %244 = vector.shape_cast %243 : vector<1x8x64xf32> to vector<8x64xf32>
    %c0_98 = arith.constant 0 : index
    %c3200 = arith.constant 3200 : index
    %245 = vector.load %arg15[%c0_98, %c3200] : memref<8x4608xf32, #tpu.memory_space<vmem>>, vector<8x64xf32>
    tpu.vector_store %arg15[%c0_98, %c3200], %244 {strides = array<i32>} : memref<8x4608xf32, #tpu.memory_space<vmem>>, vector<8x64xf32>,
    %246 = vector.extract_strided_slice %92 {offsets = [51, 0, 0], sizes = [1, 8, 64], strides = [1, 1, 1]} : vector<72x8x64xf32> to vector<1x8x64xf32>
    %247 = vector.shape_cast %246 : vector<1x8x64xf32> to vector<8x64xf32>
    %c0_99 = arith.constant 0 : index
    %c3264 = arith.constant 3264 : index
    %248 = vector.load %arg15[%c0_99, %c3264] : memref<8x4608xf32, #tpu.memory_space<vmem>>, vector<8x64xf32>
    tpu.vector_store %arg15[%c0_99, %c3264], %247 {strides = array<i32>} : memref<8x4608xf32, #tpu.memory_space<vmem>>, vector<8x64xf32>,
    %249 = vector.extract_strided_slice %92 {offsets = [52, 0, 0], sizes = [1, 8, 64], strides = [1, 1, 1]} : vector<72x8x64xf32> to vector<1x8x64xf32>
    %250 = vector.shape_cast %249 : vector<1x8x64xf32> to vector<8x64xf32>
    %c0_100 = arith.constant 0 : index
    %c3328 = arith.constant 3328 : index
    %251 = vector.load %arg15[%c0_100, %c3328] : memref<8x4608xf32, #tpu.memory_space<vmem>>, vector<8x64xf32>
    tpu.vector_store %arg15[%c0_100, %c3328], %250 {strides = array<i32>} : memref<8x4608xf32, #tpu.memory_space<vmem>>, vector<8x64xf32>,
    %252 = vector.extract_strided_slice %92 {offsets = [53, 0, 0], sizes = [1, 8, 64], strides = [1, 1, 1]} : vector<72x8x64xf32> to vector<1x8x64xf32>
    %253 = vector.shape_cast %252 : vector<1x8x64xf32> to vector<8x64xf32>
    %c0_101 = arith.constant 0 : index
    %c3392 = arith.constant 3392 : index
    %254 = vector.load %arg15[%c0_101, %c3392] : memref<8x4608xf32, #tpu.memory_space<vmem>>, vector<8x64xf32>
    tpu.vector_store %arg15[%c0_101, %c3392], %253 {strides = array<i32>} : memref<8x4608xf32, #tpu.memory_space<vmem>>, vector<8x64xf32>,
    %255 = vector.extract_strided_slice %92 {offsets = [54, 0, 0], sizes = [1, 8, 64], strides = [1, 1, 1]} : vector<72x8x64xf32> to vector<1x8x64xf32>
    %256 = vector.shape_cast %255 : vector<1x8x64xf32> to vector<8x64xf32>
    %c0_102 = arith.constant 0 : index
    %c3456 = arith.constant 3456 : index
    %257 = vector.load %arg15[%c0_102, %c3456] : memref<8x4608xf32, #tpu.memory_space<vmem>>, vector<8x64xf32>
    tpu.vector_store %arg15[%c0_102, %c3456], %256 {strides = array<i32>} : memref<8x4608xf32, #tpu.memory_space<vmem>>, vector<8x64xf32>,
    %258 = vector.extract_strided_slice %92 {offsets = [55, 0, 0], sizes = [1, 8, 64], strides = [1, 1, 1]} : vector<72x8x64xf32> to vector<1x8x64xf32>
    %259 = vector.shape_cast %258 : vector<1x8x64xf32> to vector<8x64xf32>
    %c0_103 = arith.constant 0 : index
    %c3520 = arith.constant 3520 : index
    %260 = vector.load %arg15[%c0_103, %c3520] : memref<8x4608xf32, #tpu.memory_space<vmem>>, vector<8x64xf32>
    tpu.vector_store %arg15[%c0_103, %c3520], %259 {strides = array<i32>} : memref<8x4608xf32, #tpu.memory_space<vmem>>, vector<8x64xf32>,
    %261 = vector.extract_strided_slice %92 {offsets = [56, 0, 0], sizes = [1, 8, 64], strides = [1, 1, 1]} : vector<72x8x64xf32> to vector<1x8x64xf32>
    %262 = vector.shape_cast %261 : vector<1x8x64xf32> to vector<8x64xf32>
    %c0_104 = arith.constant 0 : index
    %c3584 = arith.constant 3584 : index
    %263 = vector.load %arg15[%c0_104, %c3584] : memref<8x4608xf32, #tpu.memory_space<vmem>>, vector<8x64xf32>
    tpu.vector_store %arg15[%c0_104, %c3584], %262 {strides = array<i32>} : memref<8x4608xf32, #tpu.memory_space<vmem>>, vector<8x64xf32>,
    %264 = vector.extract_strided_slice %92 {offsets = [57, 0, 0], sizes = [1, 8, 64], strides = [1, 1, 1]} : vector<72x8x64xf32> to vector<1x8x64xf32>
    %265 = vector.shape_cast %264 : vector<1x8x64xf32> to vector<8x64xf32>
    %c0_105 = arith.constant 0 : index
    %c3648 = arith.constant 3648 : index
    %266 = vector.load %arg15[%c0_105, %c3648] : memref<8x4608xf32, #tpu.memory_space<vmem>>, vector<8x64xf32>
    tpu.vector_store %arg15[%c0_105, %c3648], %265 {strides = array<i32>} : memref<8x4608xf32, #tpu.memory_space<vmem>>, vector<8x64xf32>,
    %267 = vector.extract_strided_slice %92 {offsets = [58, 0, 0], sizes = [1, 8, 64], strides = [1, 1, 1]} : vector<72x8x64xf32> to vector<1x8x64xf32>
    %268 = vector.shape_cast %267 : vector<1x8x64xf32> to vector<8x64xf32>
    %c0_106 = arith.constant 0 : index
    %c3712 = arith.constant 3712 : index
    %269 = vector.load %arg15[%c0_106, %c3712] : memref<8x4608xf32, #tpu.memory_space<vmem>>, vector<8x64xf32>
    tpu.vector_store %arg15[%c0_106, %c3712], %268 {strides = array<i32>} : memref<8x4608xf32, #tpu.memory_space<vmem>>, vector<8x64xf32>,
    %270 = vector.extract_strided_slice %92 {offsets = [59, 0, 0], sizes = [1, 8, 64], strides = [1, 1, 1]} : vector<72x8x64xf32> to vector<1x8x64xf32>
    %271 = vector.shape_cast %270 : vector<1x8x64xf32> to vector<8x64xf32>
    %c0_107 = arith.constant 0 : index
    %c3776 = arith.constant 3776 : index
    %272 = vector.load %arg15[%c0_107, %c3776] : memref<8x4608xf32, #tpu.memory_space<vmem>>, vector<8x64xf32>
    tpu.vector_store %arg15[%c0_107, %c3776], %271 {strides = array<i32>} : memref<8x4608xf32, #tpu.memory_space<vmem>>, vector<8x64xf32>,
    %273 = vector.extract_strided_slice %92 {offsets = [60, 0, 0], sizes = [1, 8, 64], strides = [1, 1, 1]} : vector<72x8x64xf32> to vector<1x8x64xf32>
    %274 = vector.shape_cast %273 : vector<1x8x64xf32> to vector<8x64xf32>
    %c0_108 = arith.constant 0 : index
    %c3840 = arith.constant 3840 : index
    %275 = vector.load %arg15[%c0_108, %c3840] : memref<8x4608xf32, #tpu.memory_space<vmem>>, vector<8x64xf32>
    tpu.vector_store %arg15[%c0_108, %c3840], %274 {strides = array<i32>} : memref<8x4608xf32, #tpu.memory_space<vmem>>, vector<8x64xf32>,
    %276 = vector.extract_strided_slice %92 {offsets = [61, 0, 0], sizes = [1, 8, 64], strides = [1, 1, 1]} : vector<72x8x64xf32> to vector<1x8x64xf32>
    %277 = vector.shape_cast %276 : vector<1x8x64xf32> to vector<8x64xf32>
    %c0_109 = arith.constant 0 : index
    %c3904 = arith.constant 3904 : index
    %278 = vector.load %arg15[%c0_109, %c3904] : memref<8x4608xf32, #tpu.memory_space<vmem>>, vector<8x64xf32>
    tpu.vector_store %arg15[%c0_109, %c3904], %277 {strides = array<i32>} : memref<8x4608xf32, #tpu.memory_space<vmem>>, vector<8x64xf32>,
    %279 = vector.extract_strided_slice %92 {offsets = [62, 0, 0], sizes = [1, 8, 64], strides = [1, 1, 1]} : vector<72x8x64xf32> to vector<1x8x64xf32>
    %280 = vector.shape_cast %279 : vector<1x8x64xf32> to vector<8x64xf32>
    %c0_110 = arith.constant 0 : index
    %c3968 = arith.constant 3968 : index
    %281 = vector.load %arg15[%c0_110, %c3968] : memref<8x4608xf32, #tpu.memory_space<vmem>>, vector<8x64xf32>
    tpu.vector_store %arg15[%c0_110, %c3968], %280 {strides = array<i32>} : memref<8x4608xf32, #tpu.memory_space<vmem>>, vector<8x64xf32>,
    %282 = vector.extract_strided_slice %92 {offsets = [63, 0, 0], sizes = [1, 8, 64], strides = [1, 1, 1]} : vector<72x8x64xf32> to vector<1x8x64xf32>
    %283 = vector.shape_cast %282 : vector<1x8x64xf32> to vector<8x64xf32>
    %c0_111 = arith.constant 0 : index
    %c4032 = arith.constant 4032 : index
    %284 = vector.load %arg15[%c0_111, %c4032] : memref<8x4608xf32, #tpu.memory_space<vmem>>, vector<8x64xf32>
    tpu.vector_store %arg15[%c0_111, %c4032], %283 {strides = array<i32>} : memref<8x4608xf32, #tpu.memory_space<vmem>>, vector<8x64xf32>,
    %285 = vector.extract_strided_slice %92 {offsets = [64, 0, 0], sizes = [1, 8, 64], strides = [1, 1, 1]} : vector<72x8x64xf32> to vector<1x8x64xf32>
    %286 = vector.shape_cast %285 : vector<1x8x64xf32> to vector<8x64xf32>
    %c0_112 = arith.constant 0 : index
    %c4096 = arith.constant 4096 : index
    %287 = vector.load %arg15[%c0_112, %c4096] : memref<8x4608xf32, #tpu.memory_space<vmem>>, vector<8x64xf32>
    tpu.vector_store %arg15[%c0_112, %c4096], %286 {strides = array<i32>} : memref<8x4608xf32, #tpu.memory_space<vmem>>, vector<8x64xf32>,
    %288 = vector.extract_strided_slice %92 {offsets = [65, 0, 0], sizes = [1, 8, 64], strides = [1, 1, 1]} : vector<72x8x64xf32> to vector<1x8x64xf32>
    %289 = vector.shape_cast %288 : vector<1x8x64xf32> to vector<8x64xf32>
    %c0_113 = arith.constant 0 : index
    %c4160 = arith.constant 4160 : index
    %290 = vector.load %arg15[%c0_113, %c4160] : memref<8x4608xf32, #tpu.memory_space<vmem>>, vector<8x64xf32>
    tpu.vector_store %arg15[%c0_113, %c4160], %289 {strides = array<i32>} : memref<8x4608xf32, #tpu.memory_space<vmem>>, vector<8x64xf32>,
    %291 = vector.extract_strided_slice %92 {offsets = [66, 0, 0], sizes = [1, 8, 64], strides = [1, 1, 1]} : vector<72x8x64xf32> to vector<1x8x64xf32>
    %292 = vector.shape_cast %291 : vector<1x8x64xf32> to vector<8x64xf32>
    %c0_114 = arith.constant 0 : index
    %c4224 = arith.constant 4224 : index
    %293 = vector.load %arg15[%c0_114, %c4224] : memref<8x4608xf32, #tpu.memory_space<vmem>>, vector<8x64xf32>
    tpu.vector_store %arg15[%c0_114, %c4224], %292 {strides = array<i32>} : memref<8x4608xf32, #tpu.memory_space<vmem>>, vector<8x64xf32>,
    %294 = vector.extract_strided_slice %92 {offsets = [67, 0, 0], sizes = [1, 8, 64], strides = [1, 1, 1]} : vector<72x8x64xf32> to vector<1x8x64xf32>
    %295 = vector.shape_cast %294 : vector<1x8x64xf32> to vector<8x64xf32>
    %c0_115 = arith.constant 0 : index
    %c4288 = arith.constant 4288 : index
    %296 = vector.load %arg15[%c0_115, %c4288] : memref<8x4608xf32, #tpu.memory_space<vmem>>, vector<8x64xf32>
    tpu.vector_store %arg15[%c0_115, %c4288], %295 {strides = array<i32>} : memref<8x4608xf32, #tpu.memory_space<vmem>>, vector<8x64xf32>,
    %297 = vector.extract_strided_slice %92 {offsets = [68, 0, 0], sizes = [1, 8, 64], strides = [1, 1, 1]} : vector<72x8x64xf32> to vector<1x8x64xf32>
    %298 = vector.shape_cast %297 : vector<1x8x64xf32> to vector<8x64xf32>
    %c0_116 = arith.constant 0 : index
    %c4352 = arith.constant 4352 : index
    %299 = vector.load %arg15[%c0_116, %c4352] : memref<8x4608xf32, #tpu.memory_space<vmem>>, vector<8x64xf32>
    tpu.vector_store %arg15[%c0_116, %c4352], %298 {strides = array<i32>} : memref<8x4608xf32, #tpu.memory_space<vmem>>, vector<8x64xf32>,
    %300 = vector.extract_strided_slice %92 {offsets = [69, 0, 0], sizes = [1, 8, 64], strides = [1, 1, 1]} : vector<72x8x64xf32> to vector<1x8x64xf32>
    %301 = vector.shape_cast %300 : vector<1x8x64xf32> to vector<8x64xf32>
    %c0_117 = arith.constant 0 : index
    %c4416 = arith.constant 4416 : index
    %302 = vector.load %arg15[%c0_117, %c4416] : memref<8x4608xf32, #tpu.memory_space<vmem>>, vector<8x64xf32>
    tpu.vector_store %arg15[%c0_117, %c4416], %301 {strides = array<i32>} : memref<8x4608xf32, #tpu.memory_space<vmem>>, vector<8x64xf32>,
    %303 = vector.extract_strided_slice %92 {offsets = [70, 0, 0], sizes = [1, 8, 64], strides = [1, 1, 1]} : vector<72x8x64xf32> to vector<1x8x64xf32>
    %304 = vector.shape_cast %303 : vector<1x8x64xf32> to vector<8x64xf32>
    %c0_118 = arith.constant 0 : index
    %c4480 = arith.constant 4480 : index
    %305 = vector.load %arg15[%c0_118, %c4480] : memref<8x4608xf32, #tpu.memory_space<vmem>>, vector<8x64xf32>
    tpu.vector_store %arg15[%c0_118, %c4480], %304 {strides = array<i32>} : memref<8x4608xf32, #tpu.memory_space<vmem>>, vector<8x64xf32>,
    %306 = vector.extract_strided_slice %92 {offsets = [71, 0, 0], sizes = [1, 8, 64], strides = [1, 1, 1]} : vector<72x8x64xf32> to vector<1x8x64xf32>
    %307 = vector.shape_cast %306 : vector<1x8x64xf32> to vector<8x64xf32>
    %c0_119 = arith.constant 0 : index
    %c4544 = arith.constant 4544 : index
    %308 = vector.load %arg15[%c0_119, %c4544] : memref<8x4608xf32, #tpu.memory_space<vmem>>, vector<8x64xf32>
    tpu.vector_store %arg15[%c0_119, %c4544], %307 {strides = array<i32>} : memref<8x4608xf32, #tpu.memory_space<vmem>>, vector<8x64xf32>,
    %c0_120 = arith.constant 0 : index
    %c0_121 = arith.constant 0 : index
    %309 = vector.load %arg15[%c0_120, %c0_121] : memref<8x4608xf32, #tpu.memory_space<vmem>>, vector<8x4608xf32>
    %c0_122 = arith.constant 0 : index
    %c0_123 = arith.constant 0 : index
    %310 = vector.load %arg8[%c0_122, %c0_123] : memref<4608x128xf32, #tpu.memory_space<vmem>>, vector<4608x128xf32>
    %cst_124 = arith.constant dense<0.000000e+00> : vector<8x128xf32>
    %311 = tpu.matmul %309, %310, %cst_124 {dimension_numbers = #tpu.dot_dimension_numbers<[1], [0], [0], [1], [0, 0, 1, 1], [], []>} : vector<8x4608xf32>, vector<4608x128xf32>, vector<8x128xf32> -> vector<8x128xf32>
    %c0_125 = arith.constant 0 : index
    %c0_126 = arith.constant 0 : index
    %312 = vector.load %arg9[%c0_125, %c0_126] : memref<1x128xf32, #tpu.memory_space<vmem>>, vector<1x128xf32>
    %313 = vector.broadcast %312 : vector<1x128xf32> to vector<8x128xf32>
    %314 = arith.addf %311, %313 : vector<8x128xf32>
    %cst_127 = arith.constant 0.000000e+00 : f32
    %315 = vector.broadcast %cst_127 : f32 to vector<8x128xf32>
    %316 = arith.maximumf %314, %315 : vector<8x128xf32>
    %c0_128 = arith.constant 0 : index
    %c0_129 = arith.constant 0 : index
    %317 = vector.load %arg10[%c0_128, %c0_129] : memref<128x128xf32, #tpu.memory_space<vmem>>, vector<128x128xf32>
    %cst_130 = arith.constant dense<0.000000e+00> : vector<8x128xf32>
    %318 = tpu.matmul %316, %317, %cst_130 {dimension_numbers = #tpu.dot_dimension_numbers<[1], [0], [0], [1], [0, 0, 1, 1], [], []>} : vector<8x128xf32>, vector<128x128xf32>, vector<8x128xf32> -> vector<8x128xf32>
    %c0_131 = arith.constant 0 : index
    %c0_132 = arith.constant 0 : index
    %319 = vector.load %arg11[%c0_131, %c0_132] : memref<1x128xf32, #tpu.memory_space<vmem>>, vector<1x128xf32>
    %320 = vector.broadcast %319 : vector<1x128xf32> to vector<8x128xf32>
    %321 = arith.addf %318, %320 : vector<8x128xf32>
    %cst_133 = arith.constant 0.000000e+00 : f32
    %322 = vector.broadcast %cst_133 : f32 to vector<8x128xf32>
    %323 = arith.maximumf %321, %322 : vector<8x128xf32>
    %c0_134 = arith.constant 0 : index
    %c0_135 = arith.constant 0 : index
    %324 = vector.load %arg12[%c0_134, %c0_135] : memref<128x128xf32, #tpu.memory_space<vmem>>, vector<128x128xf32>
    %cst_136 = arith.constant dense<0.000000e+00> : vector<8x128xf32>
    %325 = tpu.matmul %323, %324, %cst_136 {dimension_numbers = #tpu.dot_dimension_numbers<[1], [0], [0], [1], [0, 0, 1, 1], [], []>} : vector<8x128xf32>, vector<128x128xf32>, vector<8x128xf32> -> vector<8x128xf32>
    %c0_137 = arith.constant 0 : index
    %c0_138 = arith.constant 0 : index
    %326 = vector.load %arg13[%c0_137, %c0_138] : memref<1x128xf32, #tpu.memory_space<vmem>>, vector<1x128xf32>
    %327 = vector.broadcast %326 : vector<1x128xf32> to vector<8x128xf32>
    %328 = arith.addf %325, %327 : vector<8x128xf32>
    %c0_139 = arith.constant 0 : index
    %c0_140 = arith.constant 0 : index
    %329 = vector.load %arg14[%c0_139, %c0_140] : memref<8x128xf32, #tpu.memory_space<vmem>>, vector<8x128xf32>
    tpu.vector_store %arg14[%c0_139, %c0_140], %328 {strides = array<i32>} : memref<8x128xf32, #tpu.memory_space<vmem>>, vector<8x128xf32>,
    return
  }
  func.func @transform_0(%arg0: i32) -> (i32, i32, i32) {
    %c0_i32 = arith.constant 0 : i32
    %c0_i32_0 = arith.constant 0 : i32
    %c0_i32_1 = arith.constant 0 : i32
    return %c0_i32, %arg0, %c0_i32_0 : i32, i32, i32
  }
  func.func @transform_1(%arg0: i32) -> (i32, i32) {
    %c0_i32 = arith.constant 0 : i32
    %c0_i32_0 = arith.constant 0 : i32
    %c0_i32_1 = arith.constant 0 : i32
    return %c0_i32, %c0_i32_0 : i32, i32
  }
  func.func @transform_2(%arg0: i32) -> (i32, i32) {
    %c0_i32 = arith.constant 0 : i32
    %c0_i32_0 = arith.constant 0 : i32
    %c0_i32_1 = arith.constant 0 : i32
    return %c0_i32, %c0_i32_0 : i32, i32
  }
  func.func @transform_3(%arg0: i32) -> (i32, i32, i32) {
    %c0_i32 = arith.constant 0 : i32
    %c0_i32_0 = arith.constant 0 : i32
    %c0_i32_1 = arith.constant 0 : i32
    %c0_i32_2 = arith.constant 0 : i32
    return %c0_i32, %c0_i32_0, %c0_i32_1 : i32, i32, i32
  }
  func.func @transform_4(%arg0: i32) -> (i32, i32) {
    %c0_i32 = arith.constant 0 : i32
    %c0_i32_0 = arith.constant 0 : i32
    %c0_i32_1 = arith.constant 0 : i32
    return %c0_i32, %c0_i32_0 : i32, i32
  }
  func.func @transform_5(%arg0: i32) -> (i32, i32, i32) {
    %c0_i32 = arith.constant 0 : i32
    %c0_i32_0 = arith.constant 0 : i32
    %c0_i32_1 = arith.constant 0 : i32
    %c0_i32_2 = arith.constant 0 : i32
    return %c0_i32, %c0_i32_0, %c0_i32_1 : i32, i32, i32
  }
  func.func @transform_6(%arg0: i32) -> (i32, i32) {
    %c0_i32 = arith.constant 0 : i32
    %c0_i32_0 = arith.constant 0 : i32
    %c0_i32_1 = arith.constant 0 : i32
    return %c0_i32, %c0_i32_0 : i32, i32
  }
  func.func @transform_7(%arg0: i32) -> (i32, i32) {
    %c0_i32 = arith.constant 0 : i32
    %c0_i32_0 = arith.constant 0 : i32
    %c0_i32_1 = arith.constant 0 : i32
    return %c0_i32, %c0_i32_0 : i32, i32
  }
  func.func @transform_8(%arg0: i32) -> (i32, i32) {
    %c0_i32 = arith.constant 0 : i32
    %c0_i32_0 = arith.constant 0 : i32
    %c0_i32_1 = arith.constant 0 : i32
    return %c0_i32, %c0_i32_0 : i32, i32
  }
  func.func @transform_9(%arg0: i32) -> (i32, i32) {
    %c0_i32 = arith.constant 0 : i32
    %c0_i32_0 = arith.constant 0 : i32
    %c0_i32_1 = arith.constant 0 : i32
    return %c0_i32, %c0_i32_0 : i32, i32
  }
  func.func @transform_10(%arg0: i32) -> (i32, i32) {
    %c0_i32 = arith.constant 0 : i32
    %c0_i32_0 = arith.constant 0 : i32
    %c0_i32_1 = arith.constant 0 : i32
    return %c0_i32, %c0_i32_0 : i32, i32
  }
  func.func @transform_11(%arg0: i32) -> (i32, i32) {
    %c0_i32 = arith.constant 0 : i32
    %c0_i32_0 = arith.constant 0 : i32
    %c0_i32_1 = arith.constant 0 : i32
    return %c0_i32, %c0_i32_0 : i32, i32
  }
  func.func @transform_12(%arg0: i32) -> (i32, i32) {
    %c0_i32 = arith.constant 0 : i32
    %c0_i32_0 = arith.constant 0 : i32
    %c0_i32_1 = arith.constant 0 : i32
    return %c0_i32, %c0_i32_0 : i32, i32
  }
  func.func @transform_13(%arg0: i32) -> (i32, i32) {
    %c0_i32 = arith.constant 0 : i32
    %c0_i32_0 = arith.constant 0 : i32
    return %arg0, %c0_i32 : i32, i32
  }
}

</mosaic_0001>

<llo_original>
// kernel: dqn_forward_pallas.1
$region0: #{dqn_forward_pallas.1}
  #allocation0 [shape = 'u32[]', space=smem, size = 0x4, offset = 0x4, fixed_abs, tag = 'smem constant byte address 0x4 - core index']
  #allocation1 [shape = 'u32[72,128]{1,0:T(1,128)}', space=vmem, size = 0x9000, scoped, tag = 'internal scratch']
  #allocation2 [shape = 'f32[8,4608]{1,0:T(8,128)}', space=vmem, size = 0x24000, scoped, tag = 'scratch operand']
  %s0 = inlined_call_operand.vmem [shape: f32[72,8,9], index: 0, kind: input, shape index: {}]
  %s1 = inlined_call_operand.hbm [shape: f32[9,16], index: 1, kind: input, shape index: {}]
  %s2 = inlined_call_operand.hbm [shape: f32[1,16], index: 2, kind: input, shape index: {}]
  %s3 = inlined_call_operand.vmem [shape: f32[3,48,32], index: 3, kind: input, shape index: {}]
  %s4 = inlined_call_operand.hbm [shape: f32[1,32], index: 4, kind: input, shape index: {}]
  %s5 = inlined_call_operand.vmem [shape: f32[3,96,64], index: 5, kind: input, shape index: {}]
  %s6 = inlined_call_operand.hbm [shape: f32[1,64], index: 6, kind: input, shape index: {}]
  %s7 = inlined_call_operand.hbm [shape: f32[4608,128], index: 7, kind: input, shape index: {}]
  %s8 = inlined_call_operand.hbm [shape: f32[1,128], index: 8, kind: input, shape index: {}]
  %s9 = inlined_call_operand.hbm [shape: f32[128,128], index: 9, kind: input, shape index: {}]
  %s10 = inlined_call_operand.hbm [shape: f32[1,128], index: 10, kind: input, shape index: {}]
  %s11 = inlined_call_operand.hbm [shape: f32[128,128], index: 11, kind: input, shape index: {}]
  %s12 = inlined_call_operand.hbm [shape: f32[1,128], index: 12, kind: input, shape index: {}]
  %s13 = inlined_call_operand.vmem [shape: f32[8,128], index: 13, kind: output, shape index: {}]
  %s14 = sld [smem:[#allocation0]]
  $region102: #{dqn_forward_pallas.1} parent=0
    _
  %s16 = ssub.s32 1, %s14
  %s17 = scalar_select 0, %s16, %s14
  $region1: #{dqn_forward_pallas.1} parent=0
    #allocation3 [shape = 'u8[8192]{0}', space=vmem, size = 0x2000, scoped, tag = 'input window, operand 1, single buffered']
    #allocation4 [shape = 's32[1]{0}', space=sflag, size = 0x4, scoped, tag = 'scoped memory for dqn_forward_pallas.1']
    #allocation5 [shape = 'u8[512]{0}', space=vmem, size = 0x400, scoped, tag = 'input window, operand 2, single buffered']
    #allocation6 [shape = 's32[1]{0}', space=sflag, size = 0x4, scoped, tag = 'scoped memory for dqn_forward_pallas.1']
    #allocation7 [shape = 'u8[512]{0}', space=vmem, size = 0x400, scoped, tag = 'input window, operand 4, single buffered']
    #allocation8 [shape = 'u8[512]{0}', space=vmem, size = 0x400, scoped, tag = 'input window, operand 6, single buffered']
    #allocation9 [shape = 's32[1]{0}', space=sflag, size = 0x4, scoped, tag = 'scoped memory for dqn_forward_pallas.1']
    #allocation10 [shape = 'u8[2359296]{0}', space=vmem, size = 0x240000, scoped, tag = 'input window, operand 7, single buffered']
    #allocation11 [shape = 'u8[512]{0}', space=vmem, size = 0x400, scoped, tag = 'input window, operand 8, single buffered']
    #allocation12 [shape = 's32[1]{0}', space=sflag, size = 0x4, scoped, tag = 'scoped memory for dqn_forward_pallas.1']
    #allocation13 [shape = 'u8[65536]{0}', space=vmem, size = 0x10000, scoped, tag = 'input window, operand 9, single buffered']
    #allocation14 [shape = 'u8[512]{0}', space=vmem, size = 0x400, scoped, tag = 'input window, operand 10, single buffered']
    #allocation15 [shape = 's32[1]{0}', space=sflag, size = 0x4, scoped, tag = 'scoped memory for dqn_forward_pallas.1']
    #allocation16 [shape = 'u8[65536]{0}', space=vmem, size = 0x10000, scoped, tag = 'input window, operand 11, single buffered']
    #allocation17 [shape = 'u8[512]{0}', space=vmem, size = 0x400, scoped, tag = 'input window, operand 12, single buffered']
    #allocation18 [shape = 's32[1]{0}', space=sflag, size = 0x4, scoped, tag = 'scoped memory for dqn_forward_pallas.1']
    %18 = vsyncpa [#allocation4], 0
    %19 = vsyncpa [#allocation6], 0
    %20 = vsyncpa [#allocation9], 0
    %21 = vsyncpa [#allocation12], 0
    %22 = vsyncpa [#allocation15], 0
    %23 = vsyncpa [#allocation18], 0
    // Predicated region
    $region2: #{dqn_forward_pallas.1} parent=1 // pred_check
      _
    $region3: #{dqn_forward_pallas.1} parent=1 // pred_check_branch
      %25 = sbr.rel (0) target = $region5
    $region4: #{dqn_forward_pallas.1} parent=1 // pred_region
      _
    $region5: #{dqn_forward_pallas.1} parent=1 // pred_fallthru
      _
    // Predicated region
    $region6: #{dqn_forward_pallas.1} parent=1 // pred_check
      _
    $region7: #{dqn_forward_pallas.1} parent=1 // pred_check_branch
      %27 = sbr.rel (0) target = $region9
    $region8: #{dqn_forward_pallas.1} parent=1 // pred_region
      %29 = vsyncadd [#allocation4], 0
      %s30 = sshll.u32 %s1, 4
      %s31 = int_to_ptr.hbm [resolvable:$true] %s30
      %s32 = sshll.u32 [#allocation3], 4
      %s33 = int_to_ptr.vmem [resolvable:$true] %s32
      %38 = dma.hbm_to_vmem [thread:$0]  %s31, 256, %s33, [#allocation4], 128, 128, 8
    $region9: #{dqn_forward_pallas.1} parent=1 // pred_fallthru
      _
    // Predicated region
    $region10: #{dqn_forward_pallas.1} parent=1 // pred_check
      _
    $region11: #{dqn_forward_pallas.1} parent=1 // pred_check_branch
      %40 = sbr.rel (0) target = $region13
    $region12: #{dqn_forward_pallas.1} parent=1 // pred_region
      %42 = vsyncadd [#allocation6], 0
      %s44 = sshll.u32 %s2, 4
      %s45 = int_to_ptr.hbm [resolvable:$true] %s44
      %s46 = sshll.u32 [#allocation5], 4
      %s47 = int_to_ptr.vmem [resolvable:$true] %s46
      %49 = dma.hbm_to_vmem [thread:$0]  %s45, 16, %s47, [#allocation6]
    $region13: #{dqn_forward_pallas.1} parent=1 // pred_fallthru
      _
    // Predicated region
    $region14: #{dqn_forward_pallas.1} parent=1 // pred_check
      _
    $region15: #{dqn_forward_pallas.1} parent=1 // pred_check_branch
      %51 = sbr.rel (0) target = $region17
    $region16: #{dqn_forward_pallas.1} parent=1 // pred_region
      _
    $region17: #{dqn_forward_pallas.1} parent=1 // pred_fallthru
      _
    // Predicated region
    $region18: #{dqn_forward_pallas.1} parent=1 // pred_check
      _
    $region19: #{dqn_forward_pallas.1} parent=1 // pred_check_branch
      %53 = sbr.rel (0) target = $region21
    $region20: #{dqn_forward_pallas.1} parent=1 // pred_region
      %55 = vsyncadd [#allocation6], 0
      %s57 = sshll.u32 %s4, 4
      %s58 = int_to_ptr.hbm [resolvable:$true] %s57
      %s59 = sshll.u32 [#allocation7], 4
      %s60 = int_to_ptr.vmem [resolvable:$true] %s59
      %62 = dma.hbm_to_vmem [thread:$0]  %s58, 16, %s60, [#allocation6]
    $region21: #{dqn_forward_pallas.1} parent=1 // pred_fallthru
      _
    // Predicated region
    $region22: #{dqn_forward_pallas.1} parent=1 // pred_check
      _
    $region23: #{dqn_forward_pallas.1} parent=1 // pred_check_branch
      %64 = sbr.rel (0) target = $region25
    $region24: #{dqn_forward_pallas.1} parent=1 // pred_region
      _
    $region25: #{dqn_forward_pallas.1} parent=1 // pred_fallthru
      _
    // Predicated region
    $region26: #{dqn_forward_pallas.1} parent=1 // pred_check
      _
    $region27: #{dqn_forward_pallas.1} parent=1 // pred_check_branch
      %66 = sbr.rel (0) target = $region29
    $region28: #{dqn_forward_pallas.1} parent=1 // pred_region
      %68 = vsyncadd [#allocation9], 0
      %s70 = sshll.u32 %s6, 4
      %s71 = int_to_ptr.hbm [resolvable:$true] %s70
      %s72 = sshll.u32 [#allocation8], 4
      %s73 = int_to_ptr.vmem [resolvable:$true] %s72
      %75 = dma.hbm_to_vmem [thread:$0]  %s71, 16, %s73, [#allocation9]
    $region29: #{dqn_forward_pallas.1} parent=1 // pred_fallthru
      _
    // Predicated region
    $region30: #{dqn_forward_pallas.1} parent=1 // pred_check
      _
    $region31: #{dqn_forward_pallas.1} parent=1 // pred_check_branch
      %77 = sbr.rel (0) target = $region33
    $region32: #{dqn_forward_pallas.1} parent=1 // pred_region
      %79 = vsyncadd [#allocation9], 0
      %s80 = sshll.u32 %s7, 4
      %s81 = int_to_ptr.hbm [resolvable:$true] %s80
      %s82 = sshll.u32 [#allocation10], 4
      %s83 = int_to_ptr.vmem [resolvable:$true] %s82
      %88 = dma.hbm_to_vmem [thread:$0]  %s81, 73728, %s83, [#allocation9], 128, 128, 8
    $region33: #{dqn_forward_pallas.1} parent=1 // pred_fallthru
      _
    // Predicated region
    $region34: #{dqn_forward_pallas.1} parent=1 // pred_check
      _
    $region35: #{dqn_forward_pallas.1} parent=1 // pred_check_branch
      %90 = sbr.rel (0) target = $region37
    $region36: #{dqn_forward_pallas.1} parent=1 // pred_region
      %92 = vsyncadd [#allocation12], 0
      %s94 = sshll.u32 %s8, 4
      %s95 = int_to_ptr.hbm [resolvable:$true] %s94
      %s96 = sshll.u32 [#allocation11], 4
      %s97 = int_to_ptr.vmem [resolvable:$true] %s96
      %99 = dma.hbm_to_vmem [thread:$0]  %s95, 16, %s97, [#allocation12]
    $region37: #{dqn_forward_pallas.1} parent=1 // pred_fallthru
      _
    // Predicated region
    $region38: #{dqn_forward_pallas.1} parent=1 // pred_check
      _
    $region39: #{dqn_forward_pallas.1} parent=1 // pred_check_branch
      %101 = sbr.rel (0) target = $region41
    $region40: #{dqn_forward_pallas.1} parent=1 // pred_region
      %103 = vsyncadd [#allocation12], 0
      %s104 = sshll.u32 %s9, 4
      %s105 = int_to_ptr.hbm [resolvable:$true] %s104
      %s106 = sshll.u32 [#allocation13], 4
      %s107 = int_to_ptr.vmem [resolvable:$true] %s106
      %112 = dma.hbm_to_vmem [thread:$0]  %s105, 2048, %s107, [#allocation12], 128, 128, 8
    $region41: #{dqn_forward_pallas.1} parent=1 // pred_fallthru
      _
    // Predicated region
    $region42: #{dqn_forward_pallas.1} parent=1 // pred_check
      _
    $region43: #{dqn_forward_pallas.1} parent=1 // pred_check_branch
      %114 = sbr.rel (0) target = $region45
    $region44: #{dqn_forward_pallas.1} parent=1 // pred_region
      %116 = vsyncadd [#allocation15], 0
      %s118 = sshll.u32 %s10, 4
      %s119 = int_to_ptr.hbm [resolvable:$true] %s118
      %s120 = sshll.u32 [#allocation14], 4
      %s121 = int_to_ptr.vmem [resolvable:$true] %s120
      %123 = dma.hbm_to_vmem [thread:$0]  %s119, 16, %s121, [#allocation15]
    $region45: #{dqn_forward_pallas.1} parent=1 // pred_fallthru
      _
    // Predicated region
    $region46: #{dqn_forward_pallas.1} parent=1 // pred_check
      _
    $region47: #{dqn_forward_pallas.1} parent=1 // pred_check_branch
      %125 = sbr.rel (0) target = $region49
    $region48: #{dqn_forward_pallas.1} parent=1 // pred_region
      %127 = vsyncadd [#allocation15], 0
      %s128 = sshll.u32 %s11, 4
      %s129 = int_to_ptr.hbm [resolvable:$true] %s128
      %s130 = sshll.u32 [#allocation16], 4
      %s131 = int_to_ptr.vmem [resolvable:$true] %s130
      %136 = dma.hbm_to_vmem [thread:$0]  %s129, 2048, %s131, [#allocation15], 128, 128, 8
    $region49: #{dqn_forward_pallas.1} parent=1 // pred_fallthru
      _
    // Predicated region
    $region50: #{dqn_forward_pallas.1} parent=1 // pred_check
      _
    $region51: #{dqn_forward_pallas.1} parent=1 // pred_check_branch
      %138 = sbr.rel (0) target = $region53
    $region52: #{dqn_forward_pallas.1} parent=1 // pred_region
      %140 = vsyncadd [#allocation18], 0
      %s142 = sshll.u32 %s12, 4
      %s143 = int_to_ptr.hbm [resolvable:$true] %s142
      %s144 = sshll.u32 [#allocation17], 4
      %s145 = int_to_ptr.vmem [resolvable:$true] %s144
      %147 = dma.hbm_to_vmem [thread:$0]  %s143, 16, %s145, [#allocation18]
    $region53: #{dqn_forward_pallas.1} parent=1 // pred_fallthru
      _
    // Predicated region
    $region54: #{dqn_forward_pallas.1} parent=1 // pred_check
      _
    $region55: #{dqn_forward_pallas.1} parent=1 // pred_check_branch
      %149 = sbr.rel (0) target = $region57
    $region56: #{dqn_forward_pallas.1} parent=1 // pred_region
      %151 = dma.done [#allocation4], 256
    $region57: #{dqn_forward_pallas.1} parent=1 // pred_fallthru
      _
    // Predicated region
    $region58: #{dqn_forward_pallas.1} parent=1 // pred_check
      _
    $region59: #{dqn_forward_pallas.1} parent=1 // pred_check_branch
      %153 = sbr.rel (0) target = $region61
    $region60: #{dqn_forward_pallas.1} parent=1 // pred_region
      %155 = dma.done [#allocation6], 16
    $region61: #{dqn_forward_pallas.1} parent=1 // pred_fallthru
      _
    // Predicated region
    $region62: #{dqn_forward_pallas.1} parent=1 // pred_check
      _
    $region63: #{dqn_forward_pallas.1} parent=1 // pred_check_branch
      %157 = sbr.rel (0) target = $region65
    $region64: #{dqn_forward_pallas.1} parent=1 // pred_region
      %159 = dma.done [#allocation6], 16
    $region65: #{dqn_forward_pallas.1} parent=1 // pred_fallthru
      _
    // Predicated region
    $region66: #{dqn_forward_pallas.1} parent=1 // pred_check
      _
    $region67: #{dqn_forward_pallas.1} parent=1 // pred_check_branch
      %161 = sbr.rel (0) target = $region69
    $region68: #{dqn_forward_pallas.1} parent=1 // pred_region
      %163 = dma.done [#allocation9], 16
    $region69: #{dqn_forward_pallas.1} parent=1 // pred_fallthru
      _
    // Predicated region
    $region70: #{dqn_forward_pallas.1} parent=1 // pred_check
      _
    $region71: #{dqn_forward_pallas.1} parent=1 // pred_check_branch
      %165 = sbr.rel (0) target = $region73
    $region72: #{dqn_forward_pallas.1} parent=1 // pred_region
      %167 = dma.done [#allocation9], 73728
    $region73: #{dqn_forward_pallas.1} parent=1 // pred_fallthru
      _
    // Predicated region
    $region74: #{dqn_forward_pallas.1} parent=1 // pred_check
      _
    $region75: #{dqn_forward_pallas.1} parent=1 // pred_check_branch
      %169 = sbr.rel (0) target = $region77
    $region76: #{dqn_forward_pallas.1} parent=1 // pred_region
      %171 = dma.done [#allocation12], 16
    $region77: #{dqn_forward_pallas.1} parent=1 // pred_fallthru
      _
    // Predicated region
    $region78: #{dqn_forward_pallas.1} parent=1 // pred_check
      _
    $region79: #{dqn_forward_pallas.1} parent=1 // pred_check_branch
      %173 = sbr.rel (0) target = $region81
    $region80: #{dqn_forward_pallas.1} parent=1 // pred_region
      %175 = dma.done [#allocation12], 2048
    $region81: #{dqn_forward_pallas.1} parent=1 // pred_fallthru
      _
    // Predicated region
    $region82: #{dqn_forward_pallas.1} parent=1 // pred_check
      _
    $region83: #{dqn_forward_pallas.1} parent=1 // pred_check_branch
      %177 = sbr.rel (0) target = $region85
    $region84: #{dqn_forward_pallas.1} parent=1 // pred_region
      %179 = dma.done [#allocation15], 16
    $region85: #{dqn_forward_pallas.1} parent=1 // pred_fallthru
      _
    // Predicated region
    $region86: #{dqn_forward_pallas.1} parent=1 // pred_check
      _
    $region87: #{dqn_forward_pallas.1} parent=1 // pred_check_branch
      %181 = sbr.rel (0) target = $region89
    $region88: #{dqn_forward_pallas.1} parent=1 // pred_region
      %183 = dma.done [#allocation15], 2048
    $region89: #{dqn_forward_pallas.1} parent=1 // pred_fallthru
      _
    // Predicated region
    $region90: #{dqn_forward_pallas.1} parent=1 // pred_check
      _
    $region91: #{dqn_forward_pallas.1} parent=1 // pred_check_branch
      %185 = sbr.rel (0) target = $region93
    $region92: #{dqn_forward_pallas.1} parent=1 // pred_region
      %187 = dma.done [#allocation18], 16
    $region93: #{dqn_forward_pallas.1} parent=1 // pred_fallthru
      _
    %v188 = vcvt.s32.f32 0
    %v189 = vcvt.s32.f32 1
    %v190 = vld [vmem:[%s0] sm:$0xff]
    %v191 = vld [vmem:[%s0 + $0x8] sm:$0xff]
    %v192 = vld [vmem:[%s0 + $0x10] sm:$0xff]
    %v193 = vld [vmem:[%s0 + $0x18] sm:$0xff]
    %v194 = vld [vmem:[%s0 + $0x20] sm:$0xff]
    %v195 = vld [vmem:[%s0 + $0x28] sm:$0xff]
    %v196 = vld [vmem:[%s0 + $0x30] sm:$0xff]
    %v197 = vld [vmem:[%s0 + $0x38] sm:$0xff]
    %v198 = vld [vmem:[%s0 + $0x40] sm:$0xff]
    %v199 = vld [vmem:[%s0 + $0x48] sm:$0xff]
    %v200 = vld [vmem:[%s0 + $0x50] sm:$0xff]
    %v201 = vld [vmem:[%s0 + $0x58] sm:$0xff]
    %v202 = vld [vmem:[%s0 + $0x60] sm:$0xff]
    %v203 = vld [vmem:[%s0 + $0x68] sm:$0xff]
    %v204 = vld [vmem:[%s0 + $0x70] sm:$0xff]
    %v205 = vld [vmem:[%s0 + $0x78] sm:$0xff]
    %v206 = vld [vmem:[%s0 + $0x80] sm:$0xff]
    %v207 = vld [vmem:[%s0 + $0x88] sm:$0xff]
    %v208 = vld [vmem:[%s0 + $0x90] sm:$0xff]
    %v209 = vld [vmem:[%s0 + $0x98] sm:$0xff]
    %v210 = vld [vmem:[%s0 + $0xa0] sm:$0xff]
    %v211 = vld [vmem:[%s0 + $0xa8] sm:$0xff]
    %v212 = vld [vmem:[%s0 + $0xb0] sm:$0xff]
    %v213 = vld [vmem:[%s0 + $0xb8] sm:$0xff]
    %v214 = vld [vmem:[%s0 + $0xc0] sm:$0xff]
    %v215 = vld [vmem:[%s0 + $0xc8] sm:$0xff]
    %v216 = vld [vmem:[%s0 + $0xd0] sm:$0xff]
    %v217 = vld [vmem:[%s0 + $0xd8] sm:$0xff]
    %v218 = vld [vmem:[%s0 + $0xe0] sm:$0xff]
    %v219 = vld [vmem:[%s0 + $0xe8] sm:$0xff]
    %v220 = vld [vmem:[%s0 + $0xf0] sm:$0xff]
    %v221 = vld [vmem:[%s0 + $0xf8] sm:$0xff]
    %v222 = vld [vmem:[%s0 + $0x100] sm:$0xff]
    %v223 = vld [vmem:[%s0 + $0x108] sm:$0xff]
    %v224 = vld [vmem:[%s0 + $0x110] sm:$0xff]
    %v225 = vld [vmem:[%s0 + $0x118] sm:$0xff]
    %v226 = vld [vmem:[%s0 + $0x120] sm:$0xff]
    %v227 = vld [vmem:[%s0 + $0x128] sm:$0xff]
    %v228 = vld [vmem:[%s0 + $0x130] sm:$0xff]
    %v229 = vld [vmem:[%s0 + $0x138] sm:$0xff]
    %v230 = vld [vmem:[%s0 + $0x140] sm:$0xff]
    %v231 = vld [vmem:[%s0 + $0x148] sm:$0xff]
    %v232 = vld [vmem:[%s0 + $0x150] sm:$0xff]
    %v233 = vld [vmem:[%s0 + $0x158] sm:$0xff]
    %v234 = vld [vmem:[%s0 + $0x160] sm:$0xff]
    %v235 = vld [vmem:[%s0 + $0x168] sm:$0xff]
    %v236 = vld [vmem:[%s0 + $0x170] sm:$0xff]
    %v237 = vld [vmem:[%s0 + $0x178] sm:$0xff]
    %v238 = vld [vmem:[%s0 + $0x180] sm:$0xff]
    %v239 = vld [vmem:[%s0 + $0x188] sm:$0xff]
    %v240 = vld [vmem:[%s0 + $0x190] sm:$0xff]
    %v241 = vld [vmem:[%s0 + $0x198] sm:$0xff]
    %v242 = vld [vmem:[%s0 + $0x1a0] sm:$0xff]
    %v243 = vld [vmem:[%s0 + $0x1a8] sm:$0xff]
    %v244 = vld [vmem:[%s0 + $0x1b0] sm:$0xff]
    %v245 = vld [vmem:[%s0 + $0x1b8] sm:$0xff]
    %v246 = vld [vmem:[%s0 + $0x1c0] sm:$0xff]
    %v247 = vld [vmem:[%s0 + $0x1c8] sm:$0xff]
    %v248 = vld [vmem:[%s0 + $0x1d0] sm:$0xff]
    %v249 = vld [vmem:[%s0 + $0x1d8] sm:$0xff]
    %v250 = vld [vmem:[%s0 + $0x1e0] sm:$0xff]
    %v251 = vld [vmem:[%s0 + $0x1e8] sm:$0xff]
    %v252 = vld [vmem:[%s0 + $0x1f0] sm:$0xff]
    %v253 = vld [vmem:[%s0 + $0x1f8] sm:$0xff]
    %v254 = vld [vmem:[%s0 + $0x200] sm:$0xff]
    %v255 = vld [vmem:[%s0 + $0x208] sm:$0xff]
    %v256 = vld [vmem:[%s0 + $0x210] sm:$0xff]
    %v257 = vld [vmem:[%s0 + $0x218] sm:$0xff]
    %v258 = vld [vmem:[%s0 + $0x220] sm:$0xff]
    %v259 = vld [vmem:[%s0 + $0x228] sm:$0xff]
    %v260 = vld [vmem:[%s0 + $0x230] sm:$0xff]
    %v261 = vld [vmem:[%s0 + $0x238] sm:$0xff]
    %v262 = vld [vmem:[#allocation3] sm:$0xff]
    %v263 = vld [vmem:[#allocation3 + $0x8] sm:$0x1]
    %v264 = vld [vmem:[#allocation5] sm:$0x1]
    %v266 = vperm.slane %v264, 0
    %vm268 = vcmask 72704
    %v270 = vsel %vm268, %v190, 0
    %v273 = vsel %vm268, %v191, 0
    %v276 = vsel %vm268, %v192, 0
    %v279 = vsel %vm268, %v193, 0
    %v282 = vsel %vm268, %v194, 0
    %v285 = vsel %vm268, %v195, 0
    %v288 = vsel %vm268, %v196, 0
    %v291 = vsel %vm268, %v197, 0
    %v294 = vsel %vm268, %v198, 0
    %v297 = vsel %vm268, %v199, 0
    %v300 = vsel %vm268, %v200, 0
    %v303 = vsel %vm268, %v201, 0
    %v306 = vsel %vm268, %v202, 0
    %v309 = vsel %vm268, %v203, 0
    %v312 = vsel %vm268, %v204, 0
    %v315 = vsel %vm268, %v205, 0
    %v318 = vsel %vm268, %v206, 0
    %v321 = vsel %vm268, %v207, 0
    %v324 = vsel %vm268, %v208, 0
    %v327 = vsel %vm268, %v209, 0
    %v330 = vsel %vm268, %v210, 0
    %v333 = vsel %vm268, %v211, 0
    %v336 = vsel %vm268, %v212, 0
    %v339 = vsel %vm268, %v213, 0
    %v342 = vsel %vm268, %v214, 0
    %v345 = vsel %vm268, %v215, 0
    %v348 = vsel %vm268, %v216, 0
    %v351 = vsel %vm268, %v217, 0
    %v354 = vsel %vm268, %v218, 0
    %v357 = vsel %vm268, %v219, 0
    %v360 = vsel %vm268, %v220, 0
    %v363 = vsel %vm268, %v221, 0
    %v366 = vsel %vm268, %v222, 0
    %v369 = vsel %vm268, %v223, 0
    %v372 = vsel %vm268, %v224, 0
    %v375 = vsel %vm268, %v225, 0
    %v378 = vsel %vm268, %v226, 0
    %v381 = vsel %vm268, %v227, 0
    %v384 = vsel %vm268, %v228, 0
    %v387 = vsel %vm268, %v229, 0
    %v390 = vsel %vm268, %v230, 0
    %v393 = vsel %vm268, %v231, 0
    %v396 = vsel %vm268, %v232, 0
    %v399 = vsel %vm268, %v233, 0
    %v402 = vsel %vm268, %v234, 0
    %v405 = vsel %vm268, %v235, 0
    %v408 = vsel %vm268, %v236, 0
    %v411 = vsel %vm268, %v237, 0
    %v414 = vsel %vm268, %v238, 0
    %v417 = vsel %vm268, %v239, 0
    %v420 = vsel %vm268, %v240, 0
    %v423 = vsel %vm268, %v241, 0
    %v426 = vsel %vm268, %v242, 0
    %v429 = vsel %vm268, %v243, 0
    %v432 = vsel %vm268, %v244, 0
    %v435 = vsel %vm268, %v245, 0
    %v438 = vsel %vm268, %v246, 0
    %v441 = vsel %vm268, %v247, 0
    %v444 = vsel %vm268, %v248, 0
    %v447 = vsel %vm268, %v249, 0
    %v450 = vsel %vm268, %v250, 0
    %v453 = vsel %vm268, %v251, 0
    %v456 = vsel %vm268, %v252, 0
    %v459 = vsel %vm268, %v253, 0
    %v462 = vsel %vm268, %v254, 0
    %v465 = vsel %vm268, %v255, 0
    %v468 = vsel %vm268, %v256, 0
    %v471 = vsel %vm268, %v257, 0
    %v474 = vsel %vm268, %v258, 0
    %v477 = vsel %vm268, %v259, 0
    %v480 = vsel %vm268, %v260, 0
    %v483 = vsel %vm268, %v261, 0
    %vm485 = vcmask 1040384
    %v487 = vsel %vm485, %v263, 0
    %489 = vmatpush.msra.mxu0 0.0
    %490 = vmatpush.msra.mxu0 0.0
    %491 = vmatpush.msra.mxu0 0.0
    %492 = vmatpush.msra.mxu0 0.0
    %493 = vmatpush.msra.mxu0 0.0
    %494 = vmatpush.msra.mxu0 0.0
    %495 = vmatpush.msra.mxu0 0.0
    %496 = vmatpush.msra.mxu0 0.0
    %497 = vmatpush.msra.mxu0 0.0
    %498 = vmatpush.msra.mxu0 0.0
    %499 = vmatpush.msra.mxu0 0.0
    %500 = vmatpush.msra.mxu0 0.0
    %501 = vmatpush.msra.mxu0 0.0
    %502 = vmatpush.msra.mxu0 0.0
    %503 = vmatpush.msra.mxu0 %v487
    %504 = vmatpush.msra.mxu0 %v262
    %505 = vmatmul.f32.gmra.mxu0 %v270
    %v506 = vpop.f32.mrf.mxu0
    %v507 = vadd.f32 %v266, %v506
    %508 = vmatmul.f32.gmra.mxu0 %v273
    %v509 = vpop.f32.mrf.mxu0
    %v510 = vadd.f32 %v266, %v509
    %511 = vmatmul.f32.gmra.mxu0 %v276
    %v512 = vpop.f32.mrf.mxu0
    %v513 = vadd.f32 %v266, %v512
    %514 = vmatmul.f32.gmra.mxu0 %v279
    %v515 = vpop.f32.mrf.mxu0
    %v516 = vadd.f32 %v266, %v515
    %517 = vmatmul.f32.gmra.mxu0 %v282
    %v518 = vpop.f32.mrf.mxu0
    %v519 = vadd.f32 %v266, %v518
    %520 = vmatmul.f32.gmra.mxu0 %v285
    %v521 = vpop.f32.mrf.mxu0
    %v522 = vadd.f32 %v266, %v521
    %523 = vmatmul.f32.gmra.mxu0 %v288
    %v524 = vpop.f32.mrf.mxu0
    %v525 = vadd.f32 %v266, %v524
    %526 = vmatmul.f32.gmra.mxu0 %v291
    %v527 = vpop.f32.mrf.mxu0
    %v528 = vadd.f32 %v266, %v527
    %529 = vmatmul.f32.gmra.mxu0 %v294
    %v530 = vpop.f32.mrf.mxu0
    %v531 = vadd.f32 %v266, %v530
    %532 = vmatmul.f32.gmra.mxu0 %v297
    %v533 = vpop.f32.mrf.mxu0
    %v534 = vadd.f32 %v266, %v533
    %535 = vmatmul.f32.gmra.mxu0 %v300
    %v536 = vpop.f32.mrf.mxu0
    %v537 = vadd.f32 %v266, %v536
    %538 = vmatmul.f32.gmra.mxu0 %v303
    %v539 = vpop.f32.mrf.mxu0
    %v540 = vadd.f32 %v266, %v539
    %541 = vmatmul.f32.gmra.mxu0 %v306
    %v542 = vpop.f32.mrf.mxu0
    %v543 = vadd.f32 %v266, %v542
    %544 = vmatmul.f32.gmra.mxu0 %v309
    %v545 = vpop.f32.mrf.mxu0
    %v546 = vadd.f32 %v266, %v545
    %547 = vmatmul.f32.gmra.mxu0 %v312
    %v548 = vpop.f32.mrf.mxu0
    %v549 = vadd.f32 %v266, %v548
    %550 = vmatmul.f32.gmra.mxu0 %v315
    %v551 = vpop.f32.mrf.mxu0
    %v552 = vadd.f32 %v266, %v551
    %553 = vmatmul.f32.gmra.mxu0 %v318
    %v554 = vpop.f32.mrf.mxu0
    %v555 = vadd.f32 %v266, %v554
    %556 = vmatmul.f32.gmra.mxu0 %v321
    %v557 = vpop.f32.mrf.mxu0
    %v558 = vadd.f32 %v266, %v557
    %559 = vmatmul.f32.gmra.mxu0 %v324
    %v560 = vpop.f32.mrf.mxu0
    %v561 = vadd.f32 %v266, %v560
    %562 = vmatmul.f32.gmra.mxu0 %v327
    %v563 = vpop.f32.mrf.mxu0
    %v564 = vadd.f32 %v266, %v563
    %565 = vmatmul.f32.gmra.mxu0 %v330
    %v566 = vpop.f32.mrf.mxu0
    %v567 = vadd.f32 %v266, %v566
    %568 = vmatmul.f32.gmra.mxu0 %v333
    %v569 = vpop.f32.mrf.mxu0
    %v570 = vadd.f32 %v266, %v569
    %571 = vmatmul.f32.gmra.mxu0 %v336
    %v572 = vpop.f32.mrf.mxu0
    %v573 = vadd.f32 %v266, %v572
    %574 = vmatmul.f32.gmra.mxu0 %v339
    %v575 = vpop.f32.mrf.mxu0
    %v576 = vadd.f32 %v266, %v575
    %577 = vmatmul.f32.gmra.mxu0 %v342
    %v578 = vpop.f32.mrf.mxu0
    %v579 = vadd.f32 %v266, %v578
    %580 = vmatmul.f32.gmra.mxu0 %v345
    %v581 = vpop.f32.mrf.mxu0
    %v582 = vadd.f32 %v266, %v581
    %583 = vmatmul.f32.gmra.mxu0 %v348
    %v584 = vpop.f32.mrf.mxu0
    %v585 = vadd.f32 %v266, %v584
    %586 = vmatmul.f32.gmra.mxu0 %v351
    %v587 = vpop.f32.mrf.mxu0
    %v588 = vadd.f32 %v266, %v587
    %589 = vmatmul.f32.gmra.mxu0 %v354
    %v590 = vpop.f32.mrf.mxu0
    %v591 = vadd.f32 %v266, %v590
    %592 = vmatmul.f32.gmra.mxu0 %v357
    %v593 = vpop.f32.mrf.mxu0
    %v594 = vadd.f32 %v266, %v593
    %595 = vmatmul.f32.gmra.mxu0 %v360
    %v596 = vpop.f32.mrf.mxu0
    %v597 = vadd.f32 %v266, %v596
    %598 = vmatmul.f32.gmra.mxu0 %v363
    %v599 = vpop.f32.mrf.mxu0
    %v600 = vadd.f32 %v266, %v599
    %601 = vmatmul.f32.gmra.mxu0 %v366
    %v602 = vpop.f32.mrf.mxu0
    %v603 = vadd.f32 %v266, %v602
    %604 = vmatmul.f32.gmra.mxu0 %v369
    %v605 = vpop.f32.mrf.mxu0
    %v606 = vadd.f32 %v266, %v605
    %607 = vmatmul.f32.gmra.mxu0 %v372
    %v608 = vpop.f32.mrf.mxu0
    %v609 = vadd.f32 %v266, %v608
    %610 = vmatmul.f32.gmra.mxu0 %v375
    %v611 = vpop.f32.mrf.mxu0
    %v612 = vadd.f32 %v266, %v611
    %613 = vmatmul.f32.gmra.mxu0 %v378
    %v614 = vpop.f32.mrf.mxu0
    %v615 = vadd.f32 %v266, %v614
    %616 = vmatmul.f32.gmra.mxu0 %v381
    %v617 = vpop.f32.mrf.mxu0
    %v618 = vadd.f32 %v266, %v617
    %619 = vmatmul.f32.gmra.mxu0 %v384
    %v620 = vpop.f32.mrf.mxu0
    %v621 = vadd.f32 %v266, %v620
    %622 = vmatmul.f32.gmra.mxu0 %v387
    %v623 = vpop.f32.mrf.mxu0
    %v624 = vadd.f32 %v266, %v623
    %625 = vmatmul.f32.gmra.mxu0 %v390
    %v626 = vpop.f32.mrf.mxu0
    %v627 = vadd.f32 %v266, %v626
    %628 = vmatmul.f32.gmra.mxu0 %v393
    %v629 = vpop.f32.mrf.mxu0
    %v630 = vadd.f32 %v266, %v629
    %631 = vmatmul.f32.gmra.mxu0 %v396
    %v632 = vpop.f32.mrf.mxu0
    %v633 = vadd.f32 %v266, %v632
    %634 = vmatmul.f32.gmra.mxu0 %v399
    %v635 = vpop.f32.mrf.mxu0
    %v636 = vadd.f32 %v266, %v635
    %637 = vmatmul.f32.gmra.mxu0 %v402
    %v638 = vpop.f32.mrf.mxu0
    %v639 = vadd.f32 %v266, %v638
    %640 = vmatmul.f32.gmra.mxu0 %v405
    %v641 = vpop.f32.mrf.mxu0
    %v642 = vadd.f32 %v266, %v641
    %643 = vmatmul.f32.gmra.mxu0 %v408
    %v644 = vpop.f32.mrf.mxu0
    %v645 = vadd.f32 %v266, %v644
    %646 = vmatmul.f32.gmra.mxu0 %v411
    %v647 = vpop.f32.mrf.mxu0
    %v648 = vadd.f32 %v266, %v647
    %649 = vmatmul.f32.gmra.mxu0 %v414
    %v650 = vpop.f32.mrf.mxu0
    %v651 = vadd.f32 %v266, %v650
    %652 = vmatmul.f32.gmra.mxu0 %v417
    %v653 = vpop.f32.mrf.mxu0
    %v654 = vadd.f32 %v266, %v653
    %655 = vmatmul.f32.gmra.mxu0 %v420
    %v656 = vpop.f32.mrf.mxu0
    %v657 = vadd.f32 %v266, %v656
    %658 = vmatmul.f32.gmra.mxu0 %v423
    %v659 = vpop.f32.mrf.mxu0
    %v660 = vadd.f32 %v266, %v659
    %661 = vmatmul.f32.gmra.mxu0 %v426
    %v662 = vpop.f32.mrf.mxu0
    %v663 = vadd.f32 %v266, %v662
    %664 = vmatmul.f32.gmra.mxu0 %v429
    %v665 = vpop.f32.mrf.mxu0
    %v666 = vadd.f32 %v266, %v665
    %667 = vmatmul.f32.gmra.mxu0 %v432
    %v668 = vpop.f32.mrf.mxu0
    %v669 = vadd.f32 %v266, %v668
    %670 = vmatmul.f32.gmra.mxu0 %v435
    %v671 = vpop.f32.mrf.mxu0
    %v672 = vadd.f32 %v266, %v671
    %673 = vmatmul.f32.gmra.mxu0 %v438
    %v674 = vpop.f32.mrf.mxu0
    %v675 = vadd.f32 %v266, %v674
    %676 = vmatmul.f32.gmra.mxu0 %v441
    %v677 = vpop.f32.mrf.mxu0
    %v678 = vadd.f32 %v266, %v677
    %679 = vmatmul.f32.gmra.mxu0 %v444
    %v680 = vpop.f32.mrf.mxu0
    %v681 = vadd.f32 %v266, %v680
    %682 = vmatmul.f32.gmra.mxu0 %v447
    %v683 = vpop.f32.mrf.mxu0
    %v684 = vadd.f32 %v266, %v683
    %685 = vmatmul.f32.gmra.mxu0 %v450
    %v686 = vpop.f32.mrf.mxu0
    %v687 = vadd.f32 %v266, %v686
    %688 = vmatmul.f32.gmra.mxu0 %v453
    %v689 = vpop.f32.mrf.mxu0
    %v690 = vadd.f32 %v266, %v689
    %691 = vmatmul.f32.gmra.mxu0 %v456
    %v692 = vpop.f32.mrf.mxu0
    %v693 = vadd.f32 %v266, %v692
    %694 = vmatmul.f32.gmra.mxu0 %v459
    %v695 = vpop.f32.mrf.mxu0
    %v696 = vadd.f32 %v266, %v695
    %697 = vmatmul.f32.gmra.mxu0 %v462
    %v698 = vpop.f32.mrf.mxu0
    %v699 = vadd.f32 %v266, %v698
    %700 = vmatmul.f32.gmra.mxu0 %v465
    %v701 = vpop.f32.mrf.mxu0
    %v702 = vadd.f32 %v266, %v701
    %703 = vmatmul.f32.gmra.mxu0 %v468
    %v704 = vpop.f32.mrf.mxu0
    %v705 = vadd.f32 %v266, %v704
    %706 = vmatmul.f32.gmra.mxu0 %v471
    %v707 = vpop.f32.mrf.mxu0
    %v708 = vadd.f32 %v266, %v707
    %709 = vmatmul.f32.gmra.mxu0 %v474
    %v710 = vpop.f32.mrf.mxu0
    %v711 = vadd.f32 %v266, %v710
    %712 = vmatmul.f32.gmra.mxu0 %v477
    %v713 = vpop.f32.mrf.mxu0
    %v714 = vadd.f32 %v266, %v713
    %715 = vmatmul.f32.gmra.mxu0 %v480
    %v716 = vpop.f32.mrf.mxu0
    %v717 = vadd.f32 %v266, %v716
    %718 = vmatmul.f32.gmra.mxu0 %v483
    %v719 = vpop.f32.mrf.mxu0
    %v720 = vadd.f32 %v266, %v719
    %721 = vdwg.mxu0
    %v722 = vmax.f32 %v507, 0.0
    %v723 = vmax.f32 %v510, 0.0
    %v724 = vmax.f32 %v513, 0.0
    %v725 = vmax.f32 %v516, 0.0
    %v726 = vmax.f32 %v519, 0.0
    %v727 = vmax.f32 %v522, 0.0
    %v728 = vmax.f32 %v525, 0.0
    %v729 = vmax.f32 %v528, 0.0
    %v730 = vmax.f32 %v531, 0.0
    %v731 = vmax.f32 %v534, 0.0
    %v732 = vmax.f32 %v537, 0.0
    %v733 = vmax.f32 %v540, 0.0
    %v734 = vmax.f32 %v543, 0.0
    %v735 = vmax.f32 %v546, 0.0
    %v736 = vmax.f32 %v549, 0.0
    %v737 = vmax.f32 %v552, 0.0
    %v738 = vmax.f32 %v555, 0.0
    %v739 = vmax.f32 %v558, 0.0
    %v740 = vmax.f32 %v561, 0.0
    %v741 = vmax.f32 %v564, 0.0
    %v742 = vmax.f32 %v567, 0.0
    %v743 = vmax.f32 %v570, 0.0
    %v744 = vmax.f32 %v573, 0.0
    %v745 = vmax.f32 %v576, 0.0
    %v746 = vmax.f32 %v579, 0.0
    %v747 = vmax.f32 %v582, 0.0
    %v748 = vmax.f32 %v585, 0.0
    %v749 = vmax.f32 %v588, 0.0
    %v750 = vmax.f32 %v591, 0.0
    %v751 = vmax.f32 %v594, 0.0
    %v752 = vmax.f32 %v597, 0.0
    %v753 = vmax.f32 %v600, 0.0
    %v754 = vmax.f32 %v603, 0.0
    %v755 = vmax.f32 %v606, 0.0
    %v756 = vmax.f32 %v609, 0.0
    %v757 = vmax.f32 %v612, 0.0
    %v758 = vmax.f32 %v615, 0.0
    %v759 = vmax.f32 %v618, 0.0
    %v760 = vmax.f32 %v621, 0.0
    %v761 = vmax.f32 %v624, 0.0
    %v762 = vmax.f32 %v627, 0.0
    %v763 = vmax.f32 %v630, 0.0
    %v764 = vmax.f32 %v633, 0.0
    %v765 = vmax.f32 %v636, 0.0
    %v766 = vmax.f32 %v639, 0.0
    %v767 = vmax.f32 %v642, 0.0
    %v768 = vmax.f32 %v645, 0.0
    %v769 = vmax.f32 %v648, 0.0
    %v770 = vmax.f32 %v651, 0.0
    %v771 = vmax.f32 %v654, 0.0
    %v772 = vmax.f32 %v657, 0.0
    %v773 = vmax.f32 %v660, 0.0
    %v774 = vmax.f32 %v663, 0.0
    %v775 = vmax.f32 %v666, 0.0
    %v776 = vmax.f32 %v669, 0.0
    %v777 = vmax.f32 %v672, 0.0
    %v778 = vmax.f32 %v675, 0.0
    %v779 = vmax.f32 %v678, 0.0
    %v780 = vmax.f32 %v681, 0.0
    %v781 = vmax.f32 %v684, 0.0
    %v782 = vmax.f32 %v687, 0.0
    %v783 = vmax.f32 %v690, 0.0
    %v784 = vmax.f32 %v693, 0.0
    %v785 = vmax.f32 %v696, 0.0
    %v786 = vmax.f32 %v699, 0.0
    %v787 = vmax.f32 %v702, 0.0
    %v788 = vmax.f32 %v705, 0.0
    %v789 = vmax.f32 %v708, 0.0
    %v790 = vmax.f32 %v711, 0.0
    %v791 = vmax.f32 %v714, 0.0
    %v792 = vmax.f32 %v717, 0.0
    %v793 = vmax.f32 %v720, 0.0
    %v794 = vmul.f32 %v722, %v188
    %v795 = vmul.f32 %v723, %v188
    %v796 = vmul.f32 %v724, %v188
    %v797 = vmul.f32 %v725, %v188
    %v798 = vmul.f32 %v726, %v188
    %v799 = vmul.f32 %v727, %v188
    %v800 = vmul.f32 %v728, %v188
    %v801 = vmul.f32 %v729, %v188
    %v802 = vmul.f32 %v730, %v188
    %v803 = vmul.f32 %v731, %v188
    %v804 = vmul.f32 %v732, %v189
    %v805 = vmul.f32 %v733, %v189
    %v806 = vmul.f32 %v734, %v189
    %v807 = vmul.f32 %v735, %v189
    %v808 = vmul.f32 %v736, %v189
    %v809 = vmul.f32 %v737, %v189
    %v810 = vmul.f32 %v738, %v189
    %v811 = vmul.f32 %v739, %v188
    %v812 = vmul.f32 %v740, %v188
    %v813 = vmul.f32 %v741, %v189
    %v814 = vmul.f32 %v742, %v189
    %v815 = vmul.f32 %v743, %v189
    %v816 = vmul.f32 %v744, %v189
    %v817 = vmul.f32 %v745, %v189
    %v818 = vmul.f32 %v746, %v189
    %v819 = vmul.f32 %v747, %v189
    %v820 = vmul.f32 %v748, %v188
    %v821 = vmul.f32 %v749, %v188
    %v822 = vmul.f32 %v750, %v189
    %v823 = vmul.f32 %v751, %v189
    %v824 = vmul.f32 %v752, %v189
    %v825 = vmul.f32 %v753, %v189
    %v826 = vmul.f32 %v754, %v189
    %v827 = vmul.f32 %v755, %v189
    %v828 = vmul.f32 %v756, %v189
    %v829 = vmul.f32 %v757, %v188
    %v830 = vmul.f32 %v758, %v188
    %v831 = vmul.f32 %v759, %v189
    %v832 = vmul.f32 %v760, %v189
    %v833 = vmul.f32 %v761, %v189
    %v834 = vmul.f32 %v762, %v189
    %v835 = vmul.f32 %v763, %v189
    %v836 = vmul.f32 %v764, %v189
    %v837 = vmul.f32 %v765, %v189
    %v838 = vmul.f32 %v766, %v188
    %v839 = vmul.f32 %v767, %v188
    %v840 = vmul.f32 %v768, %v189
    %v841 = vmul.f32 %v769, %v189
    %v842 = vmul.f32 %v770, %v189
    %v843 = vmul.f32 %v771, %v189
    %v844 = vmul.f32 %v772, %v189
    %v845 = vmul.f32 %v773, %v189
    %v846 = vmul.f32 %v774, %v189
    %v847 = vmul.f32 %v775, %v188
    %v848 = vmul.f32 %v776, %v188
    %v849 = vmul.f32 %v777, %v189
    %v850 = vmul.f32 %v778, %v189
    %v851 = vmul.f32 %v779, %v189
    %v852 = vmul.f32 %v780, %v189
    %v853 = vmul.f32 %v781, %v189
    %v854 = vmul.f32 %v782, %v189
    %v855 = vmul.f32 %v783, %v189
    %v856 = vmul.f32 %v784, %v188
    %v857 = vmul.f32 %v785, %v188
    %v858 = vmul.f32 %v786, %v188
    %v859 = vmul.f32 %v787, %v188
    %v860 = vmul.f32 %v788, %v188
    %v861 = vmul.f32 %v789, %v188
    %v862 = vmul.f32 %v790, %v188
    %v863 = vmul.f32 %v791, %v188
    %v864 = vmul.f32 %v792, %v188
    %v865 = vmul.f32 %v793, %v188
    %938 = vrot.lane.b32.xlu0 %v794, 16
    %v939 = vpop.permute.xlu0 %938
    %940 = vrot.lane.b32.xlu0 %v795, 16
    %v941 = vpop.permute.xlu0 %940
    %942 = vrot.lane.b32.xlu0 %v796, 16
    %v943 = vpop.permute.xlu0 %942
    %944 = vrot.lane.b32.xlu0 %v797, 16
    %v945 = vpop.permute.xlu0 %944
    %946 = vrot.lane.b32.xlu0 %v798, 16
    %v947 = vpop.permute.xlu0 %946
    %948 = vrot.lane.b32.xlu0 %v799, 16
    %v949 = vpop.permute.xlu0 %948
    %950 = vrot.lane.b32.xlu0 %v800, 16
    %v951 = vpop.permute.xlu0 %950
    %952 = vrot.lane.b32.xlu0 %v801, 16
    %v953 = vpop.permute.xlu0 %952
    %954 = vrot.lane.b32.xlu0 %v802, 16
    %v955 = vpop.permute.xlu0 %954
    %956 = vrot.lane.b32.xlu0 %v803, 16
    %v957 = vpop.permute.xlu0 %956
    %958 = vrot.lane.b32.xlu0 %v804, 16
    %v959 = vpop.permute.xlu0 %958
    %960 = vrot.lane.b32.xlu0 %v805, 16
    %v961 = vpop.permute.xlu0 %960
    %962 = vrot.lane.b32.xlu0 %v806, 16
    %v963 = vpop.permute.xlu0 %962
    %964 = vrot.lane.b32.xlu0 %v807, 16
    %v965 = vpop.permute.xlu0 %964
    %966 = vrot.lane.b32.xlu0 %v808, 16
    %v967 = vpop.permute.xlu0 %966
    %968 = vrot.lane.b32.xlu0 %v809, 16
    %v969 = vpop.permute.xlu0 %968
    %970 = vrot.lane.b32.xlu0 %v810, 16
    %v971 = vpop.permute.xlu0 %970
    %972 = vrot.lane.b32.xlu0 %v811, 16
    %v973 = vpop.permute.xlu0 %972
    %974 = vrot.lane.b32.xlu0 %v812, 16
    %v975 = vpop.permute.xlu0 %974
    %976 = vrot.lane.b32.xlu0 %v813, 16
    %v977 = vpop.permute.xlu0 %976
    %978 = vrot.lane.b32.xlu0 %v814, 16
    %v979 = vpop.permute.xlu0 %978
    %980 = vrot.lane.b32.xlu0 %v815, 16
    %v981 = vpop.permute.xlu0 %980
    %982 = vrot.lane.b32.xlu0 %v816, 16
    %v983 = vpop.permute.xlu0 %982
    %984 = vrot.lane.b32.xlu0 %v817, 16
    %v985 = vpop.permute.xlu0 %984
    %986 = vrot.lane.b32.xlu0 %v818, 16
    %v987 = vpop.permute.xlu0 %986
    %988 = vrot.lane.b32.xlu0 %v819, 16
    %v989 = vpop.permute.xlu0 %988
    %990 = vrot.lane.b32.xlu0 %v820, 16
    %v991 = vpop.permute.xlu0 %990
    %992 = vrot.lane.b32.xlu0 %v821, 16
    %v993 = vpop.permute.xlu0 %992
    %994 = vrot.lane.b32.xlu0 %v822, 16
    %v995 = vpop.permute.xlu0 %994
    %996 = vrot.lane.b32.xlu0 %v823, 16
    %v997 = vpop.permute.xlu0 %996
    %998 = vrot.lane.b32.xlu0 %v824, 16
    %v999 = vpop.permute.xlu0 %998
    %1000 = vrot.lane.b32.xlu0 %v825, 16
    %v1001 = vpop.permute.xlu0 %1000
    %1002 = vrot.lane.b32.xlu0 %v826, 16
    %v1003 = vpop.permute.xlu0 %1002
    %1004 = vrot.lane.b32.xlu0 %v827, 16
    %v1005 = vpop.permute.xlu0 %1004
    %1006 = vrot.lane.b32.xlu0 %v828, 16
    %v1007 = vpop.permute.xlu0 %1006
    %1008 = vrot.lane.b32.xlu0 %v829, 16
    %v1009 = vpop.permute.xlu0 %1008
    %1010 = vrot.lane.b32.xlu0 %v830, 16
    %v1011 = vpop.permute.xlu0 %1010
    %1012 = vrot.lane.b32.xlu0 %v831, 16
    %v1013 = vpop.permute.xlu0 %1012
    %1014 = vrot.lane.b32.xlu0 %v832, 16
    %v1015 = vpop.permute.xlu0 %1014
    %1016 = vrot.lane.b32.xlu0 %v833, 16
    %v1017 = vpop.permute.xlu0 %1016
    %1018 = vrot.lane.b32.xlu0 %v834, 16
    %v1019 = vpop.permute.xlu0 %1018
    %1020 = vrot.lane.b32.xlu0 %v835, 16
    %v1021 = vpop.permute.xlu0 %1020
    %1022 = vrot.lane.b32.xlu0 %v836, 16
    %v1023 = vpop.permute.xlu0 %1022
    %1024 = vrot.lane.b32.xlu0 %v837, 16
    %v1025 = vpop.permute.xlu0 %1024
    %1026 = vrot.lane.b32.xlu0 %v838, 16
    %v1027 = vpop.permute.xlu0 %1026
    %1028 = vrot.lane.b32.xlu0 %v839, 16
    %v1029 = vpop.permute.xlu0 %1028
    %1030 = vrot.lane.b32.xlu0 %v840, 16
    %v1031 = vpop.permute.xlu0 %1030
    %1032 = vrot.lane.b32.xlu0 %v841, 16
    %v1033 = vpop.permute.xlu0 %1032
    %1034 = vrot.lane.b32.xlu0 %v842, 16
    %v1035 = vpop.permute.xlu0 %1034
    %1036 = vrot.lane.b32.xlu0 %v843, 16
    %v1037 = vpop.permute.xlu0 %1036
    %1038 = vrot.lane.b32.xlu0 %v844, 16
    %v1039 = vpop.permute.xlu0 %1038
    %1040 = vrot.lane.b32.xlu0 %v845, 16
    %v1041 = vpop.permute.xlu0 %1040
    %1042 = vrot.lane.b32.xlu0 %v846, 16
    %v1043 = vpop.permute.xlu0 %1042
    %1044 = vrot.lane.b32.xlu0 %v847, 16
    %v1045 = vpop.permute.xlu0 %1044
    %1046 = vrot.lane.b32.xlu0 %v848, 16
    %v1047 = vpop.permute.xlu0 %1046
    %1048 = vrot.lane.b32.xlu0 %v849, 16
    %v1049 = vpop.permute.xlu0 %1048
    %1050 = vrot.lane.b32.xlu0 %v850, 16
    %v1051 = vpop.permute.xlu0 %1050
    %1052 = vrot.lane.b32.xlu0 %v851, 16
    %v1053 = vpop.permute.xlu0 %1052
    %1054 = vrot.lane.b32.xlu0 %v852, 16
    %v1055 = vpop.permute.xlu0 %1054
    %1056 = vrot.lane.b32.xlu0 %v853, 16
    %v1057 = vpop.permute.xlu0 %1056
    %1058 = vrot.lane.b32.xlu0 %v854, 16
    %v1059 = vpop.permute.xlu0 %1058
    %1060 = vrot.lane.b32.xlu0 %v855, 16
    %v1061 = vpop.permute.xlu0 %1060
    %1062 = vrot.lane.b32.xlu0 %v856, 16
    %v1063 = vpop.permute.xlu0 %1062
    %1064 = vrot.lane.b32.xlu0 %v857, 16
    %v1065 = vpop.permute.xlu0 %1064
    %1066 = vrot.lane.b32.xlu0 %v858, 16
    %v1067 = vpop.permute.xlu0 %1066
    %1068 = vrot.lane.b32.xlu0 %v859, 16
    %v1069 = vpop.permute.xlu0 %1068
    %1070 = vrot.lane.b32.xlu0 %v860, 16
    %v1071 = vpop.permute.xlu0 %1070
    %1072 = vrot.lane.b32.xlu0 %v861, 16
    %v1073 = vpop.permute.xlu0 %1072
    %1074 = vrot.lane.b32.xlu0 %v862, 16
    %v1075 = vpop.permute.xlu0 %1074
    %1076 = vrot.lane.b32.xlu0 %v863, 16
    %v1077 = vpop.permute.xlu0 %1076
    %1078 = vrot.lane.b32.xlu0 %v864, 16
    %v1079 = vpop.permute.xlu0 %1078
    %1080 = vrot.lane.b32.xlu0 %v865, 16
    %v1081 = vpop.permute.xlu0 %1080
    %1154 = vrot.lane.b32.xlu0 %v803, 32
    %v1155 = vpop.permute.xlu0 %1154
    %1156 = vrot.lane.b32.xlu0 %v804, 32
    %v1157 = vpop.permute.xlu0 %1156
    %1158 = vrot.lane.b32.xlu0 %v805, 32
    %v1159 = vpop.permute.xlu0 %1158
    %1160 = vrot.lane.b32.xlu0 %v806, 32
    %v1161 = vpop.permute.xlu0 %1160
    %1162 = vrot.lane.b32.xlu0 %v807, 32
    %v1163 = vpop.permute.xlu0 %1162
    %1164 = vrot.lane.b32.xlu0 %v808, 32
    %v1165 = vpop.permute.xlu0 %1164
    %1166 = vrot.lane.b32.xlu0 %v809, 32
    %v1167 = vpop.permute.xlu0 %1166
    %1168 = vrot.lane.b32.xlu0 %v810, 32
    %v1169 = vpop.permute.xlu0 %1168
    %1170 = vrot.lane.b32.xlu0 %v811, 32
    %v1171 = vpop.permute.xlu0 %1170
    %1172 = vrot.lane.b32.xlu0 %v812, 32
    %v1173 = vpop.permute.xlu0 %1172
    %1174 = vrot.lane.b32.xlu0 %v813, 32
    %v1175 = vpop.permute.xlu0 %1174
    %1176 = vrot.lane.b32.xlu0 %v814, 32
    %v1177 = vpop.permute.xlu0 %1176
    %1178 = vrot.lane.b32.xlu0 %v815, 32
    %v1179 = vpop.permute.xlu0 %1178
    %1180 = vrot.lane.b32.xlu0 %v816, 32
    %v1181 = vpop.permute.xlu0 %1180
    %1182 = vrot.lane.b32.xlu0 %v817, 32
    %v1183 = vpop.permute.xlu0 %1182
    %1184 = vrot.lane.b32.xlu0 %v818, 32
    %v1185 = vpop.permute.xlu0 %1184
    %1186 = vrot.lane.b32.xlu0 %v819, 32
    %v1187 = vpop.permute.xlu0 %1186
    %1188 = vrot.lane.b32.xlu0 %v820, 32
    %v1189 = vpop.permute.xlu0 %1188
    %1190 = vrot.lane.b32.xlu0 %v821, 32
    %v1191 = vpop.permute.xlu0 %1190
    %1192 = vrot.lane.b32.xlu0 %v822, 32
    %v1193 = vpop.permute.xlu0 %1192
    %1194 = vrot.lane.b32.xlu0 %v823, 32
    %v1195 = vpop.permute.xlu0 %1194
    %1196 = vrot.lane.b32.xlu0 %v824, 32
    %v1197 = vpop.permute.xlu0 %1196
    %1198 = vrot.lane.b32.xlu0 %v825, 32
    %v1199 = vpop.permute.xlu0 %1198
    %1200 = vrot.lane.b32.xlu0 %v826, 32
    %v1201 = vpop.permute.xlu0 %1200
    %1202 = vrot.lane.b32.xlu0 %v827, 32
    %v1203 = vpop.permute.xlu0 %1202
    %1204 = vrot.lane.b32.xlu0 %v828, 32
    %v1205 = vpop.permute.xlu0 %1204
    %1206 = vrot.lane.b32.xlu0 %v829, 32
    %v1207 = vpop.permute.xlu0 %1206
    %1208 = vrot.lane.b32.xlu0 %v830, 32
    %v1209 = vpop.permute.xlu0 %1208
    %1210 = vrot.lane.b32.xlu0 %v831, 32
    %v1211 = vpop.permute.xlu0 %1210
    %1212 = vrot.lane.b32.xlu0 %v832, 32
    %v1213 = vpop.permute.xlu0 %1212
    %1214 = vrot.lane.b32.xlu0 %v833, 32
    %v1215 = vpop.permute.xlu0 %1214
    %1216 = vrot.lane.b32.xlu0 %v834, 32
    %v1217 = vpop.permute.xlu0 %1216
    %1218 = vrot.lane.b32.xlu0 %v835, 32
    %v1219 = vpop.permute.xlu0 %1218
    %1220 = vrot.lane.b32.xlu0 %v836, 32
    %v1221 = vpop.permute.xlu0 %1220
    %1222 = vrot.lane.b32.xlu0 %v837, 32
    %v1223 = vpop.permute.xlu0 %1222
    %1224 = vrot.lane.b32.xlu0 %v838, 32
    %v1225 = vpop.permute.xlu0 %1224
    %1226 = vrot.lane.b32.xlu0 %v839, 32
    %v1227 = vpop.permute.xlu0 %1226
    %1228 = vrot.lane.b32.xlu0 %v840, 32
    %v1229 = vpop.permute.xlu0 %1228
    %1230 = vrot.lane.b32.xlu0 %v841, 32
    %v1231 = vpop.permute.xlu0 %1230
    %1232 = vrot.lane.b32.xlu0 %v842, 32
    %v1233 = vpop.permute.xlu0 %1232
    %1234 = vrot.lane.b32.xlu0 %v843, 32
    %v1235 = vpop.permute.xlu0 %1234
    %1236 = vrot.lane.b32.xlu0 %v844, 32
    %v1237 = vpop.permute.xlu0 %1236
    %1238 = vrot.lane.b32.xlu0 %v845, 32
    %v1239 = vpop.permute.xlu0 %1238
    %1240 = vrot.lane.b32.xlu0 %v846, 32
    %v1241 = vpop.permute.xlu0 %1240
    %1242 = vrot.lane.b32.xlu0 %v847, 32
    %v1243 = vpop.permute.xlu0 %1242
    %1244 = vrot.lane.b32.xlu0 %v848, 32
    %v1245 = vpop.permute.xlu0 %1244
    %1246 = vrot.lane.b32.xlu0 %v849, 32
    %v1247 = vpop.permute.xlu0 %1246
    %1248 = vrot.lane.b32.xlu0 %v850, 32
    %v1249 = vpop.permute.xlu0 %1248
    %1250 = vrot.lane.b32.xlu0 %v851, 32
    %v1251 = vpop.permute.xlu0 %1250
    %1252 = vrot.lane.b32.xlu0 %v852, 32
    %v1253 = vpop.permute.xlu0 %1252
    %1254 = vrot.lane.b32.xlu0 %v853, 32
    %v1255 = vpop.permute.xlu0 %1254
    %1256 = vrot.lane.b32.xlu0 %v854, 32
    %v1257 = vpop.permute.xlu0 %1256
    %1258 = vrot.lane.b32.xlu0 %v855, 32
    %v1259 = vpop.permute.xlu0 %1258
    %1260 = vrot.lane.b32.xlu0 %v856, 32
    %v1261 = vpop.permute.xlu0 %1260
    %1262 = vrot.lane.b32.xlu0 %v857, 32
    %v1263 = vpop.permute.xlu0 %1262
    %1264 = vrot.lane.b32.xlu0 %v858, 32
    %v1265 = vpop.permute.xlu0 %1264
    %1266 = vrot.lane.b32.xlu0 %v859, 32
    %v1267 = vpop.permute.xlu0 %1266
    %1268 = vrot.lane.b32.xlu0 %v860, 32
    %v1269 = vpop.permute.xlu0 %1268
    %1270 = vrot.lane.b32.xlu0 %v861, 32
    %v1271 = vpop.permute.xlu0 %1270
    %1272 = vrot.lane.b32.xlu0 %v862, 32
    %v1273 = vpop.permute.xlu0 %1272
    %1274 = vrot.lane.b32.xlu0 %v863, 32
    %v1275 = vpop.permute.xlu0 %1274
    %1276 = vrot.lane.b32.xlu0 %v864, 32
    %v1277 = vpop.permute.xlu0 %1276
    %1278 = vrot.lane.b32.xlu0 %v865, 32
    %v1279 = vpop.permute.xlu0 %1278
    %1280 = vrot.lane.b32.xlu0 %v794, 32
    %v1281 = vpop.permute.xlu0 %1280
    %1282 = vrot.lane.b32.xlu0 %v795, 32
    %v1283 = vpop.permute.xlu0 %1282
    %1284 = vrot.lane.b32.xlu0 %v796, 32
    %v1285 = vpop.permute.xlu0 %1284
    %1286 = vrot.lane.b32.xlu0 %v797, 32
    %v1287 = vpop.permute.xlu0 %1286
    %1288 = vrot.lane.b32.xlu0 %v798, 32
    %v1289 = vpop.permute.xlu0 %1288
    %1290 = vrot.lane.b32.xlu0 %v799, 32
    %v1291 = vpop.permute.xlu0 %1290
    %1292 = vrot.lane.b32.xlu0 %v800, 32
    %v1293 = vpop.permute.xlu0 %1292
    %1294 = vrot.lane.b32.xlu0 %v801, 32
    %v1295 = vpop.permute.xlu0 %1294
    %1296 = vrot.lane.b32.xlu0 %v802, 32
    %v1297 = vpop.permute.xlu0 %1296
    %vm1370 = vcmask 130048
    %v1371 = vsel %vm1370, %v857, %v939
    %v1372 = vsel %vm1370, %v858, %v941
    %v1373 = vsel %vm1370, %v859, %v943
    %v1374 = vsel %vm1370, %v860, %v945
    %v1375 = vsel %vm1370, %v861, %v947
    %v1376 = vsel %vm1370, %v862, %v949
    %v1377 = vsel %vm1370, %v863, %v951
    %v1378 = vsel %vm1370, %v864, %v953
    %v1379 = vsel %vm1370, %v865, %v955
    %v1380 = vsel %vm1370, %v794, %v957
    %v1381 = vsel %vm1370, %v795, %v959
    %v1382 = vsel %vm1370, %v796, %v961
    %v1383 = vsel %vm1370, %v797, %v963
    %v1384 = vsel %vm1370, %v798, %v965
    %v1385 = vsel %vm1370, %v799, %v967
    %v1386 = vsel %vm1370, %v800, %v969
    %v1387 = vsel %vm1370, %v801, %v971
    %v1388 = vsel %vm1370, %v802, %v973
    %v1389 = vsel %vm1370, %v803, %v975
    %v1390 = vsel %vm1370, %v804, %v977
    %v1391 = vsel %vm1370, %v805, %v979
    %v1392 = vsel %vm1370, %v806, %v981
    %v1393 = vsel %vm1370, %v807, %v983
    %v1394 = vsel %vm1370, %v808, %v985
    %v1395 = vsel %vm1370, %v809, %v987
    %v1396 = vsel %vm1370, %v810, %v989
    %v1397 = vsel %vm1370, %v811, %v991
    %v1398 = vsel %vm1370, %v812, %v993
    %v1399 = vsel %vm1370, %v813, %v995
    %v1400 = vsel %vm1370, %v814, %v997
    %v1401 = vsel %vm1370, %v815, %v999
    %v1402 = vsel %vm1370, %v816, %v1001
    %v1403 = vsel %vm1370, %v817, %v1003
    %v1404 = vsel %vm1370, %v818, %v1005
    %v1405 = vsel %vm1370, %v819, %v1007
    %v1406 = vsel %vm1370, %v820, %v1009
    %v1407 = vsel %vm1370, %v821, %v1011
    %v1408 = vsel %vm1370, %v822, %v1013
    %v1409 = vsel %vm1370, %v823, %v1015
    %v1410 = vsel %vm1370, %v824, %v1017
    %v1411 = vsel %vm1370, %v825, %v1019
    %v1412 = vsel %vm1370, %v826, %v1021
    %v1413 = vsel %vm1370, %v827, %v1023
    %v1414 = vsel %vm1370, %v828, %v1025
    %v1415 = vsel %vm1370, %v829, %v1027
    %v1416 = vsel %vm1370, %v830, %v1029
    %v1417 = vsel %vm1370, %v831, %v1031
    %v1418 = vsel %vm1370, %v832, %v1033
    %v1419 = vsel %vm1370, %v833, %v1035
    %v1420 = vsel %vm1370, %v834, %v1037
    %v1421 = vsel %vm1370, %v835, %v1039
    %v1422 = vsel %vm1370, %v836, %v1041
    %v1423 = vsel %vm1370, %v837, %v1043
    %v1424 = vsel %vm1370, %v838, %v1045
    %v1425 = vsel %vm1370, %v839, %v1047
    %v1426 = vsel %vm1370, %v840, %v1049
    %v1427 = vsel %vm1370, %v841, %v1051
    %v1428 = vsel %vm1370, %v842, %v1053
    %v1429 = vsel %vm1370, %v843, %v1055
    %v1430 = vsel %vm1370, %v844, %v1057
    %v1431 = vsel %vm1370, %v845, %v1059
    %v1432 = vsel %vm1370, %v846, %v1061
    %v1433 = vsel %vm1370, %v847, %v1063
    %v1434 = vsel %vm1370, %v848, %v1065
    %v1435 = vsel %vm1370, %v849, %v1067
    %v1436 = vsel %vm1370, %v850, %v1069
    %v1437 = vsel %vm1370, %v851, %v1071
    %v1438 = vsel %vm1370, %v852, %v1073
    %v1439 = vsel %vm1370, %v853, %v1075
    %v1440 = vsel %vm1370, %v854, %v1077
    %v1441 = vsel %vm1370, %v855, %v1079
    %v1442 = vsel %vm1370, %v856, %v1081
    %vm1443 = vcmask 261120
    %v1444 = vsel %vm1443, %v1371, %v1155
    %v1445 = vsel %vm1443, %v1372, %v1157
    %v1446 = vsel %vm1443, %v1373, %v1159
    %v1447 = vsel %vm1443, %v1374, %v1161
    %v1448 = vsel %vm1443, %v1375, %v1163
    %v1449 = vsel %vm1443, %v1376, %v1165
    %v1450 = vsel %vm1443, %v1377, %v1167
    %v1451 = vsel %vm1443, %v1378, %v1169
    %v1452 = vsel %vm1443, %v1379, %v1171
    %v1453 = vsel %vm1443, %v1380, %v1173
    %v1454 = vsel %vm1443, %v1381, %v1175
    %v1455 = vsel %vm1443, %v1382, %v1177
    %v1456 = vsel %vm1443, %v1383, %v1179
    %v1457 = vsel %vm1443, %v1384, %v1181
    %v1458 = vsel %vm1443, %v1385, %v1183
    %v1459 = vsel %vm1443, %v1386, %v1185
    %v1460 = vsel %vm1443, %v1387, %v1187
    %v1461 = vsel %vm1443, %v1388, %v1189
    %v1462 = vsel %vm1443, %v1389, %v1191
    %v1463 = vsel %vm1443, %v1390, %v1193
    %v1464 = vsel %vm1443, %v1391, %v1195
    %v1465 = vsel %vm1443, %v1392, %v1197
    %v1466 = vsel %vm1443, %v1393, %v1199
    %v1467 = vsel %vm1443, %v1394, %v1201
    %v1468 = vsel %vm1443, %v1395, %v1203
    %v1469 = vsel %vm1443, %v1396, %v1205
    %v1470 = vsel %vm1443, %v1397, %v1207
    %v1471 = vsel %vm1443, %v1398, %v1209
    %v1472 = vsel %vm1443, %v1399, %v1211
    %v1473 = vsel %vm1443, %v1400, %v1213
    %v1474 = vsel %vm1443, %v1401, %v1215
    %v1475 = vsel %vm1443, %v1402, %v1217
    %v1476 = vsel %vm1443, %v1403, %v1219
    %v1477 = vsel %vm1443, %v1404, %v1221
    %v1478 = vsel %vm1443, %v1405, %v1223
    %v1479 = vsel %vm1443, %v1406, %v1225
    %v1480 = vsel %vm1443, %v1407, %v1227
    %v1481 = vsel %vm1443, %v1408, %v1229
    %v1482 = vsel %vm1443, %v1409, %v1231
    %v1483 = vsel %vm1443, %v1410, %v1233
    %v1484 = vsel %vm1443, %v1411, %v1235
    %v1485 = vsel %vm1443, %v1412, %v1237
    %v1486 = vsel %vm1443, %v1413, %v1239
    %v1487 = vsel %vm1443, %v1414, %v1241
    %v1488 = vsel %vm1443, %v1415, %v1243
    %v1489 = vsel %vm1443, %v1416, %v1245
    %v1490 = vsel %vm1443, %v1417, %v1247
    %v1491 = vsel %vm1443, %v1418, %v1249
    %v1492 = vsel %vm1443, %v1419, %v1251
    %v1493 = vsel %vm1443, %v1420, %v1253
    %v1494 = vsel %vm1443, %v1421, %v1255
    %v1495 = vsel %vm1443, %v1422, %v1257
    %v1496 = vsel %vm1443, %v1423, %v1259
    %v1497 = vsel %vm1443, %v1424, %v1261
    %v1498 = vsel %vm1443, %v1425, %v1263
    %v1499 = vsel %vm1443, %v1426, %v1265
    %v1500 = vsel %vm1443, %v1427, %v1267
    %v1501 = vsel %vm1443, %v1428, %v1269
    %v1502 = vsel %vm1443, %v1429, %v1271
    %v1503 = vsel %vm1443, %v1430, %v1273
    %v1504 = vsel %vm1443, %v1431, %v1275
    %v1505 = vsel %vm1443, %v1432, %v1277
    %v1506 = vsel %vm1443, %v1433, %v1279
    %v1507 = vsel %vm1443, %v1434, %v1281
    %v1508 = vsel %vm1443, %v1435, %v1283
    %v1509 = vsel %vm1443, %v1436, %v1285
    %v1510 = vsel %vm1443, %v1437, %v1287
    %v1511 = vsel %vm1443, %v1438, %v1289
    %v1512 = vsel %vm1443, %v1439, %v1291
    %v1513 = vsel %vm1443, %v1440, %v1293
    %v1514 = vsel %vm1443, %v1441, %v1295
    %v1515 = vsel %vm1443, %v1442, %v1297
    %v1516 = vld [vmem:[%s3] sm:$0xff]
    %v1517 = vld [vmem:[%s3 + $0x8] sm:$0xff]
    %v1518 = vld [vmem:[%s3 + $0x10] sm:$0xff]
    %v1519 = vld [vmem:[%s3 + $0x18] sm:$0xff]
    %v1520 = vld [vmem:[%s3 + $0x20] sm:$0xff]
    %v1521 = vld [vmem:[%s3 + $0x28] sm:$0xff]
    %vm1522 = vcmask 392192
    %v1524 = vsel %vm1522, %v1444, 0
    %v1527 = vsel %vm1522, %v1445, 0
    %v1530 = vsel %vm1522, %v1446, 0
    %v1533 = vsel %vm1522, %v1447, 0
    %v1536 = vsel %vm1522, %v1448, 0
    %v1539 = vsel %vm1522, %v1449, 0
    %v1542 = vsel %vm1522, %v1450, 0
    %v1545 = vsel %vm1522, %v1451, 0
    %v1548 = vsel %vm1522, %v1452, 0
    %v1551 = vsel %vm1522, %v1453, 0
    %v1554 = vsel %vm1522, %v1454, 0
    %v1557 = vsel %vm1522, %v1455, 0
    %v1560 = vsel %vm1522, %v1456, 0
    %v1563 = vsel %vm1522, %v1457, 0
    %v1566 = vsel %vm1522, %v1458, 0
    %v1569 = vsel %vm1522, %v1459, 0
    %v1572 = vsel %vm1522, %v1460, 0
    %v1575 = vsel %vm1522, %v1461, 0
    %v1578 = vsel %vm1522, %v1462, 0
    %v1581 = vsel %vm1522, %v1463, 0
    %v1584 = vsel %vm1522, %v1464, 0
    %v1587 = vsel %vm1522, %v1465, 0
    %v1590 = vsel %vm1522, %v1466, 0
    %v1593 = vsel %vm1522, %v1467, 0
    %v1596 = vsel %vm1522, %v1468, 0
    %v1599 = vsel %vm1522, %v1469, 0
    %v1602 = vsel %vm1522, %v1470, 0
    %v1605 = vsel %vm1522, %v1471, 0
    %v1608 = vsel %vm1522, %v1472, 0
    %v1611 = vsel %vm1522, %v1473, 0
    %v1614 = vsel %vm1522, %v1474, 0
    %v1617 = vsel %vm1522, %v1475, 0
    %v1620 = vsel %vm1522, %v1476, 0
    %v1623 = vsel %vm1522, %v1477, 0
    %v1626 = vsel %vm1522, %v1478, 0
    %v1629 = vsel %vm1522, %v1479, 0
    %v1632 = vsel %vm1522, %v1480, 0
    %v1635 = vsel %vm1522, %v1481, 0
    %v1638 = vsel %vm1522, %v1482, 0
    %v1641 = vsel %vm1522, %v1483, 0
    %v1644 = vsel %vm1522, %v1484, 0
    %v1647 = vsel %vm1522, %v1485, 0
    %v1650 = vsel %vm1522, %v1486, 0
    %v1653 = vsel %vm1522, %v1487, 0
    %v1656 = vsel %vm1522, %v1488, 0
    %v1659 = vsel %vm1522, %v1489, 0
    %v1662 = vsel %vm1522, %v1490, 0
    %v1665 = vsel %vm1522, %v1491, 0
    %v1668 = vsel %vm1522, %v1492, 0
    %v1671 = vsel %vm1522, %v1493, 0
    %v1674 = vsel %vm1522, %v1494, 0
    %v1677 = vsel %vm1522, %v1495, 0
    %v1680 = vsel %vm1522, %v1496, 0
    %v1683 = vsel %vm1522, %v1497, 0
    %v1686 = vsel %vm1522, %v1498, 0
    %v1689 = vsel %vm1522, %v1499, 0
    %v1692 = vsel %vm1522, %v1500, 0
    %v1695 = vsel %vm1522, %v1501, 0
    %v1698 = vsel %vm1522, %v1502, 0
    %v1701 = vsel %vm1522, %v1503, 0
    %v1704 = vsel %vm1522, %v1504, 0
    %v1707 = vsel %vm1522, %v1505, 0
    %v1710 = vsel %vm1522, %v1506, 0
    %v1713 = vsel %vm1522, %v1507, 0
    %v1716 = vsel %vm1522, %v1508, 0
    %v1719 = vsel %vm1522, %v1509, 0
    %v1722 = vsel %vm1522, %v1510, 0
    %v1725 = vsel %vm1522, %v1511, 0
    %v1728 = vsel %vm1522, %v1512, 0
    %v1731 = vsel %vm1522, %v1513, 0
    %v1734 = vsel %vm1522, %v1514, 0
    %v1737 = vsel %vm1522, %v1515, 0
    %1739 = vmatpush.msra.mxu0 0.0
    %1740 = vmatpush.msra.mxu0 0.0
    %1741 = vmatpush.msra.mxu0 0.0
    %1742 = vmatpush.msra.mxu0 0.0
    %1743 = vmatpush.msra.mxu0 0.0
    %1744 = vmatpush.msra.mxu0 0.0
    %1745 = vmatpush.msra.mxu0 0.0
    %1746 = vmatpush.msra.mxu0 0.0
    %1747 = vmatpush.msra.mxu0 0.0
    %1748 = vmatpush.msra.mxu0 0.0
    %1749 = vmatpush.msra.mxu0 %v1521
    %1750 = vmatpush.msra.mxu0 %v1520
    %1751 = vmatpush.msra.mxu0 %v1519
    %1752 = vmatpush.msra.mxu0 %v1518
    %1753 = vmatpush.msra.mxu0 %v1517
    %1754 = vmatpush.msra.mxu0 %v1516
    %1755 = vmatmul.f32.gmra.mxu0 %v1524
    %v1756 = vpop.f32.mrf.mxu0
    %v1757 = vadd.f32 0.0, %v1756
    %1758 = vmatmul.f32.gmra.mxu0 %v1527
    %v1759 = vpop.f32.mrf.mxu0
    %v1760 = vadd.f32 0.0, %v1759
    %1761 = vmatmul.f32.gmra.mxu0 %v1530
    %v1762 = vpop.f32.mrf.mxu0
    %v1763 = vadd.f32 0.0, %v1762
    %1764 = vmatmul.f32.gmra.mxu0 %v1533
    %v1765 = vpop.f32.mrf.mxu0
    %v1766 = vadd.f32 0.0, %v1765
    %1767 = vmatmul.f32.gmra.mxu0 %v1536
    %v1768 = vpop.f32.mrf.mxu0
    %v1769 = vadd.f32 0.0, %v1768
    %1770 = vmatmul.f32.gmra.mxu0 %v1539
    %v1771 = vpop.f32.mrf.mxu0
    %v1772 = vadd.f32 0.0, %v1771
    %1773 = vmatmul.f32.gmra.mxu0 %v1542
    %v1774 = vpop.f32.mrf.mxu0
    %v1775 = vadd.f32 0.0, %v1774
    %1776 = vmatmul.f32.gmra.mxu0 %v1545
    %v1777 = vpop.f32.mrf.mxu0
    %v1778 = vadd.f32 0.0, %v1777
    %1779 = vmatmul.f32.gmra.mxu0 %v1548
    %v1780 = vpop.f32.mrf.mxu0
    %v1781 = vadd.f32 0.0, %v1780
    %1782 = vmatmul.f32.gmra.mxu0 %v1551
    %v1783 = vpop.f32.mrf.mxu0
    %v1784 = vadd.f32 0.0, %v1783
    %1785 = vmatmul.f32.gmra.mxu0 %v1554
    %v1786 = vpop.f32.mrf.mxu0
    %v1787 = vadd.f32 0.0, %v1786
    %1788 = vmatmul.f32.gmra.mxu0 %v1557
    %v1789 = vpop.f32.mrf.mxu0
    %v1790 = vadd.f32 0.0, %v1789
    %1791 = vmatmul.f32.gmra.mxu0 %v1560
    %v1792 = vpop.f32.mrf.mxu0
    %v1793 = vadd.f32 0.0, %v1792
    %1794 = vmatmul.f32.gmra.mxu0 %v1563
    %v1795 = vpop.f32.mrf.mxu0
    %v1796 = vadd.f32 0.0, %v1795
    %1797 = vmatmul.f32.gmra.mxu0 %v1566
    %v1798 = vpop.f32.mrf.mxu0
    %v1799 = vadd.f32 0.0, %v1798
    %1800 = vmatmul.f32.gmra.mxu0 %v1569
    %v1801 = vpop.f32.mrf.mxu0
    %v1802 = vadd.f32 0.0, %v1801
    %1803 = vmatmul.f32.gmra.mxu0 %v1572
    %v1804 = vpop.f32.mrf.mxu0
    %v1805 = vadd.f32 0.0, %v1804
    %1806 = vmatmul.f32.gmra.mxu0 %v1575
    %v1807 = vpop.f32.mrf.mxu0
    %v1808 = vadd.f32 0.0, %v1807
    %1809 = vmatmul.f32.gmra.mxu0 %v1578
    %v1810 = vpop.f32.mrf.mxu0
    %v1811 = vadd.f32 0.0, %v1810
    %1812 = vmatmul.f32.gmra.mxu0 %v1581
    %v1813 = vpop.f32.mrf.mxu0
    %v1814 = vadd.f32 0.0, %v1813
    %1815 = vmatmul.f32.gmra.mxu0 %v1584
    %v1816 = vpop.f32.mrf.mxu0
    %v1817 = vadd.f32 0.0, %v1816
    %1818 = vmatmul.f32.gmra.mxu0 %v1587
    %v1819 = vpop.f32.mrf.mxu0
    %v1820 = vadd.f32 0.0, %v1819
    %1821 = vmatmul.f32.gmra.mxu0 %v1590
    %v1822 = vpop.f32.mrf.mxu0
    %v1823 = vadd.f32 0.0, %v1822
    %1824 = vmatmul.f32.gmra.mxu0 %v1593
    %v1825 = vpop.f32.mrf.mxu0
    %v1826 = vadd.f32 0.0, %v1825
    %1827 = vmatmul.f32.gmra.mxu0 %v1596
    %v1828 = vpop.f32.mrf.mxu0
    %v1829 = vadd.f32 0.0, %v1828
    %1830 = vmatmul.f32.gmra.mxu0 %v1599
    %v1831 = vpop.f32.mrf.mxu0
    %v1832 = vadd.f32 0.0, %v1831
    %1833 = vmatmul.f32.gmra.mxu0 %v1602
    %v1834 = vpop.f32.mrf.mxu0
    %v1835 = vadd.f32 0.0, %v1834
    %1836 = vmatmul.f32.gmra.mxu0 %v1605
    %v1837 = vpop.f32.mrf.mxu0
    %v1838 = vadd.f32 0.0, %v1837
    %1839 = vmatmul.f32.gmra.mxu0 %v1608
    %v1840 = vpop.f32.mrf.mxu0
    %v1841 = vadd.f32 0.0, %v1840
    %1842 = vmatmul.f32.gmra.mxu0 %v1611
    %v1843 = vpop.f32.mrf.mxu0
    %v1844 = vadd.f32 0.0, %v1843
    %1845 = vmatmul.f32.gmra.mxu0 %v1614
    %v1846 = vpop.f32.mrf.mxu0
    %v1847 = vadd.f32 0.0, %v1846
    %1848 = vmatmul.f32.gmra.mxu0 %v1617
    %v1849 = vpop.f32.mrf.mxu0
    %v1850 = vadd.f32 0.0, %v1849
    %1851 = vmatmul.f32.gmra.mxu0 %v1620
    %v1852 = vpop.f32.mrf.mxu0
    %v1853 = vadd.f32 0.0, %v1852
    %1854 = vmatmul.f32.gmra.mxu0 %v1623
    %v1855 = vpop.f32.mrf.mxu0
    %v1856 = vadd.f32 0.0, %v1855
    %1857 = vmatmul.f32.gmra.mxu0 %v1626
    %v1858 = vpop.f32.mrf.mxu0
    %v1859 = vadd.f32 0.0, %v1858
    %1860 = vmatmul.f32.gmra.mxu0 %v1629
    %v1861 = vpop.f32.mrf.mxu0
    %v1862 = vadd.f32 0.0, %v1861
    %1863 = vmatmul.f32.gmra.mxu0 %v1632
    %v1864 = vpop.f32.mrf.mxu0
    %v1865 = vadd.f32 0.0, %v1864
    %1866 = vmatmul.f32.gmra.mxu0 %v1635
    %v1867 = vpop.f32.mrf.mxu0
    %v1868 = vadd.f32 0.0, %v1867
    %1869 = vmatmul.f32.gmra.mxu0 %v1638
    %v1870 = vpop.f32.mrf.mxu0
    %v1871 = vadd.f32 0.0, %v1870
    %1872 = vmatmul.f32.gmra.mxu0 %v1641
    %v1873 = vpop.f32.mrf.mxu0
    %v1874 = vadd.f32 0.0, %v1873
    %1875 = vmatmul.f32.gmra.mxu0 %v1644
    %v1876 = vpop.f32.mrf.mxu0
    %v1877 = vadd.f32 0.0, %v1876
    %1878 = vmatmul.f32.gmra.mxu0 %v1647
    %v1879 = vpop.f32.mrf.mxu0
    %v1880 = vadd.f32 0.0, %v1879
    %1881 = vmatmul.f32.gmra.mxu0 %v1650
    %v1882 = vpop.f32.mrf.mxu0
    %v1883 = vadd.f32 0.0, %v1882
    %1884 = vmatmul.f32.gmra.mxu0 %v1653
    %v1885 = vpop.f32.mrf.mxu0
    %v1886 = vadd.f32 0.0, %v1885
    %1887 = vmatmul.f32.gmra.mxu0 %v1656
    %v1888 = vpop.f32.mrf.mxu0
    %v1889 = vadd.f32 0.0, %v1888
    %1890 = vmatmul.f32.gmra.mxu0 %v1659
    %v1891 = vpop.f32.mrf.mxu0
    %v1892 = vadd.f32 0.0, %v1891
    %1893 = vmatmul.f32.gmra.mxu0 %v1662
    %v1894 = vpop.f32.mrf.mxu0
    %v1895 = vadd.f32 0.0, %v1894
    %1896 = vmatmul.f32.gmra.mxu0 %v1665
    %v1897 = vpop.f32.mrf.mxu0
    %v1898 = vadd.f32 0.0, %v1897
    %1899 = vmatmul.f32.gmra.mxu0 %v1668
    %v1900 = vpop.f32.mrf.mxu0
    %v1901 = vadd.f32 0.0, %v1900
    %1902 = vmatmul.f32.gmra.mxu0 %v1671
    %v1903 = vpop.f32.mrf.mxu0
    %v1904 = vadd.f32 0.0, %v1903
    %1905 = vmatmul.f32.gmra.mxu0 %v1674
    %v1906 = vpop.f32.mrf.mxu0
    %v1907 = vadd.f32 0.0, %v1906
    %1908 = vmatmul.f32.gmra.mxu0 %v1677
    %v1909 = vpop.f32.mrf.mxu0
    %v1910 = vadd.f32 0.0, %v1909
    %1911 = vmatmul.f32.gmra.mxu0 %v1680
    %v1912 = vpop.f32.mrf.mxu0
    %v1913 = vadd.f32 0.0, %v1912
    %1914 = vmatmul.f32.gmra.mxu0 %v1683
    %v1915 = vpop.f32.mrf.mxu0
    %v1916 = vadd.f32 0.0, %v1915
    %1917 = vmatmul.f32.gmra.mxu0 %v1686
    %v1918 = vpop.f32.mrf.mxu0
    %v1919 = vadd.f32 0.0, %v1918
    %1920 = vmatmul.f32.gmra.mxu0 %v1689
    %v1921 = vpop.f32.mrf.mxu0
    %v1922 = vadd.f32 0.0, %v1921
    %1923 = vmatmul.f32.gmra.mxu0 %v1692
    %v1924 = vpop.f32.mrf.mxu0
    %v1925 = vadd.f32 0.0, %v1924
    %1926 = vmatmul.f32.gmra.mxu0 %v1695
    %v1927 = vpop.f32.mrf.mxu0
    %v1928 = vadd.f32 0.0, %v1927
    %1929 = vmatmul.f32.gmra.mxu0 %v1698
    %v1930 = vpop.f32.mrf.mxu0
    %v1931 = vadd.f32 0.0, %v1930
    %1932 = vmatmul.f32.gmra.mxu0 %v1701
    %v1933 = vpop.f32.mrf.mxu0
    %v1934 = vadd.f32 0.0, %v1933
    %1935 = vmatmul.f32.gmra.mxu0 %v1704
    %v1936 = vpop.f32.mrf.mxu0
    %v1937 = vadd.f32 0.0, %v1936
    %1938 = vmatmul.f32.gmra.mxu0 %v1707
    %v1939 = vpop.f32.mrf.mxu0
    %v1940 = vadd.f32 0.0, %v1939
    %1941 = vmatmul.f32.gmra.mxu0 %v1710
    %v1942 = vpop.f32.mrf.mxu0
    %v1943 = vadd.f32 0.0, %v1942
    %1944 = vmatmul.f32.gmra.mxu0 %v1713
    %v1945 = vpop.f32.mrf.mxu0
    %v1946 = vadd.f32 0.0, %v1945
    %1947 = vmatmul.f32.gmra.mxu0 %v1716
    %v1948 = vpop.f32.mrf.mxu0
    %v1949 = vadd.f32 0.0, %v1948
    %1950 = vmatmul.f32.gmra.mxu0 %v1719
    %v1951 = vpop.f32.mrf.mxu0
    %v1952 = vadd.f32 0.0, %v1951
    %1953 = vmatmul.f32.gmra.mxu0 %v1722
    %v1954 = vpop.f32.mrf.mxu0
    %v1955 = vadd.f32 0.0, %v1954
    %1956 = vmatmul.f32.gmra.mxu0 %v1725
    %v1957 = vpop.f32.mrf.mxu0
    %v1958 = vadd.f32 0.0, %v1957
    %1959 = vmatmul.f32.gmra.mxu0 %v1728
    %v1960 = vpop.f32.mrf.mxu0
    %v1961 = vadd.f32 0.0, %v1960
    %1962 = vmatmul.f32.gmra.mxu0 %v1731
    %v1963 = vpop.f32.mrf.mxu0
    %v1964 = vadd.f32 0.0, %v1963
    %1965 = vmatmul.f32.gmra.mxu0 %v1734
    %v1966 = vpop.f32.mrf.mxu0
    %v1967 = vadd.f32 0.0, %v1966
    %1968 = vmatmul.f32.gmra.mxu0 %v1737
    %v1969 = vpop.f32.mrf.mxu0
    %v1970 = vadd.f32 0.0, %v1969
    %1971 = vdwg.mxu0
    %v1972 = vadd.f32 %v1970, 0.0
    %v1973 = vadd.f32 %v1757, 0.0
    %v1974 = vadd.f32 %v1760, 0.0
    %v1975 = vadd.f32 %v1763, 0.0
    %v1976 = vadd.f32 %v1766, 0.0
    %v1977 = vadd.f32 %v1769, 0.0
    %v1978 = vadd.f32 %v1772, 0.0
    %v1979 = vadd.f32 %v1775, 0.0
    %v1980 = vadd.f32 %v1778, 0.0
    %v1981 = vadd.f32 %v1781, 0.0
    %v1982 = vadd.f32 %v1784, 0.0
    %v1983 = vadd.f32 %v1787, 0.0
    %v1984 = vadd.f32 %v1790, 0.0
    %v1985 = vadd.f32 %v1793, 0.0
    %v1986 = vadd.f32 %v1796, 0.0
    %v1987 = vadd.f32 %v1799, 0.0
    %v1988 = vadd.f32 %v1802, 0.0
    %v1989 = vadd.f32 %v1805, 0.0
    %v1990 = vadd.f32 %v1808, 0.0
    %v1991 = vadd.f32 %v1811, 0.0
    %v1992 = vadd.f32 %v1814, 0.0
    %v1993 = vadd.f32 %v1817, 0.0
    %v1994 = vadd.f32 %v1820, 0.0
    %v1995 = vadd.f32 %v1823, 0.0
    %v1996 = vadd.f32 %v1826, 0.0
    %v1997 = vadd.f32 %v1829, 0.0
    %v1998 = vadd.f32 %v1832, 0.0
    %v1999 = vadd.f32 %v1835, 0.0
    %v2000 = vadd.f32 %v1838, 0.0
    %v2001 = vadd.f32 %v1841, 0.0
    %v2002 = vadd.f32 %v1844, 0.0
    %v2003 = vadd.f32 %v1847, 0.0
    %v2004 = vadd.f32 %v1850, 0.0
    %v2005 = vadd.f32 %v1853, 0.0
    %v2006 = vadd.f32 %v1856, 0.0
    %v2007 = vadd.f32 %v1859, 0.0
    %v2008 = vadd.f32 %v1862, 0.0
    %v2009 = vadd.f32 %v1865, 0.0
    %v2010 = vadd.f32 %v1868, 0.0
    %v2011 = vadd.f32 %v1871, 0.0
    %v2012 = vadd.f32 %v1874, 0.0
    %v2013 = vadd.f32 %v1877, 0.0
    %v2014 = vadd.f32 %v1880, 0.0
    %v2015 = vadd.f32 %v1883, 0.0
    %v2016 = vadd.f32 %v1886, 0.0
    %v2017 = vadd.f32 %v1889, 0.0
    %v2018 = vadd.f32 %v1892, 0.0
    %v2019 = vadd.f32 %v1895, 0.0
    %v2020 = vadd.f32 %v1898, 0.0
    %v2021 = vadd.f32 %v1901, 0.0
    %v2022 = vadd.f32 %v1904, 0.0
    %v2023 = vadd.f32 %v1907, 0.0
    %v2024 = vadd.f32 %v1910, 0.0
    %v2025 = vadd.f32 %v1913, 0.0
    %v2026 = vadd.f32 %v1916, 0.0
    %v2027 = vadd.f32 %v1919, 0.0
    %v2028 = vadd.f32 %v1922, 0.0
    %v2029 = vadd.f32 %v1925, 0.0
    %v2030 = vadd.f32 %v1928, 0.0
    %v2031 = vadd.f32 %v1931, 0.0
    %v2032 = vadd.f32 %v1934, 0.0
    %v2033 = vadd.f32 %v1937, 0.0
    %v2034 = vadd.f32 %v1940, 0.0
    %v2035 = vadd.f32 %v1943, 0.0
    %v2036 = vadd.f32 %v1946, 0.0
    %v2037 = vadd.f32 %v1949, 0.0
    %v2038 = vadd.f32 %v1952, 0.0
    %v2039 = vadd.f32 %v1955, 0.0
    %v2040 = vadd.f32 %v1958, 0.0
    %v2041 = vadd.f32 %v1961, 0.0
    %v2042 = vadd.f32 %v1964, 0.0
    %v2043 = vadd.f32 %v1967, 0.0
    %s2044 = scalar_lea.vmem %s3, 48
    %v2045 = vld [vmem:[%s2044] sm:$0xff]
    %v2046 = vld [vmem:[%s2044 + $0x8] sm:$0xff]
    %v2047 = vld [vmem:[%s2044 + $0x10] sm:$0xff]
    %v2048 = vld [vmem:[%s2044 + $0x18] sm:$0xff]
    %v2049 = vld [vmem:[%s2044 + $0x20] sm:$0xff]
    %v2050 = vld [vmem:[%s2044 + $0x28] sm:$0xff]
    %2051 = vmatpush.msra.mxu0 0.0
    %2052 = vmatpush.msra.mxu0 0.0
    %2053 = vmatpush.msra.mxu0 0.0
    %2054 = vmatpush.msra.mxu0 0.0
    %2055 = vmatpush.msra.mxu0 0.0
    %2056 = vmatpush.msra.mxu0 0.0
    %2057 = vmatpush.msra.mxu0 0.0
    %2058 = vmatpush.msra.mxu0 0.0
    %2059 = vmatpush.msra.mxu0 0.0
    %2060 = vmatpush.msra.mxu0 0.0
    %2061 = vmatpush.msra.mxu0 %v2050
    %2062 = vmatpush.msra.mxu0 %v2049
    %2063 = vmatpush.msra.mxu0 %v2048
    %2064 = vmatpush.msra.mxu0 %v2047
    %2065 = vmatpush.msra.mxu0 %v2046
    %2066 = vmatpush.msra.mxu0 %v2045
    %2067 = vmatmul.f32.gmra.mxu0 %v1524
    %v2068 = vpop.f32.mrf.mxu0
    %v2069 = vadd.f32 0.0, %v2068
    %2070 = vmatmul.f32.gmra.mxu0 %v1527
    %v2071 = vpop.f32.mrf.mxu0
    %v2072 = vadd.f32 0.0, %v2071
    %2073 = vmatmul.f32.gmra.mxu0 %v1530
    %v2074 = vpop.f32.mrf.mxu0
    %v2075 = vadd.f32 0.0, %v2074
    %2076 = vmatmul.f32.gmra.mxu0 %v1533
    %v2077 = vpop.f32.mrf.mxu0
    %v2078 = vadd.f32 0.0, %v2077
    %2079 = vmatmul.f32.gmra.mxu0 %v1536
    %v2080 = vpop.f32.mrf.mxu0
    %v2081 = vadd.f32 0.0, %v2080
    %2082 = vmatmul.f32.gmra.mxu0 %v1539
    %v2083 = vpop.f32.mrf.mxu0
    %v2084 = vadd.f32 0.0, %v2083
    %2085 = vmatmul.f32.gmra.mxu0 %v1542
    %v2086 = vpop.f32.mrf.mxu0
    %v2087 = vadd.f32 0.0, %v2086
    %2088 = vmatmul.f32.gmra.mxu0 %v1545
    %v2089 = vpop.f32.mrf.mxu0
    %v2090 = vadd.f32 0.0, %v2089
    %2091 = vmatmul.f32.gmra.mxu0 %v1548
    %v2092 = vpop.f32.mrf.mxu0
    %v2093 = vadd.f32 0.0, %v2092
    %2094 = vmatmul.f32.gmra.mxu0 %v1551
    %v2095 = vpop.f32.mrf.mxu0
    %v2096 = vadd.f32 0.0, %v2095
    %2097 = vmatmul.f32.gmra.mxu0 %v1554
    %v2098 = vpop.f32.mrf.mxu0
    %v2099 = vadd.f32 0.0, %v2098
    %2100 = vmatmul.f32.gmra.mxu0 %v1557
    %v2101 = vpop.f32.mrf.mxu0
    %v2102 = vadd.f32 0.0, %v2101
    %2103 = vmatmul.f32.gmra.mxu0 %v1560
    %v2104 = vpop.f32.mrf.mxu0
    %v2105 = vadd.f32 0.0, %v2104
    %2106 = vmatmul.f32.gmra.mxu0 %v1563
    %v2107 = vpop.f32.mrf.mxu0
    %v2108 = vadd.f32 0.0, %v2107
    %2109 = vmatmul.f32.gmra.mxu0 %v1566
    %v2110 = vpop.f32.mrf.mxu0
    %v2111 = vadd.f32 0.0, %v2110
    %2112 = vmatmul.f32.gmra.mxu0 %v1569
    %v2113 = vpop.f32.mrf.mxu0
    %v2114 = vadd.f32 0.0, %v2113
    %2115 = vmatmul.f32.gmra.mxu0 %v1572
    %v2116 = vpop.f32.mrf.mxu0
    %v2117 = vadd.f32 0.0, %v2116
    %2118 = vmatmul.f32.gmra.mxu0 %v1575
    %v2119 = vpop.f32.mrf.mxu0
    %v2120 = vadd.f32 0.0, %v2119
    %2121 = vmatmul.f32.gmra.mxu0 %v1578
    %v2122 = vpop.f32.mrf.mxu0
    %v2123 = vadd.f32 0.0, %v2122
    %2124 = vmatmul.f32.gmra.mxu0 %v1581
    %v2125 = vpop.f32.mrf.mxu0
    %v2126 = vadd.f32 0.0, %v2125
    %2127 = vmatmul.f32.gmra.mxu0 %v1584
    %v2128 = vpop.f32.mrf.mxu0
    %v2129 = vadd.f32 0.0, %v2128
    %2130 = vmatmul.f32.gmra.mxu0 %v1587
    %v2131 = vpop.f32.mrf.mxu0
    %v2132 = vadd.f32 0.0, %v2131
    %2133 = vmatmul.f32.gmra.mxu0 %v1590
    %v2134 = vpop.f32.mrf.mxu0
    %v2135 = vadd.f32 0.0, %v2134
    %2136 = vmatmul.f32.gmra.mxu0 %v1593
    %v2137 = vpop.f32.mrf.mxu0
    %v2138 = vadd.f32 0.0, %v2137
    %2139 = vmatmul.f32.gmra.mxu0 %v1596
    %v2140 = vpop.f32.mrf.mxu0
    %v2141 = vadd.f32 0.0, %v2140
    %2142 = vmatmul.f32.gmra.mxu0 %v1599
    %v2143 = vpop.f32.mrf.mxu0
    %v2144 = vadd.f32 0.0, %v2143
    %2145 = vmatmul.f32.gmra.mxu0 %v1602
    %v2146 = vpop.f32.mrf.mxu0
    %v2147 = vadd.f32 0.0, %v2146
    %2148 = vmatmul.f32.gmra.mxu0 %v1605
    %v2149 = vpop.f32.mrf.mxu0
    %v2150 = vadd.f32 0.0, %v2149
    %2151 = vmatmul.f32.gmra.mxu0 %v1608
    %v2152 = vpop.f32.mrf.mxu0
    %v2153 = vadd.f32 0.0, %v2152
    %2154 = vmatmul.f32.gmra.mxu0 %v1611
    %v2155 = vpop.f32.mrf.mxu0
    %v2156 = vadd.f32 0.0, %v2155
    %2157 = vmatmul.f32.gmra.mxu0 %v1614
    %v2158 = vpop.f32.mrf.mxu0
    %v2159 = vadd.f32 0.0, %v2158
    %2160 = vmatmul.f32.gmra.mxu0 %v1617
    %v2161 = vpop.f32.mrf.mxu0
    %v2162 = vadd.f32 0.0, %v2161
    %2163 = vmatmul.f32.gmra.mxu0 %v1620
    %v2164 = vpop.f32.mrf.mxu0
    %v2165 = vadd.f32 0.0, %v2164
    %2166 = vmatmul.f32.gmra.mxu0 %v1623
    %v2167 = vpop.f32.mrf.mxu0
    %v2168 = vadd.f32 0.0, %v2167
    %2169 = vmatmul.f32.gmra.mxu0 %v1626
    %v2170 = vpop.f32.mrf.mxu0
    %v2171 = vadd.f32 0.0, %v2170
    %2172 = vmatmul.f32.gmra.mxu0 %v1629
    %v2173 = vpop.f32.mrf.mxu0
    %v2174 = vadd.f32 0.0, %v2173
    %2175 = vmatmul.f32.gmra.mxu0 %v1632
    %v2176 = vpop.f32.mrf.mxu0
    %v2177 = vadd.f32 0.0, %v2176
    %2178 = vmatmul.f32.gmra.mxu0 %v1635
    %v2179 = vpop.f32.mrf.mxu0
    %v2180 = vadd.f32 0.0, %v2179
    %2181 = vmatmul.f32.gmra.mxu0 %v1638
    %v2182 = vpop.f32.mrf.mxu0
    %v2183 = vadd.f32 0.0, %v2182
    %2184 = vmatmul.f32.gmra.mxu0 %v1641
    %v2185 = vpop.f32.mrf.mxu0
    %v2186 = vadd.f32 0.0, %v2185
    %2187 = vmatmul.f32.gmra.mxu0 %v1644
    %v2188 = vpop.f32.mrf.mxu0
    %v2189 = vadd.f32 0.0, %v2188
    %2190 = vmatmul.f32.gmra.mxu0 %v1647
    %v2191 = vpop.f32.mrf.mxu0
    %v2192 = vadd.f32 0.0, %v2191
    %2193 = vmatmul.f32.gmra.mxu0 %v1650
    %v2194 = vpop.f32.mrf.mxu0
    %v2195 = vadd.f32 0.0, %v2194
    %2196 = vmatmul.f32.gmra.mxu0 %v1653
    %v2197 = vpop.f32.mrf.mxu0
    %v2198 = vadd.f32 0.0, %v2197
    %2199 = vmatmul.f32.gmra.mxu0 %v1656
    %v2200 = vpop.f32.mrf.mxu0
    %v2201 = vadd.f32 0.0, %v2200
    %2202 = vmatmul.f32.gmra.mxu0 %v1659
    %v2203 = vpop.f32.mrf.mxu0
    %v2204 = vadd.f32 0.0, %v2203
    %2205 = vmatmul.f32.gmra.mxu0 %v1662
    %v2206 = vpop.f32.mrf.mxu0
    %v2207 = vadd.f32 0.0, %v2206
    %2208 = vmatmul.f32.gmra.mxu0 %v1665
    %v2209 = vpop.f32.mrf.mxu0
    %v2210 = vadd.f32 0.0, %v2209
    %2211 = vmatmul.f32.gmra.mxu0 %v1668
    %v2212 = vpop.f32.mrf.mxu0
    %v2213 = vadd.f32 0.0, %v2212
    %2214 = vmatmul.f32.gmra.mxu0 %v1671
    %v2215 = vpop.f32.mrf.mxu0
    %v2216 = vadd.f32 0.0, %v2215
    %2217 = vmatmul.f32.gmra.mxu0 %v1674
    %v2218 = vpop.f32.mrf.mxu0
    %v2219 = vadd.f32 0.0, %v2218
    %2220 = vmatmul.f32.gmra.mxu0 %v1677
    %v2221 = vpop.f32.mrf.mxu0
    %v2222 = vadd.f32 0.0, %v2221
    %2223 = vmatmul.f32.gmra.mxu0 %v1680
    %v2224 = vpop.f32.mrf.mxu0
    %v2225 = vadd.f32 0.0, %v2224
    %2226 = vmatmul.f32.gmra.mxu0 %v1683
    %v2227 = vpop.f32.mrf.mxu0
    %v2228 = vadd.f32 0.0, %v2227
    %2229 = vmatmul.f32.gmra.mxu0 %v1686
    %v2230 = vpop.f32.mrf.mxu0
    %v2231 = vadd.f32 0.0, %v2230
    %2232 = vmatmul.f32.gmra.mxu0 %v1689
    %v2233 = vpop.f32.mrf.mxu0
    %v2234 = vadd.f32 0.0, %v2233
    %2235 = vmatmul.f32.gmra.mxu0 %v1692
    %v2236 = vpop.f32.mrf.mxu0
    %v2237 = vadd.f32 0.0, %v2236
    %2238 = vmatmul.f32.gmra.mxu0 %v1695
    %v2239 = vpop.f32.mrf.mxu0
    %v2240 = vadd.f32 0.0, %v2239
    %2241 = vmatmul.f32.gmra.mxu0 %v1698
    %v2242 = vpop.f32.mrf.mxu0
    %v2243 = vadd.f32 0.0, %v2242
    %2244 = vmatmul.f32.gmra.mxu0 %v1701
    %v2245 = vpop.f32.mrf.mxu0
    %v2246 = vadd.f32 0.0, %v2245
    %2247 = vmatmul.f32.gmra.mxu0 %v1704
    %v2248 = vpop.f32.mrf.mxu0
    %v2249 = vadd.f32 0.0, %v2248
    %2250 = vmatmul.f32.gmra.mxu0 %v1707
    %v2251 = vpop.f32.mrf.mxu0
    %v2252 = vadd.f32 0.0, %v2251
    %2253 = vmatmul.f32.gmra.mxu0 %v1710
    %v2254 = vpop.f32.mrf.mxu0
    %v2255 = vadd.f32 0.0, %v2254
    %2256 = vmatmul.f32.gmra.mxu0 %v1713
    %v2257 = vpop.f32.mrf.mxu0
    %v2258 = vadd.f32 0.0, %v2257
    %2259 = vmatmul.f32.gmra.mxu0 %v1716
    %v2260 = vpop.f32.mrf.mxu0
    %v2261 = vadd.f32 0.0, %v2260
    %2262 = vmatmul.f32.gmra.mxu0 %v1719
    %v2263 = vpop.f32.mrf.mxu0
    %v2264 = vadd.f32 0.0, %v2263
    %2265 = vmatmul.f32.gmra.mxu0 %v1722
    %v2266 = vpop.f32.mrf.mxu0
    %v2267 = vadd.f32 0.0, %v2266
    %2268 = vmatmul.f32.gmra.mxu0 %v1725
    %v2269 = vpop.f32.mrf.mxu0
    %v2270 = vadd.f32 0.0, %v2269
    %2271 = vmatmul.f32.gmra.mxu0 %v1728
    %v2272 = vpop.f32.mrf.mxu0
    %v2273 = vadd.f32 0.0, %v2272
    %2274 = vmatmul.f32.gmra.mxu0 %v1731
    %v2275 = vpop.f32.mrf.mxu0
    %v2276 = vadd.f32 0.0, %v2275
    %2277 = vmatmul.f32.gmra.mxu0 %v1734
    %v2278 = vpop.f32.mrf.mxu0
    %v2279 = vadd.f32 0.0, %v2278
    %2280 = vmatmul.f32.gmra.mxu0 %v1737
    %v2281 = vpop.f32.mrf.mxu0
    %v2282 = vadd.f32 0.0, %v2281
    %2283 = vdwg.mxu0
    %v2284 = vadd.f32 %v1972, %v2069
    %v2285 = vadd.f32 %v1973, %v2072
    %v2286 = vadd.f32 %v1974, %v2075
    %v2287 = vadd.f32 %v1975, %v2078
    %v2288 = vadd.f32 %v1976, %v2081
    %v2289 = vadd.f32 %v1977, %v2084
    %v2290 = vadd.f32 %v1978, %v2087
    %v2291 = vadd.f32 %v1979, %v2090
    %v2292 = vadd.f32 %v1980, %v2093
    %v2293 = vadd.f32 %v1981, %v2096
    %v2294 = vadd.f32 %v1982, %v2099
    %v2295 = vadd.f32 %v1983, %v2102
    %v2296 = vadd.f32 %v1984, %v2105
    %v2297 = vadd.f32 %v1985, %v2108
    %v2298 = vadd.f32 %v1986, %v2111
    %v2299 = vadd.f32 %v1987, %v2114
    %v2300 = vadd.f32 %v1988, %v2117
    %v2301 = vadd.f32 %v1989, %v2120
    %v2302 = vadd.f32 %v1990, %v2123
    %v2303 = vadd.f32 %v1991, %v2126
    %v2304 = vadd.f32 %v1992, %v2129
    %v2305 = vadd.f32 %v1993, %v2132
    %v2306 = vadd.f32 %v1994, %v2135
    %v2307 = vadd.f32 %v1995, %v2138
    %v2308 = vadd.f32 %v1996, %v2141
    %v2309 = vadd.f32 %v1997, %v2144
    %v2310 = vadd.f32 %v1998, %v2147
    %v2311 = vadd.f32 %v1999, %v2150
    %v2312 = vadd.f32 %v2000, %v2153
    %v2313 = vadd.f32 %v2001, %v2156
    %v2314 = vadd.f32 %v2002, %v2159
    %v2315 = vadd.f32 %v2003, %v2162
    %v2316 = vadd.f32 %v2004, %v2165
    %v2317 = vadd.f32 %v2005, %v2168
    %v2318 = vadd.f32 %v2006, %v2171
    %v2319 = vadd.f32 %v2007, %v2174
    %v2320 = vadd.f32 %v2008, %v2177
    %v2321 = vadd.f32 %v2009, %v2180
    %v2322 = vadd.f32 %v2010, %v2183
    %v2323 = vadd.f32 %v2011, %v2186
    %v2324 = vadd.f32 %v2012, %v2189
    %v2325 = vadd.f32 %v2013, %v2192
    %v2326 = vadd.f32 %v2014, %v2195
    %v2327 = vadd.f32 %v2015, %v2198
    %v2328 = vadd.f32 %v2016, %v2201
    %v2329 = vadd.f32 %v2017, %v2204
    %v2330 = vadd.f32 %v2018, %v2207
    %v2331 = vadd.f32 %v2019, %v2210
    %v2332 = vadd.f32 %v2020, %v2213
    %v2333 = vadd.f32 %v2021, %v2216
    %v2334 = vadd.f32 %v2022, %v2219
    %v2335 = vadd.f32 %v2023, %v2222
    %v2336 = vadd.f32 %v2024, %v2225
    %v2337 = vadd.f32 %v2025, %v2228
    %v2338 = vadd.f32 %v2026, %v2231
    %v2339 = vadd.f32 %v2027, %v2234
    %v2340 = vadd.f32 %v2028, %v2237
    %v2341 = vadd.f32 %v2029, %v2240
    %v2342 = vadd.f32 %v2030, %v2243
    %v2343 = vadd.f32 %v2031, %v2246
    %v2344 = vadd.f32 %v2032, %v2249
    %v2345 = vadd.f32 %v2033, %v2252
    %v2346 = vadd.f32 %v2034, %v2255
    %v2347 = vadd.f32 %v2035, %v2258
    %v2348 = vadd.f32 %v2036, %v2261
    %v2349 = vadd.f32 %v2037, %v2264
    %v2350 = vadd.f32 %v2038, %v2267
    %v2351 = vadd.f32 %v2039, %v2270
    %v2352 = vadd.f32 %v2040, %v2273
    %v2353 = vadd.f32 %v2041, %v2276
    %v2354 = vadd.f32 %v2042, %v2279
    %v2355 = vadd.f32 %v2043, %v2282
    %s2356 = scalar_lea.vmem %s3, 96
    %v2357 = vld [vmem:[%s2356] sm:$0xff]
    %v2358 = vld [vmem:[%s2356 + $0x8] sm:$0xff]
    %v2359 = vld [vmem:[%s2356 + $0x10] sm:$0xff]
    %v2360 = vld [vmem:[%s2356 + $0x18] sm:$0xff]
    %v2361 = vld [vmem:[%s2356 + $0x20] sm:$0xff]
    %v2362 = vld [vmem:[%s2356 + $0x28] sm:$0xff]
    %2363 = vmatpush.msra.mxu0 0.0
    %2364 = vmatpush.msra.mxu0 0.0
    %2365 = vmatpush.msra.mxu0 0.0
    %2366 = vmatpush.msra.mxu0 0.0
    %2367 = vmatpush.msra.mxu0 0.0
    %2368 = vmatpush.msra.mxu0 0.0
    %2369 = vmatpush.msra.mxu0 0.0
    %2370 = vmatpush.msra.mxu0 0.0
    %2371 = vmatpush.msra.mxu0 0.0
    %2372 = vmatpush.msra.mxu0 0.0
    %2373 = vmatpush.msra.mxu0 %v2362
    %2374 = vmatpush.msra.mxu0 %v2361
    %2375 = vmatpush.msra.mxu0 %v2360
    %2376 = vmatpush.msra.mxu0 %v2359
    %2377 = vmatpush.msra.mxu0 %v2358
    %2378 = vmatpush.msra.mxu0 %v2357
    %2379 = vmatmul.f32.gmra.mxu0 %v1524
    %v2380 = vpop.f32.mrf.mxu0
    %v2381 = vadd.f32 0.0, %v2380
    %2382 = vmatmul.f32.gmra.mxu0 %v1527
    %v2383 = vpop.f32.mrf.mxu0
    %v2384 = vadd.f32 0.0, %v2383
    %2385 = vmatmul.f32.gmra.mxu0 %v1530
    %v2386 = vpop.f32.mrf.mxu0
    %v2387 = vadd.f32 0.0, %v2386
    %2388 = vmatmul.f32.gmra.mxu0 %v1533
    %v2389 = vpop.f32.mrf.mxu0
    %v2390 = vadd.f32 0.0, %v2389
    %2391 = vmatmul.f32.gmra.mxu0 %v1536
    %v2392 = vpop.f32.mrf.mxu0
    %v2393 = vadd.f32 0.0, %v2392
    %2394 = vmatmul.f32.gmra.mxu0 %v1539
    %v2395 = vpop.f32.mrf.mxu0
    %v2396 = vadd.f32 0.0, %v2395
    %2397 = vmatmul.f32.gmra.mxu0 %v1542
    %v2398 = vpop.f32.mrf.mxu0
    %v2399 = vadd.f32 0.0, %v2398
    %2400 = vmatmul.f32.gmra.mxu0 %v1545
    %v2401 = vpop.f32.mrf.mxu0
    %v2402 = vadd.f32 0.0, %v2401
    %2403 = vmatmul.f32.gmra.mxu0 %v1548
    %v2404 = vpop.f32.mrf.mxu0
    %v2405 = vadd.f32 0.0, %v2404
    %2406 = vmatmul.f32.gmra.mxu0 %v1551
    %v2407 = vpop.f32.mrf.mxu0
    %v2408 = vadd.f32 0.0, %v2407
    %2409 = vmatmul.f32.gmra.mxu0 %v1554
    %v2410 = vpop.f32.mrf.mxu0
    %v2411 = vadd.f32 0.0, %v2410
    %2412 = vmatmul.f32.gmra.mxu0 %v1557
    %v2413 = vpop.f32.mrf.mxu0
    %v2414 = vadd.f32 0.0, %v2413
    %2415 = vmatmul.f32.gmra.mxu0 %v1560
    %v2416 = vpop.f32.mrf.mxu0
    %v2417 = vadd.f32 0.0, %v2416
    %2418 = vmatmul.f32.gmra.mxu0 %v1563
    %v2419 = vpop.f32.mrf.mxu0
    %v2420 = vadd.f32 0.0, %v2419
    %2421 = vmatmul.f32.gmra.mxu0 %v1566
    %v2422 = vpop.f32.mrf.mxu0
    %v2423 = vadd.f32 0.0, %v2422
    %2424 = vmatmul.f32.gmra.mxu0 %v1569
    %v2425 = vpop.f32.mrf.mxu0
    %v2426 = vadd.f32 0.0, %v2425
    %2427 = vmatmul.f32.gmra.mxu0 %v1572
    %v2428 = vpop.f32.mrf.mxu0
    %v2429 = vadd.f32 0.0, %v2428
    %2430 = vmatmul.f32.gmra.mxu0 %v1575
    %v2431 = vpop.f32.mrf.mxu0
    %v2432 = vadd.f32 0.0, %v2431
    %2433 = vmatmul.f32.gmra.mxu0 %v1578
    %v2434 = vpop.f32.mrf.mxu0
    %v2435 = vadd.f32 0.0, %v2434
    %2436 = vmatmul.f32.gmra.mxu0 %v1581
    %v2437 = vpop.f32.mrf.mxu0
    %v2438 = vadd.f32 0.0, %v2437
    %2439 = vmatmul.f32.gmra.mxu0 %v1584
    %v2440 = vpop.f32.mrf.mxu0
    %v2441 = vadd.f32 0.0, %v2440
    %2442 = vmatmul.f32.gmra.mxu0 %v1587
    %v2443 = vpop.f32.mrf.mxu0
    %v2444 = vadd.f32 0.0, %v2443
    %2445 = vmatmul.f32.gmra.mxu0 %v1590
    %v2446 = vpop.f32.mrf.mxu0
    %v2447 = vadd.f32 0.0, %v2446
    %2448 = vmatmul.f32.gmra.mxu0 %v1593
    %v2449 = vpop.f32.mrf.mxu0
    %v2450 = vadd.f32 0.0, %v2449
    %2451 = vmatmul.f32.gmra.mxu0 %v1596
    %v2452 = vpop.f32.mrf.mxu0
    %v2453 = vadd.f32 0.0, %v2452
    %2454 = vmatmul.f32.gmra.mxu0 %v1599
    %v2455 = vpop.f32.mrf.mxu0
    %v2456 = vadd.f32 0.0, %v2455
    %2457 = vmatmul.f32.gmra.mxu0 %v1602
    %v2458 = vpop.f32.mrf.mxu0
    %v2459 = vadd.f32 0.0, %v2458
    %2460 = vmatmul.f32.gmra.mxu0 %v1605
    %v2461 = vpop.f32.mrf.mxu0
    %v2462 = vadd.f32 0.0, %v2461
    %2463 = vmatmul.f32.gmra.mxu0 %v1608
    %v2464 = vpop.f32.mrf.mxu0
    %v2465 = vadd.f32 0.0, %v2464
    %2466 = vmatmul.f32.gmra.mxu0 %v1611
    %v2467 = vpop.f32.mrf.mxu0
    %v2468 = vadd.f32 0.0, %v2467
    %2469 = vmatmul.f32.gmra.mxu0 %v1614
    %v2470 = vpop.f32.mrf.mxu0
    %v2471 = vadd.f32 0.0, %v2470
    %2472 = vmatmul.f32.gmra.mxu0 %v1617
    %v2473 = vpop.f32.mrf.mxu0
    %v2474 = vadd.f32 0.0, %v2473
    %2475 = vmatmul.f32.gmra.mxu0 %v1620
    %v2476 = vpop.f32.mrf.mxu0
    %v2477 = vadd.f32 0.0, %v2476
    %2478 = vmatmul.f32.gmra.mxu0 %v1623
    %v2479 = vpop.f32.mrf.mxu0
    %v2480 = vadd.f32 0.0, %v2479
    %2481 = vmatmul.f32.gmra.mxu0 %v1626
    %v2482 = vpop.f32.mrf.mxu0
    %v2483 = vadd.f32 0.0, %v2482
    %2484 = vmatmul.f32.gmra.mxu0 %v1629
    %v2485 = vpop.f32.mrf.mxu0
    %v2486 = vadd.f32 0.0, %v2485
    %2487 = vmatmul.f32.gmra.mxu0 %v1632
    %v2488 = vpop.f32.mrf.mxu0
    %v2489 = vadd.f32 0.0, %v2488
    %2490 = vmatmul.f32.gmra.mxu0 %v1635
    %v2491 = vpop.f32.mrf.mxu0
    %v2492 = vadd.f32 0.0, %v2491
    %2493 = vmatmul.f32.gmra.mxu0 %v1638
    %v2494 = vpop.f32.mrf.mxu0
    %v2495 = vadd.f32 0.0, %v2494
    %2496 = vmatmul.f32.gmra.mxu0 %v1641
    %v2497 = vpop.f32.mrf.mxu0
    %v2498 = vadd.f32 0.0, %v2497
    %2499 = vmatmul.f32.gmra.mxu0 %v1644
    %v2500 = vpop.f32.mrf.mxu0
    %v2501 = vadd.f32 0.0, %v2500
    %2502 = vmatmul.f32.gmra.mxu0 %v1647
    %v2503 = vpop.f32.mrf.mxu0
    %v2504 = vadd.f32 0.0, %v2503
    %2505 = vmatmul.f32.gmra.mxu0 %v1650
    %v2506 = vpop.f32.mrf.mxu0
    %v2507 = vadd.f32 0.0, %v2506
    %2508 = vmatmul.f32.gmra.mxu0 %v1653
    %v2509 = vpop.f32.mrf.mxu0
    %v2510 = vadd.f32 0.0, %v2509
    %2511 = vmatmul.f32.gmra.mxu0 %v1656
    %v2512 = vpop.f32.mrf.mxu0
    %v2513 = vadd.f32 0.0, %v2512
    %2514 = vmatmul.f32.gmra.mxu0 %v1659
    %v2515 = vpop.f32.mrf.mxu0
    %v2516 = vadd.f32 0.0, %v2515
    %2517 = vmatmul.f32.gmra.mxu0 %v1662
    %v2518 = vpop.f32.mrf.mxu0
    %v2519 = vadd.f32 0.0, %v2518
    %2520 = vmatmul.f32.gmra.mxu0 %v1665
    %v2521 = vpop.f32.mrf.mxu0
    %v2522 = vadd.f32 0.0, %v2521
    %2523 = vmatmul.f32.gmra.mxu0 %v1668
    %v2524 = vpop.f32.mrf.mxu0
    %v2525 = vadd.f32 0.0, %v2524
    %2526 = vmatmul.f32.gmra.mxu0 %v1671
    %v2527 = vpop.f32.mrf.mxu0
    %v2528 = vadd.f32 0.0, %v2527
    %2529 = vmatmul.f32.gmra.mxu0 %v1674
    %v2530 = vpop.f32.mrf.mxu0
    %v2531 = vadd.f32 0.0, %v2530
    %2532 = vmatmul.f32.gmra.mxu0 %v1677
    %v2533 = vpop.f32.mrf.mxu0
    %v2534 = vadd.f32 0.0, %v2533
    %2535 = vmatmul.f32.gmra.mxu0 %v1680
    %v2536 = vpop.f32.mrf.mxu0
    %v2537 = vadd.f32 0.0, %v2536
    %2538 = vmatmul.f32.gmra.mxu0 %v1683
    %v2539 = vpop.f32.mrf.mxu0
    %v2540 = vadd.f32 0.0, %v2539
    %2541 = vmatmul.f32.gmra.mxu0 %v1686
    %v2542 = vpop.f32.mrf.mxu0
    %v2543 = vadd.f32 0.0, %v2542
    %2544 = vmatmul.f32.gmra.mxu0 %v1689
    %v2545 = vpop.f32.mrf.mxu0
    %v2546 = vadd.f32 0.0, %v2545
    %2547 = vmatmul.f32.gmra.mxu0 %v1692
    %v2548 = vpop.f32.mrf.mxu0
    %v2549 = vadd.f32 0.0, %v2548
    %2550 = vmatmul.f32.gmra.mxu0 %v1695
    %v2551 = vpop.f32.mrf.mxu0
    %v2552 = vadd.f32 0.0, %v2551
    %2553 = vmatmul.f32.gmra.mxu0 %v1698
    %v2554 = vpop.f32.mrf.mxu0
    %v2555 = vadd.f32 0.0, %v2554
    %2556 = vmatmul.f32.gmra.mxu0 %v1701
    %v2557 = vpop.f32.mrf.mxu0
    %v2558 = vadd.f32 0.0, %v2557
    %2559 = vmatmul.f32.gmra.mxu0 %v1704
    %v2560 = vpop.f32.mrf.mxu0
    %v2561 = vadd.f32 0.0, %v2560
    %2562 = vmatmul.f32.gmra.mxu0 %v1707
    %v2563 = vpop.f32.mrf.mxu0
    %v2564 = vadd.f32 0.0, %v2563
    %2565 = vmatmul.f32.gmra.mxu0 %v1710
    %v2566 = vpop.f32.mrf.mxu0
    %v2567 = vadd.f32 0.0, %v2566
    %2568 = vmatmul.f32.gmra.mxu0 %v1713
    %v2569 = vpop.f32.mrf.mxu0
    %v2570 = vadd.f32 0.0, %v2569
    %2571 = vmatmul.f32.gmra.mxu0 %v1716
    %v2572 = vpop.f32.mrf.mxu0
    %v2573 = vadd.f32 0.0, %v2572
    %2574 = vmatmul.f32.gmra.mxu0 %v1719
    %v2575 = vpop.f32.mrf.mxu0
    %v2576 = vadd.f32 0.0, %v2575
    %2577 = vmatmul.f32.gmra.mxu0 %v1722
    %v2578 = vpop.f32.mrf.mxu0
    %v2579 = vadd.f32 0.0, %v2578
    %2580 = vmatmul.f32.gmra.mxu0 %v1725
    %v2581 = vpop.f32.mrf.mxu0
    %v2582 = vadd.f32 0.0, %v2581
    %2583 = vmatmul.f32.gmra.mxu0 %v1728
    %v2584 = vpop.f32.mrf.mxu0
    %v2585 = vadd.f32 0.0, %v2584
    %2586 = vmatmul.f32.gmra.mxu0 %v1731
    %v2587 = vpop.f32.mrf.mxu0
    %v2588 = vadd.f32 0.0, %v2587
    %2589 = vmatmul.f32.gmra.mxu0 %v1734
    %v2590 = vpop.f32.mrf.mxu0
    %v2591 = vadd.f32 0.0, %v2590
    %2592 = vmatmul.f32.gmra.mxu0 %v1737
    %v2593 = vpop.f32.mrf.mxu0
    %v2594 = vadd.f32 0.0, %v2593
    %2595 = vdwg.mxu0
    %v2596 = vadd.f32 %v2284, %v2384
    %v2597 = vadd.f32 %v2285, %v2387
    %v2598 = vadd.f32 %v2286, %v2390
    %v2599 = vadd.f32 %v2287, %v2393
    %v2600 = vadd.f32 %v2288, %v2396
    %v2601 = vadd.f32 %v2289, %v2399
    %v2602 = vadd.f32 %v2290, %v2402
    %v2603 = vadd.f32 %v2291, %v2405
    %v2604 = vadd.f32 %v2292, %v2408
    %v2605 = vadd.f32 %v2293, %v2411
    %v2606 = vadd.f32 %v2294, %v2414
    %v2607 = vadd.f32 %v2295, %v2417
    %v2608 = vadd.f32 %v2296, %v2420
    %v2609 = vadd.f32 %v2297, %v2423
    %v2610 = vadd.f32 %v2298, %v2426
    %v2611 = vadd.f32 %v2299, %v2429
    %v2612 = vadd.f32 %v2300, %v2432
    %v2613 = vadd.f32 %v2301, %v2435
    %v2614 = vadd.f32 %v2302, %v2438
    %v2615 = vadd.f32 %v2303, %v2441
    %v2616 = vadd.f32 %v2304, %v2444
    %v2617 = vadd.f32 %v2305, %v2447
    %v2618 = vadd.f32 %v2306, %v2450
    %v2619 = vadd.f32 %v2307, %v2453
    %v2620 = vadd.f32 %v2308, %v2456
    %v2621 = vadd.f32 %v2309, %v2459
    %v2622 = vadd.f32 %v2310, %v2462
    %v2623 = vadd.f32 %v2311, %v2465
    %v2624 = vadd.f32 %v2312, %v2468
    %v2625 = vadd.f32 %v2313, %v2471
    %v2626 = vadd.f32 %v2314, %v2474
    %v2627 = vadd.f32 %v2315, %v2477
    %v2628 = vadd.f32 %v2316, %v2480
    %v2629 = vadd.f32 %v2317, %v2483
    %v2630 = vadd.f32 %v2318, %v2486
    %v2631 = vadd.f32 %v2319, %v2489
    %v2632 = vadd.f32 %v2320, %v2492
    %v2633 = vadd.f32 %v2321, %v2495
    %v2634 = vadd.f32 %v2322, %v2498
    %v2635 = vadd.f32 %v2323, %v2501
    %v2636 = vadd.f32 %v2324, %v2504
    %v2637 = vadd.f32 %v2325, %v2507
    %v2638 = vadd.f32 %v2326, %v2510
    %v2639 = vadd.f32 %v2327, %v2513
    %v2640 = vadd.f32 %v2328, %v2516
    %v2641 = vadd.f32 %v2329, %v2519
    %v2642 = vadd.f32 %v2330, %v2522
    %v2643 = vadd.f32 %v2331, %v2525
    %v2644 = vadd.f32 %v2332, %v2528
    %v2645 = vadd.f32 %v2333, %v2531
    %v2646 = vadd.f32 %v2334, %v2534
    %v2647 = vadd.f32 %v2335, %v2537
    %v2648 = vadd.f32 %v2336, %v2540
    %v2649 = vadd.f32 %v2337, %v2543
    %v2650 = vadd.f32 %v2338, %v2546
    %v2651 = vadd.f32 %v2339, %v2549
    %v2652 = vadd.f32 %v2340, %v2552
    %v2653 = vadd.f32 %v2341, %v2555
    %v2654 = vadd.f32 %v2342, %v2558
    %v2655 = vadd.f32 %v2343, %v2561
    %v2656 = vadd.f32 %v2344, %v2564
    %v2657 = vadd.f32 %v2345, %v2567
    %v2658 = vadd.f32 %v2346, %v2570
    %v2659 = vadd.f32 %v2347, %v2573
    %v2660 = vadd.f32 %v2348, %v2576
    %v2661 = vadd.f32 %v2349, %v2579
    %v2662 = vadd.f32 %v2350, %v2582
    %v2663 = vadd.f32 %v2351, %v2585
    %v2664 = vadd.f32 %v2352, %v2588
    %v2665 = vadd.f32 %v2353, %v2591
    %v2666 = vadd.f32 %v2354, %v2594
    %v2667 = vadd.f32 %v2355, %v2381
    %v2668 = vld [vmem:[#allocation7] sm:$0x1]
    %v2670 = vperm.slane %v2668, 0
    %v2672 = vadd.f32 %v2596, %v2670
    %v2673 = vadd.f32 %v2597, %v2670
    %v2674 = vadd.f32 %v2598, %v2670
    %v2675 = vadd.f32 %v2599, %v2670
    %v2676 = vadd.f32 %v2600, %v2670
    %v2677 = vadd.f32 %v2601, %v2670
    %v2678 = vadd.f32 %v2602, %v2670
    %v2679 = vadd.f32 %v2603, %v2670
    %v2680 = vadd.f32 %v2604, %v2670
    %v2681 = vadd.f32 %v2605, %v2670
    %v2682 = vadd.f32 %v2606, %v2670
    %v2683 = vadd.f32 %v2607, %v2670
    %v2684 = vadd.f32 %v2608, %v2670
    %v2685 = vadd.f32 %v2609, %v2670
    %v2686 = vadd.f32 %v2610, %v2670
    %v2687 = vadd.f32 %v2611, %v2670
    %v2688 = vadd.f32 %v2612, %v2670
    %v2689 = vadd.f32 %v2613, %v2670
    %v2690 = vadd.f32 %v2614, %v2670
    %v2691 = vadd.f32 %v2615, %v2670
    %v2692 = vadd.f32 %v2616, %v2670
    %v2693 = vadd.f32 %v2617, %v2670
    %v2694 = vadd.f32 %v2618, %v2670
    %v2695 = vadd.f32 %v2619, %v2670
    %v2696 = vadd.f32 %v2620, %v2670
    %v2697 = vadd.f32 %v2621, %v2670
    %v2698 = vadd.f32 %v2622, %v2670
    %v2699 = vadd.f32 %v2623, %v2670
    %v2700 = vadd.f32 %v2624, %v2670
    %v2701 = vadd.f32 %v2625, %v2670
    %v2702 = vadd.f32 %v2626, %v2670
    %v2703 = vadd.f32 %v2627, %v2670
    %v2704 = vadd.f32 %v2628, %v2670
    %v2705 = vadd.f32 %v2629, %v2670
    %v2706 = vadd.f32 %v2630, %v2670
    %v2707 = vadd.f32 %v2631, %v2670
    %v2708 = vadd.f32 %v2632, %v2670
    %v2709 = vadd.f32 %v2633, %v2670
    %v2710 = vadd.f32 %v2634, %v2670
    %v2711 = vadd.f32 %v2635, %v2670
    %v2712 = vadd.f32 %v2636, %v2670
    %v2713 = vadd.f32 %v2637, %v2670
    %v2714 = vadd.f32 %v2638, %v2670
    %v2715 = vadd.f32 %v2639, %v2670
    %v2716 = vadd.f32 %v2640, %v2670
    %v2717 = vadd.f32 %v2641, %v2670
    %v2718 = vadd.f32 %v2642, %v2670
    %v2719 = vadd.f32 %v2643, %v2670
    %v2720 = vadd.f32 %v2644, %v2670
    %v2721 = vadd.f32 %v2645, %v2670
    %v2722 = vadd.f32 %v2646, %v2670
    %v2723 = vadd.f32 %v2647, %v2670
    %v2724 = vadd.f32 %v2648, %v2670
    %v2725 = vadd.f32 %v2649, %v2670
    %v2726 = vadd.f32 %v2650, %v2670
    %v2727 = vadd.f32 %v2651, %v2670
    %v2728 = vadd.f32 %v2652, %v2670
    %v2729 = vadd.f32 %v2653, %v2670
    %v2730 = vadd.f32 %v2654, %v2670
    %v2731 = vadd.f32 %v2655, %v2670
    %v2732 = vadd.f32 %v2656, %v2670
    %v2733 = vadd.f32 %v2657, %v2670
    %v2734 = vadd.f32 %v2658, %v2670
    %v2735 = vadd.f32 %v2659, %v2670
    %v2736 = vadd.f32 %v2660, %v2670
    %v2737 = vadd.f32 %v2661, %v2670
    %v2738 = vadd.f32 %v2662, %v2670
    %v2739 = vadd.f32 %v2663, %v2670
    %v2740 = vadd.f32 %v2664, %v2670
    %v2741 = vadd.f32 %v2665, %v2670
    %v2742 = vadd.f32 %v2666, %v2670
    %v2743 = vadd.f32 %v2667, %v2670
    %v2744 = vmax.f32 %v2672, 0.0
    %v2745 = vmax.f32 %v2673, 0.0
    %v2746 = vmax.f32 %v2674, 0.0
    %v2747 = vmax.f32 %v2675, 0.0
    %v2748 = vmax.f32 %v2676, 0.0
    %v2749 = vmax.f32 %v2677, 0.0
    %v2750 = vmax.f32 %v2678, 0.0
    %v2751 = vmax.f32 %v2679, 0.0
    %v2752 = vmax.f32 %v2680, 0.0
    %v2753 = vmax.f32 %v2681, 0.0
    %v2754 = vmax.f32 %v2682, 0.0
    %v2755 = vmax.f32 %v2683, 0.0
    %v2756 = vmax.f32 %v2684, 0.0
    %v2757 = vmax.f32 %v2685, 0.0
    %v2758 = vmax.f32 %v2686, 0.0
    %v2759 = vmax.f32 %v2687, 0.0
    %v2760 = vmax.f32 %v2688, 0.0
    %v2761 = vmax.f32 %v2689, 0.0
    %v2762 = vmax.f32 %v2690, 0.0
    %v2763 = vmax.f32 %v2691, 0.0
    %v2764 = vmax.f32 %v2692, 0.0
    %v2765 = vmax.f32 %v2693, 0.0
    %v2766 = vmax.f32 %v2694, 0.0
    %v2767 = vmax.f32 %v2695, 0.0
    %v2768 = vmax.f32 %v2696, 0.0
    %v2769 = vmax.f32 %v2697, 0.0
    %v2770 = vmax.f32 %v2698, 0.0
    %v2771 = vmax.f32 %v2699, 0.0
    %v2772 = vmax.f32 %v2700, 0.0
    %v2773 = vmax.f32 %v2701, 0.0
    %v2774 = vmax.f32 %v2702, 0.0
    %v2775 = vmax.f32 %v2703, 0.0
    %v2776 = vmax.f32 %v2704, 0.0
    %v2777 = vmax.f32 %v2705, 0.0
    %v2778 = vmax.f32 %v2706, 0.0
    %v2779 = vmax.f32 %v2707, 0.0
    %v2780 = vmax.f32 %v2708, 0.0
    %v2781 = vmax.f32 %v2709, 0.0
    %v2782 = vmax.f32 %v2710, 0.0
    %v2783 = vmax.f32 %v2711, 0.0
    %v2784 = vmax.f32 %v2712, 0.0
    %v2785 = vmax.f32 %v2713, 0.0
    %v2786 = vmax.f32 %v2714, 0.0
    %v2787 = vmax.f32 %v2715, 0.0
    %v2788 = vmax.f32 %v2716, 0.0
    %v2789 = vmax.f32 %v2717, 0.0
    %v2790 = vmax.f32 %v2718, 0.0
    %v2791 = vmax.f32 %v2719, 0.0
    %v2792 = vmax.f32 %v2720, 0.0
    %v2793 = vmax.f32 %v2721, 0.0
    %v2794 = vmax.f32 %v2722, 0.0
    %v2795 = vmax.f32 %v2723, 0.0
    %v2796 = vmax.f32 %v2724, 0.0
    %v2797 = vmax.f32 %v2725, 0.0
    %v2798 = vmax.f32 %v2726, 0.0
    %v2799 = vmax.f32 %v2727, 0.0
    %v2800 = vmax.f32 %v2728, 0.0
    %v2801 = vmax.f32 %v2729, 0.0
    %v2802 = vmax.f32 %v2730, 0.0
    %v2803 = vmax.f32 %v2731, 0.0
    %v2804 = vmax.f32 %v2732, 0.0
    %v2805 = vmax.f32 %v2733, 0.0
    %v2806 = vmax.f32 %v2734, 0.0
    %v2807 = vmax.f32 %v2735, 0.0
    %v2808 = vmax.f32 %v2736, 0.0
    %v2809 = vmax.f32 %v2737, 0.0
    %v2810 = vmax.f32 %v2738, 0.0
    %v2811 = vmax.f32 %v2739, 0.0
    %v2812 = vmax.f32 %v2740, 0.0
    %v2813 = vmax.f32 %v2741, 0.0
    %v2814 = vmax.f32 %v2742, 0.0
    %v2815 = vmax.f32 %v2743, 0.0
    %v2816 = vmul.f32 %v2744, %v188
    %v2817 = vmul.f32 %v2745, %v188
    %v2818 = vmul.f32 %v2746, %v188
    %v2819 = vmul.f32 %v2747, %v188
    %v2820 = vmul.f32 %v2748, %v188
    %v2821 = vmul.f32 %v2749, %v188
    %v2822 = vmul.f32 %v2750, %v188
    %v2823 = vmul.f32 %v2751, %v188
    %v2824 = vmul.f32 %v2752, %v188
    %v2825 = vmul.f32 %v2753, %v188
    %v2826 = vmul.f32 %v2754, %v189
    %v2827 = vmul.f32 %v2755, %v189
    %v2828 = vmul.f32 %v2756, %v189
    %v2829 = vmul.f32 %v2757, %v189
    %v2830 = vmul.f32 %v2758, %v189
    %v2831 = vmul.f32 %v2759, %v189
    %v2832 = vmul.f32 %v2760, %v189
    %v2833 = vmul.f32 %v2761, %v188
    %v2834 = vmul.f32 %v2762, %v188
    %v2835 = vmul.f32 %v2763, %v189
    %v2836 = vmul.f32 %v2764, %v189
    %v2837 = vmul.f32 %v2765, %v189
    %v2838 = vmul.f32 %v2766, %v189
    %v2839 = vmul.f32 %v2767, %v189
    %v2840 = vmul.f32 %v2768, %v189
    %v2841 = vmul.f32 %v2769, %v189
    %v2842 = vmul.f32 %v2770, %v188
    %v2843 = vmul.f32 %v2771, %v188
    %v2844 = vmul.f32 %v2772, %v189
    %v2845 = vmul.f32 %v2773, %v189
    %v2846 = vmul.f32 %v2774, %v189
    %v2847 = vmul.f32 %v2775, %v189
    %v2848 = vmul.f32 %v2776, %v189
    %v2849 = vmul.f32 %v2777, %v189
    %v2850 = vmul.f32 %v2778, %v189
    %v2851 = vmul.f32 %v2779, %v188
    %v2852 = vmul.f32 %v2780, %v188
    %v2853 = vmul.f32 %v2781, %v189
    %v2854 = vmul.f32 %v2782, %v189
    %v2855 = vmul.f32 %v2783, %v189
    %v2856 = vmul.f32 %v2784, %v189
    %v2857 = vmul.f32 %v2785, %v189
    %v2858 = vmul.f32 %v2786, %v189
    %v2859 = vmul.f32 %v2787, %v189
    %v2860 = vmul.f32 %v2788, %v188
    %v2861 = vmul.f32 %v2789, %v188
    %v2862 = vmul.f32 %v2790, %v189
    %v2863 = vmul.f32 %v2791, %v189
    %v2864 = vmul.f32 %v2792, %v189
    %v2865 = vmul.f32 %v2793, %v189
    %v2866 = vmul.f32 %v2794, %v189
    %v2867 = vmul.f32 %v2795, %v189
    %v2868 = vmul.f32 %v2796, %v189
    %v2869 = vmul.f32 %v2797, %v188
    %v2870 = vmul.f32 %v2798, %v188
    %v2871 = vmul.f32 %v2799, %v189
    %v2872 = vmul.f32 %v2800, %v189
    %v2873 = vmul.f32 %v2801, %v189
    %v2874 = vmul.f32 %v2802, %v189
    %v2875 = vmul.f32 %v2803, %v189
    %v2876 = vmul.f32 %v2804, %v189
    %v2877 = vmul.f32 %v2805, %v189
    %v2878 = vmul.f32 %v2806, %v188
    %v2879 = vmul.f32 %v2807, %v188
    %v2880 = vmul.f32 %v2808, %v188
    %v2881 = vmul.f32 %v2809, %v188
    %v2882 = vmul.f32 %v2810, %v188
    %v2883 = vmul.f32 %v2811, %v188
    %v2884 = vmul.f32 %v2812, %v188
    %v2885 = vmul.f32 %v2813, %v188
    %v2886 = vmul.f32 %v2814, %v188
    %v2887 = vmul.f32 %v2815, %v188
    %2960 = vrot.lane.b32.xlu0 %v2816, 32
    %v2961 = vpop.permute.xlu0 %2960
    %2962 = vrot.lane.b32.xlu0 %v2817, 32
    %v2963 = vpop.permute.xlu0 %2962
    %2964 = vrot.lane.b32.xlu0 %v2818, 32
    %v2965 = vpop.permute.xlu0 %2964
    %2966 = vrot.lane.b32.xlu0 %v2819, 32
    %v2967 = vpop.permute.xlu0 %2966
    %2968 = vrot.lane.b32.xlu0 %v2820, 32
    %v2969 = vpop.permute.xlu0 %2968
    %2970 = vrot.lane.b32.xlu0 %v2821, 32
    %v2971 = vpop.permute.xlu0 %2970
    %2972 = vrot.lane.b32.xlu0 %v2822, 32
    %v2973 = vpop.permute.xlu0 %2972
    %2974 = vrot.lane.b32.xlu0 %v2823, 32
    %v2975 = vpop.permute.xlu0 %2974
    %2976 = vrot.lane.b32.xlu0 %v2824, 32
    %v2977 = vpop.permute.xlu0 %2976
    %2978 = vrot.lane.b32.xlu0 %v2825, 32
    %v2979 = vpop.permute.xlu0 %2978
    %2980 = vrot.lane.b32.xlu0 %v2826, 32
    %v2981 = vpop.permute.xlu0 %2980
    %2982 = vrot.lane.b32.xlu0 %v2827, 32
    %v2983 = vpop.permute.xlu0 %2982
    %2984 = vrot.lane.b32.xlu0 %v2828, 32
    %v2985 = vpop.permute.xlu0 %2984
    %2986 = vrot.lane.b32.xlu0 %v2829, 32
    %v2987 = vpop.permute.xlu0 %2986
    %2988 = vrot.lane.b32.xlu0 %v2830, 32
    %v2989 = vpop.permute.xlu0 %2988
    %2990 = vrot.lane.b32.xlu0 %v2831, 32
    %v2991 = vpop.permute.xlu0 %2990
    %2992 = vrot.lane.b32.xlu0 %v2832, 32
    %v2993 = vpop.permute.xlu0 %2992
    %2994 = vrot.lane.b32.xlu0 %v2833, 32
    %v2995 = vpop.permute.xlu0 %2994
    %2996 = vrot.lane.b32.xlu0 %v2834, 32
    %v2997 = vpop.permute.xlu0 %2996
    %2998 = vrot.lane.b32.xlu0 %v2835, 32
    %v2999 = vpop.permute.xlu0 %2998
    %3000 = vrot.lane.b32.xlu0 %v2836, 32
    %v3001 = vpop.permute.xlu0 %3000
    %3002 = vrot.lane.b32.xlu0 %v2837, 32
    %v3003 = vpop.permute.xlu0 %3002
    %3004 = vrot.lane.b32.xlu0 %v2838, 32
    %v3005 = vpop.permute.xlu0 %3004
    %3006 = vrot.lane.b32.xlu0 %v2839, 32
    %v3007 = vpop.permute.xlu0 %3006
    %3008 = vrot.lane.b32.xlu0 %v2840, 32
    %v3009 = vpop.permute.xlu0 %3008
    %3010 = vrot.lane.b32.xlu0 %v2841, 32
    %v3011 = vpop.permute.xlu0 %3010
    %3012 = vrot.lane.b32.xlu0 %v2842, 32
    %v3013 = vpop.permute.xlu0 %3012
    %3014 = vrot.lane.b32.xlu0 %v2843, 32
    %v3015 = vpop.permute.xlu0 %3014
    %3016 = vrot.lane.b32.xlu0 %v2844, 32
    %v3017 = vpop.permute.xlu0 %3016
    %3018 = vrot.lane.b32.xlu0 %v2845, 32
    %v3019 = vpop.permute.xlu0 %3018
    %3020 = vrot.lane.b32.xlu0 %v2846, 32
    %v3021 = vpop.permute.xlu0 %3020
    %3022 = vrot.lane.b32.xlu0 %v2847, 32
    %v3023 = vpop.permute.xlu0 %3022
    %3024 = vrot.lane.b32.xlu0 %v2848, 32
    %v3025 = vpop.permute.xlu0 %3024
    %3026 = vrot.lane.b32.xlu0 %v2849, 32
    %v3027 = vpop.permute.xlu0 %3026
    %3028 = vrot.lane.b32.xlu0 %v2850, 32
    %v3029 = vpop.permute.xlu0 %3028
    %3030 = vrot.lane.b32.xlu0 %v2851, 32
    %v3031 = vpop.permute.xlu0 %3030
    %3032 = vrot.lane.b32.xlu0 %v2852, 32
    %v3033 = vpop.permute.xlu0 %3032
    %3034 = vrot.lane.b32.xlu0 %v2853, 32
    %v3035 = vpop.permute.xlu0 %3034
    %3036 = vrot.lane.b32.xlu0 %v2854, 32
    %v3037 = vpop.permute.xlu0 %3036
    %3038 = vrot.lane.b32.xlu0 %v2855, 32
    %v3039 = vpop.permute.xlu0 %3038
    %3040 = vrot.lane.b32.xlu0 %v2856, 32
    %v3041 = vpop.permute.xlu0 %3040
    %3042 = vrot.lane.b32.xlu0 %v2857, 32
    %v3043 = vpop.permute.xlu0 %3042
    %3044 = vrot.lane.b32.xlu0 %v2858, 32
    %v3045 = vpop.permute.xlu0 %3044
    %3046 = vrot.lane.b32.xlu0 %v2859, 32
    %v3047 = vpop.permute.xlu0 %3046
    %3048 = vrot.lane.b32.xlu0 %v2860, 32
    %v3049 = vpop.permute.xlu0 %3048
    %3050 = vrot.lane.b32.xlu0 %v2861, 32
    %v3051 = vpop.permute.xlu0 %3050
    %3052 = vrot.lane.b32.xlu0 %v2862, 32
    %v3053 = vpop.permute.xlu0 %3052
    %3054 = vrot.lane.b32.xlu0 %v2863, 32
    %v3055 = vpop.permute.xlu0 %3054
    %3056 = vrot.lane.b32.xlu0 %v2864, 32
    %v3057 = vpop.permute.xlu0 %3056
    %3058 = vrot.lane.b32.xlu0 %v2865, 32
    %v3059 = vpop.permute.xlu0 %3058
    %3060 = vrot.lane.b32.xlu0 %v2866, 32
    %v3061 = vpop.permute.xlu0 %3060
    %3062 = vrot.lane.b32.xlu0 %v2867, 32
    %v3063 = vpop.permute.xlu0 %3062
    %3064 = vrot.lane.b32.xlu0 %v2868, 32
    %v3065 = vpop.permute.xlu0 %3064
    %3066 = vrot.lane.b32.xlu0 %v2869, 32
    %v3067 = vpop.permute.xlu0 %3066
    %3068 = vrot.lane.b32.xlu0 %v2870, 32
    %v3069 = vpop.permute.xlu0 %3068
    %3070 = vrot.lane.b32.xlu0 %v2871, 32
    %v3071 = vpop.permute.xlu0 %3070
    %3072 = vrot.lane.b32.xlu0 %v2872, 32
    %v3073 = vpop.permute.xlu0 %3072
    %3074 = vrot.lane.b32.xlu0 %v2873, 32
    %v3075 = vpop.permute.xlu0 %3074
    %3076 = vrot.lane.b32.xlu0 %v2874, 32
    %v3077 = vpop.permute.xlu0 %3076
    %3078 = vrot.lane.b32.xlu0 %v2875, 32
    %v3079 = vpop.permute.xlu0 %3078
    %3080 = vrot.lane.b32.xlu0 %v2876, 32
    %v3081 = vpop.permute.xlu0 %3080
    %3082 = vrot.lane.b32.xlu0 %v2877, 32
    %v3083 = vpop.permute.xlu0 %3082
    %3084 = vrot.lane.b32.xlu0 %v2878, 32
    %v3085 = vpop.permute.xlu0 %3084
    %3086 = vrot.lane.b32.xlu0 %v2879, 32
    %v3087 = vpop.permute.xlu0 %3086
    %3088 = vrot.lane.b32.xlu0 %v2880, 32
    %v3089 = vpop.permute.xlu0 %3088
    %3090 = vrot.lane.b32.xlu0 %v2881, 32
    %v3091 = vpop.permute.xlu0 %3090
    %3092 = vrot.lane.b32.xlu0 %v2882, 32
    %v3093 = vpop.permute.xlu0 %3092
    %3094 = vrot.lane.b32.xlu0 %v2883, 32
    %v3095 = vpop.permute.xlu0 %3094
    %3096 = vrot.lane.b32.xlu0 %v2884, 32
    %v3097 = vpop.permute.xlu0 %3096
    %3098 = vrot.lane.b32.xlu0 %v2885, 32
    %v3099 = vpop.permute.xlu0 %3098
    %3100 = vrot.lane.b32.xlu0 %v2886, 32
    %v3101 = vpop.permute.xlu0 %3100
    %3102 = vrot.lane.b32.xlu0 %v2887, 32
    %v3103 = vpop.permute.xlu0 %3102
    %3176 = vrot.lane.b32.xlu0 %v2825, 64
    %v3177 = vpop.permute.xlu0 %3176
    %3178 = vrot.lane.b32.xlu0 %v2826, 64
    %v3179 = vpop.permute.xlu0 %3178
    %3180 = vrot.lane.b32.xlu0 %v2827, 64
    %v3181 = vpop.permute.xlu0 %3180
    %3182 = vrot.lane.b32.xlu0 %v2828, 64
    %v3183 = vpop.permute.xlu0 %3182
    %3184 = vrot.lane.b32.xlu0 %v2829, 64
    %v3185 = vpop.permute.xlu0 %3184
    %3186 = vrot.lane.b32.xlu0 %v2830, 64
    %v3187 = vpop.permute.xlu0 %3186
    %3188 = vrot.lane.b32.xlu0 %v2831, 64
    %v3189 = vpop.permute.xlu0 %3188
    %3190 = vrot.lane.b32.xlu0 %v2832, 64
    %v3191 = vpop.permute.xlu0 %3190
    %3192 = vrot.lane.b32.xlu0 %v2833, 64
    %v3193 = vpop.permute.xlu0 %3192
    %3194 = vrot.lane.b32.xlu0 %v2834, 64
    %v3195 = vpop.permute.xlu0 %3194
    %3196 = vrot.lane.b32.xlu0 %v2835, 64
    %v3197 = vpop.permute.xlu0 %3196
    %3198 = vrot.lane.b32.xlu0 %v2836, 64
    %v3199 = vpop.permute.xlu0 %3198
    %3200 = vrot.lane.b32.xlu0 %v2837, 64
    %v3201 = vpop.permute.xlu0 %3200
    %3202 = vrot.lane.b32.xlu0 %v2838, 64
    %v3203 = vpop.permute.xlu0 %3202
    %3204 = vrot.lane.b32.xlu0 %v2839, 64
    %v3205 = vpop.permute.xlu0 %3204
    %3206 = vrot.lane.b32.xlu0 %v2840, 64
    %v3207 = vpop.permute.xlu0 %3206
    %3208 = vrot.lane.b32.xlu0 %v2841, 64
    %v3209 = vpop.permute.xlu0 %3208
    %3210 = vrot.lane.b32.xlu0 %v2842, 64
    %v3211 = vpop.permute.xlu0 %3210
    %3212 = vrot.lane.b32.xlu0 %v2843, 64
    %v3213 = vpop.permute.xlu0 %3212
    %3214 = vrot.lane.b32.xlu0 %v2844, 64
    %v3215 = vpop.permute.xlu0 %3214
    %3216 = vrot.lane.b32.xlu0 %v2845, 64
    %v3217 = vpop.permute.xlu0 %3216
    %3218 = vrot.lane.b32.xlu0 %v2846, 64
    %v3219 = vpop.permute.xlu0 %3218
    %3220 = vrot.lane.b32.xlu0 %v2847, 64
    %v3221 = vpop.permute.xlu0 %3220
    %3222 = vrot.lane.b32.xlu0 %v2848, 64
    %v3223 = vpop.permute.xlu0 %3222
    %3224 = vrot.lane.b32.xlu0 %v2849, 64
    %v3225 = vpop.permute.xlu0 %3224
    %3226 = vrot.lane.b32.xlu0 %v2850, 64
    %v3227 = vpop.permute.xlu0 %3226
    %3228 = vrot.lane.b32.xlu0 %v2851, 64
    %v3229 = vpop.permute.xlu0 %3228
    %3230 = vrot.lane.b32.xlu0 %v2852, 64
    %v3231 = vpop.permute.xlu0 %3230
    %3232 = vrot.lane.b32.xlu0 %v2853, 64
    %v3233 = vpop.permute.xlu0 %3232
    %3234 = vrot.lane.b32.xlu0 %v2854, 64
    %v3235 = vpop.permute.xlu0 %3234
    %3236 = vrot.lane.b32.xlu0 %v2855, 64
    %v3237 = vpop.permute.xlu0 %3236
    %3238 = vrot.lane.b32.xlu0 %v2856, 64
    %v3239 = vpop.permute.xlu0 %3238
    %3240 = vrot.lane.b32.xlu0 %v2857, 64
    %v3241 = vpop.permute.xlu0 %3240
    %3242 = vrot.lane.b32.xlu0 %v2858, 64
    %v3243 = vpop.permute.xlu0 %3242
    %3244 = vrot.lane.b32.xlu0 %v2859, 64
    %v3245 = vpop.permute.xlu0 %3244
    %3246 = vrot.lane.b32.xlu0 %v2860, 64
    %v3247 = vpop.permute.xlu0 %3246
    %3248 = vrot.lane.b32.xlu0 %v2861, 64
    %v3249 = vpop.permute.xlu0 %3248
    %3250 = vrot.lane.b32.xlu0 %v2862, 64
    %v3251 = vpop.permute.xlu0 %3250
    %3252 = vrot.lane.b32.xlu0 %v2863, 64
    %v3253 = vpop.permute.xlu0 %3252
    %3254 = vrot.lane.b32.xlu0 %v2864, 64
    %v3255 = vpop.permute.xlu0 %3254
    %3256 = vrot.lane.b32.xlu0 %v2865, 64
    %v3257 = vpop.permute.xlu0 %3256
    %3258 = vrot.lane.b32.xlu0 %v2866, 64
    %v3259 = vpop.permute.xlu0 %3258
    %3260 = vrot.lane.b32.xlu0 %v2867, 64
    %v3261 = vpop.permute.xlu0 %3260
    %3262 = vrot.lane.b32.xlu0 %v2868, 64
    %v3263 = vpop.permute.xlu0 %3262
    %3264 = vrot.lane.b32.xlu0 %v2869, 64
    %v3265 = vpop.permute.xlu0 %3264
    %3266 = vrot.lane.b32.xlu0 %v2870, 64
    %v3267 = vpop.permute.xlu0 %3266
    %3268 = vrot.lane.b32.xlu0 %v2871, 64
    %v3269 = vpop.permute.xlu0 %3268
    %3270 = vrot.lane.b32.xlu0 %v2872, 64
    %v3271 = vpop.permute.xlu0 %3270
    %3272 = vrot.lane.b32.xlu0 %v2873, 64
    %v3273 = vpop.permute.xlu0 %3272
    %3274 = vrot.lane.b32.xlu0 %v2874, 64
    %v3275 = vpop.permute.xlu0 %3274
    %3276 = vrot.lane.b32.xlu0 %v2875, 64
    %v3277 = vpop.permute.xlu0 %3276
    %3278 = vrot.lane.b32.xlu0 %v2876, 64
    %v3279 = vpop.permute.xlu0 %3278
    %3280 = vrot.lane.b32.xlu0 %v2877, 64
    %v3281 = vpop.permute.xlu0 %3280
    %3282 = vrot.lane.b32.xlu0 %v2878, 64
    %v3283 = vpop.permute.xlu0 %3282
    %3284 = vrot.lane.b32.xlu0 %v2879, 64
    %v3285 = vpop.permute.xlu0 %3284
    %3286 = vrot.lane.b32.xlu0 %v2880, 64
    %v3287 = vpop.permute.xlu0 %3286
    %3288 = vrot.lane.b32.xlu0 %v2881, 64
    %v3289 = vpop.permute.xlu0 %3288
    %3290 = vrot.lane.b32.xlu0 %v2882, 64
    %v3291 = vpop.permute.xlu0 %3290
    %3292 = vrot.lane.b32.xlu0 %v2883, 64
    %v3293 = vpop.permute.xlu0 %3292
    %3294 = vrot.lane.b32.xlu0 %v2884, 64
    %v3295 = vpop.permute.xlu0 %3294
    %3296 = vrot.lane.b32.xlu0 %v2885, 64
    %v3297 = vpop.permute.xlu0 %3296
    %3298 = vrot.lane.b32.xlu0 %v2886, 64
    %v3299 = vpop.permute.xlu0 %3298
    %3300 = vrot.lane.b32.xlu0 %v2887, 64
    %v3301 = vpop.permute.xlu0 %3300
    %3302 = vrot.lane.b32.xlu0 %v2816, 64
    %v3303 = vpop.permute.xlu0 %3302
    %3304 = vrot.lane.b32.xlu0 %v2817, 64
    %v3305 = vpop.permute.xlu0 %3304
    %3306 = vrot.lane.b32.xlu0 %v2818, 64
    %v3307 = vpop.permute.xlu0 %3306
    %3308 = vrot.lane.b32.xlu0 %v2819, 64
    %v3309 = vpop.permute.xlu0 %3308
    %3310 = vrot.lane.b32.xlu0 %v2820, 64
    %v3311 = vpop.permute.xlu0 %3310
    %3312 = vrot.lane.b32.xlu0 %v2821, 64
    %v3313 = vpop.permute.xlu0 %3312
    %3314 = vrot.lane.b32.xlu0 %v2822, 64
    %v3315 = vpop.permute.xlu0 %3314
    %3316 = vrot.lane.b32.xlu0 %v2823, 64
    %v3317 = vpop.permute.xlu0 %3316
    %3318 = vrot.lane.b32.xlu0 %v2824, 64
    %v3319 = vpop.permute.xlu0 %3318
    %v3392 = vsel %vm1443, %v2879, %v2961
    %v3393 = vsel %vm1443, %v2880, %v2963
    %v3394 = vsel %vm1443, %v2881, %v2965
    %v3395 = vsel %vm1443, %v2882, %v2967
    %v3396 = vsel %vm1443, %v2883, %v2969
    %v3397 = vsel %vm1443, %v2884, %v2971
    %v3398 = vsel %vm1443, %v2885, %v2973
    %v3399 = vsel %vm1443, %v2886, %v2975
    %v3400 = vsel %vm1443, %v2887, %v2977
    %v3401 = vsel %vm1443, %v2816, %v2979
    %v3402 = vsel %vm1443, %v2817, %v2981
    %v3403 = vsel %vm1443, %v2818, %v2983
    %v3404 = vsel %vm1443, %v2819, %v2985
    %v3405 = vsel %vm1443, %v2820, %v2987
    %v3406 = vsel %vm1443, %v2821, %v2989
    %v3407 = vsel %vm1443, %v2822, %v2991
    %v3408 = vsel %vm1443, %v2823, %v2993
    %v3409 = vsel %vm1443, %v2824, %v2995
    %v3410 = vsel %vm1443, %v2825, %v2997
    %v3411 = vsel %vm1443, %v2826, %v2999
    %v3412 = vsel %vm1443, %v2827, %v3001
    %v3413 = vsel %vm1443, %v2828, %v3003
    %v3414 = vsel %vm1443, %v2829, %v3005
    %v3415 = vsel %vm1443, %v2830, %v3007
    %v3416 = vsel %vm1443, %v2831, %v3009
    %v3417 = vsel %vm1443, %v2832, %v3011
    %v3418 = vsel %vm1443, %v2833, %v3013
    %v3419 = vsel %vm1443, %v2834, %v3015
    %v3420 = vsel %vm1443, %v2835, %v3017
    %v3421 = vsel %vm1443, %v2836, %v3019
    %v3422 = vsel %vm1443, %v2837, %v3021
    %v3423 = vsel %vm1443, %v2838, %v3023
    %v3424 = vsel %vm1443, %v2839, %v3025
    %v3425 = vsel %vm1443, %v2840, %v3027
    %v3426 = vsel %vm1443, %v2841, %v3029
    %v3427 = vsel %vm1443, %v2842, %v3031
    %v3428 = vsel %vm1443, %v2843, %v3033
    %v3429 = vsel %vm1443, %v2844, %v3035
    %v3430 = vsel %vm1443, %v2845, %v3037
    %v3431 = vsel %vm1443, %v2846, %v3039
    %v3432 = vsel %vm1443, %v2847, %v3041
    %v3433 = vsel %vm1443, %v2848, %v3043
    %v3434 = vsel %vm1443, %v2849, %v3045
    %v3435 = vsel %vm1443, %v2850, %v3047
    %v3436 = vsel %vm1443, %v2851, %v3049
    %v3437 = vsel %vm1443, %v2852, %v3051
    %v3438 = vsel %vm1443, %v2853, %v3053
    %v3439 = vsel %vm1443, %v2854, %v3055
    %v3440 = vsel %vm1443, %v2855, %v3057
    %v3441 = vsel %vm1443, %v2856, %v3059
    %v3442 = vsel %vm1443, %v2857, %v3061
    %v3443 = vsel %vm1443, %v2858, %v3063
    %v3444 = vsel %vm1443, %v2859, %v3065
    %v3445 = vsel %vm1443, %v2860, %v3067
    %v3446 = vsel %vm1443, %v2861, %v3069
    %v3447 = vsel %vm1443, %v2862, %v3071
    %v3448 = vsel %vm1443, %v2863, %v3073
    %v3449 = vsel %vm1443, %v2864, %v3075
    %v3450 = vsel %vm1443, %v2865, %v3077
    %v3451 = vsel %vm1443, %v2866, %v3079
    %v3452 = vsel %vm1443, %v2867, %v3081
    %v3453 = vsel %vm1443, %v2868, %v3083
    %v3454 = vsel %vm1443, %v2869, %v3085
    %v3455 = vsel %vm1443, %v2870, %v3087
    %v3456 = vsel %vm1443, %v2871, %v3089
    %v3457 = vsel %vm1443, %v2872, %v3091
    %v3458 = vsel %vm1443, %v2873, %v3093
    %v3459 = vsel %vm1443, %v2874, %v3095
    %v3460 = vsel %vm1443, %v2875, %v3097
    %v3461 = vsel %vm1443, %v2876, %v3099
    %v3462 = vsel %vm1443, %v2877, %v3101
    %v3463 = vsel %vm1443, %v2878, %v3103
    %vm3464 = vcmask 523264
    %v3465 = vsel %vm3464, %v3392, %v3177
    %v3466 = vsel %vm3464, %v3393, %v3179
    %v3467 = vsel %vm3464, %v3394, %v3181
    %v3468 = vsel %vm3464, %v3395, %v3183
    %v3469 = vsel %vm3464, %v3396, %v3185
    %v3470 = vsel %vm3464, %v3397, %v3187
    %v3471 = vsel %vm3464, %v3398, %v3189
    %v3472 = vsel %vm3464, %v3399, %v3191
    %v3473 = vsel %vm3464, %v3400, %v3193
    %v3474 = vsel %vm3464, %v3401, %v3195
    %v3475 = vsel %vm3464, %v3402, %v3197
    %v3476 = vsel %vm3464, %v3403, %v3199
    %v3477 = vsel %vm3464, %v3404, %v3201
    %v3478 = vsel %vm3464, %v3405, %v3203
    %v3479 = vsel %vm3464, %v3406, %v3205
    %v3480 = vsel %vm3464, %v3407, %v3207
    %v3481 = vsel %vm3464, %v3408, %v3209
    %v3482 = vsel %vm3464, %v3409, %v3211
    %v3483 = vsel %vm3464, %v3410, %v3213
    %v3484 = vsel %vm3464, %v3411, %v3215
    %v3485 = vsel %vm3464, %v3412, %v3217
    %v3486 = vsel %vm3464, %v3413, %v3219
    %v3487 = vsel %vm3464, %v3414, %v3221
    %v3488 = vsel %vm3464, %v3415, %v3223
    %v3489 = vsel %vm3464, %v3416, %v3225
    %v3490 = vsel %vm3464, %v3417, %v3227
    %v3491 = vsel %vm3464, %v3418, %v3229
    %v3492 = vsel %vm3464, %v3419, %v3231
    %v3493 = vsel %vm3464, %v3420, %v3233
    %v3494 = vsel %vm3464, %v3421, %v3235
    %v3495 = vsel %vm3464, %v3422, %v3237
    %v3496 = vsel %vm3464, %v3423, %v3239
    %v3497 = vsel %vm3464, %v3424, %v3241
    %v3498 = vsel %vm3464, %v3425, %v3243
    %v3499 = vsel %vm3464, %v3426, %v3245
    %v3500 = vsel %vm3464, %v3427, %v3247
    %v3501 = vsel %vm3464, %v3428, %v3249
    %v3502 = vsel %vm3464, %v3429, %v3251
    %v3503 = vsel %vm3464, %v3430, %v3253
    %v3504 = vsel %vm3464, %v3431, %v3255
    %v3505 = vsel %vm3464, %v3432, %v3257
    %v3506 = vsel %vm3464, %v3433, %v3259
    %v3507 = vsel %vm3464, %v3434, %v3261
    %v3508 = vsel %vm3464, %v3435, %v3263
    %v3509 = vsel %vm3464, %v3436, %v3265
    %v3510 = vsel %vm3464, %v3437, %v3267
    %v3511 = vsel %vm3464, %v3438, %v3269
    %v3512 = vsel %vm3464, %v3439, %v3271
    %v3513 = vsel %vm3464, %v3440, %v3273
    %v3514 = vsel %vm3464, %v3441, %v3275
    %v3515 = vsel %vm3464, %v3442, %v3277
    %v3516 = vsel %vm3464, %v3443, %v3279
    %v3517 = vsel %vm3464, %v3444, %v3281
    %v3518 = vsel %vm3464, %v3445, %v3283
    %v3519 = vsel %vm3464, %v3446, %v3285
    %v3520 = vsel %vm3464, %v3447, %v3287
    %v3521 = vsel %vm3464, %v3448, %v3289
    %v3522 = vsel %vm3464, %v3449, %v3291
    %v3523 = vsel %vm3464, %v3450, %v3293
    %v3524 = vsel %vm3464, %v3451, %v3295
    %v3525 = vsel %vm3464, %v3452, %v3297
    %v3526 = vsel %vm3464, %v3453, %v3299
    %v3527 = vsel %vm3464, %v3454, %v3301
    %v3528 = vsel %vm3464, %v3455, %v3303
    %v3529 = vsel %vm3464, %v3456, %v3305
    %v3530 = vsel %vm3464, %v3457, %v3307
    %v3531 = vsel %vm3464, %v3458, %v3309
    %v3532 = vsel %vm3464, %v3459, %v3311
    %v3533 = vsel %vm3464, %v3460, %v3313
    %v3534 = vsel %vm3464, %v3461, %v3315
    %v3535 = vsel %vm3464, %v3462, %v3317
    %v3536 = vsel %vm3464, %v3463, %v3319
    %v3537 = vld [vmem:[%s5] sm:$0xff]
    %v3538 = vld [vmem:[%s5 + $0x8] sm:$0xff]
    %v3539 = vld [vmem:[%s5 + $0x10] sm:$0xff]
    %v3540 = vld [vmem:[%s5 + $0x18] sm:$0xff]
    %v3541 = vld [vmem:[%s5 + $0x20] sm:$0xff]
    %v3542 = vld [vmem:[%s5 + $0x28] sm:$0xff]
    %v3543 = vld [vmem:[%s5 + $0x30] sm:$0xff]
    %v3544 = vld [vmem:[%s5 + $0x38] sm:$0xff]
    %v3545 = vld [vmem:[%s5 + $0x40] sm:$0xff]
    %v3546 = vld [vmem:[%s5 + $0x48] sm:$0xff]
    %v3547 = vld [vmem:[%s5 + $0x50] sm:$0xff]
    %v3548 = vld [vmem:[%s5 + $0x58] sm:$0xff]
    %vm3549 = vcmask 785408
    %v3551 = vsel %vm3549, %v3465, 0
    %v3554 = vsel %vm3549, %v3466, 0
    %v3557 = vsel %vm3549, %v3467, 0
    %v3560 = vsel %vm3549, %v3468, 0
    %v3563 = vsel %vm3549, %v3469, 0
    %v3566 = vsel %vm3549, %v3470, 0
    %v3569 = vsel %vm3549, %v3471, 0
    %v3572 = vsel %vm3549, %v3472, 0
    %v3575 = vsel %vm3549, %v3473, 0
    %v3578 = vsel %vm3549, %v3474, 0
    %v3581 = vsel %vm3549, %v3475, 0
    %v3584 = vsel %vm3549, %v3476, 0
    %v3587 = vsel %vm3549, %v3477, 0
    %v3590 = vsel %vm3549, %v3478, 0
    %v3593 = vsel %vm3549, %v3479, 0
    %v3596 = vsel %vm3549, %v3480, 0
    %v3599 = vsel %vm3549, %v3481, 0
    %v3602 = vsel %vm3549, %v3482, 0
    %v3605 = vsel %vm3549, %v3483, 0
    %v3608 = vsel %vm3549, %v3484, 0
    %v3611 = vsel %vm3549, %v3485, 0
    %v3614 = vsel %vm3549, %v3486, 0
    %v3617 = vsel %vm3549, %v3487, 0
    %v3620 = vsel %vm3549, %v3488, 0
    %v3623 = vsel %vm3549, %v3489, 0
    %v3626 = vsel %vm3549, %v3490, 0
    %v3629 = vsel %vm3549, %v3491, 0
    %v3632 = vsel %vm3549, %v3492, 0
    %v3635 = vsel %vm3549, %v3493, 0
    %v3638 = vsel %vm3549, %v3494, 0
    %v3641 = vsel %vm3549, %v3495, 0
    %v3644 = vsel %vm3549, %v3496, 0
    %v3647 = vsel %vm3549, %v3497, 0
    %v3650 = vsel %vm3549, %v3498, 0
    %v3653 = vsel %vm3549, %v3499, 0
    %v3656 = vsel %vm3549, %v3500, 0
    %v3659 = vsel %vm3549, %v3501, 0
    %v3662 = vsel %vm3549, %v3502, 0
    %v3665 = vsel %vm3549, %v3503, 0
    %v3668 = vsel %vm3549, %v3504, 0
    %v3671 = vsel %vm3549, %v3505, 0
    %v3674 = vsel %vm3549, %v3506, 0
    %v3677 = vsel %vm3549, %v3507, 0
    %v3680 = vsel %vm3549, %v3508, 0
    %v3683 = vsel %vm3549, %v3509, 0
    %v3686 = vsel %vm3549, %v3510, 0
    %v3689 = vsel %vm3549, %v3511, 0
    %v3692 = vsel %vm3549, %v3512, 0
    %v3695 = vsel %vm3549, %v3513, 0
    %v3698 = vsel %vm3549, %v3514, 0
    %v3701 = vsel %vm3549, %v3515, 0
    %v3704 = vsel %vm3549, %v3516, 0
    %v3707 = vsel %vm3549, %v3517, 0
    %v3710 = vsel %vm3549, %v3518, 0
    %v3713 = vsel %vm3549, %v3519, 0
    %v3716 = vsel %vm3549, %v3520, 0
    %v3719 = vsel %vm3549, %v3521, 0
    %v3722 = vsel %vm3549, %v3522, 0
    %v3725 = vsel %vm3549, %v3523, 0
    %v3728 = vsel %vm3549, %v3524, 0
    %v3731 = vsel %vm3549, %v3525, 0
    %v3734 = vsel %vm3549, %v3526, 0
    %v3737 = vsel %vm3549, %v3527, 0
    %v3740 = vsel %vm3549, %v3528, 0
    %v3743 = vsel %vm3549, %v3529, 0
    %v3746 = vsel %vm3549, %v3530, 0
    %v3749 = vsel %vm3549, %v3531, 0
    %v3752 = vsel %vm3549, %v3532, 0
    %v3755 = vsel %vm3549, %v3533, 0
    %v3758 = vsel %vm3549, %v3534, 0
    %v3761 = vsel %vm3549, %v3535, 0
    %v3764 = vsel %vm3549, %v3536, 0
    %3766 = vmatpush.msra.mxu0 0.0
    %3767 = vmatpush.msra.mxu0 0.0
    %3768 = vmatpush.msra.mxu0 0.0
    %3769 = vmatpush.msra.mxu0 0.0
    %3770 = vmatpush.msra.mxu0 %v3548
    %3771 = vmatpush.msra.mxu0 %v3547
    %3772 = vmatpush.msra.mxu0 %v3546
    %3773 = vmatpush.msra.mxu0 %v3545
    %3774 = vmatpush.msra.mxu0 %v3544
    %3775 = vmatpush.msra.mxu0 %v3543
    %3776 = vmatpush.msra.mxu0 %v3542
    %3777 = vmatpush.msra.mxu0 %v3541
    %3778 = vmatpush.msra.mxu0 %v3540
    %3779 = vmatpush.msra.mxu0 %v3539
    %3780 = vmatpush.msra.mxu0 %v3538
    %3781 = vmatpush.msra.mxu0 %v3537
    %3782 = vmatmul.f32.gmra.mxu0 %v3551
    %v3783 = vpop.f32.mrf.mxu0
    %v3784 = vadd.f32 0.0, %v3783
    %3785 = vmatmul.f32.gmra.mxu0 %v3554
    %v3786 = vpop.f32.mrf.mxu0
    %v3787 = vadd.f32 0.0, %v3786
    %3788 = vmatmul.f32.gmra.mxu0 %v3557
    %v3789 = vpop.f32.mrf.mxu0
    %v3790 = vadd.f32 0.0, %v3789
    %3791 = vmatmul.f32.gmra.mxu0 %v3560
    %v3792 = vpop.f32.mrf.mxu0
    %v3793 = vadd.f32 0.0, %v3792
    %3794 = vmatmul.f32.gmra.mxu0 %v3563
    %v3795 = vpop.f32.mrf.mxu0
    %v3796 = vadd.f32 0.0, %v3795
    %3797 = vmatmul.f32.gmra.mxu0 %v3566
    %v3798 = vpop.f32.mrf.mxu0
    %v3799 = vadd.f32 0.0, %v3798
    %3800 = vmatmul.f32.gmra.mxu0 %v3569
    %v3801 = vpop.f32.mrf.mxu0
    %v3802 = vadd.f32 0.0, %v3801
    %3803 = vmatmul.f32.gmra.mxu0 %v3572
    %v3804 = vpop.f32.mrf.mxu0
    %v3805 = vadd.f32 0.0, %v3804
    %3806 = vmatmul.f32.gmra.mxu0 %v3575
    %v3807 = vpop.f32.mrf.mxu0
    %v3808 = vadd.f32 0.0, %v3807
    %3809 = vmatmul.f32.gmra.mxu0 %v3578
    %v3810 = vpop.f32.mrf.mxu0
    %v3811 = vadd.f32 0.0, %v3810
    %3812 = vmatmul.f32.gmra.mxu0 %v3581
    %v3813 = vpop.f32.mrf.mxu0
    %v3814 = vadd.f32 0.0, %v3813
    %3815 = vmatmul.f32.gmra.mxu0 %v3584
    %v3816 = vpop.f32.mrf.mxu0
    %v3817 = vadd.f32 0.0, %v3816
    %3818 = vmatmul.f32.gmra.mxu0 %v3587
    %v3819 = vpop.f32.mrf.mxu0
    %v3820 = vadd.f32 0.0, %v3819
    %3821 = vmatmul.f32.gmra.mxu0 %v3590
    %v3822 = vpop.f32.mrf.mxu0
    %v3823 = vadd.f32 0.0, %v3822
    %3824 = vmatmul.f32.gmra.mxu0 %v3593
    %v3825 = vpop.f32.mrf.mxu0
    %v3826 = vadd.f32 0.0, %v3825
    %3827 = vmatmul.f32.gmra.mxu0 %v3596
    %v3828 = vpop.f32.mrf.mxu0
    %v3829 = vadd.f32 0.0, %v3828
    %3830 = vmatmul.f32.gmra.mxu0 %v3599
    %v3831 = vpop.f32.mrf.mxu0
    %v3832 = vadd.f32 0.0, %v3831
    %3833 = vmatmul.f32.gmra.mxu0 %v3602
    %v3834 = vpop.f32.mrf.mxu0
    %v3835 = vadd.f32 0.0, %v3834
    %3836 = vmatmul.f32.gmra.mxu0 %v3605
    %v3837 = vpop.f32.mrf.mxu0
    %v3838 = vadd.f32 0.0, %v3837
    %3839 = vmatmul.f32.gmra.mxu0 %v3608
    %v3840 = vpop.f32.mrf.mxu0
    %v3841 = vadd.f32 0.0, %v3840
    %3842 = vmatmul.f32.gmra.mxu0 %v3611
    %v3843 = vpop.f32.mrf.mxu0
    %v3844 = vadd.f32 0.0, %v3843
    %3845 = vmatmul.f32.gmra.mxu0 %v3614
    %v3846 = vpop.f32.mrf.mxu0
    %v3847 = vadd.f32 0.0, %v3846
    %3848 = vmatmul.f32.gmra.mxu0 %v3617
    %v3849 = vpop.f32.mrf.mxu0
    %v3850 = vadd.f32 0.0, %v3849
    %3851 = vmatmul.f32.gmra.mxu0 %v3620
    %v3852 = vpop.f32.mrf.mxu0
    %v3853 = vadd.f32 0.0, %v3852
    %3854 = vmatmul.f32.gmra.mxu0 %v3623
    %v3855 = vpop.f32.mrf.mxu0
    %v3856 = vadd.f32 0.0, %v3855
    %3857 = vmatmul.f32.gmra.mxu0 %v3626
    %v3858 = vpop.f32.mrf.mxu0
    %v3859 = vadd.f32 0.0, %v3858
    %3860 = vmatmul.f32.gmra.mxu0 %v3629
    %v3861 = vpop.f32.mrf.mxu0
    %v3862 = vadd.f32 0.0, %v3861
    %3863 = vmatmul.f32.gmra.mxu0 %v3632
    %v3864 = vpop.f32.mrf.mxu0
    %v3865 = vadd.f32 0.0, %v3864
    %3866 = vmatmul.f32.gmra.mxu0 %v3635
    %v3867 = vpop.f32.mrf.mxu0
    %v3868 = vadd.f32 0.0, %v3867
    %3869 = vmatmul.f32.gmra.mxu0 %v3638
    %v3870 = vpop.f32.mrf.mxu0
    %v3871 = vadd.f32 0.0, %v3870
    %3872 = vmatmul.f32.gmra.mxu0 %v3641
    %v3873 = vpop.f32.mrf.mxu0
    %v3874 = vadd.f32 0.0, %v3873
    %3875 = vmatmul.f32.gmra.mxu0 %v3644
    %v3876 = vpop.f32.mrf.mxu0
    %v3877 = vadd.f32 0.0, %v3876
    %3878 = vmatmul.f32.gmra.mxu0 %v3647
    %v3879 = vpop.f32.mrf.mxu0
    %v3880 = vadd.f32 0.0, %v3879
    %3881 = vmatmul.f32.gmra.mxu0 %v3650
    %v3882 = vpop.f32.mrf.mxu0
    %v3883 = vadd.f32 0.0, %v3882
    %3884 = vmatmul.f32.gmra.mxu0 %v3653
    %v3885 = vpop.f32.mrf.mxu0
    %v3886 = vadd.f32 0.0, %v3885
    %3887 = vmatmul.f32.gmra.mxu0 %v3656
    %v3888 = vpop.f32.mrf.mxu0
    %v3889 = vadd.f32 0.0, %v3888
    %3890 = vmatmul.f32.gmra.mxu0 %v3659
    %v3891 = vpop.f32.mrf.mxu0
    %v3892 = vadd.f32 0.0, %v3891
    %3893 = vmatmul.f32.gmra.mxu0 %v3662
    %v3894 = vpop.f32.mrf.mxu0
    %v3895 = vadd.f32 0.0, %v3894
    %3896 = vmatmul.f32.gmra.mxu0 %v3665
    %v3897 = vpop.f32.mrf.mxu0
    %v3898 = vadd.f32 0.0, %v3897
    %3899 = vmatmul.f32.gmra.mxu0 %v3668
    %v3900 = vpop.f32.mrf.mxu0
    %v3901 = vadd.f32 0.0, %v3900
    %3902 = vmatmul.f32.gmra.mxu0 %v3671
    %v3903 = vpop.f32.mrf.mxu0
    %v3904 = vadd.f32 0.0, %v3903
    %3905 = vmatmul.f32.gmra.mxu0 %v3674
    %v3906 = vpop.f32.mrf.mxu0
    %v3907 = vadd.f32 0.0, %v3906
    %3908 = vmatmul.f32.gmra.mxu0 %v3677
    %v3909 = vpop.f32.mrf.mxu0
    %v3910 = vadd.f32 0.0, %v3909
    %3911 = vmatmul.f32.gmra.mxu0 %v3680
    %v3912 = vpop.f32.mrf.mxu0
    %v3913 = vadd.f32 0.0, %v3912
    %3914 = vmatmul.f32.gmra.mxu0 %v3683
    %v3915 = vpop.f32.mrf.mxu0
    %v3916 = vadd.f32 0.0, %v3915
    %3917 = vmatmul.f32.gmra.mxu0 %v3686
    %v3918 = vpop.f32.mrf.mxu0
    %v3919 = vadd.f32 0.0, %v3918
    %3920 = vmatmul.f32.gmra.mxu0 %v3689
    %v3921 = vpop.f32.mrf.mxu0
    %v3922 = vadd.f32 0.0, %v3921
    %3923 = vmatmul.f32.gmra.mxu0 %v3692
    %v3924 = vpop.f32.mrf.mxu0
    %v3925 = vadd.f32 0.0, %v3924
    %3926 = vmatmul.f32.gmra.mxu0 %v3695
    %v3927 = vpop.f32.mrf.mxu0
    %v3928 = vadd.f32 0.0, %v3927
    %3929 = vmatmul.f32.gmra.mxu0 %v3698
    %v3930 = vpop.f32.mrf.mxu0
    %v3931 = vadd.f32 0.0, %v3930
    %3932 = vmatmul.f32.gmra.mxu0 %v3701
    %v3933 = vpop.f32.mrf.mxu0
    %v3934 = vadd.f32 0.0, %v3933
    %3935 = vmatmul.f32.gmra.mxu0 %v3704
    %v3936 = vpop.f32.mrf.mxu0
    %v3937 = vadd.f32 0.0, %v3936
    %3938 = vmatmul.f32.gmra.mxu0 %v3707
    %v3939 = vpop.f32.mrf.mxu0
    %v3940 = vadd.f32 0.0, %v3939
    %3941 = vmatmul.f32.gmra.mxu0 %v3710
    %v3942 = vpop.f32.mrf.mxu0
    %v3943 = vadd.f32 0.0, %v3942
    %3944 = vmatmul.f32.gmra.mxu0 %v3713
    %v3945 = vpop.f32.mrf.mxu0
    %v3946 = vadd.f32 0.0, %v3945
    %3947 = vmatmul.f32.gmra.mxu0 %v3716
    %v3948 = vpop.f32.mrf.mxu0
    %v3949 = vadd.f32 0.0, %v3948
    %3950 = vmatmul.f32.gmra.mxu0 %v3719
    %v3951 = vpop.f32.mrf.mxu0
    %v3952 = vadd.f32 0.0, %v3951
    %3953 = vmatmul.f32.gmra.mxu0 %v3722
    %v3954 = vpop.f32.mrf.mxu0
    %v3955 = vadd.f32 0.0, %v3954
    %3956 = vmatmul.f32.gmra.mxu0 %v3725
    %v3957 = vpop.f32.mrf.mxu0
    %v3958 = vadd.f32 0.0, %v3957
    %3959 = vmatmul.f32.gmra.mxu0 %v3728
    %v3960 = vpop.f32.mrf.mxu0
    %v3961 = vadd.f32 0.0, %v3960
    %3962 = vmatmul.f32.gmra.mxu0 %v3731
    %v3963 = vpop.f32.mrf.mxu0
    %v3964 = vadd.f32 0.0, %v3963
    %3965 = vmatmul.f32.gmra.mxu0 %v3734
    %v3966 = vpop.f32.mrf.mxu0
    %v3967 = vadd.f32 0.0, %v3966
    %3968 = vmatmul.f32.gmra.mxu0 %v3737
    %v3969 = vpop.f32.mrf.mxu0
    %v3970 = vadd.f32 0.0, %v3969
    %3971 = vmatmul.f32.gmra.mxu0 %v3740
    %v3972 = vpop.f32.mrf.mxu0
    %v3973 = vadd.f32 0.0, %v3972
    %3974 = vmatmul.f32.gmra.mxu0 %v3743
    %v3975 = vpop.f32.mrf.mxu0
    %v3976 = vadd.f32 0.0, %v3975
    %3977 = vmatmul.f32.gmra.mxu0 %v3746
    %v3978 = vpop.f32.mrf.mxu0
    %v3979 = vadd.f32 0.0, %v3978
    %3980 = vmatmul.f32.gmra.mxu0 %v3749
    %v3981 = vpop.f32.mrf.mxu0
    %v3982 = vadd.f32 0.0, %v3981
    %3983 = vmatmul.f32.gmra.mxu0 %v3752
    %v3984 = vpop.f32.mrf.mxu0
    %v3985 = vadd.f32 0.0, %v3984
    %3986 = vmatmul.f32.gmra.mxu0 %v3755
    %v3987 = vpop.f32.mrf.mxu0
    %v3988 = vadd.f32 0.0, %v3987
    %3989 = vmatmul.f32.gmra.mxu0 %v3758
    %v3990 = vpop.f32.mrf.mxu0
    %v3991 = vadd.f32 0.0, %v3990
    %3992 = vmatmul.f32.gmra.mxu0 %v3761
    %v3993 = vpop.f32.mrf.mxu0
    %v3994 = vadd.f32 0.0, %v3993
    %3995 = vmatmul.f32.gmra.mxu0 %v3764
    %v3996 = vpop.f32.mrf.mxu0
    %v3997 = vadd.f32 0.0, %v3996
    %3998 = vdwg.mxu0
    %v3999 = vadd.f32 %v3997, 0.0
    %v4000 = vadd.f32 %v3784, 0.0
    %v4001 = vadd.f32 %v3787, 0.0
    %v4002 = vadd.f32 %v3790, 0.0
    %v4003 = vadd.f32 %v3793, 0.0
    %v4004 = vadd.f32 %v3796, 0.0
    %v4005 = vadd.f32 %v3799, 0.0
    %v4006 = vadd.f32 %v3802, 0.0
    %v4007 = vadd.f32 %v3805, 0.0
    %v4008 = vadd.f32 %v3808, 0.0
    %v4009 = vadd.f32 %v3811, 0.0
    %v4010 = vadd.f32 %v3814, 0.0
    %v4011 = vadd.f32 %v3817, 0.0
    %v4012 = vadd.f32 %v3820, 0.0
    %v4013 = vadd.f32 %v3823, 0.0
    %v4014 = vadd.f32 %v3826, 0.0
    %v4015 = vadd.f32 %v3829, 0.0
    %v4016 = vadd.f32 %v3832, 0.0
    %v4017 = vadd.f32 %v3835, 0.0
    %v4018 = vadd.f32 %v3838, 0.0
    %v4019 = vadd.f32 %v3841, 0.0
    %v4020 = vadd.f32 %v3844, 0.0
    %v4021 = vadd.f32 %v3847, 0.0
    %v4022 = vadd.f32 %v3850, 0.0
    %v4023 = vadd.f32 %v3853, 0.0
    %v4024 = vadd.f32 %v3856, 0.0
    %v4025 = vadd.f32 %v3859, 0.0
    %v4026 = vadd.f32 %v3862, 0.0
    %v4027 = vadd.f32 %v3865, 0.0
    %v4028 = vadd.f32 %v3868, 0.0
    %v4029 = vadd.f32 %v3871, 0.0
    %v4030 = vadd.f32 %v3874, 0.0
    %v4031 = vadd.f32 %v3877, 0.0
    %v4032 = vadd.f32 %v3880, 0.0
    %v4033 = vadd.f32 %v3883, 0.0
    %v4034 = vadd.f32 %v3886, 0.0
    %v4035 = vadd.f32 %v3889, 0.0
    %v4036 = vadd.f32 %v3892, 0.0
    %v4037 = vadd.f32 %v3895, 0.0
    %v4038 = vadd.f32 %v3898, 0.0
    %v4039 = vadd.f32 %v3901, 0.0
    %v4040 = vadd.f32 %v3904, 0.0
    %v4041 = vadd.f32 %v3907, 0.0
    %v4042 = vadd.f32 %v3910, 0.0
    %v4043 = vadd.f32 %v3913, 0.0
    %v4044 = vadd.f32 %v3916, 0.0
    %v4045 = vadd.f32 %v3919, 0.0
    %v4046 = vadd.f32 %v3922, 0.0
    %v4047 = vadd.f32 %v3925, 0.0
    %v4048 = vadd.f32 %v3928, 0.0
    %v4049 = vadd.f32 %v3931, 0.0
    %v4050 = vadd.f32 %v3934, 0.0
    %v4051 = vadd.f32 %v3937, 0.0
    %v4052 = vadd.f32 %v3940, 0.0
    %v4053 = vadd.f32 %v3943, 0.0
    %v4054 = vadd.f32 %v3946, 0.0
    %v4055 = vadd.f32 %v3949, 0.0
    %v4056 = vadd.f32 %v3952, 0.0
    %v4057 = vadd.f32 %v3955, 0.0
    %v4058 = vadd.f32 %v3958, 0.0
    %v4059 = vadd.f32 %v3961, 0.0
    %v4060 = vadd.f32 %v3964, 0.0
    %v4061 = vadd.f32 %v3967, 0.0
    %v4062 = vadd.f32 %v3970, 0.0
    %v4063 = vadd.f32 %v3973, 0.0
    %v4064 = vadd.f32 %v3976, 0.0
    %v4065 = vadd.f32 %v3979, 0.0
    %v4066 = vadd.f32 %v3982, 0.0
    %v4067 = vadd.f32 %v3985, 0.0
    %v4068 = vadd.f32 %v3988, 0.0
    %v4069 = vadd.f32 %v3991, 0.0
    %v4070 = vadd.f32 %v3994, 0.0
    %s4071 = scalar_lea.vmem %s5, 96
    %v4072 = vld [vmem:[%s4071] sm:$0xff]
    %v4073 = vld [vmem:[%s4071 + $0x8] sm:$0xff]
    %v4074 = vld [vmem:[%s4071 + $0x10] sm:$0xff]
    %v4075 = vld [vmem:[%s4071 + $0x18] sm:$0xff]
    %v4076 = vld [vmem:[%s4071 + $0x20] sm:$0xff]
    %v4077 = vld [vmem:[%s4071 + $0x28] sm:$0xff]
    %v4078 = vld [vmem:[%s4071 + $0x30] sm:$0xff]
    %v4079 = vld [vmem:[%s4071 + $0x38] sm:$0xff]
    %v4080 = vld [vmem:[%s4071 + $0x40] sm:$0xff]
    %v4081 = vld [vmem:[%s4071 + $0x48] sm:$0xff]
    %v4082 = vld [vmem:[%s4071 + $0x50] sm:$0xff]
    %v4083 = vld [vmem:[%s4071 + $0x58] sm:$0xff]
    %4084 = vmatpush.msra.mxu0 0.0
    %4085 = vmatpush.msra.mxu0 0.0
    %4086 = vmatpush.msra.mxu0 0.0
    %4087 = vmatpush.msra.mxu0 0.0
    %4088 = vmatpush.msra.mxu0 %v4083
    %4089 = vmatpush.msra.mxu0 %v4082
    %4090 = vmatpush.msra.mxu0 %v4081
    %4091 = vmatpush.msra.mxu0 %v4080
    %4092 = vmatpush.msra.mxu0 %v4079
    %4093 = vmatpush.msra.mxu0 %v4078
    %4094 = vmatpush.msra.mxu0 %v4077
    %4095 = vmatpush.msra.mxu0 %v4076
    %4096 = vmatpush.msra.mxu0 %v4075
    %4097 = vmatpush.msra.mxu0 %v4074
    %4098 = vmatpush.msra.mxu0 %v4073
    %4099 = vmatpush.msra.mxu0 %v4072
    %4100 = vmatmul.f32.gmra.mxu0 %v3551
    %v4101 = vpop.f32.mrf.mxu0
    %v4102 = vadd.f32 0.0, %v4101
    %4103 = vmatmul.f32.gmra.mxu0 %v3554
    %v4104 = vpop.f32.mrf.mxu0
    %v4105 = vadd.f32 0.0, %v4104
    %4106 = vmatmul.f32.gmra.mxu0 %v3557
    %v4107 = vpop.f32.mrf.mxu0
    %v4108 = vadd.f32 0.0, %v4107
    %4109 = vmatmul.f32.gmra.mxu0 %v3560
    %v4110 = vpop.f32.mrf.mxu0
    %v4111 = vadd.f32 0.0, %v4110
    %4112 = vmatmul.f32.gmra.mxu0 %v3563
    %v4113 = vpop.f32.mrf.mxu0
    %v4114 = vadd.f32 0.0, %v4113
    %4115 = vmatmul.f32.gmra.mxu0 %v3566
    %v4116 = vpop.f32.mrf.mxu0
    %v4117 = vadd.f32 0.0, %v4116
    %4118 = vmatmul.f32.gmra.mxu0 %v3569
    %v4119 = vpop.f32.mrf.mxu0
    %v4120 = vadd.f32 0.0, %v4119
    %4121 = vmatmul.f32.gmra.mxu0 %v3572
    %v4122 = vpop.f32.mrf.mxu0
    %v4123 = vadd.f32 0.0, %v4122
    %4124 = vmatmul.f32.gmra.mxu0 %v3575
    %v4125 = vpop.f32.mrf.mxu0
    %v4126 = vadd.f32 0.0, %v4125
    %4127 = vmatmul.f32.gmra.mxu0 %v3578
    %v4128 = vpop.f32.mrf.mxu0
    %v4129 = vadd.f32 0.0, %v4128
    %4130 = vmatmul.f32.gmra.mxu0 %v3581
    %v4131 = vpop.f32.mrf.mxu0
    %v4132 = vadd.f32 0.0, %v4131
    %4133 = vmatmul.f32.gmra.mxu0 %v3584
    %v4134 = vpop.f32.mrf.mxu0
    %v4135 = vadd.f32 0.0, %v4134
    %4136 = vmatmul.f32.gmra.mxu0 %v3587
    %v4137 = vpop.f32.mrf.mxu0
    %v4138 = vadd.f32 0.0, %v4137
    %4139 = vmatmul.f32.gmra.mxu0 %v3590
    %v4140 = vpop.f32.mrf.mxu0
    %v4141 = vadd.f32 0.0, %v4140
    %4142 = vmatmul.f32.gmra.mxu0 %v3593
    %v4143 = vpop.f32.mrf.mxu0
    %v4144 = vadd.f32 0.0, %v4143
    %4145 = vmatmul.f32.gmra.mxu0 %v3596
    %v4146 = vpop.f32.mrf.mxu0
    %v4147 = vadd.f32 0.0, %v4146
    %4148 = vmatmul.f32.gmra.mxu0 %v3599
    %v4149 = vpop.f32.mrf.mxu0
    %v4150 = vadd.f32 0.0, %v4149
    %4151 = vmatmul.f32.gmra.mxu0 %v3602
    %v4152 = vpop.f32.mrf.mxu0
    %v4153 = vadd.f32 0.0, %v4152
    %4154 = vmatmul.f32.gmra.mxu0 %v3605
    %v4155 = vpop.f32.mrf.mxu0
    %v4156 = vadd.f32 0.0, %v4155
    %4157 = vmatmul.f32.gmra.mxu0 %v3608
    %v4158 = vpop.f32.mrf.mxu0
    %v4159 = vadd.f32 0.0, %v4158
    %4160 = vmatmul.f32.gmra.mxu0 %v3611
    %v4161 = vpop.f32.mrf.mxu0
    %v4162 = vadd.f32 0.0, %v4161
    %4163 = vmatmul.f32.gmra.mxu0 %v3614
    %v4164 = vpop.f32.mrf.mxu0
    %v4165 = vadd.f32 0.0, %v4164
    %4166 = vmatmul.f32.gmra.mxu0 %v3617
    %v4167 = vpop.f32.mrf.mxu0
    %v4168 = vadd.f32 0.0, %v4167
    %4169 = vmatmul.f32.gmra.mxu0 %v3620
    %v4170 = vpop.f32.mrf.mxu0
    %v4171 = vadd.f32 0.0, %v4170
    %4172 = vmatmul.f32.gmra.mxu0 %v3623
    %v4173 = vpop.f32.mrf.mxu0
    %v4174 = vadd.f32 0.0, %v4173
    %4175 = vmatmul.f32.gmra.mxu0 %v3626
    %v4176 = vpop.f32.mrf.mxu0
    %v4177 = vadd.f32 0.0, %v4176
    %4178 = vmatmul.f32.gmra.mxu0 %v3629
    %v4179 = vpop.f32.mrf.mxu0
    %v4180 = vadd.f32 0.0, %v4179
    %4181 = vmatmul.f32.gmra.mxu0 %v3632
    %v4182 = vpop.f32.mrf.mxu0
    %v4183 = vadd.f32 0.0, %v4182
    %4184 = vmatmul.f32.gmra.mxu0 %v3635
    %v4185 = vpop.f32.mrf.mxu0
    %v4186 = vadd.f32 0.0, %v4185
    %4187 = vmatmul.f32.gmra.mxu0 %v3638
    %v4188 = vpop.f32.mrf.mxu0
    %v4189 = vadd.f32 0.0, %v4188
    %4190 = vmatmul.f32.gmra.mxu0 %v3641
    %v4191 = vpop.f32.mrf.mxu0
    %v4192 = vadd.f32 0.0, %v4191
    %4193 = vmatmul.f32.gmra.mxu0 %v3644
    %v4194 = vpop.f32.mrf.mxu0
    %v4195 = vadd.f32 0.0, %v4194
    %4196 = vmatmul.f32.gmra.mxu0 %v3647
    %v4197 = vpop.f32.mrf.mxu0
    %v4198 = vadd.f32 0.0, %v4197
    %4199 = vmatmul.f32.gmra.mxu0 %v3650
    %v4200 = vpop.f32.mrf.mxu0
    %v4201 = vadd.f32 0.0, %v4200
    %4202 = vmatmul.f32.gmra.mxu0 %v3653
    %v4203 = vpop.f32.mrf.mxu0
    %v4204 = vadd.f32 0.0, %v4203
    %4205 = vmatmul.f32.gmra.mxu0 %v3656
    %v4206 = vpop.f32.mrf.mxu0
    %v4207 = vadd.f32 0.0, %v4206
    %4208 = vmatmul.f32.gmra.mxu0 %v3659
    %v4209 = vpop.f32.mrf.mxu0
    %v4210 = vadd.f32 0.0, %v4209
    %4211 = vmatmul.f32.gmra.mxu0 %v3662
    %v4212 = vpop.f32.mrf.mxu0
    %v4213 = vadd.f32 0.0, %v4212
    %4214 = vmatmul.f32.gmra.mxu0 %v3665
    %v4215 = vpop.f32.mrf.mxu0
    %v4216 = vadd.f32 0.0, %v4215
    %4217 = vmatmul.f32.gmra.mxu0 %v3668
    %v4218 = vpop.f32.mrf.mxu0
    %v4219 = vadd.f32 0.0, %v4218
    %4220 = vmatmul.f32.gmra.mxu0 %v3671
    %v4221 = vpop.f32.mrf.mxu0
    %v4222 = vadd.f32 0.0, %v4221
    %4223 = vmatmul.f32.gmra.mxu0 %v3674
    %v4224 = vpop.f32.mrf.mxu0
    %v4225 = vadd.f32 0.0, %v4224
    %4226 = vmatmul.f32.gmra.mxu0 %v3677
    %v4227 = vpop.f32.mrf.mxu0
    %v4228 = vadd.f32 0.0, %v4227
    %4229 = vmatmul.f32.gmra.mxu0 %v3680
    %v4230 = vpop.f32.mrf.mxu0
    %v4231 = vadd.f32 0.0, %v4230
    %4232 = vmatmul.f32.gmra.mxu0 %v3683
    %v4233 = vpop.f32.mrf.mxu0
    %v4234 = vadd.f32 0.0, %v4233
    %4235 = vmatmul.f32.gmra.mxu0 %v3686
    %v4236 = vpop.f32.mrf.mxu0
    %v4237 = vadd.f32 0.0, %v4236
    %4238 = vmatmul.f32.gmra.mxu0 %v3689
    %v4239 = vpop.f32.mrf.mxu0
    %v4240 = vadd.f32 0.0, %v4239
    %4241 = vmatmul.f32.gmra.mxu0 %v3692
    %v4242 = vpop.f32.mrf.mxu0
    %v4243 = vadd.f32 0.0, %v4242
    %4244 = vmatmul.f32.gmra.mxu0 %v3695
    %v4245 = vpop.f32.mrf.mxu0
    %v4246 = vadd.f32 0.0, %v4245
    %4247 = vmatmul.f32.gmra.mxu0 %v3698
    %v4248 = vpop.f32.mrf.mxu0
    %v4249 = vadd.f32 0.0, %v4248
    %4250 = vmatmul.f32.gmra.mxu0 %v3701
    %v4251 = vpop.f32.mrf.mxu0
    %v4252 = vadd.f32 0.0, %v4251
    %4253 = vmatmul.f32.gmra.mxu0 %v3704
    %v4254 = vpop.f32.mrf.mxu0
    %v4255 = vadd.f32 0.0, %v4254
    %4256 = vmatmul.f32.gmra.mxu0 %v3707
    %v4257 = vpop.f32.mrf.mxu0
    %v4258 = vadd.f32 0.0, %v4257
    %4259 = vmatmul.f32.gmra.mxu0 %v3710
    %v4260 = vpop.f32.mrf.mxu0
    %v4261 = vadd.f32 0.0, %v4260
    %4262 = vmatmul.f32.gmra.mxu0 %v3713
    %v4263 = vpop.f32.mrf.mxu0
    %v4264 = vadd.f32 0.0, %v4263
    %4265 = vmatmul.f32.gmra.mxu0 %v3716
    %v4266 = vpop.f32.mrf.mxu0
    %v4267 = vadd.f32 0.0, %v4266
    %4268 = vmatmul.f32.gmra.mxu0 %v3719
    %v4269 = vpop.f32.mrf.mxu0
    %v4270 = vadd.f32 0.0, %v4269
    %4271 = vmatmul.f32.gmra.mxu0 %v3722
    %v4272 = vpop.f32.mrf.mxu0
    %v4273 = vadd.f32 0.0, %v4272
    %4274 = vmatmul.f32.gmra.mxu0 %v3725
    %v4275 = vpop.f32.mrf.mxu0
    %v4276 = vadd.f32 0.0, %v4275
    %4277 = vmatmul.f32.gmra.mxu0 %v3728
    %v4278 = vpop.f32.mrf.mxu0
    %v4279 = vadd.f32 0.0, %v4278
    %4280 = vmatmul.f32.gmra.mxu0 %v3731
    %v4281 = vpop.f32.mrf.mxu0
    %v4282 = vadd.f32 0.0, %v4281
    %4283 = vmatmul.f32.gmra.mxu0 %v3734
    %v4284 = vpop.f32.mrf.mxu0
    %v4285 = vadd.f32 0.0, %v4284
    %4286 = vmatmul.f32.gmra.mxu0 %v3737
    %v4287 = vpop.f32.mrf.mxu0
    %v4288 = vadd.f32 0.0, %v4287
    %4289 = vmatmul.f32.gmra.mxu0 %v3740
    %v4290 = vpop.f32.mrf.mxu0
    %v4291 = vadd.f32 0.0, %v4290
    %4292 = vmatmul.f32.gmra.mxu0 %v3743
    %v4293 = vpop.f32.mrf.mxu0
    %v4294 = vadd.f32 0.0, %v4293
    %4295 = vmatmul.f32.gmra.mxu0 %v3746
    %v4296 = vpop.f32.mrf.mxu0
    %v4297 = vadd.f32 0.0, %v4296
    %4298 = vmatmul.f32.gmra.mxu0 %v3749
    %v4299 = vpop.f32.mrf.mxu0
    %v4300 = vadd.f32 0.0, %v4299
    %4301 = vmatmul.f32.gmra.mxu0 %v3752
    %v4302 = vpop.f32.mrf.mxu0
    %v4303 = vadd.f32 0.0, %v4302
    %4304 = vmatmul.f32.gmra.mxu0 %v3755
    %v4305 = vpop.f32.mrf.mxu0
    %v4306 = vadd.f32 0.0, %v4305
    %4307 = vmatmul.f32.gmra.mxu0 %v3758
    %v4308 = vpop.f32.mrf.mxu0
    %v4309 = vadd.f32 0.0, %v4308
    %4310 = vmatmul.f32.gmra.mxu0 %v3761
    %v4311 = vpop.f32.mrf.mxu0
    %v4312 = vadd.f32 0.0, %v4311
    %4313 = vmatmul.f32.gmra.mxu0 %v3764
    %v4314 = vpop.f32.mrf.mxu0
    %v4315 = vadd.f32 0.0, %v4314
    %4316 = vdwg.mxu0
    %v4317 = vadd.f32 %v3999, %v4102
    %v4318 = vadd.f32 %v4000, %v4105
    %v4319 = vadd.f32 %v4001, %v4108
    %v4320 = vadd.f32 %v4002, %v4111
    %v4321 = vadd.f32 %v4003, %v4114
    %v4322 = vadd.f32 %v4004, %v4117
    %v4323 = vadd.f32 %v4005, %v4120
    %v4324 = vadd.f32 %v4006, %v4123
    %v4325 = vadd.f32 %v4007, %v4126
    %v4326 = vadd.f32 %v4008, %v4129
    %v4327 = vadd.f32 %v4009, %v4132
    %v4328 = vadd.f32 %v4010, %v4135
    %v4329 = vadd.f32 %v4011, %v4138
    %v4330 = vadd.f32 %v4012, %v4141
    %v4331 = vadd.f32 %v4013, %v4144
    %v4332 = vadd.f32 %v4014, %v4147
    %v4333 = vadd.f32 %v4015, %v4150
    %v4334 = vadd.f32 %v4016, %v4153
    %v4335 = vadd.f32 %v4017, %v4156
    %v4336 = vadd.f32 %v4018, %v4159
    %v4337 = vadd.f32 %v4019, %v4162
    %v4338 = vadd.f32 %v4020, %v4165
    %v4339 = vadd.f32 %v4021, %v4168
    %v4340 = vadd.f32 %v4022, %v4171
    %v4341 = vadd.f32 %v4023, %v4174
    %v4342 = vadd.f32 %v4024, %v4177
    %v4343 = vadd.f32 %v4025, %v4180
    %v4344 = vadd.f32 %v4026, %v4183
    %v4345 = vadd.f32 %v4027, %v4186
    %v4346 = vadd.f32 %v4028, %v4189
    %v4347 = vadd.f32 %v4029, %v4192
    %v4348 = vadd.f32 %v4030, %v4195
    %v4349 = vadd.f32 %v4031, %v4198
    %v4350 = vadd.f32 %v4032, %v4201
    %v4351 = vadd.f32 %v4033, %v4204
    %v4352 = vadd.f32 %v4034, %v4207
    %v4353 = vadd.f32 %v4035, %v4210
    %v4354 = vadd.f32 %v4036, %v4213
    %v4355 = vadd.f32 %v4037, %v4216
    %v4356 = vadd.f32 %v4038, %v4219
    %v4357 = vadd.f32 %v4039, %v4222
    %v4358 = vadd.f32 %v4040, %v4225
    %v4359 = vadd.f32 %v4041, %v4228
    %v4360 = vadd.f32 %v4042, %v4231
    %v4361 = vadd.f32 %v4043, %v4234
    %v4362 = vadd.f32 %v4044, %v4237
    %v4363 = vadd.f32 %v4045, %v4240
    %v4364 = vadd.f32 %v4046, %v4243
    %v4365 = vadd.f32 %v4047, %v4246
    %v4366 = vadd.f32 %v4048, %v4249
    %v4367 = vadd.f32 %v4049, %v4252
    %v4368 = vadd.f32 %v4050, %v4255
    %v4369 = vadd.f32 %v4051, %v4258
    %v4370 = vadd.f32 %v4052, %v4261
    %v4371 = vadd.f32 %v4053, %v4264
    %v4372 = vadd.f32 %v4054, %v4267
    %v4373 = vadd.f32 %v4055, %v4270
    %v4374 = vadd.f32 %v4056, %v4273
    %v4375 = vadd.f32 %v4057, %v4276
    %v4376 = vadd.f32 %v4058, %v4279
    %v4377 = vadd.f32 %v4059, %v4282
    %v4378 = vadd.f32 %v4060, %v4285
    %v4379 = vadd.f32 %v4061, %v4288
    %v4380 = vadd.f32 %v4062, %v4291
    %v4381 = vadd.f32 %v4063, %v4294
    %v4382 = vadd.f32 %v4064, %v4297
    %v4383 = vadd.f32 %v4065, %v4300
    %v4384 = vadd.f32 %v4066, %v4303
    %v4385 = vadd.f32 %v4067, %v4306
    %v4386 = vadd.f32 %v4068, %v4309
    %v4387 = vadd.f32 %v4069, %v4312
    %v4388 = vadd.f32 %v4070, %v4315
    %s4389 = scalar_lea.vmem %s5, 192
    %v4390 = vld [vmem:[%s4389] sm:$0xff]
    %v4391 = vld [vmem:[%s4389 + $0x8] sm:$0xff]
    %v4392 = vld [vmem:[%s4389 + $0x10] sm:$0xff]
    %v4393 = vld [vmem:[%s4389 + $0x18] sm:$0xff]
    %v4394 = vld [vmem:[%s4389 + $0x20] sm:$0xff]
    %v4395 = vld [vmem:[%s4389 + $0x28] sm:$0xff]
    %v4396 = vld [vmem:[%s4389 + $0x30] sm:$0xff]
    %v4397 = vld [vmem:[%s4389 + $0x38] sm:$0xff]
    %v4398 = vld [vmem:[%s4389 + $0x40] sm:$0xff]
    %v4399 = vld [vmem:[%s4389 + $0x48] sm:$0xff]
    %v4400 = vld [vmem:[%s4389 + $0x50] sm:$0xff]
    %v4401 = vld [vmem:[%s4389 + $0x58] sm:$0xff]
    %4402 = vmatpush.msra.mxu0 0.0
    %4403 = vmatpush.msra.mxu0 0.0
    %4404 = vmatpush.msra.mxu0 0.0
    %4405 = vmatpush.msra.mxu0 0.0
    %4406 = vmatpush.msra.mxu0 %v4401
    %4407 = vmatpush.msra.mxu0 %v4400
    %4408 = vmatpush.msra.mxu0 %v4399
    %4409 = vmatpush.msra.mxu0 %v4398
    %4410 = vmatpush.msra.mxu0 %v4397
    %4411 = vmatpush.msra.mxu0 %v4396
    %4412 = vmatpush.msra.mxu0 %v4395
    %4413 = vmatpush.msra.mxu0 %v4394
    %4414 = vmatpush.msra.mxu0 %v4393
    %4415 = vmatpush.msra.mxu0 %v4392
    %4416 = vmatpush.msra.mxu0 %v4391
    %4417 = vmatpush.msra.mxu0 %v4390
    %4418 = vmatmul.f32.gmra.mxu0 %v3551
    %v4419 = vpop.f32.mrf.mxu0
    %v4420 = vadd.f32 0.0, %v4419
    %4421 = vmatmul.f32.gmra.mxu0 %v3554
    %v4422 = vpop.f32.mrf.mxu0
    %v4423 = vadd.f32 0.0, %v4422
    %4424 = vmatmul.f32.gmra.mxu0 %v3557
    %v4425 = vpop.f32.mrf.mxu0
    %v4426 = vadd.f32 0.0, %v4425
    %4427 = vmatmul.f32.gmra.mxu0 %v3560
    %v4428 = vpop.f32.mrf.mxu0
    %v4429 = vadd.f32 0.0, %v4428
    %4430 = vmatmul.f32.gmra.mxu0 %v3563
    %v4431 = vpop.f32.mrf.mxu0
    %v4432 = vadd.f32 0.0, %v4431
    %4433 = vmatmul.f32.gmra.mxu0 %v3566
    %v4434 = vpop.f32.mrf.mxu0
    %v4435 = vadd.f32 0.0, %v4434
    %4436 = vmatmul.f32.gmra.mxu0 %v3569
    %v4437 = vpop.f32.mrf.mxu0
    %v4438 = vadd.f32 0.0, %v4437
    %4439 = vmatmul.f32.gmra.mxu0 %v3572
    %v4440 = vpop.f32.mrf.mxu0
    %v4441 = vadd.f32 0.0, %v4440
    %4442 = vmatmul.f32.gmra.mxu0 %v3575
    %v4443 = vpop.f32.mrf.mxu0
    %v4444 = vadd.f32 0.0, %v4443
    %4445 = vmatmul.f32.gmra.mxu0 %v3578
    %v4446 = vpop.f32.mrf.mxu0
    %v4447 = vadd.f32 0.0, %v4446
    %4448 = vmatmul.f32.gmra.mxu0 %v3581
    %v4449 = vpop.f32.mrf.mxu0
    %v4450 = vadd.f32 0.0, %v4449
    %4451 = vmatmul.f32.gmra.mxu0 %v3584
    %v4452 = vpop.f32.mrf.mxu0
    %v4453 = vadd.f32 0.0, %v4452
    %4454 = vmatmul.f32.gmra.mxu0 %v3587
    %v4455 = vpop.f32.mrf.mxu0
    %v4456 = vadd.f32 0.0, %v4455
    %4457 = vmatmul.f32.gmra.mxu0 %v3590
    %v4458 = vpop.f32.mrf.mxu0
    %v4459 = vadd.f32 0.0, %v4458
    %4460 = vmatmul.f32.gmra.mxu0 %v3593
    %v4461 = vpop.f32.mrf.mxu0
    %v4462 = vadd.f32 0.0, %v4461
    %4463 = vmatmul.f32.gmra.mxu0 %v3596
    %v4464 = vpop.f32.mrf.mxu0
    %v4465 = vadd.f32 0.0, %v4464
    %4466 = vmatmul.f32.gmra.mxu0 %v3599
    %v4467 = vpop.f32.mrf.mxu0
    %v4468 = vadd.f32 0.0, %v4467
    %4469 = vmatmul.f32.gmra.mxu0 %v3602
    %v4470 = vpop.f32.mrf.mxu0
    %v4471 = vadd.f32 0.0, %v4470
    %4472 = vmatmul.f32.gmra.mxu0 %v3605
    %v4473 = vpop.f32.mrf.mxu0
    %v4474 = vadd.f32 0.0, %v4473
    %4475 = vmatmul.f32.gmra.mxu0 %v3608
    %v4476 = vpop.f32.mrf.mxu0
    %v4477 = vadd.f32 0.0, %v4476
    %4478 = vmatmul.f32.gmra.mxu0 %v3611
    %v4479 = vpop.f32.mrf.mxu0
    %v4480 = vadd.f32 0.0, %v4479
    %4481 = vmatmul.f32.gmra.mxu0 %v3614
    %v4482 = vpop.f32.mrf.mxu0
    %v4483 = vadd.f32 0.0, %v4482
    %4484 = vmatmul.f32.gmra.mxu0 %v3617
    %v4485 = vpop.f32.mrf.mxu0
    %v4486 = vadd.f32 0.0, %v4485
    %4487 = vmatmul.f32.gmra.mxu0 %v3620
    %v4488 = vpop.f32.mrf.mxu0
    %v4489 = vadd.f32 0.0, %v4488
    %4490 = vmatmul.f32.gmra.mxu0 %v3623
    %v4491 = vpop.f32.mrf.mxu0
    %v4492 = vadd.f32 0.0, %v4491
    %4493 = vmatmul.f32.gmra.mxu0 %v3626
    %v4494 = vpop.f32.mrf.mxu0
    %v4495 = vadd.f32 0.0, %v4494
    %4496 = vmatmul.f32.gmra.mxu0 %v3629
    %v4497 = vpop.f32.mrf.mxu0
    %v4498 = vadd.f32 0.0, %v4497
    %4499 = vmatmul.f32.gmra.mxu0 %v3632
    %v4500 = vpop.f32.mrf.mxu0
    %v4501 = vadd.f32 0.0, %v4500
    %4502 = vmatmul.f32.gmra.mxu0 %v3635
    %v4503 = vpop.f32.mrf.mxu0
    %v4504 = vadd.f32 0.0, %v4503
    %4505 = vmatmul.f32.gmra.mxu0 %v3638
    %v4506 = vpop.f32.mrf.mxu0
    %v4507 = vadd.f32 0.0, %v4506
    %4508 = vmatmul.f32.gmra.mxu0 %v3641
    %v4509 = vpop.f32.mrf.mxu0
    %v4510 = vadd.f32 0.0, %v4509
    %4511 = vmatmul.f32.gmra.mxu0 %v3644
    %v4512 = vpop.f32.mrf.mxu0
    %v4513 = vadd.f32 0.0, %v4512
    %4514 = vmatmul.f32.gmra.mxu0 %v3647
    %v4515 = vpop.f32.mrf.mxu0
    %v4516 = vadd.f32 0.0, %v4515
    %4517 = vmatmul.f32.gmra.mxu0 %v3650
    %v4518 = vpop.f32.mrf.mxu0
    %v4519 = vadd.f32 0.0, %v4518
    %4520 = vmatmul.f32.gmra.mxu0 %v3653
    %v4521 = vpop.f32.mrf.mxu0
    %v4522 = vadd.f32 0.0, %v4521
    %4523 = vmatmul.f32.gmra.mxu0 %v3656
    %v4524 = vpop.f32.mrf.mxu0
    %v4525 = vadd.f32 0.0, %v4524
    %4526 = vmatmul.f32.gmra.mxu0 %v3659
    %v4527 = vpop.f32.mrf.mxu0
    %v4528 = vadd.f32 0.0, %v4527
    %4529 = vmatmul.f32.gmra.mxu0 %v3662
    %v4530 = vpop.f32.mrf.mxu0
    %v4531 = vadd.f32 0.0, %v4530
    %4532 = vmatmul.f32.gmra.mxu0 %v3665
    %v4533 = vpop.f32.mrf.mxu0
    %v4534 = vadd.f32 0.0, %v4533
    %4535 = vmatmul.f32.gmra.mxu0 %v3668
    %v4536 = vpop.f32.mrf.mxu0
    %v4537 = vadd.f32 0.0, %v4536
    %4538 = vmatmul.f32.gmra.mxu0 %v3671
    %v4539 = vpop.f32.mrf.mxu0
    %v4540 = vadd.f32 0.0, %v4539
    %4541 = vmatmul.f32.gmra.mxu0 %v3674
    %v4542 = vpop.f32.mrf.mxu0
    %v4543 = vadd.f32 0.0, %v4542
    %4544 = vmatmul.f32.gmra.mxu0 %v3677
    %v4545 = vpop.f32.mrf.mxu0
    %v4546 = vadd.f32 0.0, %v4545
    %4547 = vmatmul.f32.gmra.mxu0 %v3680
    %v4548 = vpop.f32.mrf.mxu0
    %v4549 = vadd.f32 0.0, %v4548
    %4550 = vmatmul.f32.gmra.mxu0 %v3683
    %v4551 = vpop.f32.mrf.mxu0
    %v4552 = vadd.f32 0.0, %v4551
    %4553 = vmatmul.f32.gmra.mxu0 %v3686
    %v4554 = vpop.f32.mrf.mxu0
    %v4555 = vadd.f32 0.0, %v4554
    %4556 = vmatmul.f32.gmra.mxu0 %v3689
    %v4557 = vpop.f32.mrf.mxu0
    %v4558 = vadd.f32 0.0, %v4557
    %4559 = vmatmul.f32.gmra.mxu0 %v3692
    %v4560 = vpop.f32.mrf.mxu0
    %v4561 = vadd.f32 0.0, %v4560
    %4562 = vmatmul.f32.gmra.mxu0 %v3695
    %v4563 = vpop.f32.mrf.mxu0
    %v4564 = vadd.f32 0.0, %v4563
    %4565 = vmatmul.f32.gmra.mxu0 %v3698
    %v4566 = vpop.f32.mrf.mxu0
    %v4567 = vadd.f32 0.0, %v4566
    %4568 = vmatmul.f32.gmra.mxu0 %v3701
    %v4569 = vpop.f32.mrf.mxu0
    %v4570 = vadd.f32 0.0, %v4569
    %4571 = vmatmul.f32.gmra.mxu0 %v3704
    %v4572 = vpop.f32.mrf.mxu0
    %v4573 = vadd.f32 0.0, %v4572
    %4574 = vmatmul.f32.gmra.mxu0 %v3707
    %v4575 = vpop.f32.mrf.mxu0
    %v4576 = vadd.f32 0.0, %v4575
    %4577 = vmatmul.f32.gmra.mxu0 %v3710
    %v4578 = vpop.f32.mrf.mxu0
    %v4579 = vadd.f32 0.0, %v4578
    %4580 = vmatmul.f32.gmra.mxu0 %v3713
    %v4581 = vpop.f32.mrf.mxu0
    %v4582 = vadd.f32 0.0, %v4581
    %4583 = vmatmul.f32.gmra.mxu0 %v3716
    %v4584 = vpop.f32.mrf.mxu0
    %v4585 = vadd.f32 0.0, %v4584
    %4586 = vmatmul.f32.gmra.mxu0 %v3719
    %v4587 = vpop.f32.mrf.mxu0
    %v4588 = vadd.f32 0.0, %v4587
    %4589 = vmatmul.f32.gmra.mxu0 %v3722
    %v4590 = vpop.f32.mrf.mxu0
    %v4591 = vadd.f32 0.0, %v4590
    %4592 = vmatmul.f32.gmra.mxu0 %v3725
    %v4593 = vpop.f32.mrf.mxu0
    %v4594 = vadd.f32 0.0, %v4593
    %4595 = vmatmul.f32.gmra.mxu0 %v3728
    %v4596 = vpop.f32.mrf.mxu0
    %v4597 = vadd.f32 0.0, %v4596
    %4598 = vmatmul.f32.gmra.mxu0 %v3731
    %v4599 = vpop.f32.mrf.mxu0
    %v4600 = vadd.f32 0.0, %v4599
    %4601 = vmatmul.f32.gmra.mxu0 %v3734
    %v4602 = vpop.f32.mrf.mxu0
    %v4603 = vadd.f32 0.0, %v4602
    %4604 = vmatmul.f32.gmra.mxu0 %v3737
    %v4605 = vpop.f32.mrf.mxu0
    %v4606 = vadd.f32 0.0, %v4605
    %4607 = vmatmul.f32.gmra.mxu0 %v3740
    %v4608 = vpop.f32.mrf.mxu0
    %v4609 = vadd.f32 0.0, %v4608
    %4610 = vmatmul.f32.gmra.mxu0 %v3743
    %v4611 = vpop.f32.mrf.mxu0
    %v4612 = vadd.f32 0.0, %v4611
    %4613 = vmatmul.f32.gmra.mxu0 %v3746
    %v4614 = vpop.f32.mrf.mxu0
    %v4615 = vadd.f32 0.0, %v4614
    %4616 = vmatmul.f32.gmra.mxu0 %v3749
    %v4617 = vpop.f32.mrf.mxu0
    %v4618 = vadd.f32 0.0, %v4617
    %4619 = vmatmul.f32.gmra.mxu0 %v3752
    %v4620 = vpop.f32.mrf.mxu0
    %v4621 = vadd.f32 0.0, %v4620
    %4622 = vmatmul.f32.gmra.mxu0 %v3755
    %v4623 = vpop.f32.mrf.mxu0
    %v4624 = vadd.f32 0.0, %v4623
    %4625 = vmatmul.f32.gmra.mxu0 %v3758
    %v4626 = vpop.f32.mrf.mxu0
    %v4627 = vadd.f32 0.0, %v4626
    %4628 = vmatmul.f32.gmra.mxu0 %v3761
    %v4629 = vpop.f32.mrf.mxu0
    %v4630 = vadd.f32 0.0, %v4629
    %4631 = vmatmul.f32.gmra.mxu0 %v3764
    %v4632 = vpop.f32.mrf.mxu0
    %v4633 = vadd.f32 0.0, %v4632
    %4634 = vdwg.mxu0
    %v4635 = vadd.f32 %v4317, %v4423
    %v4636 = vadd.f32 %v4318, %v4426
    %v4637 = vadd.f32 %v4319, %v4429
    %v4638 = vadd.f32 %v4320, %v4432
    %v4639 = vadd.f32 %v4321, %v4435
    %v4640 = vadd.f32 %v4322, %v4438
    %v4641 = vadd.f32 %v4323, %v4441
    %v4642 = vadd.f32 %v4324, %v4444
    %v4643 = vadd.f32 %v4325, %v4447
    %v4644 = vadd.f32 %v4326, %v4450
    %v4645 = vadd.f32 %v4327, %v4453
    %v4646 = vadd.f32 %v4328, %v4456
    %v4647 = vadd.f32 %v4329, %v4459
    %v4648 = vadd.f32 %v4330, %v4462
    %v4649 = vadd.f32 %v4331, %v4465
    %v4650 = vadd.f32 %v4332, %v4468
    %v4651 = vadd.f32 %v4333, %v4471
    %v4652 = vadd.f32 %v4334, %v4474
    %v4653 = vadd.f32 %v4335, %v4477
    %v4654 = vadd.f32 %v4336, %v4480
    %v4655 = vadd.f32 %v4337, %v4483
    %v4656 = vadd.f32 %v4338, %v4486
    %v4657 = vadd.f32 %v4339, %v4489
    %v4658 = vadd.f32 %v4340, %v4492
    %v4659 = vadd.f32 %v4341, %v4495
    %v4660 = vadd.f32 %v4342, %v4498
    %v4661 = vadd.f32 %v4343, %v4501
    %v4662 = vadd.f32 %v4344, %v4504
    %v4663 = vadd.f32 %v4345, %v4507
    %v4664 = vadd.f32 %v4346, %v4510
    %v4665 = vadd.f32 %v4347, %v4513
    %v4666 = vadd.f32 %v4348, %v4516
    %v4667 = vadd.f32 %v4349, %v4519
    %v4668 = vadd.f32 %v4350, %v4522
    %v4669 = vadd.f32 %v4351, %v4525
    %v4670 = vadd.f32 %v4352, %v4528
    %v4671 = vadd.f32 %v4353, %v4531
    %v4672 = vadd.f32 %v4354, %v4534
    %v4673 = vadd.f32 %v4355, %v4537
    %v4674 = vadd.f32 %v4356, %v4540
    %v4675 = vadd.f32 %v4357, %v4543
    %v4676 = vadd.f32 %v4358, %v4546
    %v4677 = vadd.f32 %v4359, %v4549
    %v4678 = vadd.f32 %v4360, %v4552
    %v4679 = vadd.f32 %v4361, %v4555
    %v4680 = vadd.f32 %v4362, %v4558
    %v4681 = vadd.f32 %v4363, %v4561
    %v4682 = vadd.f32 %v4364, %v4564
    %v4683 = vadd.f32 %v4365, %v4567
    %v4684 = vadd.f32 %v4366, %v4570
    %v4685 = vadd.f32 %v4367, %v4573
    %v4686 = vadd.f32 %v4368, %v4576
    %v4687 = vadd.f32 %v4369, %v4579
    %v4688 = vadd.f32 %v4370, %v4582
    %v4689 = vadd.f32 %v4371, %v4585
    %v4690 = vadd.f32 %v4372, %v4588
    %v4691 = vadd.f32 %v4373, %v4591
    %v4692 = vadd.f32 %v4374, %v4594
    %v4693 = vadd.f32 %v4375, %v4597
    %v4694 = vadd.f32 %v4376, %v4600
    %v4695 = vadd.f32 %v4377, %v4603
    %v4696 = vadd.f32 %v4378, %v4606
    %v4697 = vadd.f32 %v4379, %v4609
    %v4698 = vadd.f32 %v4380, %v4612
    %v4699 = vadd.f32 %v4381, %v4615
    %v4700 = vadd.f32 %v4382, %v4618
    %v4701 = vadd.f32 %v4383, %v4621
    %v4702 = vadd.f32 %v4384, %v4624
    %v4703 = vadd.f32 %v4385, %v4627
    %v4704 = vadd.f32 %v4386, %v4630
    %v4705 = vadd.f32 %v4387, %v4633
    %v4706 = vadd.f32 %v4388, %v4420
    %v4707 = vld [vmem:[#allocation8] sm:$0x1]
    %v4709 = vperm.slane %v4707, 0
    %v4711 = vadd.f32 %v4635, %v4709
    %v4712 = vadd.f32 %v4636, %v4709
    %v4713 = vadd.f32 %v4637, %v4709
    %v4714 = vadd.f32 %v4638, %v4709
    %v4715 = vadd.f32 %v4639, %v4709
    %v4716 = vadd.f32 %v4640, %v4709
    %v4717 = vadd.f32 %v4641, %v4709
    %v4718 = vadd.f32 %v4642, %v4709
    %v4719 = vadd.f32 %v4643, %v4709
    %v4720 = vadd.f32 %v4644, %v4709
    %v4721 = vadd.f32 %v4645, %v4709
    %v4722 = vadd.f32 %v4646, %v4709
    %v4723 = vadd.f32 %v4647, %v4709
    %v4724 = vadd.f32 %v4648, %v4709
    %v4725 = vadd.f32 %v4649, %v4709
    %v4726 = vadd.f32 %v4650, %v4709
    %v4727 = vadd.f32 %v4651, %v4709
    %v4728 = vadd.f32 %v4652, %v4709
    %v4729 = vadd.f32 %v4653, %v4709
    %v4730 = vadd.f32 %v4654, %v4709
    %v4731 = vadd.f32 %v4655, %v4709
    %v4732 = vadd.f32 %v4656, %v4709
    %v4733 = vadd.f32 %v4657, %v4709
    %v4734 = vadd.f32 %v4658, %v4709
    %v4735 = vadd.f32 %v4659, %v4709
    %v4736 = vadd.f32 %v4660, %v4709
    %v4737 = vadd.f32 %v4661, %v4709
    %v4738 = vadd.f32 %v4662, %v4709
    %v4739 = vadd.f32 %v4663, %v4709
    %v4740 = vadd.f32 %v4664, %v4709
    %v4741 = vadd.f32 %v4665, %v4709
    %v4742 = vadd.f32 %v4666, %v4709
    %v4743 = vadd.f32 %v4667, %v4709
    %v4744 = vadd.f32 %v4668, %v4709
    %v4745 = vadd.f32 %v4669, %v4709
    %v4746 = vadd.f32 %v4670, %v4709
    %v4747 = vadd.f32 %v4671, %v4709
    %v4748 = vadd.f32 %v4672, %v4709
    %v4749 = vadd.f32 %v4673, %v4709
    %v4750 = vadd.f32 %v4674, %v4709
    %v4751 = vadd.f32 %v4675, %v4709
    %v4752 = vadd.f32 %v4676, %v4709
    %v4753 = vadd.f32 %v4677, %v4709
    %v4754 = vadd.f32 %v4678, %v4709
    %v4755 = vadd.f32 %v4679, %v4709
    %v4756 = vadd.f32 %v4680, %v4709
    %v4757 = vadd.f32 %v4681, %v4709
    %v4758 = vadd.f32 %v4682, %v4709
    %v4759 = vadd.f32 %v4683, %v4709
    %v4760 = vadd.f32 %v4684, %v4709
    %v4761 = vadd.f32 %v4685, %v4709
    %v4762 = vadd.f32 %v4686, %v4709
    %v4763 = vadd.f32 %v4687, %v4709
    %v4764 = vadd.f32 %v4688, %v4709
    %v4765 = vadd.f32 %v4689, %v4709
    %v4766 = vadd.f32 %v4690, %v4709
    %v4767 = vadd.f32 %v4691, %v4709
    %v4768 = vadd.f32 %v4692, %v4709
    %v4769 = vadd.f32 %v4693, %v4709
    %v4770 = vadd.f32 %v4694, %v4709
    %v4771 = vadd.f32 %v4695, %v4709
    %v4772 = vadd.f32 %v4696, %v4709
    %v4773 = vadd.f32 %v4697, %v4709
    %v4774 = vadd.f32 %v4698, %v4709
    %v4775 = vadd.f32 %v4699, %v4709
    %v4776 = vadd.f32 %v4700, %v4709
    %v4777 = vadd.f32 %v4701, %v4709
    %v4778 = vadd.f32 %v4702, %v4709
    %v4779 = vadd.f32 %v4703, %v4709
    %v4780 = vadd.f32 %v4704, %v4709
    %v4781 = vadd.f32 %v4705, %v4709
    %v4782 = vadd.f32 %v4706, %v4709
    %v4783 = vmax.f32 %v4711, 0.0
    %v4784 = vmax.f32 %v4712, 0.0
    %v4785 = vmax.f32 %v4713, 0.0
    %v4786 = vmax.f32 %v4714, 0.0
    %v4787 = vmax.f32 %v4715, 0.0
    %v4788 = vmax.f32 %v4716, 0.0
    %v4789 = vmax.f32 %v4717, 0.0
    %v4790 = vmax.f32 %v4718, 0.0
    %v4791 = vmax.f32 %v4719, 0.0
    %v4792 = vmax.f32 %v4720, 0.0
    %v4793 = vmax.f32 %v4721, 0.0
    %v4794 = vmax.f32 %v4722, 0.0
    %v4795 = vmax.f32 %v4723, 0.0
    %v4796 = vmax.f32 %v4724, 0.0
    %v4797 = vmax.f32 %v4725, 0.0
    %v4798 = vmax.f32 %v4726, 0.0
    %v4799 = vmax.f32 %v4727, 0.0
    %v4800 = vmax.f32 %v4728, 0.0
    %v4801 = vmax.f32 %v4729, 0.0
    %v4802 = vmax.f32 %v4730, 0.0
    %v4803 = vmax.f32 %v4731, 0.0
    %v4804 = vmax.f32 %v4732, 0.0
    %v4805 = vmax.f32 %v4733, 0.0
    %v4806 = vmax.f32 %v4734, 0.0
    %v4807 = vmax.f32 %v4735, 0.0
    %v4808 = vmax.f32 %v4736, 0.0
    %v4809 = vmax.f32 %v4737, 0.0
    %v4810 = vmax.f32 %v4738, 0.0
    %v4811 = vmax.f32 %v4739, 0.0
    %v4812 = vmax.f32 %v4740, 0.0
    %v4813 = vmax.f32 %v4741, 0.0
    %v4814 = vmax.f32 %v4742, 0.0
    %v4815 = vmax.f32 %v4743, 0.0
    %v4816 = vmax.f32 %v4744, 0.0
    %v4817 = vmax.f32 %v4745, 0.0
    %v4818 = vmax.f32 %v4746, 0.0
    %v4819 = vmax.f32 %v4747, 0.0
    %v4820 = vmax.f32 %v4748, 0.0
    %v4821 = vmax.f32 %v4749, 0.0
    %v4822 = vmax.f32 %v4750, 0.0
    %v4823 = vmax.f32 %v4751, 0.0
    %v4824 = vmax.f32 %v4752, 0.0
    %v4825 = vmax.f32 %v4753, 0.0
    %v4826 = vmax.f32 %v4754, 0.0
    %v4827 = vmax.f32 %v4755, 0.0
    %v4828 = vmax.f32 %v4756, 0.0
    %v4829 = vmax.f32 %v4757, 0.0
    %v4830 = vmax.f32 %v4758, 0.0
    %v4831 = vmax.f32 %v4759, 0.0
    %v4832 = vmax.f32 %v4760, 0.0
    %v4833 = vmax.f32 %v4761, 0.0
    %v4834 = vmax.f32 %v4762, 0.0
    %v4835 = vmax.f32 %v4763, 0.0
    %v4836 = vmax.f32 %v4764, 0.0
    %v4837 = vmax.f32 %v4765, 0.0
    %v4838 = vmax.f32 %v4766, 0.0
    %v4839 = vmax.f32 %v4767, 0.0
    %v4840 = vmax.f32 %v4768, 0.0
    %v4841 = vmax.f32 %v4769, 0.0
    %v4842 = vmax.f32 %v4770, 0.0
    %v4843 = vmax.f32 %v4771, 0.0
    %v4844 = vmax.f32 %v4772, 0.0
    %v4845 = vmax.f32 %v4773, 0.0
    %v4846 = vmax.f32 %v4774, 0.0
    %v4847 = vmax.f32 %v4775, 0.0
    %v4848 = vmax.f32 %v4776, 0.0
    %v4849 = vmax.f32 %v4777, 0.0
    %v4850 = vmax.f32 %v4778, 0.0
    %v4851 = vmax.f32 %v4779, 0.0
    %v4852 = vmax.f32 %v4780, 0.0
    %v4853 = vmax.f32 %v4781, 0.0
    %v4854 = vmax.f32 %v4782, 0.0
    %4855 = vst.msk [vmem:[#allocation2] sm:$0xff] %vm3464, %v4783
    %4857 = vrot.lane.b32.xlu0 %v4784, 64
    %v4858 = vpop.permute.xlu0 %4857
    %vm4860 = vcmask 1048064
    %4861 = vst.msk [vmem:[#allocation2] sm:$0xff] %vm4860, %v4858
    %4862 = vst.msk [vmem:[#allocation2 + $0x8] sm:$0xff] %vm3464, %v4785
    %4864 = vrot.lane.b32.xlu0 %v4786, 64
    %v4865 = vpop.permute.xlu0 %4864
    %4867 = vst.msk [vmem:[#allocation2 + $0x8] sm:$0xff] %vm4860, %v4865
    %4868 = vst.msk [vmem:[#allocation2 + $0x10] sm:$0xff] %vm3464, %v4787
    %4870 = vrot.lane.b32.xlu0 %v4788, 64
    %v4871 = vpop.permute.xlu0 %4870
    %4873 = vst.msk [vmem:[#allocation2 + $0x10] sm:$0xff] %vm4860, %v4871
    %4874 = vst.msk [vmem:[#allocation2 + $0x18] sm:$0xff] %vm3464, %v4789
    %4876 = vrot.lane.b32.xlu0 %v4790, 64
    %v4877 = vpop.permute.xlu0 %4876
    %4879 = vst.msk [vmem:[#allocation2 + $0x18] sm:$0xff] %vm4860, %v4877
    %4880 = vst.msk [vmem:[#allocation2 + $0x20] sm:$0xff] %vm3464, %v4791
    %4882 = vrot.lane.b32.xlu0 %v4792, 64
    %v4883 = vpop.permute.xlu0 %4882
    %4885 = vst.msk [vmem:[#allocation2 + $0x20] sm:$0xff] %vm4860, %v4883
    %4886 = vst.msk [vmem:[#allocation2 + $0x28] sm:$0xff] %vm3464, %v4793
    %4888 = vrot.lane.b32.xlu0 %v4794, 64
    %v4889 = vpop.permute.xlu0 %4888
    %4891 = vst.msk [vmem:[#allocation2 + $0x28] sm:$0xff] %vm4860, %v4889
    %4892 = vst.msk [vmem:[#allocation2 + $0x30] sm:$0xff] %vm3464, %v4795
    %4894 = vrot.lane.b32.xlu0 %v4796, 64
    %v4895 = vpop.permute.xlu0 %4894
    %4897 = vst.msk [vmem:[#allocation2 + $0x30] sm:$0xff] %vm4860, %v4895
    %4898 = vst.msk [vmem:[#allocation2 + $0x38] sm:$0xff] %vm3464, %v4797
    %4900 = vrot.lane.b32.xlu0 %v4798, 64
    %v4901 = vpop.permute.xlu0 %4900
    %4903 = vst.msk [vmem:[#allocation2 + $0x38] sm:$0xff] %vm4860, %v4901
    %4904 = vst.msk [vmem:[#allocation2 + $0x40] sm:$0xff] %vm3464, %v4799
    %4906 = vrot.lane.b32.xlu0 %v4800, 64
    %v4907 = vpop.permute.xlu0 %4906
    %4909 = vst.msk [vmem:[#allocation2 + $0x40] sm:$0xff] %vm4860, %v4907
    %4910 = vst.msk [vmem:[#allocation2 + $0x48] sm:$0xff] %vm3464, %v4801
    %4912 = vrot.lane.b32.xlu0 %v4802, 64
    %v4913 = vpop.permute.xlu0 %4912
    %4915 = vst.msk [vmem:[#allocation2 + $0x48] sm:$0xff] %vm4860, %v4913
    %4916 = vst.msk [vmem:[#allocation2 + $0x50] sm:$0xff] %vm3464, %v4803
    %4918 = vrot.lane.b32.xlu0 %v4804, 64
    %v4919 = vpop.permute.xlu0 %4918
    %4921 = vst.msk [vmem:[#allocation2 + $0x50] sm:$0xff] %vm4860, %v4919
    %4922 = vst.msk [vmem:[#allocation2 + $0x58] sm:$0xff] %vm3464, %v4805
    %4924 = vrot.lane.b32.xlu0 %v4806, 64
    %v4925 = vpop.permute.xlu0 %4924
    %4927 = vst.msk [vmem:[#allocation2 + $0x58] sm:$0xff] %vm4860, %v4925
    %4928 = vst.msk [vmem:[#allocation2 + $0x60] sm:$0xff] %vm3464, %v4807
    %4930 = vrot.lane.b32.xlu0 %v4808, 64
    %v4931 = vpop.permute.xlu0 %4930
    %4933 = vst.msk [vmem:[#allocation2 + $0x60] sm:$0xff] %vm4860, %v4931
    %4934 = vst.msk [vmem:[#allocation2 + $0x68] sm:$0xff] %vm3464, %v4809
    %4936 = vrot.lane.b32.xlu0 %v4810, 64
    %v4937 = vpop.permute.xlu0 %4936
    %4939 = vst.msk [vmem:[#allocation2 + $0x68] sm:$0xff] %vm4860, %v4937
    %4940 = vst.msk [vmem:[#allocation2 + $0x70] sm:$0xff] %vm3464, %v4811
    %4942 = vrot.lane.b32.xlu0 %v4812, 64
    %v4943 = vpop.permute.xlu0 %4942
    %4945 = vst.msk [vmem:[#allocation2 + $0x70] sm:$0xff] %vm4860, %v4943
    %4946 = vst.msk [vmem:[#allocation2 + $0x78] sm:$0xff] %vm3464, %v4813
    %4948 = vrot.lane.b32.xlu0 %v4814, 64
    %v4949 = vpop.permute.xlu0 %4948
    %4951 = vst.msk [vmem:[#allocation2 + $0x78] sm:$0xff] %vm4860, %v4949
    %4952 = vst.msk [vmem:[#allocation2 + $0x80] sm:$0xff] %vm3464, %v4815
    %4954 = vrot.lane.b32.xlu0 %v4816, 64
    %v4955 = vpop.permute.xlu0 %4954
    %4957 = vst.msk [vmem:[#allocation2 + $0x80] sm:$0xff] %vm4860, %v4955
    %4958 = vst.msk [vmem:[#allocation2 + $0x88] sm:$0xff] %vm3464, %v4817
    %4960 = vrot.lane.b32.xlu0 %v4818, 64
    %v4961 = vpop.permute.xlu0 %4960
    %4963 = vst.msk [vmem:[#allocation2 + $0x88] sm:$0xff] %vm4860, %v4961
    %4964 = vst.msk [vmem:[#allocation2 + $0x90] sm:$0xff] %vm3464, %v4819
    %4966 = vrot.lane.b32.xlu0 %v4820, 64
    %v4967 = vpop.permute.xlu0 %4966
    %4969 = vst.msk [vmem:[#allocation2 + $0x90] sm:$0xff] %vm4860, %v4967
    %4970 = vst.msk [vmem:[#allocation2 + $0x98] sm:$0xff] %vm3464, %v4821
    %4972 = vrot.lane.b32.xlu0 %v4822, 64
    %v4973 = vpop.permute.xlu0 %4972
    %4975 = vst.msk [vmem:[#allocation2 + $0x98] sm:$0xff] %vm4860, %v4973
    %4976 = vst.msk [vmem:[#allocation2 + $0xa0] sm:$0xff] %vm3464, %v4823
    %4978 = vrot.lane.b32.xlu0 %v4824, 64
    %v4979 = vpop.permute.xlu0 %4978
    %4981 = vst.msk [vmem:[#allocation2 + $0xa0] sm:$0xff] %vm4860, %v4979
    %4982 = vst.msk [vmem:[#allocation2 + $0xa8] sm:$0xff] %vm3464, %v4825
    %4984 = vrot.lane.b32.xlu0 %v4826, 64
    %v4985 = vpop.permute.xlu0 %4984
    %4987 = vst.msk [vmem:[#allocation2 + $0xa8] sm:$0xff] %vm4860, %v4985
    %4988 = vst.msk [vmem:[#allocation2 + $0xb0] sm:$0xff] %vm3464, %v4827
    %4990 = vrot.lane.b32.xlu0 %v4828, 64
    %v4991 = vpop.permute.xlu0 %4990
    %4993 = vst.msk [vmem:[#allocation2 + $0xb0] sm:$0xff] %vm4860, %v4991
    %4994 = vst.msk [vmem:[#allocation2 + $0xb8] sm:$0xff] %vm3464, %v4829
    %4996 = vrot.lane.b32.xlu0 %v4830, 64
    %v4997 = vpop.permute.xlu0 %4996
    %4999 = vst.msk [vmem:[#allocation2 + $0xb8] sm:$0xff] %vm4860, %v4997
    %5000 = vst.msk [vmem:[#allocation2 + $0xc0] sm:$0xff] %vm3464, %v4831
    %5002 = vrot.lane.b32.xlu0 %v4832, 64
    %v5003 = vpop.permute.xlu0 %5002
    %5005 = vst.msk [vmem:[#allocation2 + $0xc0] sm:$0xff] %vm4860, %v5003
    %5006 = vst.msk [vmem:[#allocation2 + $0xc8] sm:$0xff] %vm3464, %v4833
    %5008 = vrot.lane.b32.xlu0 %v4834, 64
    %v5009 = vpop.permute.xlu0 %5008
    %5011 = vst.msk [vmem:[#allocation2 + $0xc8] sm:$0xff] %vm4860, %v5009
    %5012 = vst.msk [vmem:[#allocation2 + $0xd0] sm:$0xff] %vm3464, %v4835
    %5014 = vrot.lane.b32.xlu0 %v4836, 64
    %v5015 = vpop.permute.xlu0 %5014
    %5017 = vst.msk [vmem:[#allocation2 + $0xd0] sm:$0xff] %vm4860, %v5015
    %5018 = vst.msk [vmem:[#allocation2 + $0xd8] sm:$0xff] %vm3464, %v4837
    %5020 = vrot.lane.b32.xlu0 %v4838, 64
    %v5021 = vpop.permute.xlu0 %5020
    %5023 = vst.msk [vmem:[#allocation2 + $0xd8] sm:$0xff] %vm4860, %v5021
    %5024 = vst.msk [vmem:[#allocation2 + $0xe0] sm:$0xff] %vm3464, %v4839
    %5026 = vrot.lane.b32.xlu0 %v4840, 64
    %v5027 = vpop.permute.xlu0 %5026
    %5029 = vst.msk [vmem:[#allocation2 + $0xe0] sm:$0xff] %vm4860, %v5027
    %5030 = vst.msk [vmem:[#allocation2 + $0xe8] sm:$0xff] %vm3464, %v4841
    %5032 = vrot.lane.b32.xlu0 %v4842, 64
    %v5033 = vpop.permute.xlu0 %5032
    %5035 = vst.msk [vmem:[#allocation2 + $0xe8] sm:$0xff] %vm4860, %v5033
    %5036 = vst.msk [vmem:[#allocation2 + $0xf0] sm:$0xff] %vm3464, %v4843
    %5038 = vrot.lane.b32.xlu0 %v4844, 64
    %v5039 = vpop.permute.xlu0 %5038
    %5041 = vst.msk [vmem:[#allocation2 + $0xf0] sm:$0xff] %vm4860, %v5039
    %5042 = vst.msk [vmem:[#allocation2 + $0xf8] sm:$0xff] %vm3464, %v4845
    %5044 = vrot.lane.b32.xlu0 %v4846, 64
    %v5045 = vpop.permute.xlu0 %5044
    %5047 = vst.msk [vmem:[#allocation2 + $0xf8] sm:$0xff] %vm4860, %v5045
    %5048 = vst.msk [vmem:[#allocation2 + $0x100] sm:$0xff] %vm3464, %v4847
    %5050 = vrot.lane.b32.xlu0 %v4848, 64
    %v5051 = vpop.permute.xlu0 %5050
    %5053 = vst.msk [vmem:[#allocation2 + $0x100] sm:$0xff] %vm4860, %v5051
    %5054 = vst.msk [vmem:[#allocation2 + $0x108] sm:$0xff] %vm3464, %v4849
    %5056 = vrot.lane.b32.xlu0 %v4850, 64
    %v5057 = vpop.permute.xlu0 %5056
    %5059 = vst.msk [vmem:[#allocation2 + $0x108] sm:$0xff] %vm4860, %v5057
    %5060 = vst.msk [vmem:[#allocation2 + $0x110] sm:$0xff] %vm3464, %v4851
    %5062 = vrot.lane.b32.xlu0 %v4852, 64
    %v5063 = vpop.permute.xlu0 %5062
    %5065 = vst.msk [vmem:[#allocation2 + $0x110] sm:$0xff] %vm4860, %v5063
    %5066 = vst.msk [vmem:[#allocation2 + $0x118] sm:$0xff] %vm3464, %v4853
    %5068 = vrot.lane.b32.xlu0 %v4854, 64
    %v5069 = vpop.permute.xlu0 %5068
    %5071 = vst.msk [vmem:[#allocation2 + $0x118] sm:$0xff] %vm4860, %v5069
    %v5072 = vld [vmem:[#allocation2] sm:$0xff]
    %v5073 = vld [vmem:[#allocation2 + $0x8] sm:$0xff]
    %v5074 = vld [vmem:[#allocation2 + $0x10] sm:$0xff]
    %v5075 = vld [vmem:[#allocation2 + $0x18] sm:$0xff]
    %v5076 = vld [vmem:[#allocation2 + $0x20] sm:$0xff]
    %v5077 = vld [vmem:[#allocation2 + $0x28] sm:$0xff]
    %v5078 = vld [vmem:[#allocation2 + $0x30] sm:$0xff]
    %v5079 = vld [vmem:[#allocation2 + $0x38] sm:$0xff]
    %v5080 = vld [vmem:[#allocation2 + $0x40] sm:$0xff]
    %v5081 = vld [vmem:[#allocation2 + $0x48] sm:$0xff]
    %v5082 = vld [vmem:[#allocation2 + $0x50] sm:$0xff]
    %v5083 = vld [vmem:[#allocation2 + $0x58] sm:$0xff]
    %v5084 = vld [vmem:[#allocation2 + $0x60] sm:$0xff]
    %v5085 = vld [vmem:[#allocation2 + $0x68] sm:$0xff]
    %v5086 = vld [vmem:[#allocation2 + $0x70] sm:$0xff]
    %v5087 = vld [vmem:[#allocation2 + $0x78] sm:$0xff]
    %v5088 = vld [vmem:[#allocation2 + $0x80] sm:$0xff]
    %v5089 = vld [vmem:[#allocation2 + $0x88] sm:$0xff]
    %v5090 = vld [vmem:[#allocation2 + $0x90] sm:$0xff]
    %v5091 = vld [vmem:[#allocation2 + $0x98] sm:$0xff]
    %v5092 = vld [vmem:[#allocation2 + $0xa0] sm:$0xff]
    %v5093 = vld [vmem:[#allocation2 + $0xa8] sm:$0xff]
    %v5094 = vld [vmem:[#allocation2 + $0xb0] sm:$0xff]
    %v5095 = vld [vmem:[#allocation2 + $0xb8] sm:$0xff]
    %v5096 = vld [vmem:[#allocation2 + $0xc0] sm:$0xff]
    %v5097 = vld [vmem:[#allocation2 + $0xc8] sm:$0xff]
    %v5098 = vld [vmem:[#allocation2 + $0xd0] sm:$0xff]
    %v5099 = vld [vmem:[#allocation2 + $0xd8] sm:$0xff]
    %v5100 = vld [vmem:[#allocation2 + $0xe0] sm:$0xff]
    %v5101 = vld [vmem:[#allocation2 + $0xe8] sm:$0xff]
    %v5102 = vld [vmem:[#allocation2 + $0xf0] sm:$0xff]
    %v5103 = vld [vmem:[#allocation2 + $0xf8] sm:$0xff]
    %v5104 = vld [vmem:[#allocation2 + $0x100] sm:$0xff]
    %v5105 = vld [vmem:[#allocation2 + $0x108] sm:$0xff]
    %v5106 = vld [vmem:[#allocation2 + $0x110] sm:$0xff]
    %v5107 = vld [vmem:[#allocation2 + $0x118] sm:$0xff]
    %v5108 = vld [vmem:[#allocation10] sm:$0xff]
    %v5109 = vld [vmem:[#allocation10 + $0x8] sm:$0xff]
    %v5110 = vld [vmem:[#allocation10 + $0x10] sm:$0xff]
    %v5111 = vld [vmem:[#allocation10 + $0x18] sm:$0xff]
    %v5112 = vld [vmem:[#allocation10 + $0x20] sm:$0xff]
    %v5113 = vld [vmem:[#allocation10 + $0x28] sm:$0xff]
    %v5114 = vld [vmem:[#allocation10 + $0x30] sm:$0xff]
    %v5115 = vld [vmem:[#allocation10 + $0x38] sm:$0xff]
    %v5116 = vld [vmem:[#allocation10 + $0x40] sm:$0xff]
    %v5117 = vld [vmem:[#allocation10 + $0x48] sm:$0xff]
    %v5118 = vld [vmem:[#allocation10 + $0x50] sm:$0xff]
    %v5119 = vld [vmem:[#allocation10 + $0x58] sm:$0xff]
    %v5120 = vld [vmem:[#allocation10 + $0x60] sm:$0xff]
    %v5121 = vld [vmem:[#allocation10 + $0x68] sm:$0xff]
    %v5122 = vld [vmem:[#allocation10 + $0x70] sm:$0xff]
    %v5123 = vld [vmem:[#allocation10 + $0x78] sm:$0xff]
    %v5124 = vld [vmem:[#allocation10 + $0x80] sm:$0xff]
    %v5125 = vld [vmem:[#allocation10 + $0x88] sm:$0xff]
    %v5126 = vld [vmem:[#allocation10 + $0x90] sm:$0xff]
    %v5127 = vld [vmem:[#allocation10 + $0x98] sm:$0xff]
    %v5128 = vld [vmem:[#allocation10 + $0xa0] sm:$0xff]
    %v5129 = vld [vmem:[#allocation10 + $0xa8] sm:$0xff]
    %v5130 = vld [vmem:[#allocation10 + $0xb0] sm:$0xff]
    %v5131 = vld [vmem:[#allocation10 + $0xb8] sm:$0xff]
    %v5132 = vld [vmem:[#allocation10 + $0xc0] sm:$0xff]
    %v5133 = vld [vmem:[#allocation10 + $0xc8] sm:$0xff]
    %v5134 = vld [vmem:[#allocation10 + $0xd0] sm:$0xff]
    %v5135 = vld [vmem:[#allocation10 + $0xd8] sm:$0xff]
    %v5136 = vld [vmem:[#allocation10 + $0xe0] sm:$0xff]
    %v5137 = vld [vmem:[#allocation10 + $0xe8] sm:$0xff]
    %v5138 = vld [vmem:[#allocation10 + $0xf0] sm:$0xff]
    %v5139 = vld [vmem:[#allocation10 + $0xf8] sm:$0xff]
    %v5140 = vld [vmem:[#allocation10 + $0x100] sm:$0xff]
    %v5141 = vld [vmem:[#allocation10 + $0x108] sm:$0xff]
    %v5142 = vld [vmem:[#allocation10 + $0x110] sm:$0xff]
    %v5143 = vld [vmem:[#allocation10 + $0x118] sm:$0xff]
    %v5144 = vld [vmem:[#allocation10 + $0x120] sm:$0xff]
    %v5145 = vld [vmem:[#allocation10 + $0x128] sm:$0xff]
    %v5146 = vld [vmem:[#allocation10 + $0x130] sm:$0xff]
    %v5147 = vld [vmem:[#allocation10 + $0x138] sm:$0xff]
    %v5148 = vld [vmem:[#allocation10 + $0x140] sm:$0xff]
    %v5149 = vld [vmem:[#allocation10 + $0x148] sm:$0xff]
    %v5150 = vld [vmem:[#allocation10 + $0x150] sm:$0xff]
    %v5151 = vld [vmem:[#allocation10 + $0x158] sm:$0xff]
    %v5152 = vld [vmem:[#allocation10 + $0x160] sm:$0xff]
    %v5153 = vld [vmem:[#allocation10 + $0x168] sm:$0xff]
    %v5154 = vld [vmem:[#allocation10 + $0x170] sm:$0xff]
    %v5155 = vld [vmem:[#allocation10 + $0x178] sm:$0xff]
    %v5156 = vld [vmem:[#allocation10 + $0x180] sm:$0xff]
    %v5157 = vld [vmem:[#allocation10 + $0x188] sm:$0xff]
    %v5158 = vld [vmem:[#allocation10 + $0x190] sm:$0xff]
    %v5159 = vld [vmem:[#allocation10 + $0x198] sm:$0xff]
    %v5160 = vld [vmem:[#allocation10 + $0x1a0] sm:$0xff]
    %v5161 = vld [vmem:[#allocation10 + $0x1a8] sm:$0xff]
    %v5162 = vld [vmem:[#allocation10 + $0x1b0] sm:$0xff]
    %v5163 = vld [vmem:[#allocation10 + $0x1b8] sm:$0xff]
    %v5164 = vld [vmem:[#allocation10 + $0x1c0] sm:$0xff]
    %v5165 = vld [vmem:[#allocation10 + $0x1c8] sm:$0xff]
    %v5166 = vld [vmem:[#allocation10 + $0x1d0] sm:$0xff]
    %v5167 = vld [vmem:[#allocation10 + $0x1d8] sm:$0xff]
    %v5168 = vld [vmem:[#allocation10 + $0x1e0] sm:$0xff]
    %v5169 = vld [vmem:[#allocation10 + $0x1e8] sm:$0xff]
    %v5170 = vld [vmem:[#allocation10 + $0x1f0] sm:$0xff]
    %v5171 = vld [vmem:[#allocation10 + $0x1f8] sm:$0xff]
    %v5172 = vld [vmem:[#allocation10 + $0x200] sm:$0xff]
    %v5173 = vld [vmem:[#allocation10 + $0x208] sm:$0xff]
    %v5174 = vld [vmem:[#allocation10 + $0x210] sm:$0xff]
    %v5175 = vld [vmem:[#allocation10 + $0x218] sm:$0xff]
    %v5176 = vld [vmem:[#allocation10 + $0x220] sm:$0xff]
    %v5177 = vld [vmem:[#allocation10 + $0x228] sm:$0xff]
    %v5178 = vld [vmem:[#allocation10 + $0x230] sm:$0xff]
    %v5179 = vld [vmem:[#allocation10 + $0x238] sm:$0xff]
    %v5180 = vld [vmem:[#allocation10 + $0x240] sm:$0xff]
    %v5181 = vld [vmem:[#allocation10 + $0x248] sm:$0xff]
    %v5182 = vld [vmem:[#allocation10 + $0x250] sm:$0xff]
    %v5183 = vld [vmem:[#allocation10 + $0x258] sm:$0xff]
    %v5184 = vld [vmem:[#allocation10 + $0x260] sm:$0xff]
    %v5185 = vld [vmem:[#allocation10 + $0x268] sm:$0xff]
    %v5186 = vld [vmem:[#allocation10 + $0x270] sm:$0xff]
    %v5187 = vld [vmem:[#allocation10 + $0x278] sm:$0xff]
    %v5188 = vld [vmem:[#allocation10 + $0x280] sm:$0xff]
    %v5189 = vld [vmem:[#allocation10 + $0x288] sm:$0xff]
    %v5190 = vld [vmem:[#allocation10 + $0x290] sm:$0xff]
    %v5191 = vld [vmem:[#allocation10 + $0x298] sm:$0xff]
    %v5192 = vld [vmem:[#allocation10 + $0x2a0] sm:$0xff]
    %v5193 = vld [vmem:[#allocation10 + $0x2a8] sm:$0xff]
    %v5194 = vld [vmem:[#allocation10 + $0x2b0] sm:$0xff]
    %v5195 = vld [vmem:[#allocation10 + $0x2b8] sm:$0xff]
    %v5196 = vld [vmem:[#allocation10 + $0x2c0] sm:$0xff]
    %v5197 = vld [vmem:[#allocation10 + $0x2c8] sm:$0xff]
    %v5198 = vld [vmem:[#allocation10 + $0x2d0] sm:$0xff]
    %v5199 = vld [vmem:[#allocation10 + $0x2d8] sm:$0xff]
    %v5200 = vld [vmem:[#allocation10 + $0x2e0] sm:$0xff]
    %v5201 = vld [vmem:[#allocation10 + $0x2e8] sm:$0xff]
    %v5202 = vld [vmem:[#allocation10 + $0x2f0] sm:$0xff]
    %v5203 = vld [vmem:[#allocation10 + $0x2f8] sm:$0xff]
    %v5204 = vld [vmem:[#allocation10 + $0x300] sm:$0xff]
    %v5205 = vld [vmem:[#allocation10 + $0x308] sm:$0xff]
    %v5206 = vld [vmem:[#allocation10 + $0x310] sm:$0xff]
    %v5207 = vld [vmem:[#allocation10 + $0x318] sm:$0xff]
    %v5208 = vld [vmem:[#allocation10 + $0x320] sm:$0xff]
    %v5209 = vld [vmem:[#allocation10 + $0x328] sm:$0xff]
    %v5210 = vld [vmem:[#allocation10 + $0x330] sm:$0xff]
    %v5211 = vld [vmem:[#allocation10 + $0x338] sm:$0xff]
    %v5212 = vld [vmem:[#allocation10 + $0x340] sm:$0xff]
    %v5213 = vld [vmem:[#allocation10 + $0x348] sm:$0xff]
    %v5214 = vld [vmem:[#allocation10 + $0x350] sm:$0xff]
    %v5215 = vld [vmem:[#allocation10 + $0x358] sm:$0xff]
    %v5216 = vld [vmem:[#allocation10 + $0x360] sm:$0xff]
    %v5217 = vld [vmem:[#allocation10 + $0x368] sm:$0xff]
    %v5218 = vld [vmem:[#allocation10 + $0x370] sm:$0xff]
    %v5219 = vld [vmem:[#allocation10 + $0x378] sm:$0xff]
    %v5220 = vld [vmem:[#allocation10 + $0x380] sm:$0xff]
    %v5221 = vld [vmem:[#allocation10 + $0x388] sm:$0xff]
    %v5222 = vld [vmem:[#allocation10 + $0x390] sm:$0xff]
    %v5223 = vld [vmem:[#allocation10 + $0x398] sm:$0xff]
    %v5224 = vld [vmem:[#allocation10 + $0x3a0] sm:$0xff]
    %v5225 = vld [vmem:[#allocation10 + $0x3a8] sm:$0xff]
    %v5226 = vld [vmem:[#allocation10 + $0x3b0] sm:$0xff]
    %v5227 = vld [vmem:[#allocation10 + $0x3b8] sm:$0xff]
    %v5228 = vld [vmem:[#allocation10 + $0x3c0] sm:$0xff]
    %v5229 = vld [vmem:[#allocation10 + $0x3c8] sm:$0xff]
    %v5230 = vld [vmem:[#allocation10 + $0x3d0] sm:$0xff]
    %v5231 = vld [vmem:[#allocation10 + $0x3d8] sm:$0xff]
    %v5232 = vld [vmem:[#allocation10 + $0x3e0] sm:$0xff]
    %v5233 = vld [vmem:[#allocation10 + $0x3e8] sm:$0xff]
    %v5234 = vld [vmem:[#allocation10 + $0x3f0] sm:$0xff]
    %v5235 = vld [vmem:[#allocation10 + $0x3f8] sm:$0xff]
    %v5236 = vld [vmem:[#allocation10 + $0x400] sm:$0xff]
    %v5237 = vld [vmem:[#allocation10 + $0x408] sm:$0xff]
    %v5238 = vld [vmem:[#allocation10 + $0x410] sm:$0xff]
    %v5239 = vld [vmem:[#allocation10 + $0x418] sm:$0xff]
    %v5240 = vld [vmem:[#allocation10 + $0x420] sm:$0xff]
    %v5241 = vld [vmem:[#allocation10 + $0x428] sm:$0xff]
    %v5242 = vld [vmem:[#allocation10 + $0x430] sm:$0xff]
    %v5243 = vld [vmem:[#allocation10 + $0x438] sm:$0xff]
    %v5244 = vld [vmem:[#allocation10 + $0x440] sm:$0xff]
    %v5245 = vld [vmem:[#allocation10 + $0x448] sm:$0xff]
    %v5246 = vld [vmem:[#allocation10 + $0x450] sm:$0xff]
    %v5247 = vld [vmem:[#allocation10 + $0x458] sm:$0xff]
    %v5248 = vld [vmem:[#allocation10 + $0x460] sm:$0xff]
    %v5249 = vld [vmem:[#allocation10 + $0x468] sm:$0xff]
    %v5250 = vld [vmem:[#allocation10 + $0x470] sm:$0xff]
    %v5251 = vld [vmem:[#allocation10 + $0x478] sm:$0xff]
    %v5252 = vld [vmem:[#allocation10 + $0x480] sm:$0xff]
    %v5253 = vld [vmem:[#allocation10 + $0x488] sm:$0xff]
    %v5254 = vld [vmem:[#allocation10 + $0x490] sm:$0xff]
    %v5255 = vld [vmem:[#allocation10 + $0x498] sm:$0xff]
    %v5256 = vld [vmem:[#allocation10 + $0x4a0] sm:$0xff]
    %v5257 = vld [vmem:[#allocation10 + $0x4a8] sm:$0xff]
    %v5258 = vld [vmem:[#allocation10 + $0x4b0] sm:$0xff]
    %v5259 = vld [vmem:[#allocation10 + $0x4b8] sm:$0xff]
    %v5260 = vld [vmem:[#allocation10 + $0x4c0] sm:$0xff]
    %v5261 = vld [vmem:[#allocation10 + $0x4c8] sm:$0xff]
    %v5262 = vld [vmem:[#allocation10 + $0x4d0] sm:$0xff]
    %v5263 = vld [vmem:[#allocation10 + $0x4d8] sm:$0xff]
    %v5264 = vld [vmem:[#allocation10 + $0x4e0] sm:$0xff]
    %v5265 = vld [vmem:[#allocation10 + $0x4e8] sm:$0xff]
    %v5266 = vld [vmem:[#allocation10 + $0x4f0] sm:$0xff]
    %v5267 = vld [vmem:[#allocation10 + $0x4f8] sm:$0xff]
    %v5268 = vld [vmem:[#allocation10 + $0x500] sm:$0xff]
    %v5269 = vld [vmem:[#allocation10 + $0x508] sm:$0xff]
    %v5270 = vld [vmem:[#allocation10 + $0x510] sm:$0xff]
    %v5271 = vld [vmem:[#allocation10 + $0x518] sm:$0xff]
    %v5272 = vld [vmem:[#allocation10 + $0x520] sm:$0xff]
    %v5273 = vld [vmem:[#allocation10 + $0x528] sm:$0xff]
    %v5274 = vld [vmem:[#allocation10 + $0x530] sm:$0xff]
    %v5275 = vld [vmem:[#allocation10 + $0x538] sm:$0xff]
    %v5276 = vld [vmem:[#allocation10 + $0x540] sm:$0xff]
    %v5277 = vld [vmem:[#allocation10 + $0x548] sm:$0xff]
    %v5278 = vld [vmem:[#allocation10 + $0x550] sm:$0xff]
    %v5279 = vld [vmem:[#allocation10 + $0x558] sm:$0xff]
    %v5280 = vld [vmem:[#allocation10 + $0x560] sm:$0xff]
    %v5281 = vld [vmem:[#allocation10 + $0x568] sm:$0xff]
    %v5282 = vld [vmem:[#allocation10 + $0x570] sm:$0xff]
    %v5283 = vld [vmem:[#allocation10 + $0x578] sm:$0xff]
    %v5284 = vld [vmem:[#allocation10 + $0x580] sm:$0xff]
    %v5285 = vld [vmem:[#allocation10 + $0x588] sm:$0xff]
    %v5286 = vld [vmem:[#allocation10 + $0x590] sm:$0xff]
    %v5287 = vld [vmem:[#allocation10 + $0x598] sm:$0xff]
    %v5288 = vld [vmem:[#allocation10 + $0x5a0] sm:$0xff]
    %v5289 = vld [vmem:[#allocation10 + $0x5a8] sm:$0xff]
    %v5290 = vld [vmem:[#allocation10 + $0x5b0] sm:$0xff]
    %v5291 = vld [vmem:[#allocation10 + $0x5b8] sm:$0xff]
    %v5292 = vld [vmem:[#allocation10 + $0x5c0] sm:$0xff]
    %v5293 = vld [vmem:[#allocation10 + $0x5c8] sm:$0xff]
    %v5294 = vld [vmem:[#allocation10 + $0x5d0] sm:$0xff]
    %v5295 = vld [vmem:[#allocation10 + $0x5d8] sm:$0xff]
    %v5296 = vld [vmem:[#allocation10 + $0x5e0] sm:$0xff]
    %v5297 = vld [vmem:[#allocation10 + $0x5e8] sm:$0xff]
    %v5298 = vld [vmem:[#allocation10 + $0x5f0] sm:$0xff]
    %v5299 = vld [vmem:[#allocation10 + $0x5f8] sm:$0xff]
    %v5300 = vld [vmem:[#allocation10 + $0x600] sm:$0xff]
    %v5301 = vld [vmem:[#allocation10 + $0x608] sm:$0xff]
    %v5302 = vld [vmem:[#allocation10 + $0x610] sm:$0xff]
    %v5303 = vld [vmem:[#allocation10 + $0x618] sm:$0xff]
    %v5304 = vld [vmem:[#allocation10 + $0x620] sm:$0xff]
    %v5305 = vld [vmem:[#allocation10 + $0x628] sm:$0xff]
    %v5306 = vld [vmem:[#allocation10 + $0x630] sm:$0xff]
    %v5307 = vld [vmem:[#allocation10 + $0x638] sm:$0xff]
    %v5308 = vld [vmem:[#allocation10 + $0x640] sm:$0xff]
    %v5309 = vld [vmem:[#allocation10 + $0x648] sm:$0xff]
    %v5310 = vld [vmem:[#allocation10 + $0x650] sm:$0xff]
    %v5311 = vld [vmem:[#allocation10 + $0x658] sm:$0xff]
    %v5312 = vld [vmem:[#allocation10 + $0x660] sm:$0xff]
    %v5313 = vld [vmem:[#allocation10 + $0x668] sm:$0xff]
    %v5314 = vld [vmem:[#allocation10 + $0x670] sm:$0xff]
    %v5315 = vld [vmem:[#allocation10 + $0x678] sm:$0xff]
    %v5316 = vld [vmem:[#allocation10 + $0x680] sm:$0xff]
    %v5317 = vld [vmem:[#allocation10 + $0x688] sm:$0xff]
    %v5318 = vld [vmem:[#allocation10 + $0x690] sm:$0xff]
    %v5319 = vld [vmem:[#allocation10 + $0x698] sm:$0xff]
    %v5320 = vld [vmem:[#allocation10 + $0x6a0] sm:$0xff]
    %v5321 = vld [vmem:[#allocation10 + $0x6a8] sm:$0xff]
    %v5322 = vld [vmem:[#allocation10 + $0x6b0] sm:$0xff]
    %v5323 = vld [vmem:[#allocation10 + $0x6b8] sm:$0xff]
    %v5324 = vld [vmem:[#allocation10 + $0x6c0] sm:$0xff]
    %v5325 = vld [vmem:[#allocation10 + $0x6c8] sm:$0xff]
    %v5326 = vld [vmem:[#allocation10 + $0x6d0] sm:$0xff]
    %v5327 = vld [vmem:[#allocation10 + $0x6d8] sm:$0xff]
    %v5328 = vld [vmem:[#allocation10 + $0x6e0] sm:$0xff]
    %v5329 = vld [vmem:[#allocation10 + $0x6e8] sm:$0xff]
    %v5330 = vld [vmem:[#allocation10 + $0x6f0] sm:$0xff]
    %v5331 = vld [vmem:[#allocation10 + $0x6f8] sm:$0xff]
    %v5332 = vld [vmem:[#allocation10 + $0x700] sm:$0xff]
    %v5333 = vld [vmem:[#allocation10 + $0x708] sm:$0xff]
    %v5334 = vld [vmem:[#allocation10 + $0x710] sm:$0xff]
    %v5335 = vld [vmem:[#allocation10 + $0x718] sm:$0xff]
    %v5336 = vld [vmem:[#allocation10 + $0x720] sm:$0xff]
    %v5337 = vld [vmem:[#allocation10 + $0x728] sm:$0xff]
    %v5338 = vld [vmem:[#allocation10 + $0x730] sm:$0xff]
    %v5339 = vld [vmem:[#allocation10 + $0x738] sm:$0xff]
    %v5340 = vld [vmem:[#allocation10 + $0x740] sm:$0xff]
    %v5341 = vld [vmem:[#allocation10 + $0x748] sm:$0xff]
    %v5342 = vld [vmem:[#allocation10 + $0x750] sm:$0xff]
    %v5343 = vld [vmem:[#allocation10 + $0x758] sm:$0xff]
    %v5344 = vld [vmem:[#allocation10 + $0x760] sm:$0xff]
    %v5345 = vld [vmem:[#allocation10 + $0x768] sm:$0xff]
    %v5346 = vld [vmem:[#allocation10 + $0x770] sm:$0xff]
    %v5347 = vld [vmem:[#allocation10 + $0x778] sm:$0xff]
    %v5348 = vld [vmem:[#allocation10 + $0x780] sm:$0xff]
    %v5349 = vld [vmem:[#allocation10 + $0x788] sm:$0xff]
    %v5350 = vld [vmem:[#allocation10 + $0x790] sm:$0xff]
    %v5351 = vld [vmem:[#allocation10 + $0x798] sm:$0xff]
    %v5352 = vld [vmem:[#allocation10 + $0x7a0] sm:$0xff]
    %v5353 = vld [vmem:[#allocation10 + $0x7a8] sm:$0xff]
    %v5354 = vld [vmem:[#allocation10 + $0x7b0] sm:$0xff]
    %v5355 = vld [vmem:[#allocation10 + $0x7b8] sm:$0xff]
    %v5356 = vld [vmem:[#allocation10 + $0x7c0] sm:$0xff]
    %v5357 = vld [vmem:[#allocation10 + $0x7c8] sm:$0xff]
    %v5358 = vld [vmem:[#allocation10 + $0x7d0] sm:$0xff]
    %v5359 = vld [vmem:[#allocation10 + $0x7d8] sm:$0xff]
    %v5360 = vld [vmem:[#allocation10 + $0x7e0] sm:$0xff]
    %v5361 = vld [vmem:[#allocation10 + $0x7e8] sm:$0xff]
    %v5362 = vld [vmem:[#allocation10 + $0x7f0] sm:$0xff]
    %v5363 = vld [vmem:[#allocation10 + $0x7f8] sm:$0xff]
    %v5364 = vld [vmem:[#allocation10 + $0x800] sm:$0xff]
    %v5365 = vld [vmem:[#allocation10 + $0x808] sm:$0xff]
    %v5366 = vld [vmem:[#allocation10 + $0x810] sm:$0xff]
    %v5367 = vld [vmem:[#allocation10 + $0x818] sm:$0xff]
    %v5368 = vld [vmem:[#allocation10 + $0x820] sm:$0xff]
    %v5369 = vld [vmem:[#allocation10 + $0x828] sm:$0xff]
    %v5370 = vld [vmem:[#allocation10 + $0x830] sm:$0xff]
    %v5371 = vld [vmem:[#allocation10 + $0x838] sm:$0xff]
    %v5372 = vld [vmem:[#allocation10 + $0x840] sm:$0xff]
    %v5373 = vld [vmem:[#allocation10 + $0x848] sm:$0xff]
    %v5374 = vld [vmem:[#allocation10 + $0x850] sm:$0xff]
    %v5375 = vld [vmem:[#allocation10 + $0x858] sm:$0xff]
    %v5376 = vld [vmem:[#allocation10 + $0x860] sm:$0xff]
    %v5377 = vld [vmem:[#allocation10 + $0x868] sm:$0xff]
    %v5378 = vld [vmem:[#allocation10 + $0x870] sm:$0xff]
    %v5379 = vld [vmem:[#allocation10 + $0x878] sm:$0xff]
    %v5380 = vld [vmem:[#allocation10 + $0x880] sm:$0xff]
    %v5381 = vld [vmem:[#allocation10 + $0x888] sm:$0xff]
    %v5382 = vld [vmem:[#allocation10 + $0x890] sm:$0xff]
    %v5383 = vld [vmem:[#allocation10 + $0x898] sm:$0xff]
    %v5384 = vld [vmem:[#allocation10 + $0x8a0] sm:$0xff]
    %v5385 = vld [vmem:[#allocation10 + $0x8a8] sm:$0xff]
    %v5386 = vld [vmem:[#allocation10 + $0x8b0] sm:$0xff]
    %v5387 = vld [vmem:[#allocation10 + $0x8b8] sm:$0xff]
    %v5388 = vld [vmem:[#allocation10 + $0x8c0] sm:$0xff]
    %v5389 = vld [vmem:[#allocation10 + $0x8c8] sm:$0xff]
    %v5390 = vld [vmem:[#allocation10 + $0x8d0] sm:$0xff]
    %v5391 = vld [vmem:[#allocation10 + $0x8d8] sm:$0xff]
    %v5392 = vld [vmem:[#allocation10 + $0x8e0] sm:$0xff]
    %v5393 = vld [vmem:[#allocation10 + $0x8e8] sm:$0xff]
    %v5394 = vld [vmem:[#allocation10 + $0x8f0] sm:$0xff]
    %v5395 = vld [vmem:[#allocation10 + $0x8f8] sm:$0xff]
    %v5396 = vld [vmem:[#allocation10 + $0x900] sm:$0xff]
    %v5397 = vld [vmem:[#allocation10 + $0x908] sm:$0xff]
    %v5398 = vld [vmem:[#allocation10 + $0x910] sm:$0xff]
    %v5399 = vld [vmem:[#allocation10 + $0x918] sm:$0xff]
    %v5400 = vld [vmem:[#allocation10 + $0x920] sm:$0xff]
    %v5401 = vld [vmem:[#allocation10 + $0x928] sm:$0xff]
    %v5402 = vld [vmem:[#allocation10 + $0x930] sm:$0xff]
    %v5403 = vld [vmem:[#allocation10 + $0x938] sm:$0xff]
    %v5404 = vld [vmem:[#allocation10 + $0x940] sm:$0xff]
    %v5405 = vld [vmem:[#allocation10 + $0x948] sm:$0xff]
    %v5406 = vld [vmem:[#allocation10 + $0x950] sm:$0xff]
    %v5407 = vld [vmem:[#allocation10 + $0x958] sm:$0xff]
    %v5408 = vld [vmem:[#allocation10 + $0x960] sm:$0xff]
    %v5409 = vld [vmem:[#allocation10 + $0x968] sm:$0xff]
    %v5410 = vld [vmem:[#allocation10 + $0x970] sm:$0xff]
    %v5411 = vld [vmem:[#allocation10 + $0x978] sm:$0xff]
    %v5412 = vld [vmem:[#allocation10 + $0x980] sm:$0xff]
    %v5413 = vld [vmem:[#allocation10 + $0x988] sm:$0xff]
    %v5414 = vld [vmem:[#allocation10 + $0x990] sm:$0xff]
    %v5415 = vld [vmem:[#allocation10 + $0x998] sm:$0xff]
    %v5416 = vld [vmem:[#allocation10 + $0x9a0] sm:$0xff]
    %v5417 = vld [vmem:[#allocation10 + $0x9a8] sm:$0xff]
    %v5418 = vld [vmem:[#allocation10 + $0x9b0] sm:$0xff]
    %v5419 = vld [vmem:[#allocation10 + $0x9b8] sm:$0xff]
    %v5420 = vld [vmem:[#allocation10 + $0x9c0] sm:$0xff]
    %v5421 = vld [vmem:[#allocation10 + $0x9c8] sm:$0xff]
    %v5422 = vld [vmem:[#allocation10 + $0x9d0] sm:$0xff]
    %v5423 = vld [vmem:[#allocation10 + $0x9d8] sm:$0xff]
    %v5424 = vld [vmem:[#allocation10 + $0x9e0] sm:$0xff]
    %v5425 = vld [vmem:[#allocation10 + $0x9e8] sm:$0xff]
    %v5426 = vld [vmem:[#allocation10 + $0x9f0] sm:$0xff]
    %v5427 = vld [vmem:[#allocation10 + $0x9f8] sm:$0xff]
    %v5428 = vld [vmem:[#allocation10 + $0xa00] sm:$0xff]
    %v5429 = vld [vmem:[#allocation10 + $0xa08] sm:$0xff]
    %v5430 = vld [vmem:[#allocation10 + $0xa10] sm:$0xff]
    %v5431 = vld [vmem:[#allocation10 + $0xa18] sm:$0xff]
    %v5432 = vld [vmem:[#allocation10 + $0xa20] sm:$0xff]
    %v5433 = vld [vmem:[#allocation10 + $0xa28] sm:$0xff]
    %v5434 = vld [vmem:[#allocation10 + $0xa30] sm:$0xff]
    %v5435 = vld [vmem:[#allocation10 + $0xa38] sm:$0xff]
    %v5436 = vld [vmem:[#allocation10 + $0xa40] sm:$0xff]
    %v5437 = vld [vmem:[#allocation10 + $0xa48] sm:$0xff]
    %v5438 = vld [vmem:[#allocation10 + $0xa50] sm:$0xff]
    %v5439 = vld [vmem:[#allocation10 + $0xa58] sm:$0xff]
    %v5440 = vld [vmem:[#allocation10 + $0xa60] sm:$0xff]
    %v5441 = vld [vmem:[#allocation10 + $0xa68] sm:$0xff]
    %v5442 = vld [vmem:[#allocation10 + $0xa70] sm:$0xff]
    %v5443 = vld [vmem:[#allocation10 + $0xa78] sm:$0xff]
    %v5444 = vld [vmem:[#allocation10 + $0xa80] sm:$0xff]
    %v5445 = vld [vmem:[#allocation10 + $0xa88] sm:$0xff]
    %v5446 = vld [vmem:[#allocation10 + $0xa90] sm:$0xff]
    %v5447 = vld [vmem:[#allocation10 + $0xa98] sm:$0xff]
    %v5448 = vld [vmem:[#allocation10 + $0xaa0] sm:$0xff]
    %v5449 = vld [vmem:[#allocation10 + $0xaa8] sm:$0xff]
    %v5450 = vld [vmem:[#allocation10 + $0xab0] sm:$0xff]
    %v5451 = vld [vmem:[#allocation10 + $0xab8] sm:$0xff]
    %v5452 = vld [vmem:[#allocation10 + $0xac0] sm:$0xff]
    %v5453 = vld [vmem:[#allocation10 + $0xac8] sm:$0xff]
    %v5454 = vld [vmem:[#allocation10 + $0xad0] sm:$0xff]
    %v5455 = vld [vmem:[#allocation10 + $0xad8] sm:$0xff]
    %v5456 = vld [vmem:[#allocation10 + $0xae0] sm:$0xff]
    %v5457 = vld [vmem:[#allocation10 + $0xae8] sm:$0xff]
    %v5458 = vld [vmem:[#allocation10 + $0xaf0] sm:$0xff]
    %v5459 = vld [vmem:[#allocation10 + $0xaf8] sm:$0xff]
    %v5460 = vld [vmem:[#allocation10 + $0xb00] sm:$0xff]
    %v5461 = vld [vmem:[#allocation10 + $0xb08] sm:$0xff]
    %v5462 = vld [vmem:[#allocation10 + $0xb10] sm:$0xff]
    %v5463 = vld [vmem:[#allocation10 + $0xb18] sm:$0xff]
    %v5464 = vld [vmem:[#allocation10 + $0xb20] sm:$0xff]
    %v5465 = vld [vmem:[#allocation10 + $0xb28] sm:$0xff]
    %v5466 = vld [vmem:[#allocation10 + $0xb30] sm:$0xff]
    %v5467 = vld [vmem:[#allocation10 + $0xb38] sm:$0xff]
    %v5468 = vld [vmem:[#allocation10 + $0xb40] sm:$0xff]
    %v5469 = vld [vmem:[#allocation10 + $0xb48] sm:$0xff]
    %v5470 = vld [vmem:[#allocation10 + $0xb50] sm:$0xff]
    %v5471 = vld [vmem:[#allocation10 + $0xb58] sm:$0xff]
    %v5472 = vld [vmem:[#allocation10 + $0xb60] sm:$0xff]
    %v5473 = vld [vmem:[#allocation10 + $0xb68] sm:$0xff]
    %v5474 = vld [vmem:[#allocation10 + $0xb70] sm:$0xff]
    %v5475 = vld [vmem:[#allocation10 + $0xb78] sm:$0xff]
    %v5476 = vld [vmem:[#allocation10 + $0xb80] sm:$0xff]
    %v5477 = vld [vmem:[#allocation10 + $0xb88] sm:$0xff]
    %v5478 = vld [vmem:[#allocation10 + $0xb90] sm:$0xff]
    %v5479 = vld [vmem:[#allocation10 + $0xb98] sm:$0xff]
    %v5480 = vld [vmem:[#allocation10 + $0xba0] sm:$0xff]
    %v5481 = vld [vmem:[#allocation10 + $0xba8] sm:$0xff]
    %v5482 = vld [vmem:[#allocation10 + $0xbb0] sm:$0xff]
    %v5483 = vld [vmem:[#allocation10 + $0xbb8] sm:$0xff]
    %v5484 = vld [vmem:[#allocation10 + $0xbc0] sm:$0xff]
    %v5485 = vld [vmem:[#allocation10 + $0xbc8] sm:$0xff]
    %v5486 = vld [vmem:[#allocation10 + $0xbd0] sm:$0xff]
    %v5487 = vld [vmem:[#allocation10 + $0xbd8] sm:$0xff]
    %v5488 = vld [vmem:[#allocation10 + $0xbe0] sm:$0xff]
    %v5489 = vld [vmem:[#allocation10 + $0xbe8] sm:$0xff]
    %v5490 = vld [vmem:[#allocation10 + $0xbf0] sm:$0xff]
    %v5491 = vld [vmem:[#allocation10 + $0xbf8] sm:$0xff]
    %v5492 = vld [vmem:[#allocation10 + $0xc00] sm:$0xff]
    %v5493 = vld [vmem:[#allocation10 + $0xc08] sm:$0xff]
    %v5494 = vld [vmem:[#allocation10 + $0xc10] sm:$0xff]
    %v5495 = vld [vmem:[#allocation10 + $0xc18] sm:$0xff]
    %v5496 = vld [vmem:[#allocation10 + $0xc20] sm:$0xff]
    %v5497 = vld [vmem:[#allocation10 + $0xc28] sm:$0xff]
    %v5498 = vld [vmem:[#allocation10 + $0xc30] sm:$0xff]
    %v5499 = vld [vmem:[#allocation10 + $0xc38] sm:$0xff]
    %v5500 = vld [vmem:[#allocation10 + $0xc40] sm:$0xff]
    %v5501 = vld [vmem:[#allocation10 + $0xc48] sm:$0xff]
    %v5502 = vld [vmem:[#allocation10 + $0xc50] sm:$0xff]
    %v5503 = vld [vmem:[#allocation10 + $0xc58] sm:$0xff]
    %v5504 = vld [vmem:[#allocation10 + $0xc60] sm:$0xff]
    %v5505 = vld [vmem:[#allocation10 + $0xc68] sm:$0xff]
    %v5506 = vld [vmem:[#allocation10 + $0xc70] sm:$0xff]
    %v5507 = vld [vmem:[#allocation10 + $0xc78] sm:$0xff]
    %v5508 = vld [vmem:[#allocation10 + $0xc80] sm:$0xff]
    %v5509 = vld [vmem:[#allocation10 + $0xc88] sm:$0xff]
    %v5510 = vld [vmem:[#allocation10 + $0xc90] sm:$0xff]
    %v5511 = vld [vmem:[#allocation10 + $0xc98] sm:$0xff]
    %v5512 = vld [vmem:[#allocation10 + $0xca0] sm:$0xff]
    %v5513 = vld [vmem:[#allocation10 + $0xca8] sm:$0xff]
    %v5514 = vld [vmem:[#allocation10 + $0xcb0] sm:$0xff]
    %v5515 = vld [vmem:[#allocation10 + $0xcb8] sm:$0xff]
    %v5516 = vld [vmem:[#allocation10 + $0xcc0] sm:$0xff]
    %v5517 = vld [vmem:[#allocation10 + $0xcc8] sm:$0xff]
    %v5518 = vld [vmem:[#allocation10 + $0xcd0] sm:$0xff]
    %v5519 = vld [vmem:[#allocation10 + $0xcd8] sm:$0xff]
    %v5520 = vld [vmem:[#allocation10 + $0xce0] sm:$0xff]
    %v5521 = vld [vmem:[#allocation10 + $0xce8] sm:$0xff]
    %v5522 = vld [vmem:[#allocation10 + $0xcf0] sm:$0xff]
    %v5523 = vld [vmem:[#allocation10 + $0xcf8] sm:$0xff]
    %v5524 = vld [vmem:[#allocation10 + $0xd00] sm:$0xff]
    %v5525 = vld [vmem:[#allocation10 + $0xd08] sm:$0xff]
    %v5526 = vld [vmem:[#allocation10 + $0xd10] sm:$0xff]
    %v5527 = vld [vmem:[#allocation10 + $0xd18] sm:$0xff]
    %v5528 = vld [vmem:[#allocation10 + $0xd20] sm:$0xff]
    %v5529 = vld [vmem:[#allocation10 + $0xd28] sm:$0xff]
    %v5530 = vld [vmem:[#allocation10 + $0xd30] sm:$0xff]
    %v5531 = vld [vmem:[#allocation10 + $0xd38] sm:$0xff]
    %v5532 = vld [vmem:[#allocation10 + $0xd40] sm:$0xff]
    %v5533 = vld [vmem:[#allocation10 + $0xd48] sm:$0xff]
    %v5534 = vld [vmem:[#allocation10 + $0xd50] sm:$0xff]
    %v5535 = vld [vmem:[#allocation10 + $0xd58] sm:$0xff]
    %v5536 = vld [vmem:[#allocation10 + $0xd60] sm:$0xff]
    %v5537 = vld [vmem:[#allocation10 + $0xd68] sm:$0xff]
    %v5538 = vld [vmem:[#allocation10 + $0xd70] sm:$0xff]
    %v5539 = vld [vmem:[#allocation10 + $0xd78] sm:$0xff]
    %v5540 = vld [vmem:[#allocation10 + $0xd80] sm:$0xff]
    %v5541 = vld [vmem:[#allocation10 + $0xd88] sm:$0xff]
    %v5542 = vld [vmem:[#allocation10 + $0xd90] sm:$0xff]
    %v5543 = vld [vmem:[#allocation10 + $0xd98] sm:$0xff]
    %v5544 = vld [vmem:[#allocation10 + $0xda0] sm:$0xff]
    %v5545 = vld [vmem:[#allocation10 + $0xda8] sm:$0xff]
    %v5546 = vld [vmem:[#allocation10 + $0xdb0] sm:$0xff]
    %v5547 = vld [vmem:[#allocation10 + $0xdb8] sm:$0xff]
    %v5548 = vld [vmem:[#allocation10 + $0xdc0] sm:$0xff]
    %v5549 = vld [vmem:[#allocation10 + $0xdc8] sm:$0xff]
    %v5550 = vld [vmem:[#allocation10 + $0xdd0] sm:$0xff]
    %v5551 = vld [vmem:[#allocation10 + $0xdd8] sm:$0xff]
    %v5552 = vld [vmem:[#allocation10 + $0xde0] sm:$0xff]
    %v5553 = vld [vmem:[#allocation10 + $0xde8] sm:$0xff]
    %v5554 = vld [vmem:[#allocation10 + $0xdf0] sm:$0xff]
    %v5555 = vld [vmem:[#allocation10 + $0xdf8] sm:$0xff]
    %v5556 = vld [vmem:[#allocation10 + $0xe00] sm:$0xff]
    %v5557 = vld [vmem:[#allocation10 + $0xe08] sm:$0xff]
    %v5558 = vld [vmem:[#allocation10 + $0xe10] sm:$0xff]
    %v5559 = vld [vmem:[#allocation10 + $0xe18] sm:$0xff]
    %v5560 = vld [vmem:[#allocation10 + $0xe20] sm:$0xff]
    %v5561 = vld [vmem:[#allocation10 + $0xe28] sm:$0xff]
    %v5562 = vld [vmem:[#allocation10 + $0xe30] sm:$0xff]
    %v5563 = vld [vmem:[#allocation10 + $0xe38] sm:$0xff]
    %v5564 = vld [vmem:[#allocation10 + $0xe40] sm:$0xff]
    %v5565 = vld [vmem:[#allocation10 + $0xe48] sm:$0xff]
    %v5566 = vld [vmem:[#allocation10 + $0xe50] sm:$0xff]
    %v5567 = vld [vmem:[#allocation10 + $0xe58] sm:$0xff]
    %v5568 = vld [vmem:[#allocation10 + $0xe60] sm:$0xff]
    %v5569 = vld [vmem:[#allocation10 + $0xe68] sm:$0xff]
    %v5570 = vld [vmem:[#allocation10 + $0xe70] sm:$0xff]
    %v5571 = vld [vmem:[#allocation10 + $0xe78] sm:$0xff]
    %v5572 = vld [vmem:[#allocation10 + $0xe80] sm:$0xff]
    %v5573 = vld [vmem:[#allocation10 + $0xe88] sm:$0xff]
    %v5574 = vld [vmem:[#allocation10 + $0xe90] sm:$0xff]
    %v5575 = vld [vmem:[#allocation10 + $0xe98] sm:$0xff]
    %v5576 = vld [vmem:[#allocation10 + $0xea0] sm:$0xff]
    %v5577 = vld [vmem:[#allocation10 + $0xea8] sm:$0xff]
    %v5578 = vld [vmem:[#allocation10 + $0xeb0] sm:$0xff]
    %v5579 = vld [vmem:[#allocation10 + $0xeb8] sm:$0xff]
    %v5580 = vld [vmem:[#allocation10 + $0xec0] sm:$0xff]
    %v5581 = vld [vmem:[#allocation10 + $0xec8] sm:$0xff]
    %v5582 = vld [vmem:[#allocation10 + $0xed0] sm:$0xff]
    %v5583 = vld [vmem:[#allocation10 + $0xed8] sm:$0xff]
    %v5584 = vld [vmem:[#allocation10 + $0xee0] sm:$0xff]
    %v5585 = vld [vmem:[#allocation10 + $0xee8] sm:$0xff]
    %v5586 = vld [vmem:[#allocation10 + $0xef0] sm:$0xff]
    %v5587 = vld [vmem:[#allocation10 + $0xef8] sm:$0xff]
    %v5588 = vld [vmem:[#allocation10 + $0xf00] sm:$0xff]
    %v5589 = vld [vmem:[#allocation10 + $0xf08] sm:$0xff]
    %v5590 = vld [vmem:[#allocation10 + $0xf10] sm:$0xff]
    %v5591 = vld [vmem:[#allocation10 + $0xf18] sm:$0xff]
    %v5592 = vld [vmem:[#allocation10 + $0xf20] sm:$0xff]
    %v5593 = vld [vmem:[#allocation10 + $0xf28] sm:$0xff]
    %v5594 = vld [vmem:[#allocation10 + $0xf30] sm:$0xff]
    %v5595 = vld [vmem:[#allocation10 + $0xf38] sm:$0xff]
    %v5596 = vld [vmem:[#allocation10 + $0xf40] sm:$0xff]
    %v5597 = vld [vmem:[#allocation10 + $0xf48] sm:$0xff]
    %v5598 = vld [vmem:[#allocation10 + $0xf50] sm:$0xff]
    %v5599 = vld [vmem:[#allocation10 + $0xf58] sm:$0xff]
    %v5600 = vld [vmem:[#allocation10 + $0xf60] sm:$0xff]
    %v5601 = vld [vmem:[#allocation10 + $0xf68] sm:$0xff]
    %v5602 = vld [vmem:[#allocation10 + $0xf70] sm:$0xff]
    %v5603 = vld [vmem:[#allocation10 + $0xf78] sm:$0xff]
    %v5604 = vld [vmem:[#allocation10 + $0xf80] sm:$0xff]
    %v5605 = vld [vmem:[#allocation10 + $0xf88] sm:$0xff]
    %v5606 = vld [vmem:[#allocation10 + $0xf90] sm:$0xff]
    %v5607 = vld [vmem:[#allocation10 + $0xf98] sm:$0xff]
    %v5608 = vld [vmem:[#allocation10 + $0xfa0] sm:$0xff]
    %v5609 = vld [vmem:[#allocation10 + $0xfa8] sm:$0xff]
    %v5610 = vld [vmem:[#allocation10 + $0xfb0] sm:$0xff]
    %v5611 = vld [vmem:[#allocation10 + $0xfb8] sm:$0xff]
    %v5612 = vld [vmem:[#allocation10 + $0xfc0] sm:$0xff]
    %v5613 = vld [vmem:[#allocation10 + $0xfc8] sm:$0xff]
    %v5614 = vld [vmem:[#allocation10 + $0xfd0] sm:$0xff]
    %v5615 = vld [vmem:[#allocation10 + $0xfd8] sm:$0xff]
    %v5616 = vld [vmem:[#allocation10 + $0xfe0] sm:$0xff]
    %v5617 = vld [vmem:[#allocation10 + $0xfe8] sm:$0xff]
    %v5618 = vld [vmem:[#allocation10 + $0xff0] sm:$0xff]
    %v5619 = vld [vmem:[#allocation10 + $0xff8] sm:$0xff]
    %v5620 = vld [vmem:[#allocation10 + $0x1000] sm:$0xff]
    %v5621 = vld [vmem:[#allocation10 + $0x1008] sm:$0xff]
    %v5622 = vld [vmem:[#allocation10 + $0x1010] sm:$0xff]
    %v5623 = vld [vmem:[#allocation10 + $0x1018] sm:$0xff]
    %v5624 = vld [vmem:[#allocation10 + $0x1020] sm:$0xff]
    %v5625 = vld [vmem:[#allocation10 + $0x1028] sm:$0xff]
    %v5626 = vld [vmem:[#allocation10 + $0x1030] sm:$0xff]
    %v5627 = vld [vmem:[#allocation10 + $0x1038] sm:$0xff]
    %v5628 = vld [vmem:[#allocation10 + $0x1040] sm:$0xff]
    %v5629 = vld [vmem:[#allocation10 + $0x1048] sm:$0xff]
    %v5630 = vld [vmem:[#allocation10 + $0x1050] sm:$0xff]
    %v5631 = vld [vmem:[#allocation10 + $0x1058] sm:$0xff]
    %v5632 = vld [vmem:[#allocation10 + $0x1060] sm:$0xff]
    %v5633 = vld [vmem:[#allocation10 + $0x1068] sm:$0xff]
    %v5634 = vld [vmem:[#allocation10 + $0x1070] sm:$0xff]
    %v5635 = vld [vmem:[#allocation10 + $0x1078] sm:$0xff]
    %v5636 = vld [vmem:[#allocation10 + $0x1080] sm:$0xff]
    %v5637 = vld [vmem:[#allocation10 + $0x1088] sm:$0xff]
    %v5638 = vld [vmem:[#allocation10 + $0x1090] sm:$0xff]
    %v5639 = vld [vmem:[#allocation10 + $0x1098] sm:$0xff]
    %v5640 = vld [vmem:[#allocation10 + $0x10a0] sm:$0xff]
    %v5641 = vld [vmem:[#allocation10 + $0x10a8] sm:$0xff]
    %v5642 = vld [vmem:[#allocation10 + $0x10b0] sm:$0xff]
    %v5643 = vld [vmem:[#allocation10 + $0x10b8] sm:$0xff]
    %v5644 = vld [vmem:[#allocation10 + $0x10c0] sm:$0xff]
    %v5645 = vld [vmem:[#allocation10 + $0x10c8] sm:$0xff]
    %v5646 = vld [vmem:[#allocation10 + $0x10d0] sm:$0xff]
    %v5647 = vld [vmem:[#allocation10 + $0x10d8] sm:$0xff]
    %v5648 = vld [vmem:[#allocation10 + $0x10e0] sm:$0xff]
    %v5649 = vld [vmem:[#allocation10 + $0x10e8] sm:$0xff]
    %v5650 = vld [vmem:[#allocation10 + $0x10f0] sm:$0xff]
    %v5651 = vld [vmem:[#allocation10 + $0x10f8] sm:$0xff]
    %v5652 = vld [vmem:[#allocation10 + $0x1100] sm:$0xff]
    %v5653 = vld [vmem:[#allocation10 + $0x1108] sm:$0xff]
    %v5654 = vld [vmem:[#allocation10 + $0x1110] sm:$0xff]
    %v5655 = vld [vmem:[#allocation10 + $0x1118] sm:$0xff]
    %v5656 = vld [vmem:[#allocation10 + $0x1120] sm:$0xff]
    %v5657 = vld [vmem:[#allocation10 + $0x1128] sm:$0xff]
    %v5658 = vld [vmem:[#allocation10 + $0x1130] sm:$0xff]
    %v5659 = vld [vmem:[#allocation10 + $0x1138] sm:$0xff]
    %v5660 = vld [vmem:[#allocation10 + $0x1140] sm:$0xff]
    %v5661 = vld [vmem:[#allocation10 + $0x1148] sm:$0xff]
    %v5662 = vld [vmem:[#allocation10 + $0x1150] sm:$0xff]
    %v5663 = vld [vmem:[#allocation10 + $0x1158] sm:$0xff]
    %v5664 = vld [vmem:[#allocation10 + $0x1160] sm:$0xff]
    %v5665 = vld [vmem:[#allocation10 + $0x1168] sm:$0xff]
    %v5666 = vld [vmem:[#allocation10 + $0x1170] sm:$0xff]
    %v5667 = vld [vmem:[#allocation10 + $0x1178] sm:$0xff]
    %v5668 = vld [vmem:[#allocation10 + $0x1180] sm:$0xff]
    %v5669 = vld [vmem:[#allocation10 + $0x1188] sm:$0xff]
    %v5670 = vld [vmem:[#allocation10 + $0x1190] sm:$0xff]
    %v5671 = vld [vmem:[#allocation10 + $0x1198] sm:$0xff]
    %v5672 = vld [vmem:[#allocation10 + $0x11a0] sm:$0xff]
    %v5673 = vld [vmem:[#allocation10 + $0x11a8] sm:$0xff]
    %v5674 = vld [vmem:[#allocation10 + $0x11b0] sm:$0xff]
    %v5675 = vld [vmem:[#allocation10 + $0x11b8] sm:$0xff]
    %v5676 = vld [vmem:[#allocation10 + $0x11c0] sm:$0xff]
    %v5677 = vld [vmem:[#allocation10 + $0x11c8] sm:$0xff]
    %v5678 = vld [vmem:[#allocation10 + $0x11d0] sm:$0xff]
    %v5679 = vld [vmem:[#allocation10 + $0x11d8] sm:$0xff]
    %v5680 = vld [vmem:[#allocation10 + $0x11e0] sm:$0xff]
    %v5681 = vld [vmem:[#allocation10 + $0x11e8] sm:$0xff]
    %v5682 = vld [vmem:[#allocation10 + $0x11f0] sm:$0xff]
    %v5683 = vld [vmem:[#allocation10 + $0x11f8] sm:$0xff]
    %v5684 = vld [vmem:[#allocation11] sm:$0x1]
    %v5686 = vperm.slane %v5684, 0
    %5688 = vmatpush.msra.mxu0 %v5123
    %5689 = vmatpush.msra.mxu0 %v5122
    %5690 = vmatpush.msra.mxu0 %v5121
    %5691 = vmatpush.msra.mxu0 %v5120
    %5692 = vmatpush.msra.mxu0 %v5119
    %5693 = vmatpush.msra.mxu0 %v5118
    %5694 = vmatpush.msra.mxu0 %v5117
    %5695 = vmatpush.msra.mxu0 %v5116
    %5696 = vmatpush.msra.mxu0 %v5115
    %5697 = vmatpush.msra.mxu0 %v5114
    %5698 = vmatpush.msra.mxu0 %v5113
    %5699 = vmatpush.msra.mxu0 %v5112
    %5700 = vmatpush.msra.mxu0 %v5111
    %5701 = vmatpush.msra.mxu0 %v5110
    %5702 = vmatpush.msra.mxu0 %v5109
    %5703 = vmatpush.msra.mxu0 %v5108
    %5704 = vmatmul.f32.gmra.mxu0 %v5072
    %v5705 = vpop.f32.mrf.mxu0
    %v5706 = vadd.f32 %v5686, %v5705
    %5707 = vdwg.mxu0
    %5708 = vmatpush.msra.mxu0 %v5139
    %5709 = vmatpush.msra.mxu0 %v5138
    %5710 = vmatpush.msra.mxu0 %v5137
    %5711 = vmatpush.msra.mxu0 %v5136
    %5712 = vmatpush.msra.mxu0 %v5135
    %5713 = vmatpush.msra.mxu0 %v5134
    %5714 = vmatpush.msra.mxu0 %v5133
    %5715 = vmatpush.msra.mxu0 %v5132
    %5716 = vmatpush.msra.mxu0 %v5131
    %5717 = vmatpush.msra.mxu0 %v5130
    %5718 = vmatpush.msra.mxu0 %v5129
    %5719 = vmatpush.msra.mxu0 %v5128
    %5720 = vmatpush.msra.mxu0 %v5127
    %5721 = vmatpush.msra.mxu0 %v5126
    %5722 = vmatpush.msra.mxu0 %v5125
    %5723 = vmatpush.msra.mxu0 %v5124
    %5724 = vmatmul.f32.gmra.mxu0 %v5073
    %v5725 = vpop.f32.mrf.mxu0
    %v5726 = vadd.f32 %v5706, %v5725
    %5727 = vdwg.mxu0
    %5728 = vmatpush.msra.mxu0 %v5155
    %5729 = vmatpush.msra.mxu0 %v5154
    %5730 = vmatpush.msra.mxu0 %v5153
    %5731 = vmatpush.msra.mxu0 %v5152
    %5732 = vmatpush.msra.mxu0 %v5151
    %5733 = vmatpush.msra.mxu0 %v5150
    %5734 = vmatpush.msra.mxu0 %v5149
    %5735 = vmatpush.msra.mxu0 %v5148
    %5736 = vmatpush.msra.mxu0 %v5147
    %5737 = vmatpush.msra.mxu0 %v5146
    %5738 = vmatpush.msra.mxu0 %v5145
    %5739 = vmatpush.msra.mxu0 %v5144
    %5740 = vmatpush.msra.mxu0 %v5143
    %5741 = vmatpush.msra.mxu0 %v5142
    %5742 = vmatpush.msra.mxu0 %v5141
    %5743 = vmatpush.msra.mxu0 %v5140
    %5744 = vmatmul.f32.gmra.mxu0 %v5074
    %v5745 = vpop.f32.mrf.mxu0
    %v5746 = vadd.f32 %v5726, %v5745
    %5747 = vdwg.mxu0
    %5748 = vmatpush.msra.mxu0 %v5171
    %5749 = vmatpush.msra.mxu0 %v5170
    %5750 = vmatpush.msra.mxu0 %v5169
    %5751 = vmatpush.msra.mxu0 %v5168
    %5752 = vmatpush.msra.mxu0 %v5167
    %5753 = vmatpush.msra.mxu0 %v5166
    %5754 = vmatpush.msra.mxu0 %v5165
    %5755 = vmatpush.msra.mxu0 %v5164
    %5756 = vmatpush.msra.mxu0 %v5163
    %5757 = vmatpush.msra.mxu0 %v5162
    %5758 = vmatpush.msra.mxu0 %v5161
    %5759 = vmatpush.msra.mxu0 %v5160
    %5760 = vmatpush.msra.mxu0 %v5159
    %5761 = vmatpush.msra.mxu0 %v5158
    %5762 = vmatpush.msra.mxu0 %v5157
    %5763 = vmatpush.msra.mxu0 %v5156
    %5764 = vmatmul.f32.gmra.mxu0 %v5075
    %v5765 = vpop.f32.mrf.mxu0
    %v5766 = vadd.f32 %v5746, %v5765
    %5767 = vdwg.mxu0
    %5768 = vmatpush.msra.mxu0 %v5187
    %5769 = vmatpush.msra.mxu0 %v5186
    %5770 = vmatpush.msra.mxu0 %v5185
    %5771 = vmatpush.msra.mxu0 %v5184
    %5772 = vmatpush.msra.mxu0 %v5183
    %5773 = vmatpush.msra.mxu0 %v5182
    %5774 = vmatpush.msra.mxu0 %v5181
    %5775 = vmatpush.msra.mxu0 %v5180
    %5776 = vmatpush.msra.mxu0 %v5179
    %5777 = vmatpush.msra.mxu0 %v5178
    %5778 = vmatpush.msra.mxu0 %v5177
    %5779 = vmatpush.msra.mxu0 %v5176
    %5780 = vmatpush.msra.mxu0 %v5175
    %5781 = vmatpush.msra.mxu0 %v5174
    %5782 = vmatpush.msra.mxu0 %v5173
    %5783 = vmatpush.msra.mxu0 %v5172
    %5784 = vmatmul.f32.gmra.mxu0 %v5076
    %v5785 = vpop.f32.mrf.mxu0
    %v5786 = vadd.f32 %v5766, %v5785
    %5787 = vdwg.mxu0
    %5788 = vmatpush.msra.mxu0 %v5203
    %5789 = vmatpush.msra.mxu0 %v5202
    %5790 = vmatpush.msra.mxu0 %v5201
    %5791 = vmatpush.msra.mxu0 %v5200
    %5792 = vmatpush.msra.mxu0 %v5199
    %5793 = vmatpush.msra.mxu0 %v5198
    %5794 = vmatpush.msra.mxu0 %v5197
    %5795 = vmatpush.msra.mxu0 %v5196
    %5796 = vmatpush.msra.mxu0 %v5195
    %5797 = vmatpush.msra.mxu0 %v5194
    %5798 = vmatpush.msra.mxu0 %v5193
    %5799 = vmatpush.msra.mxu0 %v5192
    %5800 = vmatpush.msra.mxu0 %v5191
    %5801 = vmatpush.msra.mxu0 %v5190
    %5802 = vmatpush.msra.mxu0 %v5189
    %5803 = vmatpush.msra.mxu0 %v5188
    %5804 = vmatmul.f32.gmra.mxu0 %v5077
    %v5805 = vpop.f32.mrf.mxu0
    %v5806 = vadd.f32 %v5786, %v5805
    %5807 = vdwg.mxu0
    %5808 = vmatpush.msra.mxu0 %v5219
    %5809 = vmatpush.msra.mxu0 %v5218
    %5810 = vmatpush.msra.mxu0 %v5217
    %5811 = vmatpush.msra.mxu0 %v5216
    %5812 = vmatpush.msra.mxu0 %v5215
    %5813 = vmatpush.msra.mxu0 %v5214
    %5814 = vmatpush.msra.mxu0 %v5213
    %5815 = vmatpush.msra.mxu0 %v5212
    %5816 = vmatpush.msra.mxu0 %v5211
    %5817 = vmatpush.msra.mxu0 %v5210
    %5818 = vmatpush.msra.mxu0 %v5209
    %5819 = vmatpush.msra.mxu0 %v5208
    %5820 = vmatpush.msra.mxu0 %v5207
    %5821 = vmatpush.msra.mxu0 %v5206
    %5822 = vmatpush.msra.mxu0 %v5205
    %5823 = vmatpush.msra.mxu0 %v5204
    %5824 = vmatmul.f32.gmra.mxu0 %v5078
    %v5825 = vpop.f32.mrf.mxu0
    %v5826 = vadd.f32 %v5806, %v5825
    %5827 = vdwg.mxu0
    %5828 = vmatpush.msra.mxu0 %v5235
    %5829 = vmatpush.msra.mxu0 %v5234
    %5830 = vmatpush.msra.mxu0 %v5233
    %5831 = vmatpush.msra.mxu0 %v5232
    %5832 = vmatpush.msra.mxu0 %v5231
    %5833 = vmatpush.msra.mxu0 %v5230
    %5834 = vmatpush.msra.mxu0 %v5229
    %5835 = vmatpush.msra.mxu0 %v5228
    %5836 = vmatpush.msra.mxu0 %v5227
    %5837 = vmatpush.msra.mxu0 %v5226
    %5838 = vmatpush.msra.mxu0 %v5225
    %5839 = vmatpush.msra.mxu0 %v5224
    %5840 = vmatpush.msra.mxu0 %v5223
    %5841 = vmatpush.msra.mxu0 %v5222
    %5842 = vmatpush.msra.mxu0 %v5221
    %5843 = vmatpush.msra.mxu0 %v5220
    %5844 = vmatmul.f32.gmra.mxu0 %v5079
    %v5845 = vpop.f32.mrf.mxu0
    %v5846 = vadd.f32 %v5826, %v5845
    %5847 = vdwg.mxu0
    %5848 = vmatpush.msra.mxu0 %v5251
    %5849 = vmatpush.msra.mxu0 %v5250
    %5850 = vmatpush.msra.mxu0 %v5249
    %5851 = vmatpush.msra.mxu0 %v5248
    %5852 = vmatpush.msra.mxu0 %v5247
    %5853 = vmatpush.msra.mxu0 %v5246
    %5854 = vmatpush.msra.mxu0 %v5245
    %5855 = vmatpush.msra.mxu0 %v5244
    %5856 = vmatpush.msra.mxu0 %v5243
    %5857 = vmatpush.msra.mxu0 %v5242
    %5858 = vmatpush.msra.mxu0 %v5241
    %5859 = vmatpush.msra.mxu0 %v5240
    %5860 = vmatpush.msra.mxu0 %v5239
    %5861 = vmatpush.msra.mxu0 %v5238
    %5862 = vmatpush.msra.mxu0 %v5237
    %5863 = vmatpush.msra.mxu0 %v5236
    %5864 = vmatmul.f32.gmra.mxu0 %v5080
    %v5865 = vpop.f32.mrf.mxu0
    %v5866 = vadd.f32 %v5846, %v5865
    %5867 = vdwg.mxu0
    %5868 = vmatpush.msra.mxu0 %v5267
    %5869 = vmatpush.msra.mxu0 %v5266
    %5870 = vmatpush.msra.mxu0 %v5265
    %5871 = vmatpush.msra.mxu0 %v5264
    %5872 = vmatpush.msra.mxu0 %v5263
    %5873 = vmatpush.msra.mxu0 %v5262
    %5874 = vmatpush.msra.mxu0 %v5261
    %5875 = vmatpush.msra.mxu0 %v5260
    %5876 = vmatpush.msra.mxu0 %v5259
    %5877 = vmatpush.msra.mxu0 %v5258
    %5878 = vmatpush.msra.mxu0 %v5257
    %5879 = vmatpush.msra.mxu0 %v5256
    %5880 = vmatpush.msra.mxu0 %v5255
    %5881 = vmatpush.msra.mxu0 %v5254
    %5882 = vmatpush.msra.mxu0 %v5253
    %5883 = vmatpush.msra.mxu0 %v5252
    %5884 = vmatmul.f32.gmra.mxu0 %v5081
    %v5885 = vpop.f32.mrf.mxu0
    %v5886 = vadd.f32 %v5866, %v5885
    %5887 = vdwg.mxu0
    %5888 = vmatpush.msra.mxu0 %v5283
    %5889 = vmatpush.msra.mxu0 %v5282
    %5890 = vmatpush.msra.mxu0 %v5281
    %5891 = vmatpush.msra.mxu0 %v5280
    %5892 = vmatpush.msra.mxu0 %v5279
    %5893 = vmatpush.msra.mxu0 %v5278
    %5894 = vmatpush.msra.mxu0 %v5277
    %5895 = vmatpush.msra.mxu0 %v5276
    %5896 = vmatpush.msra.mxu0 %v5275
    %5897 = vmatpush.msra.mxu0 %v5274
    %5898 = vmatpush.msra.mxu0 %v5273
    %5899 = vmatpush.msra.mxu0 %v5272
    %5900 = vmatpush.msra.mxu0 %v5271
    %5901 = vmatpush.msra.mxu0 %v5270
    %5902 = vmatpush.msra.mxu0 %v5269
    %5903 = vmatpush.msra.mxu0 %v5268
    %5904 = vmatmul.f32.gmra.mxu0 %v5082
    %v5905 = vpop.f32.mrf.mxu0
    %v5906 = vadd.f32 %v5886, %v5905
    %5907 = vdwg.mxu0
    %5908 = vmatpush.msra.mxu0 %v5299
    %5909 = vmatpush.msra.mxu0 %v5298
    %5910 = vmatpush.msra.mxu0 %v5297
    %5911 = vmatpush.msra.mxu0 %v5296
    %5912 = vmatpush.msra.mxu0 %v5295
    %5913 = vmatpush.msra.mxu0 %v5294
    %5914 = vmatpush.msra.mxu0 %v5293
    %5915 = vmatpush.msra.mxu0 %v5292
    %5916 = vmatpush.msra.mxu0 %v5291
    %5917 = vmatpush.msra.mxu0 %v5290
    %5918 = vmatpush.msra.mxu0 %v5289
    %5919 = vmatpush.msra.mxu0 %v5288
    %5920 = vmatpush.msra.mxu0 %v5287
    %5921 = vmatpush.msra.mxu0 %v5286
    %5922 = vmatpush.msra.mxu0 %v5285
    %5923 = vmatpush.msra.mxu0 %v5284
    %5924 = vmatmul.f32.gmra.mxu0 %v5083
    %v5925 = vpop.f32.mrf.mxu0
    %v5926 = vadd.f32 %v5906, %v5925
    %5927 = vdwg.mxu0
    %5928 = vmatpush.msra.mxu0 %v5315
    %5929 = vmatpush.msra.mxu0 %v5314
    %5930 = vmatpush.msra.mxu0 %v5313
    %5931 = vmatpush.msra.mxu0 %v5312
    %5932 = vmatpush.msra.mxu0 %v5311
    %5933 = vmatpush.msra.mxu0 %v5310
    %5934 = vmatpush.msra.mxu0 %v5309
    %5935 = vmatpush.msra.mxu0 %v5308
    %5936 = vmatpush.msra.mxu0 %v5307
    %5937 = vmatpush.msra.mxu0 %v5306
    %5938 = vmatpush.msra.mxu0 %v5305
    %5939 = vmatpush.msra.mxu0 %v5304
    %5940 = vmatpush.msra.mxu0 %v5303
    %5941 = vmatpush.msra.mxu0 %v5302
    %5942 = vmatpush.msra.mxu0 %v5301
    %5943 = vmatpush.msra.mxu0 %v5300
    %5944 = vmatmul.f32.gmra.mxu0 %v5084
    %v5945 = vpop.f32.mrf.mxu0
    %v5946 = vadd.f32 %v5926, %v5945
    %5947 = vdwg.mxu0
    %5948 = vmatpush.msra.mxu0 %v5331
    %5949 = vmatpush.msra.mxu0 %v5330
    %5950 = vmatpush.msra.mxu0 %v5329
    %5951 = vmatpush.msra.mxu0 %v5328
    %5952 = vmatpush.msra.mxu0 %v5327
    %5953 = vmatpush.msra.mxu0 %v5326
    %5954 = vmatpush.msra.mxu0 %v5325
    %5955 = vmatpush.msra.mxu0 %v5324
    %5956 = vmatpush.msra.mxu0 %v5323
    %5957 = vmatpush.msra.mxu0 %v5322
    %5958 = vmatpush.msra.mxu0 %v5321
    %5959 = vmatpush.msra.mxu0 %v5320
    %5960 = vmatpush.msra.mxu0 %v5319
    %5961 = vmatpush.msra.mxu0 %v5318
    %5962 = vmatpush.msra.mxu0 %v5317
    %5963 = vmatpush.msra.mxu0 %v5316
    %5964 = vmatmul.f32.gmra.mxu0 %v5085
    %v5965 = vpop.f32.mrf.mxu0
    %v5966 = vadd.f32 %v5946, %v5965
    %5967 = vdwg.mxu0
    %5968 = vmatpush.msra.mxu0 %v5347
    %5969 = vmatpush.msra.mxu0 %v5346
    %5970 = vmatpush.msra.mxu0 %v5345
    %5971 = vmatpush.msra.mxu0 %v5344
    %5972 = vmatpush.msra.mxu0 %v5343
    %5973 = vmatpush.msra.mxu0 %v5342
    %5974 = vmatpush.msra.mxu0 %v5341
    %5975 = vmatpush.msra.mxu0 %v5340
    %5976 = vmatpush.msra.mxu0 %v5339
    %5977 = vmatpush.msra.mxu0 %v5338
    %5978 = vmatpush.msra.mxu0 %v5337
    %5979 = vmatpush.msra.mxu0 %v5336
    %5980 = vmatpush.msra.mxu0 %v5335
    %5981 = vmatpush.msra.mxu0 %v5334
    %5982 = vmatpush.msra.mxu0 %v5333
    %5983 = vmatpush.msra.mxu0 %v5332
    %5984 = vmatmul.f32.gmra.mxu0 %v5086
    %v5985 = vpop.f32.mrf.mxu0
    %v5986 = vadd.f32 %v5966, %v5985
    %5987 = vdwg.mxu0
    %5988 = vmatpush.msra.mxu0 %v5363
    %5989 = vmatpush.msra.mxu0 %v5362
    %5990 = vmatpush.msra.mxu0 %v5361
    %5991 = vmatpush.msra.mxu0 %v5360
    %5992 = vmatpush.msra.mxu0 %v5359
    %5993 = vmatpush.msra.mxu0 %v5358
    %5994 = vmatpush.msra.mxu0 %v5357
    %5995 = vmatpush.msra.mxu0 %v5356
    %5996 = vmatpush.msra.mxu0 %v5355
    %5997 = vmatpush.msra.mxu0 %v5354
    %5998 = vmatpush.msra.mxu0 %v5353
    %5999 = vmatpush.msra.mxu0 %v5352
    %6000 = vmatpush.msra.mxu0 %v5351
    %6001 = vmatpush.msra.mxu0 %v5350
    %6002 = vmatpush.msra.mxu0 %v5349
    %6003 = vmatpush.msra.mxu0 %v5348
    %6004 = vmatmul.f32.gmra.mxu0 %v5087
    %v6005 = vpop.f32.mrf.mxu0
    %v6006 = vadd.f32 %v5986, %v6005
    %6007 = vdwg.mxu0
    %6008 = vmatpush.msra.mxu0 %v5379
    %6009 = vmatpush.msra.mxu0 %v5378
    %6010 = vmatpush.msra.mxu0 %v5377
    %6011 = vmatpush.msra.mxu0 %v5376
    %6012 = vmatpush.msra.mxu0 %v5375
    %6013 = vmatpush.msra.mxu0 %v5374
    %6014 = vmatpush.msra.mxu0 %v5373
    %6015 = vmatpush.msra.mxu0 %v5372
    %6016 = vmatpush.msra.mxu0 %v5371
    %6017 = vmatpush.msra.mxu0 %v5370
    %6018 = vmatpush.msra.mxu0 %v5369
    %6019 = vmatpush.msra.mxu0 %v5368
    %6020 = vmatpush.msra.mxu0 %v5367
    %6021 = vmatpush.msra.mxu0 %v5366
    %6022 = vmatpush.msra.mxu0 %v5365
    %6023 = vmatpush.msra.mxu0 %v5364
    %6024 = vmatmul.f32.gmra.mxu0 %v5088
    %v6025 = vpop.f32.mrf.mxu0
    %v6026 = vadd.f32 %v6006, %v6025
    %6027 = vdwg.mxu0
    %6028 = vmatpush.msra.mxu0 %v5395
    %6029 = vmatpush.msra.mxu0 %v5394
    %6030 = vmatpush.msra.mxu0 %v5393
    %6031 = vmatpush.msra.mxu0 %v5392
    %6032 = vmatpush.msra.mxu0 %v5391
    %6033 = vmatpush.msra.mxu0 %v5390
    %6034 = vmatpush.msra.mxu0 %v5389
    %6035 = vmatpush.msra.mxu0 %v5388
    %6036 = vmatpush.msra.mxu0 %v5387
    %6037 = vmatpush.msra.mxu0 %v5386
    %6038 = vmatpush.msra.mxu0 %v5385
    %6039 = vmatpush.msra.mxu0 %v5384
    %6040 = vmatpush.msra.mxu0 %v5383
    %6041 = vmatpush.msra.mxu0 %v5382
    %6042 = vmatpush.msra.mxu0 %v5381
    %6043 = vmatpush.msra.mxu0 %v5380
    %6044 = vmatmul.f32.gmra.mxu0 %v5089
    %v6045 = vpop.f32.mrf.mxu0
    %v6046 = vadd.f32 %v6026, %v6045
    %6047 = vdwg.mxu0
    %6048 = vmatpush.msra.mxu0 %v5411
    %6049 = vmatpush.msra.mxu0 %v5410
    %6050 = vmatpush.msra.mxu0 %v5409
    %6051 = vmatpush.msra.mxu0 %v5408
    %6052 = vmatpush.msra.mxu0 %v5407
    %6053 = vmatpush.msra.mxu0 %v5406
    %6054 = vmatpush.msra.mxu0 %v5405
    %6055 = vmatpush.msra.mxu0 %v5404
    %6056 = vmatpush.msra.mxu0 %v5403
    %6057 = vmatpush.msra.mxu0 %v5402
    %6058 = vmatpush.msra.mxu0 %v5401
    %6059 = vmatpush.msra.mxu0 %v5400
    %6060 = vmatpush.msra.mxu0 %v5399
    %6061 = vmatpush.msra.mxu0 %v5398
    %6062 = vmatpush.msra.mxu0 %v5397
    %6063 = vmatpush.msra.mxu0 %v5396
    %6064 = vmatmul.f32.gmra.mxu0 %v5090
    %v6065 = vpop.f32.mrf.mxu0
    %v6066 = vadd.f32 %v6046, %v6065
    %6067 = vdwg.mxu0
    %6068 = vmatpush.msra.mxu0 %v5427
    %6069 = vmatpush.msra.mxu0 %v5426
    %6070 = vmatpush.msra.mxu0 %v5425
    %6071 = vmatpush.msra.mxu0 %v5424
    %6072 = vmatpush.msra.mxu0 %v5423
    %6073 = vmatpush.msra.mxu0 %v5422
    %6074 = vmatpush.msra.mxu0 %v5421
    %6075 = vmatpush.msra.mxu0 %v5420
    %6076 = vmatpush.msra.mxu0 %v5419
    %6077 = vmatpush.msra.mxu0 %v5418
    %6078 = vmatpush.msra.mxu0 %v5417
    %6079 = vmatpush.msra.mxu0 %v5416
    %6080 = vmatpush.msra.mxu0 %v5415
    %6081 = vmatpush.msra.mxu0 %v5414
    %6082 = vmatpush.msra.mxu0 %v5413
    %6083 = vmatpush.msra.mxu0 %v5412
    %6084 = vmatmul.f32.gmra.mxu0 %v5091
    %v6085 = vpop.f32.mrf.mxu0
    %v6086 = vadd.f32 %v6066, %v6085
    %6087 = vdwg.mxu0
    %6088 = vmatpush.msra.mxu0 %v5443
    %6089 = vmatpush.msra.mxu0 %v5442
    %6090 = vmatpush.msra.mxu0 %v5441
    %6091 = vmatpush.msra.mxu0 %v5440
    %6092 = vmatpush.msra.mxu0 %v5439
    %6093 = vmatpush.msra.mxu0 %v5438
    %6094 = vmatpush.msra.mxu0 %v5437
    %6095 = vmatpush.msra.mxu0 %v5436
    %6096 = vmatpush.msra.mxu0 %v5435
    %6097 = vmatpush.msra.mxu0 %v5434
    %6098 = vmatpush.msra.mxu0 %v5433
    %6099 = vmatpush.msra.mxu0 %v5432
    %6100 = vmatpush.msra.mxu0 %v5431
    %6101 = vmatpush.msra.mxu0 %v5430
    %6102 = vmatpush.msra.mxu0 %v5429
    %6103 = vmatpush.msra.mxu0 %v5428
    %6104 = vmatmul.f32.gmra.mxu0 %v5092
    %v6105 = vpop.f32.mrf.mxu0
    %v6106 = vadd.f32 %v6086, %v6105
    %6107 = vdwg.mxu0
    %6108 = vmatpush.msra.mxu0 %v5459
    %6109 = vmatpush.msra.mxu0 %v5458
    %6110 = vmatpush.msra.mxu0 %v5457
    %6111 = vmatpush.msra.mxu0 %v5456
    %6112 = vmatpush.msra.mxu0 %v5455
    %6113 = vmatpush.msra.mxu0 %v5454
    %6114 = vmatpush.msra.mxu0 %v5453
    %6115 = vmatpush.msra.mxu0 %v5452
    %6116 = vmatpush.msra.mxu0 %v5451
    %6117 = vmatpush.msra.mxu0 %v5450
    %6118 = vmatpush.msra.mxu0 %v5449
    %6119 = vmatpush.msra.mxu0 %v5448
    %6120 = vmatpush.msra.mxu0 %v5447
    %6121 = vmatpush.msra.mxu0 %v5446
    %6122 = vmatpush.msra.mxu0 %v5445
    %6123 = vmatpush.msra.mxu0 %v5444
    %6124 = vmatmul.f32.gmra.mxu0 %v5093
    %v6125 = vpop.f32.mrf.mxu0
    %v6126 = vadd.f32 %v6106, %v6125
    %6127 = vdwg.mxu0
    %6128 = vmatpush.msra.mxu0 %v5475
    %6129 = vmatpush.msra.mxu0 %v5474
    %6130 = vmatpush.msra.mxu0 %v5473
    %6131 = vmatpush.msra.mxu0 %v5472
    %6132 = vmatpush.msra.mxu0 %v5471
    %6133 = vmatpush.msra.mxu0 %v5470
    %6134 = vmatpush.msra.mxu0 %v5469
    %6135 = vmatpush.msra.mxu0 %v5468
    %6136 = vmatpush.msra.mxu0 %v5467
    %6137 = vmatpush.msra.mxu0 %v5466
    %6138 = vmatpush.msra.mxu0 %v5465
    %6139 = vmatpush.msra.mxu0 %v5464
    %6140 = vmatpush.msra.mxu0 %v5463
    %6141 = vmatpush.msra.mxu0 %v5462
    %6142 = vmatpush.msra.mxu0 %v5461
    %6143 = vmatpush.msra.mxu0 %v5460
    %6144 = vmatmul.f32.gmra.mxu0 %v5094
    %v6145 = vpop.f32.mrf.mxu0
    %v6146 = vadd.f32 %v6126, %v6145
    %6147 = vdwg.mxu0
    %6148 = vmatpush.msra.mxu0 %v5491
    %6149 = vmatpush.msra.mxu0 %v5490
    %6150 = vmatpush.msra.mxu0 %v5489
    %6151 = vmatpush.msra.mxu0 %v5488
    %6152 = vmatpush.msra.mxu0 %v5487
    %6153 = vmatpush.msra.mxu0 %v5486
    %6154 = vmatpush.msra.mxu0 %v5485
    %6155 = vmatpush.msra.mxu0 %v5484
    %6156 = vmatpush.msra.mxu0 %v5483
    %6157 = vmatpush.msra.mxu0 %v5482
    %6158 = vmatpush.msra.mxu0 %v5481
    %6159 = vmatpush.msra.mxu0 %v5480
    %6160 = vmatpush.msra.mxu0 %v5479
    %6161 = vmatpush.msra.mxu0 %v5478
    %6162 = vmatpush.msra.mxu0 %v5477
    %6163 = vmatpush.msra.mxu0 %v5476
    %6164 = vmatmul.f32.gmra.mxu0 %v5095
    %v6165 = vpop.f32.mrf.mxu0
    %v6166 = vadd.f32 %v6146, %v6165
    %6167 = vdwg.mxu0
    %6168 = vmatpush.msra.mxu0 %v5507
    %6169 = vmatpush.msra.mxu0 %v5506
    %6170 = vmatpush.msra.mxu0 %v5505
    %6171 = vmatpush.msra.mxu0 %v5504
    %6172 = vmatpush.msra.mxu0 %v5503
    %6173 = vmatpush.msra.mxu0 %v5502
    %6174 = vmatpush.msra.mxu0 %v5501
    %6175 = vmatpush.msra.mxu0 %v5500
    %6176 = vmatpush.msra.mxu0 %v5499
    %6177 = vmatpush.msra.mxu0 %v5498
    %6178 = vmatpush.msra.mxu0 %v5497
    %6179 = vmatpush.msra.mxu0 %v5496
    %6180 = vmatpush.msra.mxu0 %v5495
    %6181 = vmatpush.msra.mxu0 %v5494
    %6182 = vmatpush.msra.mxu0 %v5493
    %6183 = vmatpush.msra.mxu0 %v5492
    %6184 = vmatmul.f32.gmra.mxu0 %v5096
    %v6185 = vpop.f32.mrf.mxu0
    %v6186 = vadd.f32 %v6166, %v6185
    %6187 = vdwg.mxu0
    %6188 = vmatpush.msra.mxu0 %v5523
    %6189 = vmatpush.msra.mxu0 %v5522
    %6190 = vmatpush.msra.mxu0 %v5521
    %6191 = vmatpush.msra.mxu0 %v5520
    %6192 = vmatpush.msra.mxu0 %v5519
    %6193 = vmatpush.msra.mxu0 %v5518
    %6194 = vmatpush.msra.mxu0 %v5517
    %6195 = vmatpush.msra.mxu0 %v5516
    %6196 = vmatpush.msra.mxu0 %v5515
    %6197 = vmatpush.msra.mxu0 %v5514
    %6198 = vmatpush.msra.mxu0 %v5513
    %6199 = vmatpush.msra.mxu0 %v5512
    %6200 = vmatpush.msra.mxu0 %v5511
    %6201 = vmatpush.msra.mxu0 %v5510
    %6202 = vmatpush.msra.mxu0 %v5509
    %6203 = vmatpush.msra.mxu0 %v5508
    %6204 = vmatmul.f32.gmra.mxu0 %v5097
    %v6205 = vpop.f32.mrf.mxu0
    %v6206 = vadd.f32 %v6186, %v6205
    %6207 = vdwg.mxu0
    %6208 = vmatpush.msra.mxu0 %v5539
    %6209 = vmatpush.msra.mxu0 %v5538
    %6210 = vmatpush.msra.mxu0 %v5537
    %6211 = vmatpush.msra.mxu0 %v5536
    %6212 = vmatpush.msra.mxu0 %v5535
    %6213 = vmatpush.msra.mxu0 %v5534
    %6214 = vmatpush.msra.mxu0 %v5533
    %6215 = vmatpush.msra.mxu0 %v5532
    %6216 = vmatpush.msra.mxu0 %v5531
    %6217 = vmatpush.msra.mxu0 %v5530
    %6218 = vmatpush.msra.mxu0 %v5529
    %6219 = vmatpush.msra.mxu0 %v5528
    %6220 = vmatpush.msra.mxu0 %v5527
    %6221 = vmatpush.msra.mxu0 %v5526
    %6222 = vmatpush.msra.mxu0 %v5525
    %6223 = vmatpush.msra.mxu0 %v5524
    %6224 = vmatmul.f32.gmra.mxu0 %v5098
    %v6225 = vpop.f32.mrf.mxu0
    %v6226 = vadd.f32 %v6206, %v6225
    %6227 = vdwg.mxu0
    %6228 = vmatpush.msra.mxu0 %v5555
    %6229 = vmatpush.msra.mxu0 %v5554
    %6230 = vmatpush.msra.mxu0 %v5553
    %6231 = vmatpush.msra.mxu0 %v5552
    %6232 = vmatpush.msra.mxu0 %v5551
    %6233 = vmatpush.msra.mxu0 %v5550
    %6234 = vmatpush.msra.mxu0 %v5549
    %6235 = vmatpush.msra.mxu0 %v5548
    %6236 = vmatpush.msra.mxu0 %v5547
    %6237 = vmatpush.msra.mxu0 %v5546
    %6238 = vmatpush.msra.mxu0 %v5545
    %6239 = vmatpush.msra.mxu0 %v5544
    %6240 = vmatpush.msra.mxu0 %v5543
    %6241 = vmatpush.msra.mxu0 %v5542
    %6242 = vmatpush.msra.mxu0 %v5541
    %6243 = vmatpush.msra.mxu0 %v5540
    %6244 = vmatmul.f32.gmra.mxu0 %v5099
    %v6245 = vpop.f32.mrf.mxu0
    %v6246 = vadd.f32 %v6226, %v6245
    %6247 = vdwg.mxu0
    %6248 = vmatpush.msra.mxu0 %v5571
    %6249 = vmatpush.msra.mxu0 %v5570
    %6250 = vmatpush.msra.mxu0 %v5569
    %6251 = vmatpush.msra.mxu0 %v5568
    %6252 = vmatpush.msra.mxu0 %v5567
    %6253 = vmatpush.msra.mxu0 %v5566
    %6254 = vmatpush.msra.mxu0 %v5565
    %6255 = vmatpush.msra.mxu0 %v5564
    %6256 = vmatpush.msra.mxu0 %v5563
    %6257 = vmatpush.msra.mxu0 %v5562
    %6258 = vmatpush.msra.mxu0 %v5561
    %6259 = vmatpush.msra.mxu0 %v5560
    %6260 = vmatpush.msra.mxu0 %v5559
    %6261 = vmatpush.msra.mxu0 %v5558
    %6262 = vmatpush.msra.mxu0 %v5557
    %6263 = vmatpush.msra.mxu0 %v5556
    %6264 = vmatmul.f32.gmra.mxu0 %v5100
    %v6265 = vpop.f32.mrf.mxu0
    %v6266 = vadd.f32 %v6246, %v6265
    %6267 = vdwg.mxu0
    %6268 = vmatpush.msra.mxu0 %v5587
    %6269 = vmatpush.msra.mxu0 %v5586
    %6270 = vmatpush.msra.mxu0 %v5585
    %6271 = vmatpush.msra.mxu0 %v5584
    %6272 = vmatpush.msra.mxu0 %v5583
    %6273 = vmatpush.msra.mxu0 %v5582
    %6274 = vmatpush.msra.mxu0 %v5581
    %6275 = vmatpush.msra.mxu0 %v5580
    %6276 = vmatpush.msra.mxu0 %v5579
    %6277 = vmatpush.msra.mxu0 %v5578
    %6278 = vmatpush.msra.mxu0 %v5577
    %6279 = vmatpush.msra.mxu0 %v5576
    %6280 = vmatpush.msra.mxu0 %v5575
    %6281 = vmatpush.msra.mxu0 %v5574
    %6282 = vmatpush.msra.mxu0 %v5573
    %6283 = vmatpush.msra.mxu0 %v5572
    %6284 = vmatmul.f32.gmra.mxu0 %v5101
    %v6285 = vpop.f32.mrf.mxu0
    %v6286 = vadd.f32 %v6266, %v6285
    %6287 = vdwg.mxu0
    %6288 = vmatpush.msra.mxu0 %v5603
    %6289 = vmatpush.msra.mxu0 %v5602
    %6290 = vmatpush.msra.mxu0 %v5601
    %6291 = vmatpush.msra.mxu0 %v5600
    %6292 = vmatpush.msra.mxu0 %v5599
    %6293 = vmatpush.msra.mxu0 %v5598
    %6294 = vmatpush.msra.mxu0 %v5597
    %6295 = vmatpush.msra.mxu0 %v5596
    %6296 = vmatpush.msra.mxu0 %v5595
    %6297 = vmatpush.msra.mxu0 %v5594
    %6298 = vmatpush.msra.mxu0 %v5593
    %6299 = vmatpush.msra.mxu0 %v5592
    %6300 = vmatpush.msra.mxu0 %v5591
    %6301 = vmatpush.msra.mxu0 %v5590
    %6302 = vmatpush.msra.mxu0 %v5589
    %6303 = vmatpush.msra.mxu0 %v5588
    %6304 = vmatmul.f32.gmra.mxu0 %v5102
    %v6305 = vpop.f32.mrf.mxu0
    %v6306 = vadd.f32 %v6286, %v6305
    %6307 = vdwg.mxu0
    %6308 = vmatpush.msra.mxu0 %v5619
    %6309 = vmatpush.msra.mxu0 %v5618
    %6310 = vmatpush.msra.mxu0 %v5617
    %6311 = vmatpush.msra.mxu0 %v5616
    %6312 = vmatpush.msra.mxu0 %v5615
    %6313 = vmatpush.msra.mxu0 %v5614
    %6314 = vmatpush.msra.mxu0 %v5613
    %6315 = vmatpush.msra.mxu0 %v5612
    %6316 = vmatpush.msra.mxu0 %v5611
    %6317 = vmatpush.msra.mxu0 %v5610
    %6318 = vmatpush.msra.mxu0 %v5609
    %6319 = vmatpush.msra.mxu0 %v5608
    %6320 = vmatpush.msra.mxu0 %v5607
    %6321 = vmatpush.msra.mxu0 %v5606
    %6322 = vmatpush.msra.mxu0 %v5605
    %6323 = vmatpush.msra.mxu0 %v5604
    %6324 = vmatmul.f32.gmra.mxu0 %v5103
    %v6325 = vpop.f32.mrf.mxu0
    %v6326 = vadd.f32 %v6306, %v6325
    %6327 = vdwg.mxu0
    %6328 = vmatpush.msra.mxu0 %v5635
    %6329 = vmatpush.msra.mxu0 %v5634
    %6330 = vmatpush.msra.mxu0 %v5633
    %6331 = vmatpush.msra.mxu0 %v5632
    %6332 = vmatpush.msra.mxu0 %v5631
    %6333 = vmatpush.msra.mxu0 %v5630
    %6334 = vmatpush.msra.mxu0 %v5629
    %6335 = vmatpush.msra.mxu0 %v5628
    %6336 = vmatpush.msra.mxu0 %v5627
    %6337 = vmatpush.msra.mxu0 %v5626
    %6338 = vmatpush.msra.mxu0 %v5625
    %6339 = vmatpush.msra.mxu0 %v5624
    %6340 = vmatpush.msra.mxu0 %v5623
    %6341 = vmatpush.msra.mxu0 %v5622
    %6342 = vmatpush.msra.mxu0 %v5621
    %6343 = vmatpush.msra.mxu0 %v5620
    %6344 = vmatmul.f32.gmra.mxu0 %v5104
    %v6345 = vpop.f32.mrf.mxu0
    %v6346 = vadd.f32 %v6326, %v6345
    %6347 = vdwg.mxu0
    %6348 = vmatpush.msra.mxu0 %v5651
    %6349 = vmatpush.msra.mxu0 %v5650
    %6350 = vmatpush.msra.mxu0 %v5649
    %6351 = vmatpush.msra.mxu0 %v5648
    %6352 = vmatpush.msra.mxu0 %v5647
    %6353 = vmatpush.msra.mxu0 %v5646
    %6354 = vmatpush.msra.mxu0 %v5645
    %6355 = vmatpush.msra.mxu0 %v5644
    %6356 = vmatpush.msra.mxu0 %v5643
    %6357 = vmatpush.msra.mxu0 %v5642
    %6358 = vmatpush.msra.mxu0 %v5641
    %6359 = vmatpush.msra.mxu0 %v5640
    %6360 = vmatpush.msra.mxu0 %v5639
    %6361 = vmatpush.msra.mxu0 %v5638
    %6362 = vmatpush.msra.mxu0 %v5637
    %6363 = vmatpush.msra.mxu0 %v5636
    %6364 = vmatmul.f32.gmra.mxu0 %v5105
    %v6365 = vpop.f32.mrf.mxu0
    %v6366 = vadd.f32 %v6346, %v6365
    %6367 = vdwg.mxu0
    %6368 = vmatpush.msra.mxu0 %v5667
    %6369 = vmatpush.msra.mxu0 %v5666
    %6370 = vmatpush.msra.mxu0 %v5665
    %6371 = vmatpush.msra.mxu0 %v5664
    %6372 = vmatpush.msra.mxu0 %v5663
    %6373 = vmatpush.msra.mxu0 %v5662
    %6374 = vmatpush.msra.mxu0 %v5661
    %6375 = vmatpush.msra.mxu0 %v5660
    %6376 = vmatpush.msra.mxu0 %v5659
    %6377 = vmatpush.msra.mxu0 %v5658
    %6378 = vmatpush.msra.mxu0 %v5657
    %6379 = vmatpush.msra.mxu0 %v5656
    %6380 = vmatpush.msra.mxu0 %v5655
    %6381 = vmatpush.msra.mxu0 %v5654
    %6382 = vmatpush.msra.mxu0 %v5653
    %6383 = vmatpush.msra.mxu0 %v5652
    %6384 = vmatmul.f32.gmra.mxu0 %v5106
    %v6385 = vpop.f32.mrf.mxu0
    %v6386 = vadd.f32 %v6366, %v6385
    %6387 = vdwg.mxu0
    %6388 = vmatpush.msra.mxu0 %v5683
    %6389 = vmatpush.msra.mxu0 %v5682
    %6390 = vmatpush.msra.mxu0 %v5681
    %6391 = vmatpush.msra.mxu0 %v5680
    %6392 = vmatpush.msra.mxu0 %v5679
    %6393 = vmatpush.msra.mxu0 %v5678
    %6394 = vmatpush.msra.mxu0 %v5677
    %6395 = vmatpush.msra.mxu0 %v5676
    %6396 = vmatpush.msra.mxu0 %v5675
    %6397 = vmatpush.msra.mxu0 %v5674
    %6398 = vmatpush.msra.mxu0 %v5673
    %6399 = vmatpush.msra.mxu0 %v5672
    %6400 = vmatpush.msra.mxu0 %v5671
    %6401 = vmatpush.msra.mxu0 %v5670
    %6402 = vmatpush.msra.mxu0 %v5669
    %6403 = vmatpush.msra.mxu0 %v5668
    %6404 = vmatmul.f32.gmra.mxu0 %v5107
    %v6405 = vpop.f32.mrf.mxu0
    %v6406 = vadd.f32 %v6386, %v6405
    %6407 = vdwg.mxu0
    %v6408 = vmax.f32 %v6406, 0.0
    %v6409 = vld [vmem:[#allocation13] sm:$0xff]
    %v6410 = vld [vmem:[#allocation13 + $0x8] sm:$0xff]
    %v6411 = vld [vmem:[#allocation13 + $0x10] sm:$0xff]
    %v6412 = vld [vmem:[#allocation13 + $0x18] sm:$0xff]
    %v6413 = vld [vmem:[#allocation13 + $0x20] sm:$0xff]
    %v6414 = vld [vmem:[#allocation13 + $0x28] sm:$0xff]
    %v6415 = vld [vmem:[#allocation13 + $0x30] sm:$0xff]
    %v6416 = vld [vmem:[#allocation13 + $0x38] sm:$0xff]
    %v6417 = vld [vmem:[#allocation13 + $0x40] sm:$0xff]
    %v6418 = vld [vmem:[#allocation13 + $0x48] sm:$0xff]
    %v6419 = vld [vmem:[#allocation13 + $0x50] sm:$0xff]
    %v6420 = vld [vmem:[#allocation13 + $0x58] sm:$0xff]
    %v6421 = vld [vmem:[#allocation13 + $0x60] sm:$0xff]
    %v6422 = vld [vmem:[#allocation13 + $0x68] sm:$0xff]
    %v6423 = vld [vmem:[#allocation13 + $0x70] sm:$0xff]
    %v6424 = vld [vmem:[#allocation13 + $0x78] sm:$0xff]
    %v6425 = vld [vmem:[#allocation14] sm:$0x1]
    %v6427 = vperm.slane %v6425, 0
    %6429 = vmatpush.msra.mxu0 %v6424
    %6430 = vmatpush.msra.mxu0 %v6423
    %6431 = vmatpush.msra.mxu0 %v6422
    %6432 = vmatpush.msra.mxu0 %v6421
    %6433 = vmatpush.msra.mxu0 %v6420
    %6434 = vmatpush.msra.mxu0 %v6419
    %6435 = vmatpush.msra.mxu0 %v6418
    %6436 = vmatpush.msra.mxu0 %v6417
    %6437 = vmatpush.msra.mxu0 %v6416
    %6438 = vmatpush.msra.mxu0 %v6415
    %6439 = vmatpush.msra.mxu0 %v6414
    %6440 = vmatpush.msra.mxu0 %v6413
    %6441 = vmatpush.msra.mxu0 %v6412
    %6442 = vmatpush.msra.mxu0 %v6411
    %6443 = vmatpush.msra.mxu0 %v6410
    %6444 = vmatpush.msra.mxu0 %v6409
    %6445 = vmatmul.f32.gmra.mxu0 %v6408
    %v6446 = vpop.f32.mrf.mxu0
    %v6447 = vadd.f32 %v6427, %v6446
    %6448 = vdwg.mxu0
    %v6449 = vmax.f32 %v6447, 0.0
    %v6450 = vld [vmem:[#allocation16] sm:$0xff]
    %v6451 = vld [vmem:[#allocation16 + $0x8] sm:$0xff]
    %v6452 = vld [vmem:[#allocation16 + $0x10] sm:$0xff]
    %v6453 = vld [vmem:[#allocation16 + $0x18] sm:$0xff]
    %v6454 = vld [vmem:[#allocation16 + $0x20] sm:$0xff]
    %v6455 = vld [vmem:[#allocation16 + $0x28] sm:$0xff]
    %v6456 = vld [vmem:[#allocation16 + $0x30] sm:$0xff]
    %v6457 = vld [vmem:[#allocation16 + $0x38] sm:$0xff]
    %v6458 = vld [vmem:[#allocation16 + $0x40] sm:$0xff]
    %v6459 = vld [vmem:[#allocation16 + $0x48] sm:$0xff]
    %v6460 = vld [vmem:[#allocation16 + $0x50] sm:$0xff]
    %v6461 = vld [vmem:[#allocation16 + $0x58] sm:$0xff]
    %v6462 = vld [vmem:[#allocation16 + $0x60] sm:$0xff]
    %v6463 = vld [vmem:[#allocation16 + $0x68] sm:$0xff]
    %v6464 = vld [vmem:[#allocation16 + $0x70] sm:$0xff]
    %v6465 = vld [vmem:[#allocation16 + $0x78] sm:$0xff]
    %v6466 = vld [vmem:[#allocation17] sm:$0x1]
    %v6468 = vperm.slane %v6466, 0
    %6470 = vmatpush.msra.mxu0 %v6465
    %6471 = vmatpush.msra.mxu0 %v6464
    %6472 = vmatpush.msra.mxu0 %v6463
    %6473 = vmatpush.msra.mxu0 %v6462
    %6474 = vmatpush.msra.mxu0 %v6461
    %6475 = vmatpush.msra.mxu0 %v6460
    %6476 = vmatpush.msra.mxu0 %v6459
    %6477 = vmatpush.msra.mxu0 %v6458
    %6478 = vmatpush.msra.mxu0 %v6457
    %6479 = vmatpush.msra.mxu0 %v6456
    %6480 = vmatpush.msra.mxu0 %v6455
    %6481 = vmatpush.msra.mxu0 %v6454
    %6482 = vmatpush.msra.mxu0 %v6453
    %6483 = vmatpush.msra.mxu0 %v6452
    %6484 = vmatpush.msra.mxu0 %v6451
    %6485 = vmatpush.msra.mxu0 %v6450
    %6486 = vmatmul.f32.gmra.mxu0 %v6449
    %v6487 = vpop.f32.mrf.mxu0
    %v6488 = vadd.f32 %v6468, %v6487
    %6489 = vdwg.mxu0
    %6490 = vst [vmem:[%s13] sm:$0xff] %v6488
    // Predicated region
    $region94: #{dqn_forward_pallas.1} parent=1 // pred_check
      _
    $region95: #{dqn_forward_pallas.1} parent=1 // pred_check_branch
      %6492 = sbr.rel (0) target = $region97
    $region96: #{dqn_forward_pallas.1} parent=1 // pred_region
      _
    $region97: #{dqn_forward_pallas.1} parent=1 // pred_fallthru
      _
    // Predicated region
    $region98: #{dqn_forward_pallas.1} parent=1 // pred_check
      _
    $region99: #{dqn_forward_pallas.1} parent=1 // pred_check_branch
      %6494 = sbr.rel (0) target = $region101
    $region100: #{dqn_forward_pallas.1} parent=1 // pred_region
      _
    $region101: #{dqn_forward_pallas.1} parent=1 // pred_fallthru
      _
    %6495 = vsyncpa [#allocation4], 1
    %6496 = vsyncpa [#allocation6], 1
    %6497 = vsyncpa [#allocation9], 1
    %6498 = vsyncpa [#allocation12], 1
    %6499 = vsyncpa [#allocation15], 1
    %6500 = vsyncpa [#allocation18], 1

</llo_original>
